<compile_context>
chip_gen: v7x
topology: tpu7x:2x2x1
jax: 0.10.0
libtpu: 0.0.40
codegen_flags: <defaults>
</compile_context>

<pallas_src>
import jax
import jax.numpy as jnp
from jax.experimental import pallas as pl
from jax.experimental.pallas import tpu as pltpu


def _round_up(x, m):
    return (x + m - 1) // m * m


def _make_fused_kernel(Cout, LC, WT, offsets):
    """Fused 3x(KxK valid conv + bias(+const) + relu); activations in vregs."""
    n_taps = len(offsets)

    def kernel(x_ref, w_ref, b_ref, o_ref):
        a = x_ref[...]                                  # (Cin, WT) ~5 vregs
        tail = jnp.zeros((Cout, WT - LC), jnp.float32)  # finite tail for shifted reads

        for stage in range(3):
            # Tap-accumulate convolution: never materializes an im2col buffer.
            acc = jnp.dot(w_ref[0], a[:, 0:LC],
                          preferred_element_type=jnp.float32)
            for t in range(1, n_taps):
                d = offsets[t]
                acc = acc + jnp.dot(w_ref[t], a[:, d:d + LC],
                                    preferred_element_type=jnp.float32)
            y = jnp.maximum(acc + b_ref[stage], 0.0)    # (Cout, LC) lane-dense
            if stage < 2:
                a = jnp.concatenate([y, tail], axis=-1)  # (Cout, WT), vreg-resident
            else:
                o_ref[...] = y                           # unmasked full-tile store

    return kernel


def prepare_params(w, b):
    """One-time repack of the shared conv parameters (outside the hot path)."""
    Cout, Cin, K, _ = w.shape
    # per-tap (Cout, Cin) weight tiles, tap index t = i*K + j
    w_taps = jnp.transpose(w, (2, 3, 0, 1)).reshape(K * K, Cout, Cin)
    # per-stage additive constants folded into the bias row
    b3 = jnp.stack([b - 0.75, b - 1.0, b + 0.25], axis=0).reshape(3, Cout, 1)
    return w_taps.astype(jnp.float32), b3.astype(jnp.float32)


@jax.jit
def model_forward(x, w_taps, b3):
    """Forward pass of the PyTorch Model (same conv weights used 3 times). NCHW."""
    N, Cin, H, W = x.shape
    KK, Cout, _ = w_taps.shape
    K = int(round(KK ** 0.5))
    H3, W3 = H - 3 * (K - 1), W - 3 * (K - 1)
    assert H3 > 0 and W3 > 0, "input too small for three valid 5x5 convs"

    S = H * W                              # per-sample lane stride (samples packed)
    LC = _round_up(N * S, 128)             # computed/stored width per stage
    d_max = (K - 1) * W + (K - 1)          # largest flattened window offset
    WT = _round_up(LC + d_max, 128)        # readable width fed to each stage
    offsets = tuple(i * W + j for i in range(K) for j in range(K))

    # Batch folded onto the lane axis: (Cin, N*H*W), zero-padded to WT columns.
    x_flat = jnp.transpose(x, (1, 0, 2, 3)).reshape(Cin, N * S)
    x_flat = jnp.pad(x_flat, ((0, 0), (0, WT - N * S)))

    out_flat = pl.pallas_call(
        _make_fused_kernel(Cout, LC, WT, offsets),
        out_shape=jax.ShapeDtypeStruct((Cout, LC), jnp.float32),
        in_specs=[
            pl.BlockSpec(memory_space=pltpu.MemorySpace.VMEM),
            pl.BlockSpec(memory_space=pltpu.MemorySpace.VMEM),
            pl.BlockSpec(memory_space=pltpu.MemorySpace.VMEM),
        ],
        out_specs=pl.BlockSpec(memory_space=pltpu.MemorySpace.VMEM),
    )(x_flat, w_taps, b3)

    # Crop the garbage columns (row stride stayed at the original width W).
    out = out_flat[:, :N * S].reshape(Cout, N, H, W)
    return jnp.transpose(out, (1, 0, 2, 3))[:, :, :H3, :W3]


def _reference_forward(x, w, b):
    """Pure-JAX reference (lax.conv) for a correctness sanity check."""
    def step(t, const):
        t = jax.lax.conv_general_dilated(
            t, w, window_strides=(1, 1), padding="VALID",
            dimension_numbers=("NCHW", "OIHW", "NCHW"))
        t = t + b.reshape(1, -1, 1, 1) + const
        return jnp.maximum(t, 0.0)
    y = step(x, -0.75)
    y = step(y, -1.0)
    return step(y, 0.25)


if __name__ == "__main__":
    key = jax.random.PRNGKey(0)
    k_x, k_w, k_b = jax.random.split(key, 3)

    # Conv2d(8, 8, 5) applied 3x: spatial 16 -> 12 -> 8 -> 4 stays valid.
    N, C, H, W = 2, 8, 16, 16
    K, Cout = 5, 8

    x = jax.random.normal(k_x, (N, C, H, W), dtype=jnp.float32)

    # Deterministic Conv2d-style init: U(-sqrt(k), sqrt(k)), k = 1/(Cin*K*K)
    fan_in = C * K * K
    bound = 1.0 / (fan_in ** 0.5)
    w = jax.random.uniform(k_w, (Cout, C, K, K), jnp.float32, -bound, bound)
    b = jax.random.uniform(k_b, (Cout,), jnp.float32, -bound, bound)

    # Parameter repack happens once, outside the jitted hot path.
    w_taps, b3 = prepare_params(w, b)

    out = jax.block_until_ready(model_forward(x, w_taps, b3))
    ref = _reference_forward(x, w, b)

    assert out.shape == (N, Cout, H - 3 * (K - 1), W - 3 * (K - 1))
    assert jnp.allclose(out, ref, rtol=1e-3, atol=1e-3), \
        float(jnp.max(jnp.abs(out - ref)))

    print("KERNEL_OK")
</pallas_src>

<mosaic_0001>
module attributes {stable_mosaic.version = 11 : i64} {
  func.func @kernel(%arg0: memref<8x640xf32, #tpu.memory_space<vmem>>, %arg1: memref<25x8x8xf32, #tpu.memory_space<vmem>>, %arg2: memref<3x8x1xf32, #tpu.memory_space<vmem>>, %arg3: memref<8x512xf32, #tpu.memory_space<vmem>>) attributes {dimension_semantics = [], scalar_prefetch = 0 : i64, scratch_operands = 0 : i64, tpu.core_type = #tpu.core_type<tc>} {
    %c0 = arith.constant 0 : index
    %c0_0 = arith.constant 0 : index
    %0 = vector.load %arg0[%c0, %c0_0] : memref<8x640xf32, #tpu.memory_space<vmem>>, vector<8x640xf32>
    %cst = arith.constant 0.000000e+00 : f32
    %1 = vector.broadcast %cst : f32 to vector<8x128xf32>
    %c0_1 = arith.constant 0 : index
    %c0_2 = arith.constant 0 : index
    %c0_3 = arith.constant 0 : index
    %2 = vector.load %arg1[%c0_1, %c0_2, %c0_3] : memref<25x8x8xf32, #tpu.memory_space<vmem>>, vector<1x8x8xf32>
    %3 = vector.shape_cast %2 : vector<1x8x8xf32> to vector<8x8xf32>
    %4 = vector.extract_strided_slice %0 {offsets = [0, 0], sizes = [8, 512], strides = [1, 1]} : vector<8x640xf32> to vector<8x512xf32>
    %cst_4 = arith.constant dense<0.000000e+00> : vector<8x512xf32>
    %5 = tpu.matmul %3, %4, %cst_4 {dimension_numbers = #tpu.dot_dimension_numbers<[1], [0], [0], [1], [0, 0, 1, 1], [], []>} : vector<8x8xf32>, vector<8x512xf32>, vector<8x512xf32> -> vector<8x512xf32>
    %c1 = arith.constant 1 : index
    %c0_5 = arith.constant 0 : index
    %c0_6 = arith.constant 0 : index
    %6 = vector.load %arg1[%c1, %c0_5, %c0_6] : memref<25x8x8xf32, #tpu.memory_space<vmem>>, vector<1x8x8xf32>
    %7 = vector.shape_cast %6 : vector<1x8x8xf32> to vector<8x8xf32>
    %8 = vector.extract_strided_slice %0 {offsets = [0, 1], sizes = [8, 512], strides = [1, 1]} : vector<8x640xf32> to vector<8x512xf32>
    %cst_7 = arith.constant dense<0.000000e+00> : vector<8x512xf32>
    %9 = tpu.matmul %7, %8, %cst_7 {dimension_numbers = #tpu.dot_dimension_numbers<[1], [0], [0], [1], [0, 0, 1, 1], [], []>} : vector<8x8xf32>, vector<8x512xf32>, vector<8x512xf32> -> vector<8x512xf32>
    %10 = arith.addf %5, %9 : vector<8x512xf32>
    %c2 = arith.constant 2 : index
    %c0_8 = arith.constant 0 : index
    %c0_9 = arith.constant 0 : index
    %11 = vector.load %arg1[%c2, %c0_8, %c0_9] : memref<25x8x8xf32, #tpu.memory_space<vmem>>, vector<1x8x8xf32>
    %12 = vector.shape_cast %11 : vector<1x8x8xf32> to vector<8x8xf32>
    %13 = vector.extract_strided_slice %0 {offsets = [0, 2], sizes = [8, 512], strides = [1, 1]} : vector<8x640xf32> to vector<8x512xf32>
    %cst_10 = arith.constant dense<0.000000e+00> : vector<8x512xf32>
    %14 = tpu.matmul %12, %13, %cst_10 {dimension_numbers = #tpu.dot_dimension_numbers<[1], [0], [0], [1], [0, 0, 1, 1], [], []>} : vector<8x8xf32>, vector<8x512xf32>, vector<8x512xf32> -> vector<8x512xf32>
    %15 = arith.addf %10, %14 : vector<8x512xf32>
    %c3 = arith.constant 3 : index
    %c0_11 = arith.constant 0 : index
    %c0_12 = arith.constant 0 : index
    %16 = vector.load %arg1[%c3, %c0_11, %c0_12] : memref<25x8x8xf32, #tpu.memory_space<vmem>>, vector<1x8x8xf32>
    %17 = vector.shape_cast %16 : vector<1x8x8xf32> to vector<8x8xf32>
    %18 = vector.extract_strided_slice %0 {offsets = [0, 3], sizes = [8, 512], strides = [1, 1]} : vector<8x640xf32> to vector<8x512xf32>
    %cst_13 = arith.constant dense<0.000000e+00> : vector<8x512xf32>
    %19 = tpu.matmul %17, %18, %cst_13 {dimension_numbers = #tpu.dot_dimension_numbers<[1], [0], [0], [1], [0, 0, 1, 1], [], []>} : vector<8x8xf32>, vector<8x512xf32>, vector<8x512xf32> -> vector<8x512xf32>
    %20 = arith.addf %15, %19 : vector<8x512xf32>
    %c4 = arith.constant 4 : index
    %c0_14 = arith.constant 0 : index
    %c0_15 = arith.constant 0 : index
    %21 = vector.load %arg1[%c4, %c0_14, %c0_15] : memref<25x8x8xf32, #tpu.memory_space<vmem>>, vector<1x8x8xf32>
    %22 = vector.shape_cast %21 : vector<1x8x8xf32> to vector<8x8xf32>
    %23 = vector.extract_strided_slice %0 {offsets = [0, 4], sizes = [8, 512], strides = [1, 1]} : vector<8x640xf32> to vector<8x512xf32>
    %cst_16 = arith.constant dense<0.000000e+00> : vector<8x512xf32>
    %24 = tpu.matmul %22, %23, %cst_16 {dimension_numbers = #tpu.dot_dimension_numbers<[1], [0], [0], [1], [0, 0, 1, 1], [], []>} : vector<8x8xf32>, vector<8x512xf32>, vector<8x512xf32> -> vector<8x512xf32>
    %25 = arith.addf %20, %24 : vector<8x512xf32>
    %c5 = arith.constant 5 : index
    %c0_17 = arith.constant 0 : index
    %c0_18 = arith.constant 0 : index
    %26 = vector.load %arg1[%c5, %c0_17, %c0_18] : memref<25x8x8xf32, #tpu.memory_space<vmem>>, vector<1x8x8xf32>
    %27 = vector.shape_cast %26 : vector<1x8x8xf32> to vector<8x8xf32>
    %28 = vector.extract_strided_slice %0 {offsets = [0, 16], sizes = [8, 512], strides = [1, 1]} : vector<8x640xf32> to vector<8x512xf32>
    %cst_19 = arith.constant dense<0.000000e+00> : vector<8x512xf32>
    %29 = tpu.matmul %27, %28, %cst_19 {dimension_numbers = #tpu.dot_dimension_numbers<[1], [0], [0], [1], [0, 0, 1, 1], [], []>} : vector<8x8xf32>, vector<8x512xf32>, vector<8x512xf32> -> vector<8x512xf32>
    %30 = arith.addf %25, %29 : vector<8x512xf32>
    %c6 = arith.constant 6 : index
    %c0_20 = arith.constant 0 : index
    %c0_21 = arith.constant 0 : index
    %31 = vector.load %arg1[%c6, %c0_20, %c0_21] : memref<25x8x8xf32, #tpu.memory_space<vmem>>, vector<1x8x8xf32>
    %32 = vector.shape_cast %31 : vector<1x8x8xf32> to vector<8x8xf32>
    %33 = vector.extract_strided_slice %0 {offsets = [0, 17], sizes = [8, 512], strides = [1, 1]} : vector<8x640xf32> to vector<8x512xf32>
    %cst_22 = arith.constant dense<0.000000e+00> : vector<8x512xf32>
    %34 = tpu.matmul %32, %33, %cst_22 {dimension_numbers = #tpu.dot_dimension_numbers<[1], [0], [0], [1], [0, 0, 1, 1], [], []>} : vector<8x8xf32>, vector<8x512xf32>, vector<8x512xf32> -> vector<8x512xf32>
    %35 = arith.addf %30, %34 : vector<8x512xf32>
    %c7 = arith.constant 7 : index
    %c0_23 = arith.constant 0 : index
    %c0_24 = arith.constant 0 : index
    %36 = vector.load %arg1[%c7, %c0_23, %c0_24] : memref<25x8x8xf32, #tpu.memory_space<vmem>>, vector<1x8x8xf32>
    %37 = vector.shape_cast %36 : vector<1x8x8xf32> to vector<8x8xf32>
    %38 = vector.extract_strided_slice %0 {offsets = [0, 18], sizes = [8, 512], strides = [1, 1]} : vector<8x640xf32> to vector<8x512xf32>
    %cst_25 = arith.constant dense<0.000000e+00> : vector<8x512xf32>
    %39 = tpu.matmul %37, %38, %cst_25 {dimension_numbers = #tpu.dot_dimension_numbers<[1], [0], [0], [1], [0, 0, 1, 1], [], []>} : vector<8x8xf32>, vector<8x512xf32>, vector<8x512xf32> -> vector<8x512xf32>
    %40 = arith.addf %35, %39 : vector<8x512xf32>
    %c8 = arith.constant 8 : index
    %c0_26 = arith.constant 0 : index
    %c0_27 = arith.constant 0 : index
    %41 = vector.load %arg1[%c8, %c0_26, %c0_27] : memref<25x8x8xf32, #tpu.memory_space<vmem>>, vector<1x8x8xf32>
    %42 = vector.shape_cast %41 : vector<1x8x8xf32> to vector<8x8xf32>
    %43 = vector.extract_strided_slice %0 {offsets = [0, 19], sizes = [8, 512], strides = [1, 1]} : vector<8x640xf32> to vector<8x512xf32>
    %cst_28 = arith.constant dense<0.000000e+00> : vector<8x512xf32>
    %44 = tpu.matmul %42, %43, %cst_28 {dimension_numbers = #tpu.dot_dimension_numbers<[1], [0], [0], [1], [0, 0, 1, 1], [], []>} : vector<8x8xf32>, vector<8x512xf32>, vector<8x512xf32> -> vector<8x512xf32>
    %45 = arith.addf %40, %44 : vector<8x512xf32>
    %c9 = arith.constant 9 : index
    %c0_29 = arith.constant 0 : index
    %c0_30 = arith.constant 0 : index
    %46 = vector.load %arg1[%c9, %c0_29, %c0_30] : memref<25x8x8xf32, #tpu.memory_space<vmem>>, vector<1x8x8xf32>
    %47 = vector.shape_cast %46 : vector<1x8x8xf32> to vector<8x8xf32>
    %48 = vector.extract_strided_slice %0 {offsets = [0, 20], sizes = [8, 512], strides = [1, 1]} : vector<8x640xf32> to vector<8x512xf32>
    %cst_31 = arith.constant dense<0.000000e+00> : vector<8x512xf32>
    %49 = tpu.matmul %47, %48, %cst_31 {dimension_numbers = #tpu.dot_dimension_numbers<[1], [0], [0], [1], [0, 0, 1, 1], [], []>} : vector<8x8xf32>, vector<8x512xf32>, vector<8x512xf32> -> vector<8x512xf32>
    %50 = arith.addf %45, %49 : vector<8x512xf32>
    %c10 = arith.constant 10 : index
    %c0_32 = arith.constant 0 : index
    %c0_33 = arith.constant 0 : index
    %51 = vector.load %arg1[%c10, %c0_32, %c0_33] : memref<25x8x8xf32, #tpu.memory_space<vmem>>, vector<1x8x8xf32>
    %52 = vector.shape_cast %51 : vector<1x8x8xf32> to vector<8x8xf32>
    %53 = vector.extract_strided_slice %0 {offsets = [0, 32], sizes = [8, 512], strides = [1, 1]} : vector<8x640xf32> to vector<8x512xf32>
    %cst_34 = arith.constant dense<0.000000e+00> : vector<8x512xf32>
    %54 = tpu.matmul %52, %53, %cst_34 {dimension_numbers = #tpu.dot_dimension_numbers<[1], [0], [0], [1], [0, 0, 1, 1], [], []>} : vector<8x8xf32>, vector<8x512xf32>, vector<8x512xf32> -> vector<8x512xf32>
    %55 = arith.addf %50, %54 : vector<8x512xf32>
    %c11 = arith.constant 11 : index
    %c0_35 = arith.constant 0 : index
    %c0_36 = arith.constant 0 : index
    %56 = vector.load %arg1[%c11, %c0_35, %c0_36] : memref<25x8x8xf32, #tpu.memory_space<vmem>>, vector<1x8x8xf32>
    %57 = vector.shape_cast %56 : vector<1x8x8xf32> to vector<8x8xf32>
    %58 = vector.extract_strided_slice %0 {offsets = [0, 33], sizes = [8, 512], strides = [1, 1]} : vector<8x640xf32> to vector<8x512xf32>
    %cst_37 = arith.constant dense<0.000000e+00> : vector<8x512xf32>
    %59 = tpu.matmul %57, %58, %cst_37 {dimension_numbers = #tpu.dot_dimension_numbers<[1], [0], [0], [1], [0, 0, 1, 1], [], []>} : vector<8x8xf32>, vector<8x512xf32>, vector<8x512xf32> -> vector<8x512xf32>
    %60 = arith.addf %55, %59 : vector<8x512xf32>
    %c12 = arith.constant 12 : index
    %c0_38 = arith.constant 0 : index
    %c0_39 = arith.constant 0 : index
    %61 = vector.load %arg1[%c12, %c0_38, %c0_39] : memref<25x8x8xf32, #tpu.memory_space<vmem>>, vector<1x8x8xf32>
    %62 = vector.shape_cast %61 : vector<1x8x8xf32> to vector<8x8xf32>
    %63 = vector.extract_strided_slice %0 {offsets = [0, 34], sizes = [8, 512], strides = [1, 1]} : vector<8x640xf32> to vector<8x512xf32>
    %cst_40 = arith.constant dense<0.000000e+00> : vector<8x512xf32>
    %64 = tpu.matmul %62, %63, %cst_40 {dimension_numbers = #tpu.dot_dimension_numbers<[1], [0], [0], [1], [0, 0, 1, 1], [], []>} : vector<8x8xf32>, vector<8x512xf32>, vector<8x512xf32> -> vector<8x512xf32>
    %65 = arith.addf %60, %64 : vector<8x512xf32>
    %c13 = arith.constant 13 : index
    %c0_41 = arith.constant 0 : index
    %c0_42 = arith.constant 0 : index
    %66 = vector.load %arg1[%c13, %c0_41, %c0_42] : memref<25x8x8xf32, #tpu.memory_space<vmem>>, vector<1x8x8xf32>
    %67 = vector.shape_cast %66 : vector<1x8x8xf32> to vector<8x8xf32>
    %68 = vector.extract_strided_slice %0 {offsets = [0, 35], sizes = [8, 512], strides = [1, 1]} : vector<8x640xf32> to vector<8x512xf32>
    %cst_43 = arith.constant dense<0.000000e+00> : vector<8x512xf32>
    %69 = tpu.matmul %67, %68, %cst_43 {dimension_numbers = #tpu.dot_dimension_numbers<[1], [0], [0], [1], [0, 0, 1, 1], [], []>} : vector<8x8xf32>, vector<8x512xf32>, vector<8x512xf32> -> vector<8x512xf32>
    %70 = arith.addf %65, %69 : vector<8x512xf32>
    %c14 = arith.constant 14 : index
    %c0_44 = arith.constant 0 : index
    %c0_45 = arith.constant 0 : index
    %71 = vector.load %arg1[%c14, %c0_44, %c0_45] : memref<25x8x8xf32, #tpu.memory_space<vmem>>, vector<1x8x8xf32>
    %72 = vector.shape_cast %71 : vector<1x8x8xf32> to vector<8x8xf32>
    %73 = vector.extract_strided_slice %0 {offsets = [0, 36], sizes = [8, 512], strides = [1, 1]} : vector<8x640xf32> to vector<8x512xf32>
    %cst_46 = arith.constant dense<0.000000e+00> : vector<8x512xf32>
    %74 = tpu.matmul %72, %73, %cst_46 {dimension_numbers = #tpu.dot_dimension_numbers<[1], [0], [0], [1], [0, 0, 1, 1], [], []>} : vector<8x8xf32>, vector<8x512xf32>, vector<8x512xf32> -> vector<8x512xf32>
    %75 = arith.addf %70, %74 : vector<8x512xf32>
    %c15 = arith.constant 15 : index
    %c0_47 = arith.constant 0 : index
    %c0_48 = arith.constant 0 : index
    %76 = vector.load %arg1[%c15, %c0_47, %c0_48] : memref<25x8x8xf32, #tpu.memory_space<vmem>>, vector<1x8x8xf32>
    %77 = vector.shape_cast %76 : vector<1x8x8xf32> to vector<8x8xf32>
    %78 = vector.extract_strided_slice %0 {offsets = [0, 48], sizes = [8, 512], strides = [1, 1]} : vector<8x640xf32> to vector<8x512xf32>
    %cst_49 = arith.constant dense<0.000000e+00> : vector<8x512xf32>
    %79 = tpu.matmul %77, %78, %cst_49 {dimension_numbers = #tpu.dot_dimension_numbers<[1], [0], [0], [1], [0, 0, 1, 1], [], []>} : vector<8x8xf32>, vector<8x512xf32>, vector<8x512xf32> -> vector<8x512xf32>
    %80 = arith.addf %75, %79 : vector<8x512xf32>
    %c16 = arith.constant 16 : index
    %c0_50 = arith.constant 0 : index
    %c0_51 = arith.constant 0 : index
    %81 = vector.load %arg1[%c16, %c0_50, %c0_51] : memref<25x8x8xf32, #tpu.memory_space<vmem>>, vector<1x8x8xf32>
    %82 = vector.shape_cast %81 : vector<1x8x8xf32> to vector<8x8xf32>
    %83 = vector.extract_strided_slice %0 {offsets = [0, 49], sizes = [8, 512], strides = [1, 1]} : vector<8x640xf32> to vector<8x512xf32>
    %cst_52 = arith.constant dense<0.000000e+00> : vector<8x512xf32>
    %84 = tpu.matmul %82, %83, %cst_52 {dimension_numbers = #tpu.dot_dimension_numbers<[1], [0], [0], [1], [0, 0, 1, 1], [], []>} : vector<8x8xf32>, vector<8x512xf32>, vector<8x512xf32> -> vector<8x512xf32>
    %85 = arith.addf %80, %84 : vector<8x512xf32>
    %c17 = arith.constant 17 : index
    %c0_53 = arith.constant 0 : index
    %c0_54 = arith.constant 0 : index
    %86 = vector.load %arg1[%c17, %c0_53, %c0_54] : memref<25x8x8xf32, #tpu.memory_space<vmem>>, vector<1x8x8xf32>
    %87 = vector.shape_cast %86 : vector<1x8x8xf32> to vector<8x8xf32>
    %88 = vector.extract_strided_slice %0 {offsets = [0, 50], sizes = [8, 512], strides = [1, 1]} : vector<8x640xf32> to vector<8x512xf32>
    %cst_55 = arith.constant dense<0.000000e+00> : vector<8x512xf32>
    %89 = tpu.matmul %87, %88, %cst_55 {dimension_numbers = #tpu.dot_dimension_numbers<[1], [0], [0], [1], [0, 0, 1, 1], [], []>} : vector<8x8xf32>, vector<8x512xf32>, vector<8x512xf32> -> vector<8x512xf32>
    %90 = arith.addf %85, %89 : vector<8x512xf32>
    %c18 = arith.constant 18 : index
    %c0_56 = arith.constant 0 : index
    %c0_57 = arith.constant 0 : index
    %91 = vector.load %arg1[%c18, %c0_56, %c0_57] : memref<25x8x8xf32, #tpu.memory_space<vmem>>, vector<1x8x8xf32>
    %92 = vector.shape_cast %91 : vector<1x8x8xf32> to vector<8x8xf32>
    %93 = vector.extract_strided_slice %0 {offsets = [0, 51], sizes = [8, 512], strides = [1, 1]} : vector<8x640xf32> to vector<8x512xf32>
    %cst_58 = arith.constant dense<0.000000e+00> : vector<8x512xf32>
    %94 = tpu.matmul %92, %93, %cst_58 {dimension_numbers = #tpu.dot_dimension_numbers<[1], [0], [0], [1], [0, 0, 1, 1], [], []>} : vector<8x8xf32>, vector<8x512xf32>, vector<8x512xf32> -> vector<8x512xf32>
    %95 = arith.addf %90, %94 : vector<8x512xf32>
    %c19 = arith.constant 19 : index
    %c0_59 = arith.constant 0 : index
    %c0_60 = arith.constant 0 : index
    %96 = vector.load %arg1[%c19, %c0_59, %c0_60] : memref<25x8x8xf32, #tpu.memory_space<vmem>>, vector<1x8x8xf32>
    %97 = vector.shape_cast %96 : vector<1x8x8xf32> to vector<8x8xf32>
    %98 = vector.extract_strided_slice %0 {offsets = [0, 52], sizes = [8, 512], strides = [1, 1]} : vector<8x640xf32> to vector<8x512xf32>
    %cst_61 = arith.constant dense<0.000000e+00> : vector<8x512xf32>
    %99 = tpu.matmul %97, %98, %cst_61 {dimension_numbers = #tpu.dot_dimension_numbers<[1], [0], [0], [1], [0, 0, 1, 1], [], []>} : vector<8x8xf32>, vector<8x512xf32>, vector<8x512xf32> -> vector<8x512xf32>
    %100 = arith.addf %95, %99 : vector<8x512xf32>
    %c20 = arith.constant 20 : index
    %c0_62 = arith.constant 0 : index
    %c0_63 = arith.constant 0 : index
    %101 = vector.load %arg1[%c20, %c0_62, %c0_63] : memref<25x8x8xf32, #tpu.memory_space<vmem>>, vector<1x8x8xf32>
    %102 = vector.shape_cast %101 : vector<1x8x8xf32> to vector<8x8xf32>
    %103 = vector.extract_strided_slice %0 {offsets = [0, 64], sizes = [8, 512], strides = [1, 1]} : vector<8x640xf32> to vector<8x512xf32>
    %cst_64 = arith.constant dense<0.000000e+00> : vector<8x512xf32>
    %104 = tpu.matmul %102, %103, %cst_64 {dimension_numbers = #tpu.dot_dimension_numbers<[1], [0], [0], [1], [0, 0, 1, 1], [], []>} : vector<8x8xf32>, vector<8x512xf32>, vector<8x512xf32> -> vector<8x512xf32>
    %105 = arith.addf %100, %104 : vector<8x512xf32>
    %c21 = arith.constant 21 : index
    %c0_65 = arith.constant 0 : index
    %c0_66 = arith.constant 0 : index
    %106 = vector.load %arg1[%c21, %c0_65, %c0_66] : memref<25x8x8xf32, #tpu.memory_space<vmem>>, vector<1x8x8xf32>
    %107 = vector.shape_cast %106 : vector<1x8x8xf32> to vector<8x8xf32>
    %108 = vector.extract_strided_slice %0 {offsets = [0, 65], sizes = [8, 512], strides = [1, 1]} : vector<8x640xf32> to vector<8x512xf32>
    %cst_67 = arith.constant dense<0.000000e+00> : vector<8x512xf32>
    %109 = tpu.matmul %107, %108, %cst_67 {dimension_numbers = #tpu.dot_dimension_numbers<[1], [0], [0], [1], [0, 0, 1, 1], [], []>} : vector<8x8xf32>, vector<8x512xf32>, vector<8x512xf32> -> vector<8x512xf32>
    %110 = arith.addf %105, %109 : vector<8x512xf32>
    %c22 = arith.constant 22 : index
    %c0_68 = arith.constant 0 : index
    %c0_69 = arith.constant 0 : index
    %111 = vector.load %arg1[%c22, %c0_68, %c0_69] : memref<25x8x8xf32, #tpu.memory_space<vmem>>, vector<1x8x8xf32>
    %112 = vector.shape_cast %111 : vector<1x8x8xf32> to vector<8x8xf32>
    %113 = vector.extract_strided_slice %0 {offsets = [0, 66], sizes = [8, 512], strides = [1, 1]} : vector<8x640xf32> to vector<8x512xf32>
    %cst_70 = arith.constant dense<0.000000e+00> : vector<8x512xf32>
    %114 = tpu.matmul %112, %113, %cst_70 {dimension_numbers = #tpu.dot_dimension_numbers<[1], [0], [0], [1], [0, 0, 1, 1], [], []>} : vector<8x8xf32>, vector<8x512xf32>, vector<8x512xf32> -> vector<8x512xf32>
    %115 = arith.addf %110, %114 : vector<8x512xf32>
    %c23 = arith.constant 23 : index
    %c0_71 = arith.constant 0 : index
    %c0_72 = arith.constant 0 : index
    %116 = vector.load %arg1[%c23, %c0_71, %c0_72] : memref<25x8x8xf32, #tpu.memory_space<vmem>>, vector<1x8x8xf32>
    %117 = vector.shape_cast %116 : vector<1x8x8xf32> to vector<8x8xf32>
    %118 = vector.extract_strided_slice %0 {offsets = [0, 67], sizes = [8, 512], strides = [1, 1]} : vector<8x640xf32> to vector<8x512xf32>
    %cst_73 = arith.constant dense<0.000000e+00> : vector<8x512xf32>
    %119 = tpu.matmul %117, %118, %cst_73 {dimension_numbers = #tpu.dot_dimension_numbers<[1], [0], [0], [1], [0, 0, 1, 1], [], []>} : vector<8x8xf32>, vector<8x512xf32>, vector<8x512xf32> -> vector<8x512xf32>
    %120 = arith.addf %115, %119 : vector<8x512xf32>
    %c24 = arith.constant 24 : index
    %c0_74 = arith.constant 0 : index
    %c0_75 = arith.constant 0 : index
    %121 = vector.load %arg1[%c24, %c0_74, %c0_75] : memref<25x8x8xf32, #tpu.memory_space<vmem>>, vector<1x8x8xf32>
    %122 = vector.shape_cast %121 : vector<1x8x8xf32> to vector<8x8xf32>
    %123 = vector.extract_strided_slice %0 {offsets = [0, 68], sizes = [8, 512], strides = [1, 1]} : vector<8x640xf32> to vector<8x512xf32>
    %cst_76 = arith.constant dense<0.000000e+00> : vector<8x512xf32>
    %124 = tpu.matmul %122, %123, %cst_76 {dimension_numbers = #tpu.dot_dimension_numbers<[1], [0], [0], [1], [0, 0, 1, 1], [], []>} : vector<8x8xf32>, vector<8x512xf32>, vector<8x512xf32> -> vector<8x512xf32>
    %125 = arith.addf %120, %124 : vector<8x512xf32>
    %c0_77 = arith.constant 0 : index
    %c0_78 = arith.constant 0 : index
    %c0_79 = arith.constant 0 : index
    %126 = vector.load %arg2[%c0_77, %c0_78, %c0_79] : memref<3x8x1xf32, #tpu.memory_space<vmem>>, vector<1x8x1xf32>
    %127 = vector.shape_cast %126 : vector<1x8x1xf32> to vector<8x1xf32>
    %128 = vector.broadcast %127 : vector<8x1xf32> to vector<8x512xf32>
    %129 = arith.addf %125, %128 : vector<8x512xf32>
    %cst_80 = arith.constant 0.000000e+00 : f32
    %130 = vector.broadcast %cst_80 : f32 to vector<8x512xf32>
    %131 = arith.maximumf %129, %130 : vector<8x512xf32>
    %132 = tpu.concatenate %131, %1 in 1 : vector<8x512xf32>, vector<8x128xf32> -> vector<8x640xf32>
    %c0_81 = arith.constant 0 : index
    %c0_82 = arith.constant 0 : index
    %c0_83 = arith.constant 0 : index
    %133 = vector.load %arg1[%c0_81, %c0_82, %c0_83] : memref<25x8x8xf32, #tpu.memory_space<vmem>>, vector<1x8x8xf32>
    %134 = vector.shape_cast %133 : vector<1x8x8xf32> to vector<8x8xf32>
    %135 = vector.extract_strided_slice %132 {offsets = [0, 0], sizes = [8, 512], strides = [1, 1]} : vector<8x640xf32> to vector<8x512xf32>
    %cst_84 = arith.constant dense<0.000000e+00> : vector<8x512xf32>
    %136 = tpu.matmul %134, %135, %cst_84 {dimension_numbers = #tpu.dot_dimension_numbers<[1], [0], [0], [1], [0, 0, 1, 1], [], []>} : vector<8x8xf32>, vector<8x512xf32>, vector<8x512xf32> -> vector<8x512xf32>
    %c1_85 = arith.constant 1 : index
    %c0_86 = arith.constant 0 : index
    %c0_87 = arith.constant 0 : index
    %137 = vector.load %arg1[%c1_85, %c0_86, %c0_87] : memref<25x8x8xf32, #tpu.memory_space<vmem>>, vector<1x8x8xf32>
    %138 = vector.shape_cast %137 : vector<1x8x8xf32> to vector<8x8xf32>
    %139 = vector.extract_strided_slice %132 {offsets = [0, 1], sizes = [8, 512], strides = [1, 1]} : vector<8x640xf32> to vector<8x512xf32>
    %cst_88 = arith.constant dense<0.000000e+00> : vector<8x512xf32>
    %140 = tpu.matmul %138, %139, %cst_88 {dimension_numbers = #tpu.dot_dimension_numbers<[1], [0], [0], [1], [0, 0, 1, 1], [], []>} : vector<8x8xf32>, vector<8x512xf32>, vector<8x512xf32> -> vector<8x512xf32>
    %141 = arith.addf %136, %140 : vector<8x512xf32>
    %c2_89 = arith.constant 2 : index
    %c0_90 = arith.constant 0 : index
    %c0_91 = arith.constant 0 : index
    %142 = vector.load %arg1[%c2_89, %c0_90, %c0_91] : memref<25x8x8xf32, #tpu.memory_space<vmem>>, vector<1x8x8xf32>
    %143 = vector.shape_cast %142 : vector<1x8x8xf32> to vector<8x8xf32>
    %144 = vector.extract_strided_slice %132 {offsets = [0, 2], sizes = [8, 512], strides = [1, 1]} : vector<8x640xf32> to vector<8x512xf32>
    %cst_92 = arith.constant dense<0.000000e+00> : vector<8x512xf32>
    %145 = tpu.matmul %143, %144, %cst_92 {dimension_numbers = #tpu.dot_dimension_numbers<[1], [0], [0], [1], [0, 0, 1, 1], [], []>} : vector<8x8xf32>, vector<8x512xf32>, vector<8x512xf32> -> vector<8x512xf32>
    %146 = arith.addf %141, %145 : vector<8x512xf32>
    %c3_93 = arith.constant 3 : index
    %c0_94 = arith.constant 0 : index
    %c0_95 = arith.constant 0 : index
    %147 = vector.load %arg1[%c3_93, %c0_94, %c0_95] : memref<25x8x8xf32, #tpu.memory_space<vmem>>, vector<1x8x8xf32>
    %148 = vector.shape_cast %147 : vector<1x8x8xf32> to vector<8x8xf32>
    %149 = vector.extract_strided_slice %132 {offsets = [0, 3], sizes = [8, 512], strides = [1, 1]} : vector<8x640xf32> to vector<8x512xf32>
    %cst_96 = arith.constant dense<0.000000e+00> : vector<8x512xf32>
    %150 = tpu.matmul %148, %149, %cst_96 {dimension_numbers = #tpu.dot_dimension_numbers<[1], [0], [0], [1], [0, 0, 1, 1], [], []>} : vector<8x8xf32>, vector<8x512xf32>, vector<8x512xf32> -> vector<8x512xf32>
    %151 = arith.addf %146, %150 : vector<8x512xf32>
    %c4_97 = arith.constant 4 : index
    %c0_98 = arith.constant 0 : index
    %c0_99 = arith.constant 0 : index
    %152 = vector.load %arg1[%c4_97, %c0_98, %c0_99] : memref<25x8x8xf32, #tpu.memory_space<vmem>>, vector<1x8x8xf32>
    %153 = vector.shape_cast %152 : vector<1x8x8xf32> to vector<8x8xf32>
    %154 = vector.extract_strided_slice %132 {offsets = [0, 4], sizes = [8, 512], strides = [1, 1]} : vector<8x640xf32> to vector<8x512xf32>
    %cst_100 = arith.constant dense<0.000000e+00> : vector<8x512xf32>
    %155 = tpu.matmul %153, %154, %cst_100 {dimension_numbers = #tpu.dot_dimension_numbers<[1], [0], [0], [1], [0, 0, 1, 1], [], []>} : vector<8x8xf32>, vector<8x512xf32>, vector<8x512xf32> -> vector<8x512xf32>
    %156 = arith.addf %151, %155 : vector<8x512xf32>
    %c5_101 = arith.constant 5 : index
    %c0_102 = arith.constant 0 : index
    %c0_103 = arith.constant 0 : index
    %157 = vector.load %arg1[%c5_101, %c0_102, %c0_103] : memref<25x8x8xf32, #tpu.memory_space<vmem>>, vector<1x8x8xf32>
    %158 = vector.shape_cast %157 : vector<1x8x8xf32> to vector<8x8xf32>
    %159 = vector.extract_strided_slice %132 {offsets = [0, 16], sizes = [8, 512], strides = [1, 1]} : vector<8x640xf32> to vector<8x512xf32>
    %cst_104 = arith.constant dense<0.000000e+00> : vector<8x512xf32>
    %160 = tpu.matmul %158, %159, %cst_104 {dimension_numbers = #tpu.dot_dimension_numbers<[1], [0], [0], [1], [0, 0, 1, 1], [], []>} : vector<8x8xf32>, vector<8x512xf32>, vector<8x512xf32> -> vector<8x512xf32>
    %161 = arith.addf %156, %160 : vector<8x512xf32>
    %c6_105 = arith.constant 6 : index
    %c0_106 = arith.constant 0 : index
    %c0_107 = arith.constant 0 : index
    %162 = vector.load %arg1[%c6_105, %c0_106, %c0_107] : memref<25x8x8xf32, #tpu.memory_space<vmem>>, vector<1x8x8xf32>
    %163 = vector.shape_cast %162 : vector<1x8x8xf32> to vector<8x8xf32>
    %164 = vector.extract_strided_slice %132 {offsets = [0, 17], sizes = [8, 512], strides = [1, 1]} : vector<8x640xf32> to vector<8x512xf32>
    %cst_108 = arith.constant dense<0.000000e+00> : vector<8x512xf32>
    %165 = tpu.matmul %163, %164, %cst_108 {dimension_numbers = #tpu.dot_dimension_numbers<[1], [0], [0], [1], [0, 0, 1, 1], [], []>} : vector<8x8xf32>, vector<8x512xf32>, vector<8x512xf32> -> vector<8x512xf32>
    %166 = arith.addf %161, %165 : vector<8x512xf32>
    %c7_109 = arith.constant 7 : index
    %c0_110 = arith.constant 0 : index
    %c0_111 = arith.constant 0 : index
    %167 = vector.load %arg1[%c7_109, %c0_110, %c0_111] : memref<25x8x8xf32, #tpu.memory_space<vmem>>, vector<1x8x8xf32>
    %168 = vector.shape_cast %167 : vector<1x8x8xf32> to vector<8x8xf32>
    %169 = vector.extract_strided_slice %132 {offsets = [0, 18], sizes = [8, 512], strides = [1, 1]} : vector<8x640xf32> to vector<8x512xf32>
    %cst_112 = arith.constant dense<0.000000e+00> : vector<8x512xf32>
    %170 = tpu.matmul %168, %169, %cst_112 {dimension_numbers = #tpu.dot_dimension_numbers<[1], [0], [0], [1], [0, 0, 1, 1], [], []>} : vector<8x8xf32>, vector<8x512xf32>, vector<8x512xf32> -> vector<8x512xf32>
    %171 = arith.addf %166, %170 : vector<8x512xf32>
    %c8_113 = arith.constant 8 : index
    %c0_114 = arith.constant 0 : index
    %c0_115 = arith.constant 0 : index
    %172 = vector.load %arg1[%c8_113, %c0_114, %c0_115] : memref<25x8x8xf32, #tpu.memory_space<vmem>>, vector<1x8x8xf32>
    %173 = vector.shape_cast %172 : vector<1x8x8xf32> to vector<8x8xf32>
    %174 = vector.extract_strided_slice %132 {offsets = [0, 19], sizes = [8, 512], strides = [1, 1]} : vector<8x640xf32> to vector<8x512xf32>
    %cst_116 = arith.constant dense<0.000000e+00> : vector<8x512xf32>
    %175 = tpu.matmul %173, %174, %cst_116 {dimension_numbers = #tpu.dot_dimension_numbers<[1], [0], [0], [1], [0, 0, 1, 1], [], []>} : vector<8x8xf32>, vector<8x512xf32>, vector<8x512xf32> -> vector<8x512xf32>
    %176 = arith.addf %171, %175 : vector<8x512xf32>
    %c9_117 = arith.constant 9 : index
    %c0_118 = arith.constant 0 : index
    %c0_119 = arith.constant 0 : index
    %177 = vector.load %arg1[%c9_117, %c0_118, %c0_119] : memref<25x8x8xf32, #tpu.memory_space<vmem>>, vector<1x8x8xf32>
    %178 = vector.shape_cast %177 : vector<1x8x8xf32> to vector<8x8xf32>
    %179 = vector.extract_strided_slice %132 {offsets = [0, 20], sizes = [8, 512], strides = [1, 1]} : vector<8x640xf32> to vector<8x512xf32>
    %cst_120 = arith.constant dense<0.000000e+00> : vector<8x512xf32>
    %180 = tpu.matmul %178, %179, %cst_120 {dimension_numbers = #tpu.dot_dimension_numbers<[1], [0], [0], [1], [0, 0, 1, 1], [], []>} : vector<8x8xf32>, vector<8x512xf32>, vector<8x512xf32> -> vector<8x512xf32>
    %181 = arith.addf %176, %180 : vector<8x512xf32>
    %c10_121 = arith.constant 10 : index
    %c0_122 = arith.constant 0 : index
    %c0_123 = arith.constant 0 : index
    %182 = vector.load %arg1[%c10_121, %c0_122, %c0_123] : memref<25x8x8xf32, #tpu.memory_space<vmem>>, vector<1x8x8xf32>
    %183 = vector.shape_cast %182 : vector<1x8x8xf32> to vector<8x8xf32>
    %184 = vector.extract_strided_slice %132 {offsets = [0, 32], sizes = [8, 512], strides = [1, 1]} : vector<8x640xf32> to vector<8x512xf32>
    %cst_124 = arith.constant dense<0.000000e+00> : vector<8x512xf32>
    %185 = tpu.matmul %183, %184, %cst_124 {dimension_numbers = #tpu.dot_dimension_numbers<[1], [0], [0], [1], [0, 0, 1, 1], [], []>} : vector<8x8xf32>, vector<8x512xf32>, vector<8x512xf32> -> vector<8x512xf32>
    %186 = arith.addf %181, %185 : vector<8x512xf32>
    %c11_125 = arith.constant 11 : index
    %c0_126 = arith.constant 0 : index
    %c0_127 = arith.constant 0 : index
    %187 = vector.load %arg1[%c11_125, %c0_126, %c0_127] : memref<25x8x8xf32, #tpu.memory_space<vmem>>, vector<1x8x8xf32>
    %188 = vector.shape_cast %187 : vector<1x8x8xf32> to vector<8x8xf32>
    %189 = vector.extract_strided_slice %132 {offsets = [0, 33], sizes = [8, 512], strides = [1, 1]} : vector<8x640xf32> to vector<8x512xf32>
    %cst_128 = arith.constant dense<0.000000e+00> : vector<8x512xf32>
    %190 = tpu.matmul %188, %189, %cst_128 {dimension_numbers = #tpu.dot_dimension_numbers<[1], [0], [0], [1], [0, 0, 1, 1], [], []>} : vector<8x8xf32>, vector<8x512xf32>, vector<8x512xf32> -> vector<8x512xf32>
    %191 = arith.addf %186, %190 : vector<8x512xf32>
    %c12_129 = arith.constant 12 : index
    %c0_130 = arith.constant 0 : index
    %c0_131 = arith.constant 0 : index
    %192 = vector.load %arg1[%c12_129, %c0_130, %c0_131] : memref<25x8x8xf32, #tpu.memory_space<vmem>>, vector<1x8x8xf32>
    %193 = vector.shape_cast %192 : vector<1x8x8xf32> to vector<8x8xf32>
    %194 = vector.extract_strided_slice %132 {offsets = [0, 34], sizes = [8, 512], strides = [1, 1]} : vector<8x640xf32> to vector<8x512xf32>
    %cst_132 = arith.constant dense<0.000000e+00> : vector<8x512xf32>
    %195 = tpu.matmul %193, %194, %cst_132 {dimension_numbers = #tpu.dot_dimension_numbers<[1], [0], [0], [1], [0, 0, 1, 1], [], []>} : vector<8x8xf32>, vector<8x512xf32>, vector<8x512xf32> -> vector<8x512xf32>
    %196 = arith.addf %191, %195 : vector<8x512xf32>
    %c13_133 = arith.constant 13 : index
    %c0_134 = arith.constant 0 : index
    %c0_135 = arith.constant 0 : index
    %197 = vector.load %arg1[%c13_133, %c0_134, %c0_135] : memref<25x8x8xf32, #tpu.memory_space<vmem>>, vector<1x8x8xf32>
    %198 = vector.shape_cast %197 : vector<1x8x8xf32> to vector<8x8xf32>
    %199 = vector.extract_strided_slice %132 {offsets = [0, 35], sizes = [8, 512], strides = [1, 1]} : vector<8x640xf32> to vector<8x512xf32>
    %cst_136 = arith.constant dense<0.000000e+00> : vector<8x512xf32>
    %200 = tpu.matmul %198, %199, %cst_136 {dimension_numbers = #tpu.dot_dimension_numbers<[1], [0], [0], [1], [0, 0, 1, 1], [], []>} : vector<8x8xf32>, vector<8x512xf32>, vector<8x512xf32> -> vector<8x512xf32>
    %201 = arith.addf %196, %200 : vector<8x512xf32>
    %c14_137 = arith.constant 14 : index
    %c0_138 = arith.constant 0 : index
    %c0_139 = arith.constant 0 : index
    %202 = vector.load %arg1[%c14_137, %c0_138, %c0_139] : memref<25x8x8xf32, #tpu.memory_space<vmem>>, vector<1x8x8xf32>
    %203 = vector.shape_cast %202 : vector<1x8x8xf32> to vector<8x8xf32>
    %204 = vector.extract_strided_slice %132 {offsets = [0, 36], sizes = [8, 512], strides = [1, 1]} : vector<8x640xf32> to vector<8x512xf32>
    %cst_140 = arith.constant dense<0.000000e+00> : vector<8x512xf32>
    %205 = tpu.matmul %203, %204, %cst_140 {dimension_numbers = #tpu.dot_dimension_numbers<[1], [0], [0], [1], [0, 0, 1, 1], [], []>} : vector<8x8xf32>, vector<8x512xf32>, vector<8x512xf32> -> vector<8x512xf32>
    %206 = arith.addf %201, %205 : vector<8x512xf32>
    %c15_141 = arith.constant 15 : index
    %c0_142 = arith.constant 0 : index
    %c0_143 = arith.constant 0 : index
    %207 = vector.load %arg1[%c15_141, %c0_142, %c0_143] : memref<25x8x8xf32, #tpu.memory_space<vmem>>, vector<1x8x8xf32>
    %208 = vector.shape_cast %207 : vector<1x8x8xf32> to vector<8x8xf32>
    %209 = vector.extract_strided_slice %132 {offsets = [0, 48], sizes = [8, 512], strides = [1, 1]} : vector<8x640xf32> to vector<8x512xf32>
    %cst_144 = arith.constant dense<0.000000e+00> : vector<8x512xf32>
    %210 = tpu.matmul %208, %209, %cst_144 {dimension_numbers = #tpu.dot_dimension_numbers<[1], [0], [0], [1], [0, 0, 1, 1], [], []>} : vector<8x8xf32>, vector<8x512xf32>, vector<8x512xf32> -> vector<8x512xf32>
    %211 = arith.addf %206, %210 : vector<8x512xf32>
    %c16_145 = arith.constant 16 : index
    %c0_146 = arith.constant 0 : index
    %c0_147 = arith.constant 0 : index
    %212 = vector.load %arg1[%c16_145, %c0_146, %c0_147] : memref<25x8x8xf32, #tpu.memory_space<vmem>>, vector<1x8x8xf32>
    %213 = vector.shape_cast %212 : vector<1x8x8xf32> to vector<8x8xf32>
    %214 = vector.extract_strided_slice %132 {offsets = [0, 49], sizes = [8, 512], strides = [1, 1]} : vector<8x640xf32> to vector<8x512xf32>
    %cst_148 = arith.constant dense<0.000000e+00> : vector<8x512xf32>
    %215 = tpu.matmul %213, %214, %cst_148 {dimension_numbers = #tpu.dot_dimension_numbers<[1], [0], [0], [1], [0, 0, 1, 1], [], []>} : vector<8x8xf32>, vector<8x512xf32>, vector<8x512xf32> -> vector<8x512xf32>
    %216 = arith.addf %211, %215 : vector<8x512xf32>
    %c17_149 = arith.constant 17 : index
    %c0_150 = arith.constant 0 : index
    %c0_151 = arith.constant 0 : index
    %217 = vector.load %arg1[%c17_149, %c0_150, %c0_151] : memref<25x8x8xf32, #tpu.memory_space<vmem>>, vector<1x8x8xf32>
    %218 = vector.shape_cast %217 : vector<1x8x8xf32> to vector<8x8xf32>
    %219 = vector.extract_strided_slice %132 {offsets = [0, 50], sizes = [8, 512], strides = [1, 1]} : vector<8x640xf32> to vector<8x512xf32>
    %cst_152 = arith.constant dense<0.000000e+00> : vector<8x512xf32>
    %220 = tpu.matmul %218, %219, %cst_152 {dimension_numbers = #tpu.dot_dimension_numbers<[1], [0], [0], [1], [0, 0, 1, 1], [], []>} : vector<8x8xf32>, vector<8x512xf32>, vector<8x512xf32> -> vector<8x512xf32>
    %221 = arith.addf %216, %220 : vector<8x512xf32>
    %c18_153 = arith.constant 18 : index
    %c0_154 = arith.constant 0 : index
    %c0_155 = arith.constant 0 : index
    %222 = vector.load %arg1[%c18_153, %c0_154, %c0_155] : memref<25x8x8xf32, #tpu.memory_space<vmem>>, vector<1x8x8xf32>
    %223 = vector.shape_cast %222 : vector<1x8x8xf32> to vector<8x8xf32>
    %224 = vector.extract_strided_slice %132 {offsets = [0, 51], sizes = [8, 512], strides = [1, 1]} : vector<8x640xf32> to vector<8x512xf32>
    %cst_156 = arith.constant dense<0.000000e+00> : vector<8x512xf32>
    %225 = tpu.matmul %223, %224, %cst_156 {dimension_numbers = #tpu.dot_dimension_numbers<[1], [0], [0], [1], [0, 0, 1, 1], [], []>} : vector<8x8xf32>, vector<8x512xf32>, vector<8x512xf32> -> vector<8x512xf32>
    %226 = arith.addf %221, %225 : vector<8x512xf32>
    %c19_157 = arith.constant 19 : index
    %c0_158 = arith.constant 0 : index
    %c0_159 = arith.constant 0 : index
    %227 = vector.load %arg1[%c19_157, %c0_158, %c0_159] : memref<25x8x8xf32, #tpu.memory_space<vmem>>, vector<1x8x8xf32>
    %228 = vector.shape_cast %227 : vector<1x8x8xf32> to vector<8x8xf32>
    %229 = vector.extract_strided_slice %132 {offsets = [0, 52], sizes = [8, 512], strides = [1, 1]} : vector<8x640xf32> to vector<8x512xf32>
    %cst_160 = arith.constant dense<0.000000e+00> : vector<8x512xf32>
    %230 = tpu.matmul %228, %229, %cst_160 {dimension_numbers = #tpu.dot_dimension_numbers<[1], [0], [0], [1], [0, 0, 1, 1], [], []>} : vector<8x8xf32>, vector<8x512xf32>, vector<8x512xf32> -> vector<8x512xf32>
    %231 = arith.addf %226, %230 : vector<8x512xf32>
    %c20_161 = arith.constant 20 : index
    %c0_162 = arith.constant 0 : index
    %c0_163 = arith.constant 0 : index
    %232 = vector.load %arg1[%c20_161, %c0_162, %c0_163] : memref<25x8x8xf32, #tpu.memory_space<vmem>>, vector<1x8x8xf32>
    %233 = vector.shape_cast %232 : vector<1x8x8xf32> to vector<8x8xf32>
    %234 = vector.extract_strided_slice %132 {offsets = [0, 64], sizes = [8, 512], strides = [1, 1]} : vector<8x640xf32> to vector<8x512xf32>
    %cst_164 = arith.constant dense<0.000000e+00> : vector<8x512xf32>
    %235 = tpu.matmul %233, %234, %cst_164 {dimension_numbers = #tpu.dot_dimension_numbers<[1], [0], [0], [1], [0, 0, 1, 1], [], []>} : vector<8x8xf32>, vector<8x512xf32>, vector<8x512xf32> -> vector<8x512xf32>
    %236 = arith.addf %231, %235 : vector<8x512xf32>
    %c21_165 = arith.constant 21 : index
    %c0_166 = arith.constant 0 : index
    %c0_167 = arith.constant 0 : index
    %237 = vector.load %arg1[%c21_165, %c0_166, %c0_167] : memref<25x8x8xf32, #tpu.memory_space<vmem>>, vector<1x8x8xf32>
    %238 = vector.shape_cast %237 : vector<1x8x8xf32> to vector<8x8xf32>
    %239 = vector.extract_strided_slice %132 {offsets = [0, 65], sizes = [8, 512], strides = [1, 1]} : vector<8x640xf32> to vector<8x512xf32>
    %cst_168 = arith.constant dense<0.000000e+00> : vector<8x512xf32>
    %240 = tpu.matmul %238, %239, %cst_168 {dimension_numbers = #tpu.dot_dimension_numbers<[1], [0], [0], [1], [0, 0, 1, 1], [], []>} : vector<8x8xf32>, vector<8x512xf32>, vector<8x512xf32> -> vector<8x512xf32>
    %241 = arith.addf %236, %240 : vector<8x512xf32>
    %c22_169 = arith.constant 22 : index
    %c0_170 = arith.constant 0 : index
    %c0_171 = arith.constant 0 : index
    %242 = vector.load %arg1[%c22_169, %c0_170, %c0_171] : memref<25x8x8xf32, #tpu.memory_space<vmem>>, vector<1x8x8xf32>
    %243 = vector.shape_cast %242 : vector<1x8x8xf32> to vector<8x8xf32>
    %244 = vector.extract_strided_slice %132 {offsets = [0, 66], sizes = [8, 512], strides = [1, 1]} : vector<8x640xf32> to vector<8x512xf32>
    %cst_172 = arith.constant dense<0.000000e+00> : vector<8x512xf32>
    %245 = tpu.matmul %243, %244, %cst_172 {dimension_numbers = #tpu.dot_dimension_numbers<[1], [0], [0], [1], [0, 0, 1, 1], [], []>} : vector<8x8xf32>, vector<8x512xf32>, vector<8x512xf32> -> vector<8x512xf32>
    %246 = arith.addf %241, %245 : vector<8x512xf32>
    %c23_173 = arith.constant 23 : index
    %c0_174 = arith.constant 0 : index
    %c0_175 = arith.constant 0 : index
    %247 = vector.load %arg1[%c23_173, %c0_174, %c0_175] : memref<25x8x8xf32, #tpu.memory_space<vmem>>, vector<1x8x8xf32>
    %248 = vector.shape_cast %247 : vector<1x8x8xf32> to vector<8x8xf32>
    %249 = vector.extract_strided_slice %132 {offsets = [0, 67], sizes = [8, 512], strides = [1, 1]} : vector<8x640xf32> to vector<8x512xf32>
    %cst_176 = arith.constant dense<0.000000e+00> : vector<8x512xf32>
    %250 = tpu.matmul %248, %249, %cst_176 {dimension_numbers = #tpu.dot_dimension_numbers<[1], [0], [0], [1], [0, 0, 1, 1], [], []>} : vector<8x8xf32>, vector<8x512xf32>, vector<8x512xf32> -> vector<8x512xf32>
    %251 = arith.addf %246, %250 : vector<8x512xf32>
    %c24_177 = arith.constant 24 : index
    %c0_178 = arith.constant 0 : index
    %c0_179 = arith.constant 0 : index
    %252 = vector.load %arg1[%c24_177, %c0_178, %c0_179] : memref<25x8x8xf32, #tpu.memory_space<vmem>>, vector<1x8x8xf32>
    %253 = vector.shape_cast %252 : vector<1x8x8xf32> to vector<8x8xf32>
    %254 = vector.extract_strided_slice %132 {offsets = [0, 68], sizes = [8, 512], strides = [1, 1]} : vector<8x640xf32> to vector<8x512xf32>
    %cst_180 = arith.constant dense<0.000000e+00> : vector<8x512xf32>
    %255 = tpu.matmul %253, %254, %cst_180 {dimension_numbers = #tpu.dot_dimension_numbers<[1], [0], [0], [1], [0, 0, 1, 1], [], []>} : vector<8x8xf32>, vector<8x512xf32>, vector<8x512xf32> -> vector<8x512xf32>
    %256 = arith.addf %251, %255 : vector<8x512xf32>
    %c1_181 = arith.constant 1 : index
    %c0_182 = arith.constant 0 : index
    %c0_183 = arith.constant 0 : index
    %257 = vector.load %arg2[%c1_181, %c0_182, %c0_183] : memref<3x8x1xf32, #tpu.memory_space<vmem>>, vector<1x8x1xf32>
    %258 = vector.shape_cast %257 : vector<1x8x1xf32> to vector<8x1xf32>
    %259 = vector.broadcast %258 : vector<8x1xf32> to vector<8x512xf32>
    %260 = arith.addf %256, %259 : vector<8x512xf32>
    %cst_184 = arith.constant 0.000000e+00 : f32
    %261 = vector.broadcast %cst_184 : f32 to vector<8x512xf32>
    %262 = arith.maximumf %260, %261 : vector<8x512xf32>
    %263 = tpu.concatenate %262, %1 in 1 : vector<8x512xf32>, vector<8x128xf32> -> vector<8x640xf32>
    %c0_185 = arith.constant 0 : index
    %c0_186 = arith.constant 0 : index
    %c0_187 = arith.constant 0 : index
    %264 = vector.load %arg1[%c0_185, %c0_186, %c0_187] : memref<25x8x8xf32, #tpu.memory_space<vmem>>, vector<1x8x8xf32>
    %265 = vector.shape_cast %264 : vector<1x8x8xf32> to vector<8x8xf32>
    %266 = vector.extract_strided_slice %263 {offsets = [0, 0], sizes = [8, 512], strides = [1, 1]} : vector<8x640xf32> to vector<8x512xf32>
    %cst_188 = arith.constant dense<0.000000e+00> : vector<8x512xf32>
    %267 = tpu.matmul %265, %266, %cst_188 {dimension_numbers = #tpu.dot_dimension_numbers<[1], [0], [0], [1], [0, 0, 1, 1], [], []>} : vector<8x8xf32>, vector<8x512xf32>, vector<8x512xf32> -> vector<8x512xf32>
    %c1_189 = arith.constant 1 : index
    %c0_190 = arith.constant 0 : index
    %c0_191 = arith.constant 0 : index
    %268 = vector.load %arg1[%c1_189, %c0_190, %c0_191] : memref<25x8x8xf32, #tpu.memory_space<vmem>>, vector<1x8x8xf32>
    %269 = vector.shape_cast %268 : vector<1x8x8xf32> to vector<8x8xf32>
    %270 = vector.extract_strided_slice %263 {offsets = [0, 1], sizes = [8, 512], strides = [1, 1]} : vector<8x640xf32> to vector<8x512xf32>
    %cst_192 = arith.constant dense<0.000000e+00> : vector<8x512xf32>
    %271 = tpu.matmul %269, %270, %cst_192 {dimension_numbers = #tpu.dot_dimension_numbers<[1], [0], [0], [1], [0, 0, 1, 1], [], []>} : vector<8x8xf32>, vector<8x512xf32>, vector<8x512xf32> -> vector<8x512xf32>
    %272 = arith.addf %267, %271 : vector<8x512xf32>
    %c2_193 = arith.constant 2 : index
    %c0_194 = arith.constant 0 : index
    %c0_195 = arith.constant 0 : index
    %273 = vector.load %arg1[%c2_193, %c0_194, %c0_195] : memref<25x8x8xf32, #tpu.memory_space<vmem>>, vector<1x8x8xf32>
    %274 = vector.shape_cast %273 : vector<1x8x8xf32> to vector<8x8xf32>
    %275 = vector.extract_strided_slice %263 {offsets = [0, 2], sizes = [8, 512], strides = [1, 1]} : vector<8x640xf32> to vector<8x512xf32>
    %cst_196 = arith.constant dense<0.000000e+00> : vector<8x512xf32>
    %276 = tpu.matmul %274, %275, %cst_196 {dimension_numbers = #tpu.dot_dimension_numbers<[1], [0], [0], [1], [0, 0, 1, 1], [], []>} : vector<8x8xf32>, vector<8x512xf32>, vector<8x512xf32> -> vector<8x512xf32>
    %277 = arith.addf %272, %276 : vector<8x512xf32>
    %c3_197 = arith.constant 3 : index
    %c0_198 = arith.constant 0 : index
    %c0_199 = arith.constant 0 : index
    %278 = vector.load %arg1[%c3_197, %c0_198, %c0_199] : memref<25x8x8xf32, #tpu.memory_space<vmem>>, vector<1x8x8xf32>
    %279 = vector.shape_cast %278 : vector<1x8x8xf32> to vector<8x8xf32>
    %280 = vector.extract_strided_slice %263 {offsets = [0, 3], sizes = [8, 512], strides = [1, 1]} : vector<8x640xf32> to vector<8x512xf32>
    %cst_200 = arith.constant dense<0.000000e+00> : vector<8x512xf32>
    %281 = tpu.matmul %279, %280, %cst_200 {dimension_numbers = #tpu.dot_dimension_numbers<[1], [0], [0], [1], [0, 0, 1, 1], [], []>} : vector<8x8xf32>, vector<8x512xf32>, vector<8x512xf32> -> vector<8x512xf32>
    %282 = arith.addf %277, %281 : vector<8x512xf32>
    %c4_201 = arith.constant 4 : index
    %c0_202 = arith.constant 0 : index
    %c0_203 = arith.constant 0 : index
    %283 = vector.load %arg1[%c4_201, %c0_202, %c0_203] : memref<25x8x8xf32, #tpu.memory_space<vmem>>, vector<1x8x8xf32>
    %284 = vector.shape_cast %283 : vector<1x8x8xf32> to vector<8x8xf32>
    %285 = vector.extract_strided_slice %263 {offsets = [0, 4], sizes = [8, 512], strides = [1, 1]} : vector<8x640xf32> to vector<8x512xf32>
    %cst_204 = arith.constant dense<0.000000e+00> : vector<8x512xf32>
    %286 = tpu.matmul %284, %285, %cst_204 {dimension_numbers = #tpu.dot_dimension_numbers<[1], [0], [0], [1], [0, 0, 1, 1], [], []>} : vector<8x8xf32>, vector<8x512xf32>, vector<8x512xf32> -> vector<8x512xf32>
    %287 = arith.addf %282, %286 : vector<8x512xf32>
    %c5_205 = arith.constant 5 : index
    %c0_206 = arith.constant 0 : index
    %c0_207 = arith.constant 0 : index
    %288 = vector.load %arg1[%c5_205, %c0_206, %c0_207] : memref<25x8x8xf32, #tpu.memory_space<vmem>>, vector<1x8x8xf32>
    %289 = vector.shape_cast %288 : vector<1x8x8xf32> to vector<8x8xf32>
    %290 = vector.extract_strided_slice %263 {offsets = [0, 16], sizes = [8, 512], strides = [1, 1]} : vector<8x640xf32> to vector<8x512xf32>
    %cst_208 = arith.constant dense<0.000000e+00> : vector<8x512xf32>
    %291 = tpu.matmul %289, %290, %cst_208 {dimension_numbers = #tpu.dot_dimension_numbers<[1], [0], [0], [1], [0, 0, 1, 1], [], []>} : vector<8x8xf32>, vector<8x512xf32>, vector<8x512xf32> -> vector<8x512xf32>
    %292 = arith.addf %287, %291 : vector<8x512xf32>
    %c6_209 = arith.constant 6 : index
    %c0_210 = arith.constant 0 : index
    %c0_211 = arith.constant 0 : index
    %293 = vector.load %arg1[%c6_209, %c0_210, %c0_211] : memref<25x8x8xf32, #tpu.memory_space<vmem>>, vector<1x8x8xf32>
    %294 = vector.shape_cast %293 : vector<1x8x8xf32> to vector<8x8xf32>
    %295 = vector.extract_strided_slice %263 {offsets = [0, 17], sizes = [8, 512], strides = [1, 1]} : vector<8x640xf32> to vector<8x512xf32>
    %cst_212 = arith.constant dense<0.000000e+00> : vector<8x512xf32>
    %296 = tpu.matmul %294, %295, %cst_212 {dimension_numbers = #tpu.dot_dimension_numbers<[1], [0], [0], [1], [0, 0, 1, 1], [], []>} : vector<8x8xf32>, vector<8x512xf32>, vector<8x512xf32> -> vector<8x512xf32>
    %297 = arith.addf %292, %296 : vector<8x512xf32>
    %c7_213 = arith.constant 7 : index
    %c0_214 = arith.constant 0 : index
    %c0_215 = arith.constant 0 : index
    %298 = vector.load %arg1[%c7_213, %c0_214, %c0_215] : memref<25x8x8xf32, #tpu.memory_space<vmem>>, vector<1x8x8xf32>
    %299 = vector.shape_cast %298 : vector<1x8x8xf32> to vector<8x8xf32>
    %300 = vector.extract_strided_slice %263 {offsets = [0, 18], sizes = [8, 512], strides = [1, 1]} : vector<8x640xf32> to vector<8x512xf32>
    %cst_216 = arith.constant dense<0.000000e+00> : vector<8x512xf32>
    %301 = tpu.matmul %299, %300, %cst_216 {dimension_numbers = #tpu.dot_dimension_numbers<[1], [0], [0], [1], [0, 0, 1, 1], [], []>} : vector<8x8xf32>, vector<8x512xf32>, vector<8x512xf32> -> vector<8x512xf32>
    %302 = arith.addf %297, %301 : vector<8x512xf32>
    %c8_217 = arith.constant 8 : index
    %c0_218 = arith.constant 0 : index
    %c0_219 = arith.constant 0 : index
    %303 = vector.load %arg1[%c8_217, %c0_218, %c0_219] : memref<25x8x8xf32, #tpu.memory_space<vmem>>, vector<1x8x8xf32>
    %304 = vector.shape_cast %303 : vector<1x8x8xf32> to vector<8x8xf32>
    %305 = vector.extract_strided_slice %263 {offsets = [0, 19], sizes = [8, 512], strides = [1, 1]} : vector<8x640xf32> to vector<8x512xf32>
    %cst_220 = arith.constant dense<0.000000e+00> : vector<8x512xf32>
    %306 = tpu.matmul %304, %305, %cst_220 {dimension_numbers = #tpu.dot_dimension_numbers<[1], [0], [0], [1], [0, 0, 1, 1], [], []>} : vector<8x8xf32>, vector<8x512xf32>, vector<8x512xf32> -> vector<8x512xf32>
    %307 = arith.addf %302, %306 : vector<8x512xf32>
    %c9_221 = arith.constant 9 : index
    %c0_222 = arith.constant 0 : index
    %c0_223 = arith.constant 0 : index
    %308 = vector.load %arg1[%c9_221, %c0_222, %c0_223] : memref<25x8x8xf32, #tpu.memory_space<vmem>>, vector<1x8x8xf32>
    %309 = vector.shape_cast %308 : vector<1x8x8xf32> to vector<8x8xf32>
    %310 = vector.extract_strided_slice %263 {offsets = [0, 20], sizes = [8, 512], strides = [1, 1]} : vector<8x640xf32> to vector<8x512xf32>
    %cst_224 = arith.constant dense<0.000000e+00> : vector<8x512xf32>
    %311 = tpu.matmul %309, %310, %cst_224 {dimension_numbers = #tpu.dot_dimension_numbers<[1], [0], [0], [1], [0, 0, 1, 1], [], []>} : vector<8x8xf32>, vector<8x512xf32>, vector<8x512xf32> -> vector<8x512xf32>
    %312 = arith.addf %307, %311 : vector<8x512xf32>
    %c10_225 = arith.constant 10 : index
    %c0_226 = arith.constant 0 : index
    %c0_227 = arith.constant 0 : index
    %313 = vector.load %arg1[%c10_225, %c0_226, %c0_227] : memref<25x8x8xf32, #tpu.memory_space<vmem>>, vector<1x8x8xf32>
    %314 = vector.shape_cast %313 : vector<1x8x8xf32> to vector<8x8xf32>
    %315 = vector.extract_strided_slice %263 {offsets = [0, 32], sizes = [8, 512], strides = [1, 1]} : vector<8x640xf32> to vector<8x512xf32>
    %cst_228 = arith.constant dense<0.000000e+00> : vector<8x512xf32>
    %316 = tpu.matmul %314, %315, %cst_228 {dimension_numbers = #tpu.dot_dimension_numbers<[1], [0], [0], [1], [0, 0, 1, 1], [], []>} : vector<8x8xf32>, vector<8x512xf32>, vector<8x512xf32> -> vector<8x512xf32>
    %317 = arith.addf %312, %316 : vector<8x512xf32>
    %c11_229 = arith.constant 11 : index
    %c0_230 = arith.constant 0 : index
    %c0_231 = arith.constant 0 : index
    %318 = vector.load %arg1[%c11_229, %c0_230, %c0_231] : memref<25x8x8xf32, #tpu.memory_space<vmem>>, vector<1x8x8xf32>
    %319 = vector.shape_cast %318 : vector<1x8x8xf32> to vector<8x8xf32>
    %320 = vector.extract_strided_slice %263 {offsets = [0, 33], sizes = [8, 512], strides = [1, 1]} : vector<8x640xf32> to vector<8x512xf32>
    %cst_232 = arith.constant dense<0.000000e+00> : vector<8x512xf32>
    %321 = tpu.matmul %319, %320, %cst_232 {dimension_numbers = #tpu.dot_dimension_numbers<[1], [0], [0], [1], [0, 0, 1, 1], [], []>} : vector<8x8xf32>, vector<8x512xf32>, vector<8x512xf32> -> vector<8x512xf32>
    %322 = arith.addf %317, %321 : vector<8x512xf32>
    %c12_233 = arith.constant 12 : index
    %c0_234 = arith.constant 0 : index
    %c0_235 = arith.constant 0 : index
    %323 = vector.load %arg1[%c12_233, %c0_234, %c0_235] : memref<25x8x8xf32, #tpu.memory_space<vmem>>, vector<1x8x8xf32>
    %324 = vector.shape_cast %323 : vector<1x8x8xf32> to vector<8x8xf32>
    %325 = vector.extract_strided_slice %263 {offsets = [0, 34], sizes = [8, 512], strides = [1, 1]} : vector<8x640xf32> to vector<8x512xf32>
    %cst_236 = arith.constant dense<0.000000e+00> : vector<8x512xf32>
    %326 = tpu.matmul %324, %325, %cst_236 {dimension_numbers = #tpu.dot_dimension_numbers<[1], [0], [0], [1], [0, 0, 1, 1], [], []>} : vector<8x8xf32>, vector<8x512xf32>, vector<8x512xf32> -> vector<8x512xf32>
    %327 = arith.addf %322, %326 : vector<8x512xf32>
    %c13_237 = arith.constant 13 : index
    %c0_238 = arith.constant 0 : index
    %c0_239 = arith.constant 0 : index
    %328 = vector.load %arg1[%c13_237, %c0_238, %c0_239] : memref<25x8x8xf32, #tpu.memory_space<vmem>>, vector<1x8x8xf32>
    %329 = vector.shape_cast %328 : vector<1x8x8xf32> to vector<8x8xf32>
    %330 = vector.extract_strided_slice %263 {offsets = [0, 35], sizes = [8, 512], strides = [1, 1]} : vector<8x640xf32> to vector<8x512xf32>
    %cst_240 = arith.constant dense<0.000000e+00> : vector<8x512xf32>
    %331 = tpu.matmul %329, %330, %cst_240 {dimension_numbers = #tpu.dot_dimension_numbers<[1], [0], [0], [1], [0, 0, 1, 1], [], []>} : vector<8x8xf32>, vector<8x512xf32>, vector<8x512xf32> -> vector<8x512xf32>
    %332 = arith.addf %327, %331 : vector<8x512xf32>
    %c14_241 = arith.constant 14 : index
    %c0_242 = arith.constant 0 : index
    %c0_243 = arith.constant 0 : index
    %333 = vector.load %arg1[%c14_241, %c0_242, %c0_243] : memref<25x8x8xf32, #tpu.memory_space<vmem>>, vector<1x8x8xf32>
    %334 = vector.shape_cast %333 : vector<1x8x8xf32> to vector<8x8xf32>
    %335 = vector.extract_strided_slice %263 {offsets = [0, 36], sizes = [8, 512], strides = [1, 1]} : vector<8x640xf32> to vector<8x512xf32>
    %cst_244 = arith.constant dense<0.000000e+00> : vector<8x512xf32>
    %336 = tpu.matmul %334, %335, %cst_244 {dimension_numbers = #tpu.dot_dimension_numbers<[1], [0], [0], [1], [0, 0, 1, 1], [], []>} : vector<8x8xf32>, vector<8x512xf32>, vector<8x512xf32> -> vector<8x512xf32>
    %337 = arith.addf %332, %336 : vector<8x512xf32>
    %c15_245 = arith.constant 15 : index
    %c0_246 = arith.constant 0 : index
    %c0_247 = arith.constant 0 : index
    %338 = vector.load %arg1[%c15_245, %c0_246, %c0_247] : memref<25x8x8xf32, #tpu.memory_space<vmem>>, vector<1x8x8xf32>
    %339 = vector.shape_cast %338 : vector<1x8x8xf32> to vector<8x8xf32>
    %340 = vector.extract_strided_slice %263 {offsets = [0, 48], sizes = [8, 512], strides = [1, 1]} : vector<8x640xf32> to vector<8x512xf32>
    %cst_248 = arith.constant dense<0.000000e+00> : vector<8x512xf32>
    %341 = tpu.matmul %339, %340, %cst_248 {dimension_numbers = #tpu.dot_dimension_numbers<[1], [0], [0], [1], [0, 0, 1, 1], [], []>} : vector<8x8xf32>, vector<8x512xf32>, vector<8x512xf32> -> vector<8x512xf32>
    %342 = arith.addf %337, %341 : vector<8x512xf32>
    %c16_249 = arith.constant 16 : index
    %c0_250 = arith.constant 0 : index
    %c0_251 = arith.constant 0 : index
    %343 = vector.load %arg1[%c16_249, %c0_250, %c0_251] : memref<25x8x8xf32, #tpu.memory_space<vmem>>, vector<1x8x8xf32>
    %344 = vector.shape_cast %343 : vector<1x8x8xf32> to vector<8x8xf32>
    %345 = vector.extract_strided_slice %263 {offsets = [0, 49], sizes = [8, 512], strides = [1, 1]} : vector<8x640xf32> to vector<8x512xf32>
    %cst_252 = arith.constant dense<0.000000e+00> : vector<8x512xf32>
    %346 = tpu.matmul %344, %345, %cst_252 {dimension_numbers = #tpu.dot_dimension_numbers<[1], [0], [0], [1], [0, 0, 1, 1], [], []>} : vector<8x8xf32>, vector<8x512xf32>, vector<8x512xf32> -> vector<8x512xf32>
    %347 = arith.addf %342, %346 : vector<8x512xf32>
    %c17_253 = arith.constant 17 : index
    %c0_254 = arith.constant 0 : index
    %c0_255 = arith.constant 0 : index
    %348 = vector.load %arg1[%c17_253, %c0_254, %c0_255] : memref<25x8x8xf32, #tpu.memory_space<vmem>>, vector<1x8x8xf32>
    %349 = vector.shape_cast %348 : vector<1x8x8xf32> to vector<8x8xf32>
    %350 = vector.extract_strided_slice %263 {offsets = [0, 50], sizes = [8, 512], strides = [1, 1]} : vector<8x640xf32> to vector<8x512xf32>
    %cst_256 = arith.constant dense<0.000000e+00> : vector<8x512xf32>
    %351 = tpu.matmul %349, %350, %cst_256 {dimension_numbers = #tpu.dot_dimension_numbers<[1], [0], [0], [1], [0, 0, 1, 1], [], []>} : vector<8x8xf32>, vector<8x512xf32>, vector<8x512xf32> -> vector<8x512xf32>
    %352 = arith.addf %347, %351 : vector<8x512xf32>
    %c18_257 = arith.constant 18 : index
    %c0_258 = arith.constant 0 : index
    %c0_259 = arith.constant 0 : index
    %353 = vector.load %arg1[%c18_257, %c0_258, %c0_259] : memref<25x8x8xf32, #tpu.memory_space<vmem>>, vector<1x8x8xf32>
    %354 = vector.shape_cast %353 : vector<1x8x8xf32> to vector<8x8xf32>
    %355 = vector.extract_strided_slice %263 {offsets = [0, 51], sizes = [8, 512], strides = [1, 1]} : vector<8x640xf32> to vector<8x512xf32>
    %cst_260 = arith.constant dense<0.000000e+00> : vector<8x512xf32>
    %356 = tpu.matmul %354, %355, %cst_260 {dimension_numbers = #tpu.dot_dimension_numbers<[1], [0], [0], [1], [0, 0, 1, 1], [], []>} : vector<8x8xf32>, vector<8x512xf32>, vector<8x512xf32> -> vector<8x512xf32>
    %357 = arith.addf %352, %356 : vector<8x512xf32>
    %c19_261 = arith.constant 19 : index
    %c0_262 = arith.constant 0 : index
    %c0_263 = arith.constant 0 : index
    %358 = vector.load %arg1[%c19_261, %c0_262, %c0_263] : memref<25x8x8xf32, #tpu.memory_space<vmem>>, vector<1x8x8xf32>
    %359 = vector.shape_cast %358 : vector<1x8x8xf32> to vector<8x8xf32>
    %360 = vector.extract_strided_slice %263 {offsets = [0, 52], sizes = [8, 512], strides = [1, 1]} : vector<8x640xf32> to vector<8x512xf32>
    %cst_264 = arith.constant dense<0.000000e+00> : vector<8x512xf32>
    %361 = tpu.matmul %359, %360, %cst_264 {dimension_numbers = #tpu.dot_dimension_numbers<[1], [0], [0], [1], [0, 0, 1, 1], [], []>} : vector<8x8xf32>, vector<8x512xf32>, vector<8x512xf32> -> vector<8x512xf32>
    %362 = arith.addf %357, %361 : vector<8x512xf32>
    %c20_265 = arith.constant 20 : index
    %c0_266 = arith.constant 0 : index
    %c0_267 = arith.constant 0 : index
    %363 = vector.load %arg1[%c20_265, %c0_266, %c0_267] : memref<25x8x8xf32, #tpu.memory_space<vmem>>, vector<1x8x8xf32>
    %364 = vector.shape_cast %363 : vector<1x8x8xf32> to vector<8x8xf32>
    %365 = vector.extract_strided_slice %263 {offsets = [0, 64], sizes = [8, 512], strides = [1, 1]} : vector<8x640xf32> to vector<8x512xf32>
    %cst_268 = arith.constant dense<0.000000e+00> : vector<8x512xf32>
    %366 = tpu.matmul %364, %365, %cst_268 {dimension_numbers = #tpu.dot_dimension_numbers<[1], [0], [0], [1], [0, 0, 1, 1], [], []>} : vector<8x8xf32>, vector<8x512xf32>, vector<8x512xf32> -> vector<8x512xf32>
    %367 = arith.addf %362, %366 : vector<8x512xf32>
    %c21_269 = arith.constant 21 : index
    %c0_270 = arith.constant 0 : index
    %c0_271 = arith.constant 0 : index
    %368 = vector.load %arg1[%c21_269, %c0_270, %c0_271] : memref<25x8x8xf32, #tpu.memory_space<vmem>>, vector<1x8x8xf32>
    %369 = vector.shape_cast %368 : vector<1x8x8xf32> to vector<8x8xf32>
    %370 = vector.extract_strided_slice %263 {offsets = [0, 65], sizes = [8, 512], strides = [1, 1]} : vector<8x640xf32> to vector<8x512xf32>
    %cst_272 = arith.constant dense<0.000000e+00> : vector<8x512xf32>
    %371 = tpu.matmul %369, %370, %cst_272 {dimension_numbers = #tpu.dot_dimension_numbers<[1], [0], [0], [1], [0, 0, 1, 1], [], []>} : vector<8x8xf32>, vector<8x512xf32>, vector<8x512xf32> -> vector<8x512xf32>
    %372 = arith.addf %367, %371 : vector<8x512xf32>
    %c22_273 = arith.constant 22 : index
    %c0_274 = arith.constant 0 : index
    %c0_275 = arith.constant 0 : index
    %373 = vector.load %arg1[%c22_273, %c0_274, %c0_275] : memref<25x8x8xf32, #tpu.memory_space<vmem>>, vector<1x8x8xf32>
    %374 = vector.shape_cast %373 : vector<1x8x8xf32> to vector<8x8xf32>
    %375 = vector.extract_strided_slice %263 {offsets = [0, 66], sizes = [8, 512], strides = [1, 1]} : vector<8x640xf32> to vector<8x512xf32>
    %cst_276 = arith.constant dense<0.000000e+00> : vector<8x512xf32>
    %376 = tpu.matmul %374, %375, %cst_276 {dimension_numbers = #tpu.dot_dimension_numbers<[1], [0], [0], [1], [0, 0, 1, 1], [], []>} : vector<8x8xf32>, vector<8x512xf32>, vector<8x512xf32> -> vector<8x512xf32>
    %377 = arith.addf %372, %376 : vector<8x512xf32>
    %c23_277 = arith.constant 23 : index
    %c0_278 = arith.constant 0 : index
    %c0_279 = arith.constant 0 : index
    %378 = vector.load %arg1[%c23_277, %c0_278, %c0_279] : memref<25x8x8xf32, #tpu.memory_space<vmem>>, vector<1x8x8xf32>
    %379 = vector.shape_cast %378 : vector<1x8x8xf32> to vector<8x8xf32>
    %380 = vector.extract_strided_slice %263 {offsets = [0, 67], sizes = [8, 512], strides = [1, 1]} : vector<8x640xf32> to vector<8x512xf32>
    %cst_280 = arith.constant dense<0.000000e+00> : vector<8x512xf32>
    %381 = tpu.matmul %379, %380, %cst_280 {dimension_numbers = #tpu.dot_dimension_numbers<[1], [0], [0], [1], [0, 0, 1, 1], [], []>} : vector<8x8xf32>, vector<8x512xf32>, vector<8x512xf32> -> vector<8x512xf32>
    %382 = arith.addf %377, %381 : vector<8x512xf32>
    %c24_281 = arith.constant 24 : index
    %c0_282 = arith.constant 0 : index
    %c0_283 = arith.constant 0 : index
    %383 = vector.load %arg1[%c24_281, %c0_282, %c0_283] : memref<25x8x8xf32, #tpu.memory_space<vmem>>, vector<1x8x8xf32>
    %384 = vector.shape_cast %383 : vector<1x8x8xf32> to vector<8x8xf32>
    %385 = vector.extract_strided_slice %263 {offsets = [0, 68], sizes = [8, 512], strides = [1, 1]} : vector<8x640xf32> to vector<8x512xf32>
    %cst_284 = arith.constant dense<0.000000e+00> : vector<8x512xf32>
    %386 = tpu.matmul %384, %385, %cst_284 {dimension_numbers = #tpu.dot_dimension_numbers<[1], [0], [0], [1], [0, 0, 1, 1], [], []>} : vector<8x8xf32>, vector<8x512xf32>, vector<8x512xf32> -> vector<8x512xf32>
    %387 = arith.addf %382, %386 : vector<8x512xf32>
    %c2_285 = arith.constant 2 : index
    %c0_286 = arith.constant 0 : index
    %c0_287 = arith.constant 0 : index
    %388 = vector.load %arg2[%c2_285, %c0_286, %c0_287] : memref<3x8x1xf32, #tpu.memory_space<vmem>>, vector<1x8x1xf32>
    %389 = vector.shape_cast %388 : vector<1x8x1xf32> to vector<8x1xf32>
    %390 = vector.broadcast %389 : vector<8x1xf32> to vector<8x512xf32>
    %391 = arith.addf %387, %390 : vector<8x512xf32>
    %cst_288 = arith.constant 0.000000e+00 : f32
    %392 = vector.broadcast %cst_288 : f32 to vector<8x512xf32>
    %393 = arith.maximumf %391, %392 : vector<8x512xf32>
    %c0_289 = arith.constant 0 : index
    %c0_290 = arith.constant 0 : index
    %394 = vector.load %arg3[%c0_289, %c0_290] : memref<8x512xf32, #tpu.memory_space<vmem>>, vector<8x512xf32>
    tpu.vector_store %arg3[%c0_289, %c0_290], %393 {strides = array<i32>} : memref<8x512xf32, #tpu.memory_space<vmem>>, vector<8x512xf32>,
    return
  }
}

</mosaic_0001>

<llo_original>
// kernel: model_forward.1
$region0: #{model_forward.1}
  #allocation0 [shape = 'u32[]', space=smem, size = 0x4, offset = 0x4, fixed_abs, tag = 'smem constant byte address 0x4 - core index']
  #allocation1 [shape = 'u32[144,128]{1,0:T(1,128)}', space=vmem, size = 0x12000, scoped, tag = 'internal scratch']
  %s0 = inlined_call_operand.vmem [shape: f32[8,640], index: 0, kind: input, shape index: {}]
  %s1 = inlined_call_operand.vmem [shape: f32[25,8,8], index: 1, kind: input, shape index: {}]
  %s2 = inlined_call_operand.vmem [shape: f32[3,8,1], index: 2, kind: input, shape index: {}]
  %s3 = inlined_call_operand.vmem [shape: f32[8,512], index: 3, kind: output, shape index: {}]
  %s4 = sld [smem:[#allocation0]]
  $region22: #{model_forward.1} parent=0
    _
  %s6 = ssub.s32 1, %s4
  %s7 = scalar_select 0, %s6, %s4
  // Predicated region
  $region2: #{model_forward.1} parent=0 // pred_check
    _
  $region3: #{model_forward.1} parent=0 // pred_check_branch
    %9 = sbr.rel (0) target = $region5
  $region4: #{model_forward.1} parent=0 // pred_region
    _
  $region5: #{model_forward.1} parent=0 // pred_fallthru
    _
  // Predicated region
  $region6: #{model_forward.1} parent=0 // pred_check
    _
  $region7: #{model_forward.1} parent=0 // pred_check_branch
    %11 = sbr.rel (0) target = $region9
  $region8: #{model_forward.1} parent=0 // pred_region
    _
  $region9: #{model_forward.1} parent=0 // pred_fallthru
    _
  // Predicated region
  $region10: #{model_forward.1} parent=0 // pred_check
    _
  $region11: #{model_forward.1} parent=0 // pred_check_branch
    %13 = sbr.rel (0) target = $region13
  $region12: #{model_forward.1} parent=0 // pred_region
    _
  $region13: #{model_forward.1} parent=0 // pred_fallthru
    _
  %v14 = vld [vmem:[%s0] sm:$0xff]
  %v15 = vld [vmem:[%s0 + $0x8] sm:$0xff]
  %v16 = vld [vmem:[%s0 + $0x10] sm:$0xff]
  %v17 = vld [vmem:[%s0 + $0x18] sm:$0xff]
  %v18 = vld [vmem:[%s0 + $0x20] sm:$0xff]
  %v19 = vld [vmem:[%s1] sm:$0xff]
  %s20 = scalar_lea.vmem %s1, 8
  %v21 = vld [vmem:[%s20] sm:$0xff]
  %27 = vrot.lane.b32.xlu0 %v14, 127
  %v28 = vpop.permute.xlu0 %27
  %29 = vrot.lane.b32.xlu0 %v15, 127
  %v30 = vpop.permute.xlu0 %29
  %31 = vrot.lane.b32.xlu0 %v16, 127
  %v32 = vpop.permute.xlu0 %31
  %33 = vrot.lane.b32.xlu0 %v17, 127
  %v34 = vpop.permute.xlu0 %33
  %35 = vrot.lane.b32.xlu0 %v18, 127
  %v36 = vpop.permute.xlu0 %35
  %vm37 = vcmask 1039360
  %v38 = vsel %vm37, %v28, %v30
  %v39 = vsel %vm37, %v30, %v32
  %v40 = vsel %vm37, %v32, %v34
  %v41 = vsel %vm37, %v34, %v36
  %vm46 = vcmask 64512
  %v48 = vsel %vm46, %v21, 0
  %50 = vmatprep.subr.mxu0 %v39
  %51 = vmatpush1.msra.mxu0 %v38
  %52 = vmatprep.subr.mxu0 0.0
  %53 = vmatpush1.msra.mxu0 0.0
  %54 = vmatprep.subr.mxu0 0.0
  %55 = vmatpush1.msra.mxu0 0.0
  %56 = vmatprep.subr.mxu0 0.0
  %57 = vmatpush1.msra.mxu0 0.0
  %58 = vmatprep.subr.mxu0 0.0
  %59 = vmatpush1.msra.mxu0 0.0
  %60 = vmatprep.subr.mxu0 0.0
  %61 = vmatpush1.msra.mxu0 0.0
  %62 = vmatprep.subr.mxu0 0.0
  %63 = vmatpush1.msra.mxu0 0.0
  %64 = vmatprep.subr.mxu0 0.0
  %65 = vmatpush1.msra.mxu0 0.0
  %66 = vmatprep.subr.mxu0 0.0
  %67 = vmatpush1.msra.mxu0 0.0
  %68 = vmatprep.subr.mxu0 0.0
  %69 = vmatpush1.msra.mxu0 0.0
  %70 = vmatprep.subr.mxu0 0.0
  %71 = vmatpush1.msra.mxu0 0.0
  %72 = vmatprep.subr.mxu0 0.0
  %73 = vmatpush1.msra.mxu0 0.0
  %74 = vmatprep.subr.mxu0 0.0
  %75 = vmatpush1.msra.mxu0 0.0
  %76 = vmatprep.subr.mxu0 0.0
  %77 = vmatpush1.msra.mxu0 0.0
  %78 = vmatprep.subr.mxu0 0.0
  %79 = vmatpush1.msra.mxu0 0.0
  %80 = vmatprep.subr.mxu0 0.0
  %81 = vmatpush1.msra.mxu0 0.0
  %82 = vmatprep.subr.mxu0 0.0
  %83 = vmatpush1.msra.mxu0 0.0
  %84 = vmatprep.subr.mxu0 0.0
  %85 = vmatpush1.msra.mxu0 0.0
  %86 = vmatprep.subr.mxu0 0.0
  %87 = vmatpush1.msra.mxu0 0.0
  %88 = vmatprep.subr.mxu0 0.0
  %89 = vmatpush1.msra.mxu0 0.0
  %90 = vmatprep.subr.mxu0 0.0
  %91 = vmatpush1.msra.mxu0 0.0
  %92 = vmatprep.subr.mxu0 0.0
  %93 = vmatpush1.msra.mxu0 0.0
  %94 = vmatprep.subr.mxu0 0.0
  %95 = vmatpush1.msra.mxu0 0.0
  %96 = vmatprep.subr.mxu0 0.0
  %97 = vmatpush1.msra.mxu0 0.0
  %98 = vmatprep.subr.mxu0 0.0
  %99 = vmatpush1.msra.mxu0 0.0
  %100 = vmatprep.subr.mxu0 0.0
  %101 = vmatpush1.msra.mxu0 0.0
  %102 = vmatprep.subr.mxu0 0.0
  %103 = vmatpush1.msra.mxu0 0.0
  %104 = vmatprep.subr.mxu0 0.0
  %105 = vmatpush1.msra.mxu0 0.0
  %106 = vmatprep.subr.mxu0 0.0
  %107 = vmatpush1.msra.mxu0 0.0
  %108 = vmatprep.subr.mxu0 0.0
  %109 = vmatpush1.msra.mxu0 0.0
  %110 = vmatprep.subr.mxu0 0.0
  %111 = vmatpush1.msra.mxu0 0.0
  %112 = vmatprep.subr.mxu0 0.0
  %113 = vmatpush1.msra.mxu0 0.0
  %114 = vmatprep.mubr.f32.mxu0 0.0
  %115 = vmatmul.mubr.f32.gmra.mrb[0].mxu0 %v48
  %v116 = vpop.f32.mrb[0].mxu0
  %v117 = vadd.f32 0.0, %v116
  %v118 = vpop.f32.mrb[0].mxu0
  %v119 = vadd.f32 0.0, %v118
  %120 = vdwg.mxu0
  %121 = vmatprep.subr.mxu0 %v41
  %122 = vmatpush1.msra.mxu0 %v40
  %123 = vmatprep.subr.mxu0 0.0
  %124 = vmatpush1.msra.mxu0 0.0
  %125 = vmatprep.subr.mxu0 0.0
  %126 = vmatpush1.msra.mxu0 0.0
  %127 = vmatprep.subr.mxu0 0.0
  %128 = vmatpush1.msra.mxu0 0.0
  %129 = vmatprep.subr.mxu0 0.0
  %130 = vmatpush1.msra.mxu0 0.0
  %131 = vmatprep.subr.mxu0 0.0
  %132 = vmatpush1.msra.mxu0 0.0
  %133 = vmatprep.subr.mxu0 0.0
  %134 = vmatpush1.msra.mxu0 0.0
  %135 = vmatprep.subr.mxu0 0.0
  %136 = vmatpush1.msra.mxu0 0.0
  %137 = vmatprep.subr.mxu0 0.0
  %138 = vmatpush1.msra.mxu0 0.0
  %139 = vmatprep.subr.mxu0 0.0
  %140 = vmatpush1.msra.mxu0 0.0
  %141 = vmatprep.subr.mxu0 0.0
  %142 = vmatpush1.msra.mxu0 0.0
  %143 = vmatprep.subr.mxu0 0.0
  %144 = vmatpush1.msra.mxu0 0.0
  %145 = vmatprep.subr.mxu0 0.0
  %146 = vmatpush1.msra.mxu0 0.0
  %147 = vmatprep.subr.mxu0 0.0
  %148 = vmatpush1.msra.mxu0 0.0
  %149 = vmatprep.subr.mxu0 0.0
  %150 = vmatpush1.msra.mxu0 0.0
  %151 = vmatprep.subr.mxu0 0.0
  %152 = vmatpush1.msra.mxu0 0.0
  %153 = vmatprep.subr.mxu0 0.0
  %154 = vmatpush1.msra.mxu0 0.0
  %155 = vmatprep.subr.mxu0 0.0
  %156 = vmatpush1.msra.mxu0 0.0
  %157 = vmatprep.subr.mxu0 0.0
  %158 = vmatpush1.msra.mxu0 0.0
  %159 = vmatprep.subr.mxu0 0.0
  %160 = vmatpush1.msra.mxu0 0.0
  %161 = vmatprep.subr.mxu0 0.0
  %162 = vmatpush1.msra.mxu0 0.0
  %163 = vmatprep.subr.mxu0 0.0
  %164 = vmatpush1.msra.mxu0 0.0
  %165 = vmatprep.subr.mxu0 0.0
  %166 = vmatpush1.msra.mxu0 0.0
  %167 = vmatprep.subr.mxu0 0.0
  %168 = vmatpush1.msra.mxu0 0.0
  %169 = vmatprep.subr.mxu0 0.0
  %170 = vmatpush1.msra.mxu0 0.0
  %171 = vmatprep.subr.mxu0 0.0
  %172 = vmatpush1.msra.mxu0 0.0
  %173 = vmatprep.subr.mxu0 0.0
  %174 = vmatpush1.msra.mxu0 0.0
  %175 = vmatprep.subr.mxu0 0.0
  %176 = vmatpush1.msra.mxu0 0.0
  %177 = vmatprep.subr.mxu0 0.0
  %178 = vmatpush1.msra.mxu0 0.0
  %179 = vmatprep.subr.mxu0 0.0
  %180 = vmatpush1.msra.mxu0 0.0
  %181 = vmatprep.subr.mxu0 0.0
  %182 = vmatpush1.msra.mxu0 0.0
  %183 = vmatprep.subr.mxu0 0.0
  %184 = vmatpush1.msra.mxu0 0.0
  %185 = vmatprep.mubr.f32.mxu0 0.0
  %186 = vmatmul.mubr.f32.gmra.mrb[0].mxu0 %v48
  %v187 = vpop.f32.mrb[0].mxu0
  %v188 = vadd.f32 0.0, %v187
  %v189 = vpop.f32.mrb[0].mxu0
  %v190 = vadd.f32 0.0, %v189
  %191 = vdwg.mxu0
  %v193 = vsel %vm46, %v19, 0
  %195 = vmatprep.subr.mxu0 %v15
  %196 = vmatpush1.msra.mxu0 %v14
  %197 = vmatprep.subr.mxu0 0.0
  %198 = vmatpush1.msra.mxu0 0.0
  %199 = vmatprep.subr.mxu0 0.0
  %200 = vmatpush1.msra.mxu0 0.0
  %201 = vmatprep.subr.mxu0 0.0
  %202 = vmatpush1.msra.mxu0 0.0
  %203 = vmatprep.subr.mxu0 0.0
  %204 = vmatpush1.msra.mxu0 0.0
  %205 = vmatprep.subr.mxu0 0.0
  %206 = vmatpush1.msra.mxu0 0.0
  %207 = vmatprep.subr.mxu0 0.0
  %208 = vmatpush1.msra.mxu0 0.0
  %209 = vmatprep.subr.mxu0 0.0
  %210 = vmatpush1.msra.mxu0 0.0
  %211 = vmatprep.subr.mxu0 0.0
  %212 = vmatpush1.msra.mxu0 0.0
  %213 = vmatprep.subr.mxu0 0.0
  %214 = vmatpush1.msra.mxu0 0.0
  %215 = vmatprep.subr.mxu0 0.0
  %216 = vmatpush1.msra.mxu0 0.0
  %217 = vmatprep.subr.mxu0 0.0
  %218 = vmatpush1.msra.mxu0 0.0
  %219 = vmatprep.subr.mxu0 0.0
  %220 = vmatpush1.msra.mxu0 0.0
  %221 = vmatprep.subr.mxu0 0.0
  %222 = vmatpush1.msra.mxu0 0.0
  %223 = vmatprep.subr.mxu0 0.0
  %224 = vmatpush1.msra.mxu0 0.0
  %225 = vmatprep.subr.mxu0 0.0
  %226 = vmatpush1.msra.mxu0 0.0
  %227 = vmatprep.subr.mxu0 0.0
  %228 = vmatpush1.msra.mxu0 0.0
  %229 = vmatprep.subr.mxu0 0.0
  %230 = vmatpush1.msra.mxu0 0.0
  %231 = vmatprep.subr.mxu0 0.0
  %232 = vmatpush1.msra.mxu0 0.0
  %233 = vmatprep.subr.mxu0 0.0
  %234 = vmatpush1.msra.mxu0 0.0
  %235 = vmatprep.subr.mxu0 0.0
  %236 = vmatpush1.msra.mxu0 0.0
  %237 = vmatprep.subr.mxu0 0.0
  %238 = vmatpush1.msra.mxu0 0.0
  %239 = vmatprep.subr.mxu0 0.0
  %240 = vmatpush1.msra.mxu0 0.0
  %241 = vmatprep.subr.mxu0 0.0
  %242 = vmatpush1.msra.mxu0 0.0
  %243 = vmatprep.subr.mxu0 0.0
  %244 = vmatpush1.msra.mxu0 0.0
  %245 = vmatprep.subr.mxu0 0.0
  %246 = vmatpush1.msra.mxu0 0.0
  %247 = vmatprep.subr.mxu0 0.0
  %248 = vmatpush1.msra.mxu0 0.0
  %249 = vmatprep.subr.mxu0 0.0
  %250 = vmatpush1.msra.mxu0 0.0
  %251 = vmatprep.subr.mxu0 0.0
  %252 = vmatpush1.msra.mxu0 0.0
  %253 = vmatprep.subr.mxu0 0.0
  %254 = vmatpush1.msra.mxu0 0.0
  %255 = vmatprep.subr.mxu0 0.0
  %256 = vmatpush1.msra.mxu0 0.0
  %257 = vmatprep.subr.mxu0 0.0
  %258 = vmatpush1.msra.mxu0 0.0
  %259 = vmatprep.mubr.f32.mxu0 0.0
  %260 = vmatmul.mubr.f32.gmra.mrb[0].mxu0 %v193
  %v261 = vpop.f32.mrb[0].mxu0
  %v262 = vadd.f32 %v117, %v261
  %v263 = vpop.f32.mrb[0].mxu0
  %v264 = vadd.f32 %v119, %v263
  %265 = vdwg.mxu0
  %266 = vmatprep.subr.mxu0 %v17
  %267 = vmatpush1.msra.mxu0 %v16
  %268 = vmatprep.subr.mxu0 0.0
  %269 = vmatpush1.msra.mxu0 0.0
  %270 = vmatprep.subr.mxu0 0.0
  %271 = vmatpush1.msra.mxu0 0.0
  %272 = vmatprep.subr.mxu0 0.0
  %273 = vmatpush1.msra.mxu0 0.0
  %274 = vmatprep.subr.mxu0 0.0
  %275 = vmatpush1.msra.mxu0 0.0
  %276 = vmatprep.subr.mxu0 0.0
  %277 = vmatpush1.msra.mxu0 0.0
  %278 = vmatprep.subr.mxu0 0.0
  %279 = vmatpush1.msra.mxu0 0.0
  %280 = vmatprep.subr.mxu0 0.0
  %281 = vmatpush1.msra.mxu0 0.0
  %282 = vmatprep.subr.mxu0 0.0
  %283 = vmatpush1.msra.mxu0 0.0
  %284 = vmatprep.subr.mxu0 0.0
  %285 = vmatpush1.msra.mxu0 0.0
  %286 = vmatprep.subr.mxu0 0.0
  %287 = vmatpush1.msra.mxu0 0.0
  %288 = vmatprep.subr.mxu0 0.0
  %289 = vmatpush1.msra.mxu0 0.0
  %290 = vmatprep.subr.mxu0 0.0
  %291 = vmatpush1.msra.mxu0 0.0
  %292 = vmatprep.subr.mxu0 0.0
  %293 = vmatpush1.msra.mxu0 0.0
  %294 = vmatprep.subr.mxu0 0.0
  %295 = vmatpush1.msra.mxu0 0.0
  %296 = vmatprep.subr.mxu0 0.0
  %297 = vmatpush1.msra.mxu0 0.0
  %298 = vmatprep.subr.mxu0 0.0
  %299 = vmatpush1.msra.mxu0 0.0
  %300 = vmatprep.subr.mxu0 0.0
  %301 = vmatpush1.msra.mxu0 0.0
  %302 = vmatprep.subr.mxu0 0.0
  %303 = vmatpush1.msra.mxu0 0.0
  %304 = vmatprep.subr.mxu0 0.0
  %305 = vmatpush1.msra.mxu0 0.0
  %306 = vmatprep.subr.mxu0 0.0
  %307 = vmatpush1.msra.mxu0 0.0
  %308 = vmatprep.subr.mxu0 0.0
  %309 = vmatpush1.msra.mxu0 0.0
  %310 = vmatprep.subr.mxu0 0.0
  %311 = vmatpush1.msra.mxu0 0.0
  %312 = vmatprep.subr.mxu0 0.0
  %313 = vmatpush1.msra.mxu0 0.0
  %314 = vmatprep.subr.mxu0 0.0
  %315 = vmatpush1.msra.mxu0 0.0
  %316 = vmatprep.subr.mxu0 0.0
  %317 = vmatpush1.msra.mxu0 0.0
  %318 = vmatprep.subr.mxu0 0.0
  %319 = vmatpush1.msra.mxu0 0.0
  %320 = vmatprep.subr.mxu0 0.0
  %321 = vmatpush1.msra.mxu0 0.0
  %322 = vmatprep.subr.mxu0 0.0
  %323 = vmatpush1.msra.mxu0 0.0
  %324 = vmatprep.subr.mxu0 0.0
  %325 = vmatpush1.msra.mxu0 0.0
  %326 = vmatprep.subr.mxu0 0.0
  %327 = vmatpush1.msra.mxu0 0.0
  %328 = vmatprep.subr.mxu0 0.0
  %329 = vmatpush1.msra.mxu0 0.0
  %330 = vmatprep.mubr.f32.mxu0 0.0
  %331 = vmatmul.mubr.f32.gmra.mrb[0].mxu0 %v193
  %v332 = vpop.f32.mrb[0].mxu0
  %v333 = vadd.f32 %v188, %v332
  %v334 = vpop.f32.mrb[0].mxu0
  %v335 = vadd.f32 %v190, %v334
  %336 = vdwg.mxu0
  %s337 = scalar_lea.vmem %s1, 16
  %v338 = vld [vmem:[%s337] sm:$0xff]
  %339 = vrot.lane.b32.xlu0 %v14, 126
  %v340 = vpop.permute.xlu0 %339
  %341 = vrot.lane.b32.xlu0 %v15, 126
  %v342 = vpop.permute.xlu0 %341
  %343 = vrot.lane.b32.xlu0 %v16, 126
  %v344 = vpop.permute.xlu0 %343
  %345 = vrot.lane.b32.xlu0 %v17, 126
  %v346 = vpop.permute.xlu0 %345
  %347 = vrot.lane.b32.xlu0 %v18, 126
  %v348 = vpop.permute.xlu0 %347
  %vm349 = vcmask 1031168
  %v350 = vsel %vm349, %v340, %v342
  %v351 = vsel %vm349, %v342, %v344
  %v352 = vsel %vm349, %v344, %v346
  %v353 = vsel %vm349, %v346, %v348
  %v359 = vsel %vm46, %v338, 0
  %361 = vmatprep.subr.mxu0 %v351
  %362 = vmatpush1.msra.mxu0 %v350
  %363 = vmatprep.subr.mxu0 0.0
  %364 = vmatpush1.msra.mxu0 0.0
  %365 = vmatprep.subr.mxu0 0.0
  %366 = vmatpush1.msra.mxu0 0.0
  %367 = vmatprep.subr.mxu0 0.0
  %368 = vmatpush1.msra.mxu0 0.0
  %369 = vmatprep.subr.mxu0 0.0
  %370 = vmatpush1.msra.mxu0 0.0
  %371 = vmatprep.subr.mxu0 0.0
  %372 = vmatpush1.msra.mxu0 0.0
  %373 = vmatprep.subr.mxu0 0.0
  %374 = vmatpush1.msra.mxu0 0.0
  %375 = vmatprep.subr.mxu0 0.0
  %376 = vmatpush1.msra.mxu0 0.0
  %377 = vmatprep.subr.mxu0 0.0
  %378 = vmatpush1.msra.mxu0 0.0
  %379 = vmatprep.subr.mxu0 0.0
  %380 = vmatpush1.msra.mxu0 0.0
  %381 = vmatprep.subr.mxu0 0.0
  %382 = vmatpush1.msra.mxu0 0.0
  %383 = vmatprep.subr.mxu0 0.0
  %384 = vmatpush1.msra.mxu0 0.0
  %385 = vmatprep.subr.mxu0 0.0
  %386 = vmatpush1.msra.mxu0 0.0
  %387 = vmatprep.subr.mxu0 0.0
  %388 = vmatpush1.msra.mxu0 0.0
  %389 = vmatprep.subr.mxu0 0.0
  %390 = vmatpush1.msra.mxu0 0.0
  %391 = vmatprep.subr.mxu0 0.0
  %392 = vmatpush1.msra.mxu0 0.0
  %393 = vmatprep.subr.mxu0 0.0
  %394 = vmatpush1.msra.mxu0 0.0
  %395 = vmatprep.subr.mxu0 0.0
  %396 = vmatpush1.msra.mxu0 0.0
  %397 = vmatprep.subr.mxu0 0.0
  %398 = vmatpush1.msra.mxu0 0.0
  %399 = vmatprep.subr.mxu0 0.0
  %400 = vmatpush1.msra.mxu0 0.0
  %401 = vmatprep.subr.mxu0 0.0
  %402 = vmatpush1.msra.mxu0 0.0
  %403 = vmatprep.subr.mxu0 0.0
  %404 = vmatpush1.msra.mxu0 0.0
  %405 = vmatprep.subr.mxu0 0.0
  %406 = vmatpush1.msra.mxu0 0.0
  %407 = vmatprep.subr.mxu0 0.0
  %408 = vmatpush1.msra.mxu0 0.0
  %409 = vmatprep.subr.mxu0 0.0
  %410 = vmatpush1.msra.mxu0 0.0
  %411 = vmatprep.subr.mxu0 0.0
  %412 = vmatpush1.msra.mxu0 0.0
  %413 = vmatprep.subr.mxu0 0.0
  %414 = vmatpush1.msra.mxu0 0.0
  %415 = vmatprep.subr.mxu0 0.0
  %416 = vmatpush1.msra.mxu0 0.0
  %417 = vmatprep.subr.mxu0 0.0
  %418 = vmatpush1.msra.mxu0 0.0
  %419 = vmatprep.subr.mxu0 0.0
  %420 = vmatpush1.msra.mxu0 0.0
  %421 = vmatprep.subr.mxu0 0.0
  %422 = vmatpush1.msra.mxu0 0.0
  %423 = vmatprep.subr.mxu0 0.0
  %424 = vmatpush1.msra.mxu0 0.0
  %425 = vmatprep.mubr.f32.mxu0 0.0
  %426 = vmatmul.mubr.f32.gmra.mrb[0].mxu0 %v359
  %v427 = vpop.f32.mrb[0].mxu0
  %v428 = vadd.f32 0.0, %v427
  %v429 = vpop.f32.mrb[0].mxu0
  %v430 = vadd.f32 0.0, %v429
  %431 = vdwg.mxu0
  %432 = vmatprep.subr.mxu0 %v353
  %433 = vmatpush1.msra.mxu0 %v352
  %434 = vmatprep.subr.mxu0 0.0
  %435 = vmatpush1.msra.mxu0 0.0
  %436 = vmatprep.subr.mxu0 0.0
  %437 = vmatpush1.msra.mxu0 0.0
  %438 = vmatprep.subr.mxu0 0.0
  %439 = vmatpush1.msra.mxu0 0.0
  %440 = vmatprep.subr.mxu0 0.0
  %441 = vmatpush1.msra.mxu0 0.0
  %442 = vmatprep.subr.mxu0 0.0
  %443 = vmatpush1.msra.mxu0 0.0
  %444 = vmatprep.subr.mxu0 0.0
  %445 = vmatpush1.msra.mxu0 0.0
  %446 = vmatprep.subr.mxu0 0.0
  %447 = vmatpush1.msra.mxu0 0.0
  %448 = vmatprep.subr.mxu0 0.0
  %449 = vmatpush1.msra.mxu0 0.0
  %450 = vmatprep.subr.mxu0 0.0
  %451 = vmatpush1.msra.mxu0 0.0
  %452 = vmatprep.subr.mxu0 0.0
  %453 = vmatpush1.msra.mxu0 0.0
  %454 = vmatprep.subr.mxu0 0.0
  %455 = vmatpush1.msra.mxu0 0.0
  %456 = vmatprep.subr.mxu0 0.0
  %457 = vmatpush1.msra.mxu0 0.0
  %458 = vmatprep.subr.mxu0 0.0
  %459 = vmatpush1.msra.mxu0 0.0
  %460 = vmatprep.subr.mxu0 0.0
  %461 = vmatpush1.msra.mxu0 0.0
  %462 = vmatprep.subr.mxu0 0.0
  %463 = vmatpush1.msra.mxu0 0.0
  %464 = vmatprep.subr.mxu0 0.0
  %465 = vmatpush1.msra.mxu0 0.0
  %466 = vmatprep.subr.mxu0 0.0
  %467 = vmatpush1.msra.mxu0 0.0
  %468 = vmatprep.subr.mxu0 0.0
  %469 = vmatpush1.msra.mxu0 0.0
  %470 = vmatprep.subr.mxu0 0.0
  %471 = vmatpush1.msra.mxu0 0.0
  %472 = vmatprep.subr.mxu0 0.0
  %473 = vmatpush1.msra.mxu0 0.0
  %474 = vmatprep.subr.mxu0 0.0
  %475 = vmatpush1.msra.mxu0 0.0
  %476 = vmatprep.subr.mxu0 0.0
  %477 = vmatpush1.msra.mxu0 0.0
  %478 = vmatprep.subr.mxu0 0.0
  %479 = vmatpush1.msra.mxu0 0.0
  %480 = vmatprep.subr.mxu0 0.0
  %481 = vmatpush1.msra.mxu0 0.0
  %482 = vmatprep.subr.mxu0 0.0
  %483 = vmatpush1.msra.mxu0 0.0
  %484 = vmatprep.subr.mxu0 0.0
  %485 = vmatpush1.msra.mxu0 0.0
  %486 = vmatprep.subr.mxu0 0.0
  %487 = vmatpush1.msra.mxu0 0.0
  %488 = vmatprep.subr.mxu0 0.0
  %489 = vmatpush1.msra.mxu0 0.0
  %490 = vmatprep.subr.mxu0 0.0
  %491 = vmatpush1.msra.mxu0 0.0
  %492 = vmatprep.subr.mxu0 0.0
  %493 = vmatpush1.msra.mxu0 0.0
  %494 = vmatprep.subr.mxu0 0.0
  %495 = vmatpush1.msra.mxu0 0.0
  %496 = vmatprep.mubr.f32.mxu0 0.0
  %497 = vmatmul.mubr.f32.gmra.mrb[0].mxu0 %v359
  %v498 = vpop.f32.mrb[0].mxu0
  %v499 = vadd.f32 0.0, %v498
  %v500 = vpop.f32.mrb[0].mxu0
  %v501 = vadd.f32 0.0, %v500
  %502 = vdwg.mxu0
  %v503 = vadd.f32 %v262, %v428
  %v504 = vadd.f32 %v264, %v430
  %v505 = vadd.f32 %v333, %v499
  %v506 = vadd.f32 %v335, %v501
  %s507 = scalar_lea.vmem %s1, 24
  %v508 = vld [vmem:[%s507] sm:$0xff]
  %509 = vrot.lane.b32.xlu0 %v14, 125
  %v510 = vpop.permute.xlu0 %509
  %511 = vrot.lane.b32.xlu0 %v15, 125
  %v512 = vpop.permute.xlu0 %511
  %513 = vrot.lane.b32.xlu0 %v16, 125
  %v514 = vpop.permute.xlu0 %513
  %515 = vrot.lane.b32.xlu0 %v17, 125
  %v516 = vpop.permute.xlu0 %515
  %517 = vrot.lane.b32.xlu0 %v18, 125
  %v518 = vpop.permute.xlu0 %517
  %vm519 = vcmask 1022976
  %v520 = vsel %vm519, %v510, %v512
  %v521 = vsel %vm519, %v512, %v514
  %v522 = vsel %vm519, %v514, %v516
  %v523 = vsel %vm519, %v516, %v518
  %v529 = vsel %vm46, %v508, 0
  %531 = vmatprep.subr.mxu0 %v521
  %532 = vmatpush1.msra.mxu0 %v520
  %533 = vmatprep.subr.mxu0 0.0
  %534 = vmatpush1.msra.mxu0 0.0
  %535 = vmatprep.subr.mxu0 0.0
  %536 = vmatpush1.msra.mxu0 0.0
  %537 = vmatprep.subr.mxu0 0.0
  %538 = vmatpush1.msra.mxu0 0.0
  %539 = vmatprep.subr.mxu0 0.0
  %540 = vmatpush1.msra.mxu0 0.0
  %541 = vmatprep.subr.mxu0 0.0
  %542 = vmatpush1.msra.mxu0 0.0
  %543 = vmatprep.subr.mxu0 0.0
  %544 = vmatpush1.msra.mxu0 0.0
  %545 = vmatprep.subr.mxu0 0.0
  %546 = vmatpush1.msra.mxu0 0.0
  %547 = vmatprep.subr.mxu0 0.0
  %548 = vmatpush1.msra.mxu0 0.0
  %549 = vmatprep.subr.mxu0 0.0
  %550 = vmatpush1.msra.mxu0 0.0
  %551 = vmatprep.subr.mxu0 0.0
  %552 = vmatpush1.msra.mxu0 0.0
  %553 = vmatprep.subr.mxu0 0.0
  %554 = vmatpush1.msra.mxu0 0.0
  %555 = vmatprep.subr.mxu0 0.0
  %556 = vmatpush1.msra.mxu0 0.0
  %557 = vmatprep.subr.mxu0 0.0
  %558 = vmatpush1.msra.mxu0 0.0
  %559 = vmatprep.subr.mxu0 0.0
  %560 = vmatpush1.msra.mxu0 0.0
  %561 = vmatprep.subr.mxu0 0.0
  %562 = vmatpush1.msra.mxu0 0.0
  %563 = vmatprep.subr.mxu0 0.0
  %564 = vmatpush1.msra.mxu0 0.0
  %565 = vmatprep.subr.mxu0 0.0
  %566 = vmatpush1.msra.mxu0 0.0
  %567 = vmatprep.subr.mxu0 0.0
  %568 = vmatpush1.msra.mxu0 0.0
  %569 = vmatprep.subr.mxu0 0.0
  %570 = vmatpush1.msra.mxu0 0.0
  %571 = vmatprep.subr.mxu0 0.0
  %572 = vmatpush1.msra.mxu0 0.0
  %573 = vmatprep.subr.mxu0 0.0
  %574 = vmatpush1.msra.mxu0 0.0
  %575 = vmatprep.subr.mxu0 0.0
  %576 = vmatpush1.msra.mxu0 0.0
  %577 = vmatprep.subr.mxu0 0.0
  %578 = vmatpush1.msra.mxu0 0.0
  %579 = vmatprep.subr.mxu0 0.0
  %580 = vmatpush1.msra.mxu0 0.0
  %581 = vmatprep.subr.mxu0 0.0
  %582 = vmatpush1.msra.mxu0 0.0
  %583 = vmatprep.subr.mxu0 0.0
  %584 = vmatpush1.msra.mxu0 0.0
  %585 = vmatprep.subr.mxu0 0.0
  %586 = vmatpush1.msra.mxu0 0.0
  %587 = vmatprep.subr.mxu0 0.0
  %588 = vmatpush1.msra.mxu0 0.0
  %589 = vmatprep.subr.mxu0 0.0
  %590 = vmatpush1.msra.mxu0 0.0
  %591 = vmatprep.subr.mxu0 0.0
  %592 = vmatpush1.msra.mxu0 0.0
  %593 = vmatprep.subr.mxu0 0.0
  %594 = vmatpush1.msra.mxu0 0.0
  %595 = vmatprep.mubr.f32.mxu0 0.0
  %596 = vmatmul.mubr.f32.gmra.mrb[0].mxu0 %v529
  %v597 = vpop.f32.mrb[0].mxu0
  %v598 = vadd.f32 0.0, %v597
  %v599 = vpop.f32.mrb[0].mxu0
  %v600 = vadd.f32 0.0, %v599
  %601 = vdwg.mxu0
  %602 = vmatprep.subr.mxu0 %v523
  %603 = vmatpush1.msra.mxu0 %v522
  %604 = vmatprep.subr.mxu0 0.0
  %605 = vmatpush1.msra.mxu0 0.0
  %606 = vmatprep.subr.mxu0 0.0
  %607 = vmatpush1.msra.mxu0 0.0
  %608 = vmatprep.subr.mxu0 0.0
  %609 = vmatpush1.msra.mxu0 0.0
  %610 = vmatprep.subr.mxu0 0.0
  %611 = vmatpush1.msra.mxu0 0.0
  %612 = vmatprep.subr.mxu0 0.0
  %613 = vmatpush1.msra.mxu0 0.0
  %614 = vmatprep.subr.mxu0 0.0
  %615 = vmatpush1.msra.mxu0 0.0
  %616 = vmatprep.subr.mxu0 0.0
  %617 = vmatpush1.msra.mxu0 0.0
  %618 = vmatprep.subr.mxu0 0.0
  %619 = vmatpush1.msra.mxu0 0.0
  %620 = vmatprep.subr.mxu0 0.0
  %621 = vmatpush1.msra.mxu0 0.0
  %622 = vmatprep.subr.mxu0 0.0
  %623 = vmatpush1.msra.mxu0 0.0
  %624 = vmatprep.subr.mxu0 0.0
  %625 = vmatpush1.msra.mxu0 0.0
  %626 = vmatprep.subr.mxu0 0.0
  %627 = vmatpush1.msra.mxu0 0.0
  %628 = vmatprep.subr.mxu0 0.0
  %629 = vmatpush1.msra.mxu0 0.0
  %630 = vmatprep.subr.mxu0 0.0
  %631 = vmatpush1.msra.mxu0 0.0
  %632 = vmatprep.subr.mxu0 0.0
  %633 = vmatpush1.msra.mxu0 0.0
  %634 = vmatprep.subr.mxu0 0.0
  %635 = vmatpush1.msra.mxu0 0.0
  %636 = vmatprep.subr.mxu0 0.0
  %637 = vmatpush1.msra.mxu0 0.0
  %638 = vmatprep.subr.mxu0 0.0
  %639 = vmatpush1.msra.mxu0 0.0
  %640 = vmatprep.subr.mxu0 0.0
  %641 = vmatpush1.msra.mxu0 0.0
  %642 = vmatprep.subr.mxu0 0.0
  %643 = vmatpush1.msra.mxu0 0.0
  %644 = vmatprep.subr.mxu0 0.0
  %645 = vmatpush1.msra.mxu0 0.0
  %646 = vmatprep.subr.mxu0 0.0
  %647 = vmatpush1.msra.mxu0 0.0
  %648 = vmatprep.subr.mxu0 0.0
  %649 = vmatpush1.msra.mxu0 0.0
  %650 = vmatprep.subr.mxu0 0.0
  %651 = vmatpush1.msra.mxu0 0.0
  %652 = vmatprep.subr.mxu0 0.0
  %653 = vmatpush1.msra.mxu0 0.0
  %654 = vmatprep.subr.mxu0 0.0
  %655 = vmatpush1.msra.mxu0 0.0
  %656 = vmatprep.subr.mxu0 0.0
  %657 = vmatpush1.msra.mxu0 0.0
  %658 = vmatprep.subr.mxu0 0.0
  %659 = vmatpush1.msra.mxu0 0.0
  %660 = vmatprep.subr.mxu0 0.0
  %661 = vmatpush1.msra.mxu0 0.0
  %662 = vmatprep.subr.mxu0 0.0
  %663 = vmatpush1.msra.mxu0 0.0
  %664 = vmatprep.subr.mxu0 0.0
  %665 = vmatpush1.msra.mxu0 0.0
  %666 = vmatprep.mubr.f32.mxu0 0.0
  %667 = vmatmul.mubr.f32.gmra.mrb[0].mxu0 %v529
  %v668 = vpop.f32.mrb[0].mxu0
  %v669 = vadd.f32 0.0, %v668
  %v670 = vpop.f32.mrb[0].mxu0
  %v671 = vadd.f32 0.0, %v670
  %672 = vdwg.mxu0
  %v673 = vadd.f32 %v503, %v598
  %v674 = vadd.f32 %v504, %v600
  %v675 = vadd.f32 %v505, %v669
  %v676 = vadd.f32 %v506, %v671
  %s677 = scalar_lea.vmem %s1, 32
  %v678 = vld [vmem:[%s677] sm:$0xff]
  %679 = vrot.lane.b32.xlu0 %v14, 124
  %v680 = vpop.permute.xlu0 %679
  %681 = vrot.lane.b32.xlu0 %v15, 124
  %v682 = vpop.permute.xlu0 %681
  %683 = vrot.lane.b32.xlu0 %v16, 124
  %v684 = vpop.permute.xlu0 %683
  %685 = vrot.lane.b32.xlu0 %v17, 124
  %v686 = vpop.permute.xlu0 %685
  %687 = vrot.lane.b32.xlu0 %v18, 124
  %v688 = vpop.permute.xlu0 %687
  %vm689 = vcmask 1014784
  %v690 = vsel %vm689, %v680, %v682
  %v691 = vsel %vm689, %v682, %v684
  %v692 = vsel %vm689, %v684, %v686
  %v693 = vsel %vm689, %v686, %v688
  %v699 = vsel %vm46, %v678, 0
  %701 = vmatprep.subr.mxu0 %v691
  %702 = vmatpush1.msra.mxu0 %v690
  %703 = vmatprep.subr.mxu0 0.0
  %704 = vmatpush1.msra.mxu0 0.0
  %705 = vmatprep.subr.mxu0 0.0
  %706 = vmatpush1.msra.mxu0 0.0
  %707 = vmatprep.subr.mxu0 0.0
  %708 = vmatpush1.msra.mxu0 0.0
  %709 = vmatprep.subr.mxu0 0.0
  %710 = vmatpush1.msra.mxu0 0.0
  %711 = vmatprep.subr.mxu0 0.0
  %712 = vmatpush1.msra.mxu0 0.0
  %713 = vmatprep.subr.mxu0 0.0
  %714 = vmatpush1.msra.mxu0 0.0
  %715 = vmatprep.subr.mxu0 0.0
  %716 = vmatpush1.msra.mxu0 0.0
  %717 = vmatprep.subr.mxu0 0.0
  %718 = vmatpush1.msra.mxu0 0.0
  %719 = vmatprep.subr.mxu0 0.0
  %720 = vmatpush1.msra.mxu0 0.0
  %721 = vmatprep.subr.mxu0 0.0
  %722 = vmatpush1.msra.mxu0 0.0
  %723 = vmatprep.subr.mxu0 0.0
  %724 = vmatpush1.msra.mxu0 0.0
  %725 = vmatprep.subr.mxu0 0.0
  %726 = vmatpush1.msra.mxu0 0.0
  %727 = vmatprep.subr.mxu0 0.0
  %728 = vmatpush1.msra.mxu0 0.0
  %729 = vmatprep.subr.mxu0 0.0
  %730 = vmatpush1.msra.mxu0 0.0
  %731 = vmatprep.subr.mxu0 0.0
  %732 = vmatpush1.msra.mxu0 0.0
  %733 = vmatprep.subr.mxu0 0.0
  %734 = vmatpush1.msra.mxu0 0.0
  %735 = vmatprep.subr.mxu0 0.0
  %736 = vmatpush1.msra.mxu0 0.0
  %737 = vmatprep.subr.mxu0 0.0
  %738 = vmatpush1.msra.mxu0 0.0
  %739 = vmatprep.subr.mxu0 0.0
  %740 = vmatpush1.msra.mxu0 0.0
  %741 = vmatprep.subr.mxu0 0.0
  %742 = vmatpush1.msra.mxu0 0.0
  %743 = vmatprep.subr.mxu0 0.0
  %744 = vmatpush1.msra.mxu0 0.0
  %745 = vmatprep.subr.mxu0 0.0
  %746 = vmatpush1.msra.mxu0 0.0
  %747 = vmatprep.subr.mxu0 0.0
  %748 = vmatpush1.msra.mxu0 0.0
  %749 = vmatprep.subr.mxu0 0.0
  %750 = vmatpush1.msra.mxu0 0.0
  %751 = vmatprep.subr.mxu0 0.0
  %752 = vmatpush1.msra.mxu0 0.0
  %753 = vmatprep.subr.mxu0 0.0
  %754 = vmatpush1.msra.mxu0 0.0
  %755 = vmatprep.subr.mxu0 0.0
  %756 = vmatpush1.msra.mxu0 0.0
  %757 = vmatprep.subr.mxu0 0.0
  %758 = vmatpush1.msra.mxu0 0.0
  %759 = vmatprep.subr.mxu0 0.0
  %760 = vmatpush1.msra.mxu0 0.0
  %761 = vmatprep.subr.mxu0 0.0
  %762 = vmatpush1.msra.mxu0 0.0
  %763 = vmatprep.subr.mxu0 0.0
  %764 = vmatpush1.msra.mxu0 0.0
  %765 = vmatprep.mubr.f32.mxu0 0.0
  %766 = vmatmul.mubr.f32.gmra.mrb[0].mxu0 %v699
  %v767 = vpop.f32.mrb[0].mxu0
  %v768 = vadd.f32 0.0, %v767
  %v769 = vpop.f32.mrb[0].mxu0
  %v770 = vadd.f32 0.0, %v769
  %771 = vdwg.mxu0
  %772 = vmatprep.subr.mxu0 %v693
  %773 = vmatpush1.msra.mxu0 %v692
  %774 = vmatprep.subr.mxu0 0.0
  %775 = vmatpush1.msra.mxu0 0.0
  %776 = vmatprep.subr.mxu0 0.0
  %777 = vmatpush1.msra.mxu0 0.0
  %778 = vmatprep.subr.mxu0 0.0
  %779 = vmatpush1.msra.mxu0 0.0
  %780 = vmatprep.subr.mxu0 0.0
  %781 = vmatpush1.msra.mxu0 0.0
  %782 = vmatprep.subr.mxu0 0.0
  %783 = vmatpush1.msra.mxu0 0.0
  %784 = vmatprep.subr.mxu0 0.0
  %785 = vmatpush1.msra.mxu0 0.0
  %786 = vmatprep.subr.mxu0 0.0
  %787 = vmatpush1.msra.mxu0 0.0
  %788 = vmatprep.subr.mxu0 0.0
  %789 = vmatpush1.msra.mxu0 0.0
  %790 = vmatprep.subr.mxu0 0.0
  %791 = vmatpush1.msra.mxu0 0.0
  %792 = vmatprep.subr.mxu0 0.0
  %793 = vmatpush1.msra.mxu0 0.0
  %794 = vmatprep.subr.mxu0 0.0
  %795 = vmatpush1.msra.mxu0 0.0
  %796 = vmatprep.subr.mxu0 0.0
  %797 = vmatpush1.msra.mxu0 0.0
  %798 = vmatprep.subr.mxu0 0.0
  %799 = vmatpush1.msra.mxu0 0.0
  %800 = vmatprep.subr.mxu0 0.0
  %801 = vmatpush1.msra.mxu0 0.0
  %802 = vmatprep.subr.mxu0 0.0
  %803 = vmatpush1.msra.mxu0 0.0
  %804 = vmatprep.subr.mxu0 0.0
  %805 = vmatpush1.msra.mxu0 0.0
  %806 = vmatprep.subr.mxu0 0.0
  %807 = vmatpush1.msra.mxu0 0.0
  %808 = vmatprep.subr.mxu0 0.0
  %809 = vmatpush1.msra.mxu0 0.0
  %810 = vmatprep.subr.mxu0 0.0
  %811 = vmatpush1.msra.mxu0 0.0
  %812 = vmatprep.subr.mxu0 0.0
  %813 = vmatpush1.msra.mxu0 0.0
  %814 = vmatprep.subr.mxu0 0.0
  %815 = vmatpush1.msra.mxu0 0.0
  %816 = vmatprep.subr.mxu0 0.0
  %817 = vmatpush1.msra.mxu0 0.0
  %818 = vmatprep.subr.mxu0 0.0
  %819 = vmatpush1.msra.mxu0 0.0
  %820 = vmatprep.subr.mxu0 0.0
  %821 = vmatpush1.msra.mxu0 0.0
  %822 = vmatprep.subr.mxu0 0.0
  %823 = vmatpush1.msra.mxu0 0.0
  %824 = vmatprep.subr.mxu0 0.0
  %825 = vmatpush1.msra.mxu0 0.0
  %826 = vmatprep.subr.mxu0 0.0
  %827 = vmatpush1.msra.mxu0 0.0
  %828 = vmatprep.subr.mxu0 0.0
  %829 = vmatpush1.msra.mxu0 0.0
  %830 = vmatprep.subr.mxu0 0.0
  %831 = vmatpush1.msra.mxu0 0.0
  %832 = vmatprep.subr.mxu0 0.0
  %833 = vmatpush1.msra.mxu0 0.0
  %834 = vmatprep.subr.mxu0 0.0
  %835 = vmatpush1.msra.mxu0 0.0
  %836 = vmatprep.mubr.f32.mxu0 0.0
  %837 = vmatmul.mubr.f32.gmra.mrb[0].mxu0 %v699
  %v838 = vpop.f32.mrb[0].mxu0
  %v839 = vadd.f32 0.0, %v838
  %v840 = vpop.f32.mrb[0].mxu0
  %v841 = vadd.f32 0.0, %v840
  %842 = vdwg.mxu0
  %v843 = vadd.f32 %v673, %v768
  %v844 = vadd.f32 %v674, %v770
  %v845 = vadd.f32 %v675, %v839
  %v846 = vadd.f32 %v676, %v841
  %s847 = scalar_lea.vmem %s1, 40
  %v848 = vld [vmem:[%s847] sm:$0xff]
  %849 = vrot.lane.b32.xlu0 %v14, 112
  %v850 = vpop.permute.xlu0 %849
  %851 = vrot.lane.b32.xlu0 %v15, 112
  %v852 = vpop.permute.xlu0 %851
  %853 = vrot.lane.b32.xlu0 %v16, 112
  %v854 = vpop.permute.xlu0 %853
  %855 = vrot.lane.b32.xlu0 %v17, 112
  %v856 = vpop.permute.xlu0 %855
  %857 = vrot.lane.b32.xlu0 %v18, 112
  %v858 = vpop.permute.xlu0 %857
  %vm859 = vcmask 916480
  %v860 = vsel %vm859, %v850, %v852
  %v861 = vsel %vm859, %v852, %v854
  %v862 = vsel %vm859, %v854, %v856
  %v863 = vsel %vm859, %v856, %v858
  %v869 = vsel %vm46, %v848, 0
  %871 = vmatprep.subr.mxu0 %v861
  %872 = vmatpush1.msra.mxu0 %v860
  %873 = vmatprep.subr.mxu0 0.0
  %874 = vmatpush1.msra.mxu0 0.0
  %875 = vmatprep.subr.mxu0 0.0
  %876 = vmatpush1.msra.mxu0 0.0
  %877 = vmatprep.subr.mxu0 0.0
  %878 = vmatpush1.msra.mxu0 0.0
  %879 = vmatprep.subr.mxu0 0.0
  %880 = vmatpush1.msra.mxu0 0.0
  %881 = vmatprep.subr.mxu0 0.0
  %882 = vmatpush1.msra.mxu0 0.0
  %883 = vmatprep.subr.mxu0 0.0
  %884 = vmatpush1.msra.mxu0 0.0
  %885 = vmatprep.subr.mxu0 0.0
  %886 = vmatpush1.msra.mxu0 0.0
  %887 = vmatprep.subr.mxu0 0.0
  %888 = vmatpush1.msra.mxu0 0.0
  %889 = vmatprep.subr.mxu0 0.0
  %890 = vmatpush1.msra.mxu0 0.0
  %891 = vmatprep.subr.mxu0 0.0
  %892 = vmatpush1.msra.mxu0 0.0
  %893 = vmatprep.subr.mxu0 0.0
  %894 = vmatpush1.msra.mxu0 0.0
  %895 = vmatprep.subr.mxu0 0.0
  %896 = vmatpush1.msra.mxu0 0.0
  %897 = vmatprep.subr.mxu0 0.0
  %898 = vmatpush1.msra.mxu0 0.0
  %899 = vmatprep.subr.mxu0 0.0
  %900 = vmatpush1.msra.mxu0 0.0
  %901 = vmatprep.subr.mxu0 0.0
  %902 = vmatpush1.msra.mxu0 0.0
  %903 = vmatprep.subr.mxu0 0.0
  %904 = vmatpush1.msra.mxu0 0.0
  %905 = vmatprep.subr.mxu0 0.0
  %906 = vmatpush1.msra.mxu0 0.0
  %907 = vmatprep.subr.mxu0 0.0
  %908 = vmatpush1.msra.mxu0 0.0
  %909 = vmatprep.subr.mxu0 0.0
  %910 = vmatpush1.msra.mxu0 0.0
  %911 = vmatprep.subr.mxu0 0.0
  %912 = vmatpush1.msra.mxu0 0.0
  %913 = vmatprep.subr.mxu0 0.0
  %914 = vmatpush1.msra.mxu0 0.0
  %915 = vmatprep.subr.mxu0 0.0
  %916 = vmatpush1.msra.mxu0 0.0
  %917 = vmatprep.subr.mxu0 0.0
  %918 = vmatpush1.msra.mxu0 0.0
  %919 = vmatprep.subr.mxu0 0.0
  %920 = vmatpush1.msra.mxu0 0.0
  %921 = vmatprep.subr.mxu0 0.0
  %922 = vmatpush1.msra.mxu0 0.0
  %923 = vmatprep.subr.mxu0 0.0
  %924 = vmatpush1.msra.mxu0 0.0
  %925 = vmatprep.subr.mxu0 0.0
  %926 = vmatpush1.msra.mxu0 0.0
  %927 = vmatprep.subr.mxu0 0.0
  %928 = vmatpush1.msra.mxu0 0.0
  %929 = vmatprep.subr.mxu0 0.0
  %930 = vmatpush1.msra.mxu0 0.0
  %931 = vmatprep.subr.mxu0 0.0
  %932 = vmatpush1.msra.mxu0 0.0
  %933 = vmatprep.subr.mxu0 0.0
  %934 = vmatpush1.msra.mxu0 0.0
  %935 = vmatprep.mubr.f32.mxu0 0.0
  %936 = vmatmul.mubr.f32.gmra.mrb[0].mxu0 %v869
  %v937 = vpop.f32.mrb[0].mxu0
  %v938 = vadd.f32 0.0, %v937
  %v939 = vpop.f32.mrb[0].mxu0
  %v940 = vadd.f32 0.0, %v939
  %941 = vdwg.mxu0
  %942 = vmatprep.subr.mxu0 %v863
  %943 = vmatpush1.msra.mxu0 %v862
  %944 = vmatprep.subr.mxu0 0.0
  %945 = vmatpush1.msra.mxu0 0.0
  %946 = vmatprep.subr.mxu0 0.0
  %947 = vmatpush1.msra.mxu0 0.0
  %948 = vmatprep.subr.mxu0 0.0
  %949 = vmatpush1.msra.mxu0 0.0
  %950 = vmatprep.subr.mxu0 0.0
  %951 = vmatpush1.msra.mxu0 0.0
  %952 = vmatprep.subr.mxu0 0.0
  %953 = vmatpush1.msra.mxu0 0.0
  %954 = vmatprep.subr.mxu0 0.0
  %955 = vmatpush1.msra.mxu0 0.0
  %956 = vmatprep.subr.mxu0 0.0
  %957 = vmatpush1.msra.mxu0 0.0
  %958 = vmatprep.subr.mxu0 0.0
  %959 = vmatpush1.msra.mxu0 0.0
  %960 = vmatprep.subr.mxu0 0.0
  %961 = vmatpush1.msra.mxu0 0.0
  %962 = vmatprep.subr.mxu0 0.0
  %963 = vmatpush1.msra.mxu0 0.0
  %964 = vmatprep.subr.mxu0 0.0
  %965 = vmatpush1.msra.mxu0 0.0
  %966 = vmatprep.subr.mxu0 0.0
  %967 = vmatpush1.msra.mxu0 0.0
  %968 = vmatprep.subr.mxu0 0.0
  %969 = vmatpush1.msra.mxu0 0.0
  %970 = vmatprep.subr.mxu0 0.0
  %971 = vmatpush1.msra.mxu0 0.0
  %972 = vmatprep.subr.mxu0 0.0
  %973 = vmatpush1.msra.mxu0 0.0
  %974 = vmatprep.subr.mxu0 0.0
  %975 = vmatpush1.msra.mxu0 0.0
  %976 = vmatprep.subr.mxu0 0.0
  %977 = vmatpush1.msra.mxu0 0.0
  %978 = vmatprep.subr.mxu0 0.0
  %979 = vmatpush1.msra.mxu0 0.0
  %980 = vmatprep.subr.mxu0 0.0
  %981 = vmatpush1.msra.mxu0 0.0
  %982 = vmatprep.subr.mxu0 0.0
  %983 = vmatpush1.msra.mxu0 0.0
  %984 = vmatprep.subr.mxu0 0.0
  %985 = vmatpush1.msra.mxu0 0.0
  %986 = vmatprep.subr.mxu0 0.0
  %987 = vmatpush1.msra.mxu0 0.0
  %988 = vmatprep.subr.mxu0 0.0
  %989 = vmatpush1.msra.mxu0 0.0
  %990 = vmatprep.subr.mxu0 0.0
  %991 = vmatpush1.msra.mxu0 0.0
  %992 = vmatprep.subr.mxu0 0.0
  %993 = vmatpush1.msra.mxu0 0.0
  %994 = vmatprep.subr.mxu0 0.0
  %995 = vmatpush1.msra.mxu0 0.0
  %996 = vmatprep.subr.mxu0 0.0
  %997 = vmatpush1.msra.mxu0 0.0
  %998 = vmatprep.subr.mxu0 0.0
  %999 = vmatpush1.msra.mxu0 0.0
  %1000 = vmatprep.subr.mxu0 0.0
  %1001 = vmatpush1.msra.mxu0 0.0
  %1002 = vmatprep.subr.mxu0 0.0
  %1003 = vmatpush1.msra.mxu0 0.0
  %1004 = vmatprep.subr.mxu0 0.0
  %1005 = vmatpush1.msra.mxu0 0.0
  %1006 = vmatprep.mubr.f32.mxu0 0.0
  %1007 = vmatmul.mubr.f32.gmra.mrb[0].mxu0 %v869
  %v1008 = vpop.f32.mrb[0].mxu0
  %v1009 = vadd.f32 0.0, %v1008
  %v1010 = vpop.f32.mrb[0].mxu0
  %v1011 = vadd.f32 0.0, %v1010
  %1012 = vdwg.mxu0
  %v1013 = vadd.f32 %v843, %v938
  %v1014 = vadd.f32 %v844, %v940
  %v1015 = vadd.f32 %v845, %v1009
  %v1016 = vadd.f32 %v846, %v1011
  %s1017 = scalar_lea.vmem %s1, 48
  %v1018 = vld [vmem:[%s1017] sm:$0xff]
  %1019 = vrot.lane.b32.xlu0 %v14, 111
  %v1020 = vpop.permute.xlu0 %1019
  %1021 = vrot.lane.b32.xlu0 %v15, 111
  %v1022 = vpop.permute.xlu0 %1021
  %1023 = vrot.lane.b32.xlu0 %v16, 111
  %v1024 = vpop.permute.xlu0 %1023
  %1025 = vrot.lane.b32.xlu0 %v17, 111
  %v1026 = vpop.permute.xlu0 %1025
  %1027 = vrot.lane.b32.xlu0 %v18, 111
  %v1028 = vpop.permute.xlu0 %1027
  %vm1029 = vcmask 908288
  %v1030 = vsel %vm1029, %v1020, %v1022
  %v1031 = vsel %vm1029, %v1022, %v1024
  %v1032 = vsel %vm1029, %v1024, %v1026
  %v1033 = vsel %vm1029, %v1026, %v1028
  %v1039 = vsel %vm46, %v1018, 0
  %1041 = vmatprep.subr.mxu0 %v1031
  %1042 = vmatpush1.msra.mxu0 %v1030
  %1043 = vmatprep.subr.mxu0 0.0
  %1044 = vmatpush1.msra.mxu0 0.0
  %1045 = vmatprep.subr.mxu0 0.0
  %1046 = vmatpush1.msra.mxu0 0.0
  %1047 = vmatprep.subr.mxu0 0.0
  %1048 = vmatpush1.msra.mxu0 0.0
  %1049 = vmatprep.subr.mxu0 0.0
  %1050 = vmatpush1.msra.mxu0 0.0
  %1051 = vmatprep.subr.mxu0 0.0
  %1052 = vmatpush1.msra.mxu0 0.0
  %1053 = vmatprep.subr.mxu0 0.0
  %1054 = vmatpush1.msra.mxu0 0.0
  %1055 = vmatprep.subr.mxu0 0.0
  %1056 = vmatpush1.msra.mxu0 0.0
  %1057 = vmatprep.subr.mxu0 0.0
  %1058 = vmatpush1.msra.mxu0 0.0
  %1059 = vmatprep.subr.mxu0 0.0
  %1060 = vmatpush1.msra.mxu0 0.0
  %1061 = vmatprep.subr.mxu0 0.0
  %1062 = vmatpush1.msra.mxu0 0.0
  %1063 = vmatprep.subr.mxu0 0.0
  %1064 = vmatpush1.msra.mxu0 0.0
  %1065 = vmatprep.subr.mxu0 0.0
  %1066 = vmatpush1.msra.mxu0 0.0
  %1067 = vmatprep.subr.mxu0 0.0
  %1068 = vmatpush1.msra.mxu0 0.0
  %1069 = vmatprep.subr.mxu0 0.0
  %1070 = vmatpush1.msra.mxu0 0.0
  %1071 = vmatprep.subr.mxu0 0.0
  %1072 = vmatpush1.msra.mxu0 0.0
  %1073 = vmatprep.subr.mxu0 0.0
  %1074 = vmatpush1.msra.mxu0 0.0
  %1075 = vmatprep.subr.mxu0 0.0
  %1076 = vmatpush1.msra.mxu0 0.0
  %1077 = vmatprep.subr.mxu0 0.0
  %1078 = vmatpush1.msra.mxu0 0.0
  %1079 = vmatprep.subr.mxu0 0.0
  %1080 = vmatpush1.msra.mxu0 0.0
  %1081 = vmatprep.subr.mxu0 0.0
  %1082 = vmatpush1.msra.mxu0 0.0
  %1083 = vmatprep.subr.mxu0 0.0
  %1084 = vmatpush1.msra.mxu0 0.0
  %1085 = vmatprep.subr.mxu0 0.0
  %1086 = vmatpush1.msra.mxu0 0.0
  %1087 = vmatprep.subr.mxu0 0.0
  %1088 = vmatpush1.msra.mxu0 0.0
  %1089 = vmatprep.subr.mxu0 0.0
  %1090 = vmatpush1.msra.mxu0 0.0
  %1091 = vmatprep.subr.mxu0 0.0
  %1092 = vmatpush1.msra.mxu0 0.0
  %1093 = vmatprep.subr.mxu0 0.0
  %1094 = vmatpush1.msra.mxu0 0.0
  %1095 = vmatprep.subr.mxu0 0.0
  %1096 = vmatpush1.msra.mxu0 0.0
  %1097 = vmatprep.subr.mxu0 0.0
  %1098 = vmatpush1.msra.mxu0 0.0
  %1099 = vmatprep.subr.mxu0 0.0
  %1100 = vmatpush1.msra.mxu0 0.0
  %1101 = vmatprep.subr.mxu0 0.0
  %1102 = vmatpush1.msra.mxu0 0.0
  %1103 = vmatprep.subr.mxu0 0.0
  %1104 = vmatpush1.msra.mxu0 0.0
  %1105 = vmatprep.mubr.f32.mxu0 0.0
  %1106 = vmatmul.mubr.f32.gmra.mrb[0].mxu0 %v1039
  %v1107 = vpop.f32.mrb[0].mxu0
  %v1108 = vadd.f32 0.0, %v1107
  %v1109 = vpop.f32.mrb[0].mxu0
  %v1110 = vadd.f32 0.0, %v1109
  %1111 = vdwg.mxu0
  %1112 = vmatprep.subr.mxu0 %v1033
  %1113 = vmatpush1.msra.mxu0 %v1032
  %1114 = vmatprep.subr.mxu0 0.0
  %1115 = vmatpush1.msra.mxu0 0.0
  %1116 = vmatprep.subr.mxu0 0.0
  %1117 = vmatpush1.msra.mxu0 0.0
  %1118 = vmatprep.subr.mxu0 0.0
  %1119 = vmatpush1.msra.mxu0 0.0
  %1120 = vmatprep.subr.mxu0 0.0
  %1121 = vmatpush1.msra.mxu0 0.0
  %1122 = vmatprep.subr.mxu0 0.0
  %1123 = vmatpush1.msra.mxu0 0.0
  %1124 = vmatprep.subr.mxu0 0.0
  %1125 = vmatpush1.msra.mxu0 0.0
  %1126 = vmatprep.subr.mxu0 0.0
  %1127 = vmatpush1.msra.mxu0 0.0
  %1128 = vmatprep.subr.mxu0 0.0
  %1129 = vmatpush1.msra.mxu0 0.0
  %1130 = vmatprep.subr.mxu0 0.0
  %1131 = vmatpush1.msra.mxu0 0.0
  %1132 = vmatprep.subr.mxu0 0.0
  %1133 = vmatpush1.msra.mxu0 0.0
  %1134 = vmatprep.subr.mxu0 0.0
  %1135 = vmatpush1.msra.mxu0 0.0
  %1136 = vmatprep.subr.mxu0 0.0
  %1137 = vmatpush1.msra.mxu0 0.0
  %1138 = vmatprep.subr.mxu0 0.0
  %1139 = vmatpush1.msra.mxu0 0.0
  %1140 = vmatprep.subr.mxu0 0.0
  %1141 = vmatpush1.msra.mxu0 0.0
  %1142 = vmatprep.subr.mxu0 0.0
  %1143 = vmatpush1.msra.mxu0 0.0
  %1144 = vmatprep.subr.mxu0 0.0
  %1145 = vmatpush1.msra.mxu0 0.0
  %1146 = vmatprep.subr.mxu0 0.0
  %1147 = vmatpush1.msra.mxu0 0.0
  %1148 = vmatprep.subr.mxu0 0.0
  %1149 = vmatpush1.msra.mxu0 0.0
  %1150 = vmatprep.subr.mxu0 0.0
  %1151 = vmatpush1.msra.mxu0 0.0
  %1152 = vmatprep.subr.mxu0 0.0
  %1153 = vmatpush1.msra.mxu0 0.0
  %1154 = vmatprep.subr.mxu0 0.0
  %1155 = vmatpush1.msra.mxu0 0.0
  %1156 = vmatprep.subr.mxu0 0.0
  %1157 = vmatpush1.msra.mxu0 0.0
  %1158 = vmatprep.subr.mxu0 0.0
  %1159 = vmatpush1.msra.mxu0 0.0
  %1160 = vmatprep.subr.mxu0 0.0
  %1161 = vmatpush1.msra.mxu0 0.0
  %1162 = vmatprep.subr.mxu0 0.0
  %1163 = vmatpush1.msra.mxu0 0.0
  %1164 = vmatprep.subr.mxu0 0.0
  %1165 = vmatpush1.msra.mxu0 0.0
  %1166 = vmatprep.subr.mxu0 0.0
  %1167 = vmatpush1.msra.mxu0 0.0
  %1168 = vmatprep.subr.mxu0 0.0
  %1169 = vmatpush1.msra.mxu0 0.0
  %1170 = vmatprep.subr.mxu0 0.0
  %1171 = vmatpush1.msra.mxu0 0.0
  %1172 = vmatprep.subr.mxu0 0.0
  %1173 = vmatpush1.msra.mxu0 0.0
  %1174 = vmatprep.subr.mxu0 0.0
  %1175 = vmatpush1.msra.mxu0 0.0
  %1176 = vmatprep.mubr.f32.mxu0 0.0
  %1177 = vmatmul.mubr.f32.gmra.mrb[0].mxu0 %v1039
  %v1178 = vpop.f32.mrb[0].mxu0
  %v1179 = vadd.f32 0.0, %v1178
  %v1180 = vpop.f32.mrb[0].mxu0
  %v1181 = vadd.f32 0.0, %v1180
  %1182 = vdwg.mxu0
  %v1183 = vadd.f32 %v1013, %v1108
  %v1184 = vadd.f32 %v1014, %v1110
  %v1185 = vadd.f32 %v1015, %v1179
  %v1186 = vadd.f32 %v1016, %v1181
  %s1187 = scalar_lea.vmem %s1, 56
  %v1188 = vld [vmem:[%s1187] sm:$0xff]
  %1189 = vrot.lane.b32.xlu0 %v14, 110
  %v1190 = vpop.permute.xlu0 %1189
  %1191 = vrot.lane.b32.xlu0 %v15, 110
  %v1192 = vpop.permute.xlu0 %1191
  %1193 = vrot.lane.b32.xlu0 %v16, 110
  %v1194 = vpop.permute.xlu0 %1193
  %1195 = vrot.lane.b32.xlu0 %v17, 110
  %v1196 = vpop.permute.xlu0 %1195
  %1197 = vrot.lane.b32.xlu0 %v18, 110
  %v1198 = vpop.permute.xlu0 %1197
  %vm1199 = vcmask 900096
  %v1200 = vsel %vm1199, %v1190, %v1192
  %v1201 = vsel %vm1199, %v1192, %v1194
  %v1202 = vsel %vm1199, %v1194, %v1196
  %v1203 = vsel %vm1199, %v1196, %v1198
  %v1209 = vsel %vm46, %v1188, 0
  %1211 = vmatprep.subr.mxu0 %v1201
  %1212 = vmatpush1.msra.mxu0 %v1200
  %1213 = vmatprep.subr.mxu0 0.0
  %1214 = vmatpush1.msra.mxu0 0.0
  %1215 = vmatprep.subr.mxu0 0.0
  %1216 = vmatpush1.msra.mxu0 0.0
  %1217 = vmatprep.subr.mxu0 0.0
  %1218 = vmatpush1.msra.mxu0 0.0
  %1219 = vmatprep.subr.mxu0 0.0
  %1220 = vmatpush1.msra.mxu0 0.0
  %1221 = vmatprep.subr.mxu0 0.0
  %1222 = vmatpush1.msra.mxu0 0.0
  %1223 = vmatprep.subr.mxu0 0.0
  %1224 = vmatpush1.msra.mxu0 0.0
  %1225 = vmatprep.subr.mxu0 0.0
  %1226 = vmatpush1.msra.mxu0 0.0
  %1227 = vmatprep.subr.mxu0 0.0
  %1228 = vmatpush1.msra.mxu0 0.0
  %1229 = vmatprep.subr.mxu0 0.0
  %1230 = vmatpush1.msra.mxu0 0.0
  %1231 = vmatprep.subr.mxu0 0.0
  %1232 = vmatpush1.msra.mxu0 0.0
  %1233 = vmatprep.subr.mxu0 0.0
  %1234 = vmatpush1.msra.mxu0 0.0
  %1235 = vmatprep.subr.mxu0 0.0
  %1236 = vmatpush1.msra.mxu0 0.0
  %1237 = vmatprep.subr.mxu0 0.0
  %1238 = vmatpush1.msra.mxu0 0.0
  %1239 = vmatprep.subr.mxu0 0.0
  %1240 = vmatpush1.msra.mxu0 0.0
  %1241 = vmatprep.subr.mxu0 0.0
  %1242 = vmatpush1.msra.mxu0 0.0
  %1243 = vmatprep.subr.mxu0 0.0
  %1244 = vmatpush1.msra.mxu0 0.0
  %1245 = vmatprep.subr.mxu0 0.0
  %1246 = vmatpush1.msra.mxu0 0.0
  %1247 = vmatprep.subr.mxu0 0.0
  %1248 = vmatpush1.msra.mxu0 0.0
  %1249 = vmatprep.subr.mxu0 0.0
  %1250 = vmatpush1.msra.mxu0 0.0
  %1251 = vmatprep.subr.mxu0 0.0
  %1252 = vmatpush1.msra.mxu0 0.0
  %1253 = vmatprep.subr.mxu0 0.0
  %1254 = vmatpush1.msra.mxu0 0.0
  %1255 = vmatprep.subr.mxu0 0.0
  %1256 = vmatpush1.msra.mxu0 0.0
  %1257 = vmatprep.subr.mxu0 0.0
  %1258 = vmatpush1.msra.mxu0 0.0
  %1259 = vmatprep.subr.mxu0 0.0
  %1260 = vmatpush1.msra.mxu0 0.0
  %1261 = vmatprep.subr.mxu0 0.0
  %1262 = vmatpush1.msra.mxu0 0.0
  %1263 = vmatprep.subr.mxu0 0.0
  %1264 = vmatpush1.msra.mxu0 0.0
  %1265 = vmatprep.subr.mxu0 0.0
  %1266 = vmatpush1.msra.mxu0 0.0
  %1267 = vmatprep.subr.mxu0 0.0
  %1268 = vmatpush1.msra.mxu0 0.0
  %1269 = vmatprep.subr.mxu0 0.0
  %1270 = vmatpush1.msra.mxu0 0.0
  %1271 = vmatprep.subr.mxu0 0.0
  %1272 = vmatpush1.msra.mxu0 0.0
  %1273 = vmatprep.subr.mxu0 0.0
  %1274 = vmatpush1.msra.mxu0 0.0
  %1275 = vmatprep.mubr.f32.mxu0 0.0
  %1276 = vmatmul.mubr.f32.gmra.mrb[0].mxu0 %v1209
  %v1277 = vpop.f32.mrb[0].mxu0
  %v1278 = vadd.f32 0.0, %v1277
  %v1279 = vpop.f32.mrb[0].mxu0
  %v1280 = vadd.f32 0.0, %v1279
  %1281 = vdwg.mxu0
  %1282 = vmatprep.subr.mxu0 %v1203
  %1283 = vmatpush1.msra.mxu0 %v1202
  %1284 = vmatprep.subr.mxu0 0.0
  %1285 = vmatpush1.msra.mxu0 0.0
  %1286 = vmatprep.subr.mxu0 0.0
  %1287 = vmatpush1.msra.mxu0 0.0
  %1288 = vmatprep.subr.mxu0 0.0
  %1289 = vmatpush1.msra.mxu0 0.0
  %1290 = vmatprep.subr.mxu0 0.0
  %1291 = vmatpush1.msra.mxu0 0.0
  %1292 = vmatprep.subr.mxu0 0.0
  %1293 = vmatpush1.msra.mxu0 0.0
  %1294 = vmatprep.subr.mxu0 0.0
  %1295 = vmatpush1.msra.mxu0 0.0
  %1296 = vmatprep.subr.mxu0 0.0
  %1297 = vmatpush1.msra.mxu0 0.0
  %1298 = vmatprep.subr.mxu0 0.0
  %1299 = vmatpush1.msra.mxu0 0.0
  %1300 = vmatprep.subr.mxu0 0.0
  %1301 = vmatpush1.msra.mxu0 0.0
  %1302 = vmatprep.subr.mxu0 0.0
  %1303 = vmatpush1.msra.mxu0 0.0
  %1304 = vmatprep.subr.mxu0 0.0
  %1305 = vmatpush1.msra.mxu0 0.0
  %1306 = vmatprep.subr.mxu0 0.0
  %1307 = vmatpush1.msra.mxu0 0.0
  %1308 = vmatprep.subr.mxu0 0.0
  %1309 = vmatpush1.msra.mxu0 0.0
  %1310 = vmatprep.subr.mxu0 0.0
  %1311 = vmatpush1.msra.mxu0 0.0
  %1312 = vmatprep.subr.mxu0 0.0
  %1313 = vmatpush1.msra.mxu0 0.0
  %1314 = vmatprep.subr.mxu0 0.0
  %1315 = vmatpush1.msra.mxu0 0.0
  %1316 = vmatprep.subr.mxu0 0.0
  %1317 = vmatpush1.msra.mxu0 0.0
  %1318 = vmatprep.subr.mxu0 0.0
  %1319 = vmatpush1.msra.mxu0 0.0
  %1320 = vmatprep.subr.mxu0 0.0
  %1321 = vmatpush1.msra.mxu0 0.0
  %1322 = vmatprep.subr.mxu0 0.0
  %1323 = vmatpush1.msra.mxu0 0.0
  %1324 = vmatprep.subr.mxu0 0.0
  %1325 = vmatpush1.msra.mxu0 0.0
  %1326 = vmatprep.subr.mxu0 0.0
  %1327 = vmatpush1.msra.mxu0 0.0
  %1328 = vmatprep.subr.mxu0 0.0
  %1329 = vmatpush1.msra.mxu0 0.0
  %1330 = vmatprep.subr.mxu0 0.0
  %1331 = vmatpush1.msra.mxu0 0.0
  %1332 = vmatprep.subr.mxu0 0.0
  %1333 = vmatpush1.msra.mxu0 0.0
  %1334 = vmatprep.subr.mxu0 0.0
  %1335 = vmatpush1.msra.mxu0 0.0
  %1336 = vmatprep.subr.mxu0 0.0
  %1337 = vmatpush1.msra.mxu0 0.0
  %1338 = vmatprep.subr.mxu0 0.0
  %1339 = vmatpush1.msra.mxu0 0.0
  %1340 = vmatprep.subr.mxu0 0.0
  %1341 = vmatpush1.msra.mxu0 0.0
  %1342 = vmatprep.subr.mxu0 0.0
  %1343 = vmatpush1.msra.mxu0 0.0
  %1344 = vmatprep.subr.mxu0 0.0
  %1345 = vmatpush1.msra.mxu0 0.0
  %1346 = vmatprep.mubr.f32.mxu0 0.0
  %1347 = vmatmul.mubr.f32.gmra.mrb[0].mxu0 %v1209
  %v1348 = vpop.f32.mrb[0].mxu0
  %v1349 = vadd.f32 0.0, %v1348
  %v1350 = vpop.f32.mrb[0].mxu0
  %v1351 = vadd.f32 0.0, %v1350
  %1352 = vdwg.mxu0
  %v1353 = vadd.f32 %v1183, %v1278
  %v1354 = vadd.f32 %v1184, %v1280
  %v1355 = vadd.f32 %v1185, %v1349
  %v1356 = vadd.f32 %v1186, %v1351
  %s1357 = scalar_lea.vmem %s1, 64
  %v1358 = vld [vmem:[%s1357] sm:$0xff]
  %1359 = vrot.lane.b32.xlu0 %v14, 109
  %v1360 = vpop.permute.xlu0 %1359
  %1361 = vrot.lane.b32.xlu0 %v15, 109
  %v1362 = vpop.permute.xlu0 %1361
  %1363 = vrot.lane.b32.xlu0 %v16, 109
  %v1364 = vpop.permute.xlu0 %1363
  %1365 = vrot.lane.b32.xlu0 %v17, 109
  %v1366 = vpop.permute.xlu0 %1365
  %1367 = vrot.lane.b32.xlu0 %v18, 109
  %v1368 = vpop.permute.xlu0 %1367
  %vm1369 = vcmask 891904
  %v1370 = vsel %vm1369, %v1360, %v1362
  %v1371 = vsel %vm1369, %v1362, %v1364
  %v1372 = vsel %vm1369, %v1364, %v1366
  %v1373 = vsel %vm1369, %v1366, %v1368
  %v1379 = vsel %vm46, %v1358, 0
  %1381 = vmatprep.subr.mxu0 %v1371
  %1382 = vmatpush1.msra.mxu0 %v1370
  %1383 = vmatprep.subr.mxu0 0.0
  %1384 = vmatpush1.msra.mxu0 0.0
  %1385 = vmatprep.subr.mxu0 0.0
  %1386 = vmatpush1.msra.mxu0 0.0
  %1387 = vmatprep.subr.mxu0 0.0
  %1388 = vmatpush1.msra.mxu0 0.0
  %1389 = vmatprep.subr.mxu0 0.0
  %1390 = vmatpush1.msra.mxu0 0.0
  %1391 = vmatprep.subr.mxu0 0.0
  %1392 = vmatpush1.msra.mxu0 0.0
  %1393 = vmatprep.subr.mxu0 0.0
  %1394 = vmatpush1.msra.mxu0 0.0
  %1395 = vmatprep.subr.mxu0 0.0
  %1396 = vmatpush1.msra.mxu0 0.0
  %1397 = vmatprep.subr.mxu0 0.0
  %1398 = vmatpush1.msra.mxu0 0.0
  %1399 = vmatprep.subr.mxu0 0.0
  %1400 = vmatpush1.msra.mxu0 0.0
  %1401 = vmatprep.subr.mxu0 0.0
  %1402 = vmatpush1.msra.mxu0 0.0
  %1403 = vmatprep.subr.mxu0 0.0
  %1404 = vmatpush1.msra.mxu0 0.0
  %1405 = vmatprep.subr.mxu0 0.0
  %1406 = vmatpush1.msra.mxu0 0.0
  %1407 = vmatprep.subr.mxu0 0.0
  %1408 = vmatpush1.msra.mxu0 0.0
  %1409 = vmatprep.subr.mxu0 0.0
  %1410 = vmatpush1.msra.mxu0 0.0
  %1411 = vmatprep.subr.mxu0 0.0
  %1412 = vmatpush1.msra.mxu0 0.0
  %1413 = vmatprep.subr.mxu0 0.0
  %1414 = vmatpush1.msra.mxu0 0.0
  %1415 = vmatprep.subr.mxu0 0.0
  %1416 = vmatpush1.msra.mxu0 0.0
  %1417 = vmatprep.subr.mxu0 0.0
  %1418 = vmatpush1.msra.mxu0 0.0
  %1419 = vmatprep.subr.mxu0 0.0
  %1420 = vmatpush1.msra.mxu0 0.0
  %1421 = vmatprep.subr.mxu0 0.0
  %1422 = vmatpush1.msra.mxu0 0.0
  %1423 = vmatprep.subr.mxu0 0.0
  %1424 = vmatpush1.msra.mxu0 0.0
  %1425 = vmatprep.subr.mxu0 0.0
  %1426 = vmatpush1.msra.mxu0 0.0
  %1427 = vmatprep.subr.mxu0 0.0
  %1428 = vmatpush1.msra.mxu0 0.0
  %1429 = vmatprep.subr.mxu0 0.0
  %1430 = vmatpush1.msra.mxu0 0.0
  %1431 = vmatprep.subr.mxu0 0.0
  %1432 = vmatpush1.msra.mxu0 0.0
  %1433 = vmatprep.subr.mxu0 0.0
  %1434 = vmatpush1.msra.mxu0 0.0
  %1435 = vmatprep.subr.mxu0 0.0
  %1436 = vmatpush1.msra.mxu0 0.0
  %1437 = vmatprep.subr.mxu0 0.0
  %1438 = vmatpush1.msra.mxu0 0.0
  %1439 = vmatprep.subr.mxu0 0.0
  %1440 = vmatpush1.msra.mxu0 0.0
  %1441 = vmatprep.subr.mxu0 0.0
  %1442 = vmatpush1.msra.mxu0 0.0
  %1443 = vmatprep.subr.mxu0 0.0
  %1444 = vmatpush1.msra.mxu0 0.0
  %1445 = vmatprep.mubr.f32.mxu0 0.0
  %1446 = vmatmul.mubr.f32.gmra.mrb[0].mxu0 %v1379
  %v1447 = vpop.f32.mrb[0].mxu0
  %v1448 = vadd.f32 0.0, %v1447
  %v1449 = vpop.f32.mrb[0].mxu0
  %v1450 = vadd.f32 0.0, %v1449
  %1451 = vdwg.mxu0
  %1452 = vmatprep.subr.mxu0 %v1373
  %1453 = vmatpush1.msra.mxu0 %v1372
  %1454 = vmatprep.subr.mxu0 0.0
  %1455 = vmatpush1.msra.mxu0 0.0
  %1456 = vmatprep.subr.mxu0 0.0
  %1457 = vmatpush1.msra.mxu0 0.0
  %1458 = vmatprep.subr.mxu0 0.0
  %1459 = vmatpush1.msra.mxu0 0.0
  %1460 = vmatprep.subr.mxu0 0.0
  %1461 = vmatpush1.msra.mxu0 0.0
  %1462 = vmatprep.subr.mxu0 0.0
  %1463 = vmatpush1.msra.mxu0 0.0
  %1464 = vmatprep.subr.mxu0 0.0
  %1465 = vmatpush1.msra.mxu0 0.0
  %1466 = vmatprep.subr.mxu0 0.0
  %1467 = vmatpush1.msra.mxu0 0.0
  %1468 = vmatprep.subr.mxu0 0.0
  %1469 = vmatpush1.msra.mxu0 0.0
  %1470 = vmatprep.subr.mxu0 0.0
  %1471 = vmatpush1.msra.mxu0 0.0
  %1472 = vmatprep.subr.mxu0 0.0
  %1473 = vmatpush1.msra.mxu0 0.0
  %1474 = vmatprep.subr.mxu0 0.0
  %1475 = vmatpush1.msra.mxu0 0.0
  %1476 = vmatprep.subr.mxu0 0.0
  %1477 = vmatpush1.msra.mxu0 0.0
  %1478 = vmatprep.subr.mxu0 0.0
  %1479 = vmatpush1.msra.mxu0 0.0
  %1480 = vmatprep.subr.mxu0 0.0
  %1481 = vmatpush1.msra.mxu0 0.0
  %1482 = vmatprep.subr.mxu0 0.0
  %1483 = vmatpush1.msra.mxu0 0.0
  %1484 = vmatprep.subr.mxu0 0.0
  %1485 = vmatpush1.msra.mxu0 0.0
  %1486 = vmatprep.subr.mxu0 0.0
  %1487 = vmatpush1.msra.mxu0 0.0
  %1488 = vmatprep.subr.mxu0 0.0
  %1489 = vmatpush1.msra.mxu0 0.0
  %1490 = vmatprep.subr.mxu0 0.0
  %1491 = vmatpush1.msra.mxu0 0.0
  %1492 = vmatprep.subr.mxu0 0.0
  %1493 = vmatpush1.msra.mxu0 0.0
  %1494 = vmatprep.subr.mxu0 0.0
  %1495 = vmatpush1.msra.mxu0 0.0
  %1496 = vmatprep.subr.mxu0 0.0
  %1497 = vmatpush1.msra.mxu0 0.0
  %1498 = vmatprep.subr.mxu0 0.0
  %1499 = vmatpush1.msra.mxu0 0.0
  %1500 = vmatprep.subr.mxu0 0.0
  %1501 = vmatpush1.msra.mxu0 0.0
  %1502 = vmatprep.subr.mxu0 0.0
  %1503 = vmatpush1.msra.mxu0 0.0
  %1504 = vmatprep.subr.mxu0 0.0
  %1505 = vmatpush1.msra.mxu0 0.0
  %1506 = vmatprep.subr.mxu0 0.0
  %1507 = vmatpush1.msra.mxu0 0.0
  %1508 = vmatprep.subr.mxu0 0.0
  %1509 = vmatpush1.msra.mxu0 0.0
  %1510 = vmatprep.subr.mxu0 0.0
  %1511 = vmatpush1.msra.mxu0 0.0
  %1512 = vmatprep.subr.mxu0 0.0
  %1513 = vmatpush1.msra.mxu0 0.0
  %1514 = vmatprep.subr.mxu0 0.0
  %1515 = vmatpush1.msra.mxu0 0.0
  %1516 = vmatprep.mubr.f32.mxu0 0.0
  %1517 = vmatmul.mubr.f32.gmra.mrb[0].mxu0 %v1379
  %v1518 = vpop.f32.mrb[0].mxu0
  %v1519 = vadd.f32 0.0, %v1518
  %v1520 = vpop.f32.mrb[0].mxu0
  %v1521 = vadd.f32 0.0, %v1520
  %1522 = vdwg.mxu0
  %v1523 = vadd.f32 %v1353, %v1448
  %v1524 = vadd.f32 %v1354, %v1450
  %v1525 = vadd.f32 %v1355, %v1519
  %v1526 = vadd.f32 %v1356, %v1521
  %s1527 = scalar_lea.vmem %s1, 72
  %v1528 = vld [vmem:[%s1527] sm:$0xff]
  %1529 = vrot.lane.b32.xlu0 %v14, 108
  %v1530 = vpop.permute.xlu0 %1529
  %1531 = vrot.lane.b32.xlu0 %v15, 108
  %v1532 = vpop.permute.xlu0 %1531
  %1533 = vrot.lane.b32.xlu0 %v16, 108
  %v1534 = vpop.permute.xlu0 %1533
  %1535 = vrot.lane.b32.xlu0 %v17, 108
  %v1536 = vpop.permute.xlu0 %1535
  %1537 = vrot.lane.b32.xlu0 %v18, 108
  %v1538 = vpop.permute.xlu0 %1537
  %vm1539 = vcmask 883712
  %v1540 = vsel %vm1539, %v1530, %v1532
  %v1541 = vsel %vm1539, %v1532, %v1534
  %v1542 = vsel %vm1539, %v1534, %v1536
  %v1543 = vsel %vm1539, %v1536, %v1538
  %v1549 = vsel %vm46, %v1528, 0
  %1551 = vmatprep.subr.mxu0 %v1541
  %1552 = vmatpush1.msra.mxu0 %v1540
  %1553 = vmatprep.subr.mxu0 0.0
  %1554 = vmatpush1.msra.mxu0 0.0
  %1555 = vmatprep.subr.mxu0 0.0
  %1556 = vmatpush1.msra.mxu0 0.0
  %1557 = vmatprep.subr.mxu0 0.0
  %1558 = vmatpush1.msra.mxu0 0.0
  %1559 = vmatprep.subr.mxu0 0.0
  %1560 = vmatpush1.msra.mxu0 0.0
  %1561 = vmatprep.subr.mxu0 0.0
  %1562 = vmatpush1.msra.mxu0 0.0
  %1563 = vmatprep.subr.mxu0 0.0
  %1564 = vmatpush1.msra.mxu0 0.0
  %1565 = vmatprep.subr.mxu0 0.0
  %1566 = vmatpush1.msra.mxu0 0.0
  %1567 = vmatprep.subr.mxu0 0.0
  %1568 = vmatpush1.msra.mxu0 0.0
  %1569 = vmatprep.subr.mxu0 0.0
  %1570 = vmatpush1.msra.mxu0 0.0
  %1571 = vmatprep.subr.mxu0 0.0
  %1572 = vmatpush1.msra.mxu0 0.0
  %1573 = vmatprep.subr.mxu0 0.0
  %1574 = vmatpush1.msra.mxu0 0.0
  %1575 = vmatprep.subr.mxu0 0.0
  %1576 = vmatpush1.msra.mxu0 0.0
  %1577 = vmatprep.subr.mxu0 0.0
  %1578 = vmatpush1.msra.mxu0 0.0
  %1579 = vmatprep.subr.mxu0 0.0
  %1580 = vmatpush1.msra.mxu0 0.0
  %1581 = vmatprep.subr.mxu0 0.0
  %1582 = vmatpush1.msra.mxu0 0.0
  %1583 = vmatprep.subr.mxu0 0.0
  %1584 = vmatpush1.msra.mxu0 0.0
  %1585 = vmatprep.subr.mxu0 0.0
  %1586 = vmatpush1.msra.mxu0 0.0
  %1587 = vmatprep.subr.mxu0 0.0
  %1588 = vmatpush1.msra.mxu0 0.0
  %1589 = vmatprep.subr.mxu0 0.0
  %1590 = vmatpush1.msra.mxu0 0.0
  %1591 = vmatprep.subr.mxu0 0.0
  %1592 = vmatpush1.msra.mxu0 0.0
  %1593 = vmatprep.subr.mxu0 0.0
  %1594 = vmatpush1.msra.mxu0 0.0
  %1595 = vmatprep.subr.mxu0 0.0
  %1596 = vmatpush1.msra.mxu0 0.0
  %1597 = vmatprep.subr.mxu0 0.0
  %1598 = vmatpush1.msra.mxu0 0.0
  %1599 = vmatprep.subr.mxu0 0.0
  %1600 = vmatpush1.msra.mxu0 0.0
  %1601 = vmatprep.subr.mxu0 0.0
  %1602 = vmatpush1.msra.mxu0 0.0
  %1603 = vmatprep.subr.mxu0 0.0
  %1604 = vmatpush1.msra.mxu0 0.0
  %1605 = vmatprep.subr.mxu0 0.0
  %1606 = vmatpush1.msra.mxu0 0.0
  %1607 = vmatprep.subr.mxu0 0.0
  %1608 = vmatpush1.msra.mxu0 0.0
  %1609 = vmatprep.subr.mxu0 0.0
  %1610 = vmatpush1.msra.mxu0 0.0
  %1611 = vmatprep.subr.mxu0 0.0
  %1612 = vmatpush1.msra.mxu0 0.0
  %1613 = vmatprep.subr.mxu0 0.0
  %1614 = vmatpush1.msra.mxu0 0.0
  %1615 = vmatprep.mubr.f32.mxu0 0.0
  %1616 = vmatmul.mubr.f32.gmra.mrb[0].mxu0 %v1549
  %v1617 = vpop.f32.mrb[0].mxu0
  %v1618 = vadd.f32 0.0, %v1617
  %v1619 = vpop.f32.mrb[0].mxu0
  %v1620 = vadd.f32 0.0, %v1619
  %1621 = vdwg.mxu0
  %1622 = vmatprep.subr.mxu0 %v1543
  %1623 = vmatpush1.msra.mxu0 %v1542
  %1624 = vmatprep.subr.mxu0 0.0
  %1625 = vmatpush1.msra.mxu0 0.0
  %1626 = vmatprep.subr.mxu0 0.0
  %1627 = vmatpush1.msra.mxu0 0.0
  %1628 = vmatprep.subr.mxu0 0.0
  %1629 = vmatpush1.msra.mxu0 0.0
  %1630 = vmatprep.subr.mxu0 0.0
  %1631 = vmatpush1.msra.mxu0 0.0
  %1632 = vmatprep.subr.mxu0 0.0
  %1633 = vmatpush1.msra.mxu0 0.0
  %1634 = vmatprep.subr.mxu0 0.0
  %1635 = vmatpush1.msra.mxu0 0.0
  %1636 = vmatprep.subr.mxu0 0.0
  %1637 = vmatpush1.msra.mxu0 0.0
  %1638 = vmatprep.subr.mxu0 0.0
  %1639 = vmatpush1.msra.mxu0 0.0
  %1640 = vmatprep.subr.mxu0 0.0
  %1641 = vmatpush1.msra.mxu0 0.0
  %1642 = vmatprep.subr.mxu0 0.0
  %1643 = vmatpush1.msra.mxu0 0.0
  %1644 = vmatprep.subr.mxu0 0.0
  %1645 = vmatpush1.msra.mxu0 0.0
  %1646 = vmatprep.subr.mxu0 0.0
  %1647 = vmatpush1.msra.mxu0 0.0
  %1648 = vmatprep.subr.mxu0 0.0
  %1649 = vmatpush1.msra.mxu0 0.0
  %1650 = vmatprep.subr.mxu0 0.0
  %1651 = vmatpush1.msra.mxu0 0.0
  %1652 = vmatprep.subr.mxu0 0.0
  %1653 = vmatpush1.msra.mxu0 0.0
  %1654 = vmatprep.subr.mxu0 0.0
  %1655 = vmatpush1.msra.mxu0 0.0
  %1656 = vmatprep.subr.mxu0 0.0
  %1657 = vmatpush1.msra.mxu0 0.0
  %1658 = vmatprep.subr.mxu0 0.0
  %1659 = vmatpush1.msra.mxu0 0.0
  %1660 = vmatprep.subr.mxu0 0.0
  %1661 = vmatpush1.msra.mxu0 0.0
  %1662 = vmatprep.subr.mxu0 0.0
  %1663 = vmatpush1.msra.mxu0 0.0
  %1664 = vmatprep.subr.mxu0 0.0
  %1665 = vmatpush1.msra.mxu0 0.0
  %1666 = vmatprep.subr.mxu0 0.0
  %1667 = vmatpush1.msra.mxu0 0.0
  %1668 = vmatprep.subr.mxu0 0.0
  %1669 = vmatpush1.msra.mxu0 0.0
  %1670 = vmatprep.subr.mxu0 0.0
  %1671 = vmatpush1.msra.mxu0 0.0
  %1672 = vmatprep.subr.mxu0 0.0
  %1673 = vmatpush1.msra.mxu0 0.0
  %1674 = vmatprep.subr.mxu0 0.0
  %1675 = vmatpush1.msra.mxu0 0.0
  %1676 = vmatprep.subr.mxu0 0.0
  %1677 = vmatpush1.msra.mxu0 0.0
  %1678 = vmatprep.subr.mxu0 0.0
  %1679 = vmatpush1.msra.mxu0 0.0
  %1680 = vmatprep.subr.mxu0 0.0
  %1681 = vmatpush1.msra.mxu0 0.0
  %1682 = vmatprep.subr.mxu0 0.0
  %1683 = vmatpush1.msra.mxu0 0.0
  %1684 = vmatprep.subr.mxu0 0.0
  %1685 = vmatpush1.msra.mxu0 0.0
  %1686 = vmatprep.mubr.f32.mxu0 0.0
  %1687 = vmatmul.mubr.f32.gmra.mrb[0].mxu0 %v1549
  %v1688 = vpop.f32.mrb[0].mxu0
  %v1689 = vadd.f32 0.0, %v1688
  %v1690 = vpop.f32.mrb[0].mxu0
  %v1691 = vadd.f32 0.0, %v1690
  %1692 = vdwg.mxu0
  %v1693 = vadd.f32 %v1523, %v1618
  %v1694 = vadd.f32 %v1524, %v1620
  %v1695 = vadd.f32 %v1525, %v1689
  %v1696 = vadd.f32 %v1526, %v1691
  %s1697 = scalar_lea.vmem %s1, 80
  %v1698 = vld [vmem:[%s1697] sm:$0xff]
  %1699 = vrot.lane.b32.xlu0 %v14, 96
  %v1700 = vpop.permute.xlu0 %1699
  %1701 = vrot.lane.b32.xlu0 %v15, 96
  %v1702 = vpop.permute.xlu0 %1701
  %1703 = vrot.lane.b32.xlu0 %v16, 96
  %v1704 = vpop.permute.xlu0 %1703
  %1705 = vrot.lane.b32.xlu0 %v17, 96
  %v1706 = vpop.permute.xlu0 %1705
  %1707 = vrot.lane.b32.xlu0 %v18, 96
  %v1708 = vpop.permute.xlu0 %1707
  %vm1709 = vcmask 785408
  %v1710 = vsel %vm1709, %v1700, %v1702
  %v1711 = vsel %vm1709, %v1702, %v1704
  %v1712 = vsel %vm1709, %v1704, %v1706
  %v1713 = vsel %vm1709, %v1706, %v1708
  %v1719 = vsel %vm46, %v1698, 0
  %1721 = vmatprep.subr.mxu0 %v1711
  %1722 = vmatpush1.msra.mxu0 %v1710
  %1723 = vmatprep.subr.mxu0 0.0
  %1724 = vmatpush1.msra.mxu0 0.0
  %1725 = vmatprep.subr.mxu0 0.0
  %1726 = vmatpush1.msra.mxu0 0.0
  %1727 = vmatprep.subr.mxu0 0.0
  %1728 = vmatpush1.msra.mxu0 0.0
  %1729 = vmatprep.subr.mxu0 0.0
  %1730 = vmatpush1.msra.mxu0 0.0
  %1731 = vmatprep.subr.mxu0 0.0
  %1732 = vmatpush1.msra.mxu0 0.0
  %1733 = vmatprep.subr.mxu0 0.0
  %1734 = vmatpush1.msra.mxu0 0.0
  %1735 = vmatprep.subr.mxu0 0.0
  %1736 = vmatpush1.msra.mxu0 0.0
  %1737 = vmatprep.subr.mxu0 0.0
  %1738 = vmatpush1.msra.mxu0 0.0
  %1739 = vmatprep.subr.mxu0 0.0
  %1740 = vmatpush1.msra.mxu0 0.0
  %1741 = vmatprep.subr.mxu0 0.0
  %1742 = vmatpush1.msra.mxu0 0.0
  %1743 = vmatprep.subr.mxu0 0.0
  %1744 = vmatpush1.msra.mxu0 0.0
  %1745 = vmatprep.subr.mxu0 0.0
  %1746 = vmatpush1.msra.mxu0 0.0
  %1747 = vmatprep.subr.mxu0 0.0
  %1748 = vmatpush1.msra.mxu0 0.0
  %1749 = vmatprep.subr.mxu0 0.0
  %1750 = vmatpush1.msra.mxu0 0.0
  %1751 = vmatprep.subr.mxu0 0.0
  %1752 = vmatpush1.msra.mxu0 0.0
  %1753 = vmatprep.subr.mxu0 0.0
  %1754 = vmatpush1.msra.mxu0 0.0
  %1755 = vmatprep.subr.mxu0 0.0
  %1756 = vmatpush1.msra.mxu0 0.0
  %1757 = vmatprep.subr.mxu0 0.0
  %1758 = vmatpush1.msra.mxu0 0.0
  %1759 = vmatprep.subr.mxu0 0.0
  %1760 = vmatpush1.msra.mxu0 0.0
  %1761 = vmatprep.subr.mxu0 0.0
  %1762 = vmatpush1.msra.mxu0 0.0
  %1763 = vmatprep.subr.mxu0 0.0
  %1764 = vmatpush1.msra.mxu0 0.0
  %1765 = vmatprep.subr.mxu0 0.0
  %1766 = vmatpush1.msra.mxu0 0.0
  %1767 = vmatprep.subr.mxu0 0.0
  %1768 = vmatpush1.msra.mxu0 0.0
  %1769 = vmatprep.subr.mxu0 0.0
  %1770 = vmatpush1.msra.mxu0 0.0
  %1771 = vmatprep.subr.mxu0 0.0
  %1772 = vmatpush1.msra.mxu0 0.0
  %1773 = vmatprep.subr.mxu0 0.0
  %1774 = vmatpush1.msra.mxu0 0.0
  %1775 = vmatprep.subr.mxu0 0.0
  %1776 = vmatpush1.msra.mxu0 0.0
  %1777 = vmatprep.subr.mxu0 0.0
  %1778 = vmatpush1.msra.mxu0 0.0
  %1779 = vmatprep.subr.mxu0 0.0
  %1780 = vmatpush1.msra.mxu0 0.0
  %1781 = vmatprep.subr.mxu0 0.0
  %1782 = vmatpush1.msra.mxu0 0.0
  %1783 = vmatprep.subr.mxu0 0.0
  %1784 = vmatpush1.msra.mxu0 0.0
  %1785 = vmatprep.mubr.f32.mxu0 0.0
  %1786 = vmatmul.mubr.f32.gmra.mrb[0].mxu0 %v1719
  %v1787 = vpop.f32.mrb[0].mxu0
  %v1788 = vadd.f32 0.0, %v1787
  %v1789 = vpop.f32.mrb[0].mxu0
  %v1790 = vadd.f32 0.0, %v1789
  %1791 = vdwg.mxu0
  %1792 = vmatprep.subr.mxu0 %v1713
  %1793 = vmatpush1.msra.mxu0 %v1712
  %1794 = vmatprep.subr.mxu0 0.0
  %1795 = vmatpush1.msra.mxu0 0.0
  %1796 = vmatprep.subr.mxu0 0.0
  %1797 = vmatpush1.msra.mxu0 0.0
  %1798 = vmatprep.subr.mxu0 0.0
  %1799 = vmatpush1.msra.mxu0 0.0
  %1800 = vmatprep.subr.mxu0 0.0
  %1801 = vmatpush1.msra.mxu0 0.0
  %1802 = vmatprep.subr.mxu0 0.0
  %1803 = vmatpush1.msra.mxu0 0.0
  %1804 = vmatprep.subr.mxu0 0.0
  %1805 = vmatpush1.msra.mxu0 0.0
  %1806 = vmatprep.subr.mxu0 0.0
  %1807 = vmatpush1.msra.mxu0 0.0
  %1808 = vmatprep.subr.mxu0 0.0
  %1809 = vmatpush1.msra.mxu0 0.0
  %1810 = vmatprep.subr.mxu0 0.0
  %1811 = vmatpush1.msra.mxu0 0.0
  %1812 = vmatprep.subr.mxu0 0.0
  %1813 = vmatpush1.msra.mxu0 0.0
  %1814 = vmatprep.subr.mxu0 0.0
  %1815 = vmatpush1.msra.mxu0 0.0
  %1816 = vmatprep.subr.mxu0 0.0
  %1817 = vmatpush1.msra.mxu0 0.0
  %1818 = vmatprep.subr.mxu0 0.0
  %1819 = vmatpush1.msra.mxu0 0.0
  %1820 = vmatprep.subr.mxu0 0.0
  %1821 = vmatpush1.msra.mxu0 0.0
  %1822 = vmatprep.subr.mxu0 0.0
  %1823 = vmatpush1.msra.mxu0 0.0
  %1824 = vmatprep.subr.mxu0 0.0
  %1825 = vmatpush1.msra.mxu0 0.0
  %1826 = vmatprep.subr.mxu0 0.0
  %1827 = vmatpush1.msra.mxu0 0.0
  %1828 = vmatprep.subr.mxu0 0.0
  %1829 = vmatpush1.msra.mxu0 0.0
  %1830 = vmatprep.subr.mxu0 0.0
  %1831 = vmatpush1.msra.mxu0 0.0
  %1832 = vmatprep.subr.mxu0 0.0
  %1833 = vmatpush1.msra.mxu0 0.0
  %1834 = vmatprep.subr.mxu0 0.0
  %1835 = vmatpush1.msra.mxu0 0.0
  %1836 = vmatprep.subr.mxu0 0.0
  %1837 = vmatpush1.msra.mxu0 0.0
  %1838 = vmatprep.subr.mxu0 0.0
  %1839 = vmatpush1.msra.mxu0 0.0
  %1840 = vmatprep.subr.mxu0 0.0
  %1841 = vmatpush1.msra.mxu0 0.0
  %1842 = vmatprep.subr.mxu0 0.0
  %1843 = vmatpush1.msra.mxu0 0.0
  %1844 = vmatprep.subr.mxu0 0.0
  %1845 = vmatpush1.msra.mxu0 0.0
  %1846 = vmatprep.subr.mxu0 0.0
  %1847 = vmatpush1.msra.mxu0 0.0
  %1848 = vmatprep.subr.mxu0 0.0
  %1849 = vmatpush1.msra.mxu0 0.0
  %1850 = vmatprep.subr.mxu0 0.0
  %1851 = vmatpush1.msra.mxu0 0.0
  %1852 = vmatprep.subr.mxu0 0.0
  %1853 = vmatpush1.msra.mxu0 0.0
  %1854 = vmatprep.subr.mxu0 0.0
  %1855 = vmatpush1.msra.mxu0 0.0
  %1856 = vmatprep.mubr.f32.mxu0 0.0
  %1857 = vmatmul.mubr.f32.gmra.mrb[0].mxu0 %v1719
  %v1858 = vpop.f32.mrb[0].mxu0
  %v1859 = vadd.f32 0.0, %v1858
  %v1860 = vpop.f32.mrb[0].mxu0
  %v1861 = vadd.f32 0.0, %v1860
  %1862 = vdwg.mxu0
  %v1863 = vadd.f32 %v1693, %v1788
  %v1864 = vadd.f32 %v1694, %v1790
  %v1865 = vadd.f32 %v1695, %v1859
  %v1866 = vadd.f32 %v1696, %v1861
  %s1867 = scalar_lea.vmem %s1, 88
  %v1868 = vld [vmem:[%s1867] sm:$0xff]
  %1869 = vrot.lane.b32.xlu0 %v14, 95
  %v1870 = vpop.permute.xlu0 %1869
  %1871 = vrot.lane.b32.xlu0 %v15, 95
  %v1872 = vpop.permute.xlu0 %1871
  %1873 = vrot.lane.b32.xlu0 %v16, 95
  %v1874 = vpop.permute.xlu0 %1873
  %1875 = vrot.lane.b32.xlu0 %v17, 95
  %v1876 = vpop.permute.xlu0 %1875
  %1877 = vrot.lane.b32.xlu0 %v18, 95
  %v1878 = vpop.permute.xlu0 %1877
  %vm1879 = vcmask 777216
  %v1880 = vsel %vm1879, %v1870, %v1872
  %v1881 = vsel %vm1879, %v1872, %v1874
  %v1882 = vsel %vm1879, %v1874, %v1876
  %v1883 = vsel %vm1879, %v1876, %v1878
  %v1889 = vsel %vm46, %v1868, 0
  %1891 = vmatprep.subr.mxu0 %v1881
  %1892 = vmatpush1.msra.mxu0 %v1880
  %1893 = vmatprep.subr.mxu0 0.0
  %1894 = vmatpush1.msra.mxu0 0.0
  %1895 = vmatprep.subr.mxu0 0.0
  %1896 = vmatpush1.msra.mxu0 0.0
  %1897 = vmatprep.subr.mxu0 0.0
  %1898 = vmatpush1.msra.mxu0 0.0
  %1899 = vmatprep.subr.mxu0 0.0
  %1900 = vmatpush1.msra.mxu0 0.0
  %1901 = vmatprep.subr.mxu0 0.0
  %1902 = vmatpush1.msra.mxu0 0.0
  %1903 = vmatprep.subr.mxu0 0.0
  %1904 = vmatpush1.msra.mxu0 0.0
  %1905 = vmatprep.subr.mxu0 0.0
  %1906 = vmatpush1.msra.mxu0 0.0
  %1907 = vmatprep.subr.mxu0 0.0
  %1908 = vmatpush1.msra.mxu0 0.0
  %1909 = vmatprep.subr.mxu0 0.0
  %1910 = vmatpush1.msra.mxu0 0.0
  %1911 = vmatprep.subr.mxu0 0.0
  %1912 = vmatpush1.msra.mxu0 0.0
  %1913 = vmatprep.subr.mxu0 0.0
  %1914 = vmatpush1.msra.mxu0 0.0
  %1915 = vmatprep.subr.mxu0 0.0
  %1916 = vmatpush1.msra.mxu0 0.0
  %1917 = vmatprep.subr.mxu0 0.0
  %1918 = vmatpush1.msra.mxu0 0.0
  %1919 = vmatprep.subr.mxu0 0.0
  %1920 = vmatpush1.msra.mxu0 0.0
  %1921 = vmatprep.subr.mxu0 0.0
  %1922 = vmatpush1.msra.mxu0 0.0
  %1923 = vmatprep.subr.mxu0 0.0
  %1924 = vmatpush1.msra.mxu0 0.0
  %1925 = vmatprep.subr.mxu0 0.0
  %1926 = vmatpush1.msra.mxu0 0.0
  %1927 = vmatprep.subr.mxu0 0.0
  %1928 = vmatpush1.msra.mxu0 0.0
  %1929 = vmatprep.subr.mxu0 0.0
  %1930 = vmatpush1.msra.mxu0 0.0
  %1931 = vmatprep.subr.mxu0 0.0
  %1932 = vmatpush1.msra.mxu0 0.0
  %1933 = vmatprep.subr.mxu0 0.0
  %1934 = vmatpush1.msra.mxu0 0.0
  %1935 = vmatprep.subr.mxu0 0.0
  %1936 = vmatpush1.msra.mxu0 0.0
  %1937 = vmatprep.subr.mxu0 0.0
  %1938 = vmatpush1.msra.mxu0 0.0
  %1939 = vmatprep.subr.mxu0 0.0
  %1940 = vmatpush1.msra.mxu0 0.0
  %1941 = vmatprep.subr.mxu0 0.0
  %1942 = vmatpush1.msra.mxu0 0.0
  %1943 = vmatprep.subr.mxu0 0.0
  %1944 = vmatpush1.msra.mxu0 0.0
  %1945 = vmatprep.subr.mxu0 0.0
  %1946 = vmatpush1.msra.mxu0 0.0
  %1947 = vmatprep.subr.mxu0 0.0
  %1948 = vmatpush1.msra.mxu0 0.0
  %1949 = vmatprep.subr.mxu0 0.0
  %1950 = vmatpush1.msra.mxu0 0.0
  %1951 = vmatprep.subr.mxu0 0.0
  %1952 = vmatpush1.msra.mxu0 0.0
  %1953 = vmatprep.subr.mxu0 0.0
  %1954 = vmatpush1.msra.mxu0 0.0
  %1955 = vmatprep.mubr.f32.mxu0 0.0
  %1956 = vmatmul.mubr.f32.gmra.mrb[0].mxu0 %v1889
  %v1957 = vpop.f32.mrb[0].mxu0
  %v1958 = vadd.f32 0.0, %v1957
  %v1959 = vpop.f32.mrb[0].mxu0
  %v1960 = vadd.f32 0.0, %v1959
  %1961 = vdwg.mxu0
  %1962 = vmatprep.subr.mxu0 %v1883
  %1963 = vmatpush1.msra.mxu0 %v1882
  %1964 = vmatprep.subr.mxu0 0.0
  %1965 = vmatpush1.msra.mxu0 0.0
  %1966 = vmatprep.subr.mxu0 0.0
  %1967 = vmatpush1.msra.mxu0 0.0
  %1968 = vmatprep.subr.mxu0 0.0
  %1969 = vmatpush1.msra.mxu0 0.0
  %1970 = vmatprep.subr.mxu0 0.0
  %1971 = vmatpush1.msra.mxu0 0.0
  %1972 = vmatprep.subr.mxu0 0.0
  %1973 = vmatpush1.msra.mxu0 0.0
  %1974 = vmatprep.subr.mxu0 0.0
  %1975 = vmatpush1.msra.mxu0 0.0
  %1976 = vmatprep.subr.mxu0 0.0
  %1977 = vmatpush1.msra.mxu0 0.0
  %1978 = vmatprep.subr.mxu0 0.0
  %1979 = vmatpush1.msra.mxu0 0.0
  %1980 = vmatprep.subr.mxu0 0.0
  %1981 = vmatpush1.msra.mxu0 0.0
  %1982 = vmatprep.subr.mxu0 0.0
  %1983 = vmatpush1.msra.mxu0 0.0
  %1984 = vmatprep.subr.mxu0 0.0
  %1985 = vmatpush1.msra.mxu0 0.0
  %1986 = vmatprep.subr.mxu0 0.0
  %1987 = vmatpush1.msra.mxu0 0.0
  %1988 = vmatprep.subr.mxu0 0.0
  %1989 = vmatpush1.msra.mxu0 0.0
  %1990 = vmatprep.subr.mxu0 0.0
  %1991 = vmatpush1.msra.mxu0 0.0
  %1992 = vmatprep.subr.mxu0 0.0
  %1993 = vmatpush1.msra.mxu0 0.0
  %1994 = vmatprep.subr.mxu0 0.0
  %1995 = vmatpush1.msra.mxu0 0.0
  %1996 = vmatprep.subr.mxu0 0.0
  %1997 = vmatpush1.msra.mxu0 0.0
  %1998 = vmatprep.subr.mxu0 0.0
  %1999 = vmatpush1.msra.mxu0 0.0
  %2000 = vmatprep.subr.mxu0 0.0
  %2001 = vmatpush1.msra.mxu0 0.0
  %2002 = vmatprep.subr.mxu0 0.0
  %2003 = vmatpush1.msra.mxu0 0.0
  %2004 = vmatprep.subr.mxu0 0.0
  %2005 = vmatpush1.msra.mxu0 0.0
  %2006 = vmatprep.subr.mxu0 0.0
  %2007 = vmatpush1.msra.mxu0 0.0
  %2008 = vmatprep.subr.mxu0 0.0
  %2009 = vmatpush1.msra.mxu0 0.0
  %2010 = vmatprep.subr.mxu0 0.0
  %2011 = vmatpush1.msra.mxu0 0.0
  %2012 = vmatprep.subr.mxu0 0.0
  %2013 = vmatpush1.msra.mxu0 0.0
  %2014 = vmatprep.subr.mxu0 0.0
  %2015 = vmatpush1.msra.mxu0 0.0
  %2016 = vmatprep.subr.mxu0 0.0
  %2017 = vmatpush1.msra.mxu0 0.0
  %2018 = vmatprep.subr.mxu0 0.0
  %2019 = vmatpush1.msra.mxu0 0.0
  %2020 = vmatprep.subr.mxu0 0.0
  %2021 = vmatpush1.msra.mxu0 0.0
  %2022 = vmatprep.subr.mxu0 0.0
  %2023 = vmatpush1.msra.mxu0 0.0
  %2024 = vmatprep.subr.mxu0 0.0
  %2025 = vmatpush1.msra.mxu0 0.0
  %2026 = vmatprep.mubr.f32.mxu0 0.0
  %2027 = vmatmul.mubr.f32.gmra.mrb[0].mxu0 %v1889
  %v2028 = vpop.f32.mrb[0].mxu0
  %v2029 = vadd.f32 0.0, %v2028
  %v2030 = vpop.f32.mrb[0].mxu0
  %v2031 = vadd.f32 0.0, %v2030
  %2032 = vdwg.mxu0
  %v2033 = vadd.f32 %v1863, %v1958
  %v2034 = vadd.f32 %v1864, %v1960
  %v2035 = vadd.f32 %v1865, %v2029
  %v2036 = vadd.f32 %v1866, %v2031
  %s2037 = scalar_lea.vmem %s1, 96
  %v2038 = vld [vmem:[%s2037] sm:$0xff]
  %2039 = vrot.lane.b32.xlu0 %v14, 94
  %v2040 = vpop.permute.xlu0 %2039
  %2041 = vrot.lane.b32.xlu0 %v15, 94
  %v2042 = vpop.permute.xlu0 %2041
  %2043 = vrot.lane.b32.xlu0 %v16, 94
  %v2044 = vpop.permute.xlu0 %2043
  %2045 = vrot.lane.b32.xlu0 %v17, 94
  %v2046 = vpop.permute.xlu0 %2045
  %2047 = vrot.lane.b32.xlu0 %v18, 94
  %v2048 = vpop.permute.xlu0 %2047
  %vm2049 = vcmask 769024
  %v2050 = vsel %vm2049, %v2040, %v2042
  %v2051 = vsel %vm2049, %v2042, %v2044
  %v2052 = vsel %vm2049, %v2044, %v2046
  %v2053 = vsel %vm2049, %v2046, %v2048
  %v2059 = vsel %vm46, %v2038, 0
  %2061 = vmatprep.subr.mxu0 %v2051
  %2062 = vmatpush1.msra.mxu0 %v2050
  %2063 = vmatprep.subr.mxu0 0.0
  %2064 = vmatpush1.msra.mxu0 0.0
  %2065 = vmatprep.subr.mxu0 0.0
  %2066 = vmatpush1.msra.mxu0 0.0
  %2067 = vmatprep.subr.mxu0 0.0
  %2068 = vmatpush1.msra.mxu0 0.0
  %2069 = vmatprep.subr.mxu0 0.0
  %2070 = vmatpush1.msra.mxu0 0.0
  %2071 = vmatprep.subr.mxu0 0.0
  %2072 = vmatpush1.msra.mxu0 0.0
  %2073 = vmatprep.subr.mxu0 0.0
  %2074 = vmatpush1.msra.mxu0 0.0
  %2075 = vmatprep.subr.mxu0 0.0
  %2076 = vmatpush1.msra.mxu0 0.0
  %2077 = vmatprep.subr.mxu0 0.0
  %2078 = vmatpush1.msra.mxu0 0.0
  %2079 = vmatprep.subr.mxu0 0.0
  %2080 = vmatpush1.msra.mxu0 0.0
  %2081 = vmatprep.subr.mxu0 0.0
  %2082 = vmatpush1.msra.mxu0 0.0
  %2083 = vmatprep.subr.mxu0 0.0
  %2084 = vmatpush1.msra.mxu0 0.0
  %2085 = vmatprep.subr.mxu0 0.0
  %2086 = vmatpush1.msra.mxu0 0.0
  %2087 = vmatprep.subr.mxu0 0.0
  %2088 = vmatpush1.msra.mxu0 0.0
  %2089 = vmatprep.subr.mxu0 0.0
  %2090 = vmatpush1.msra.mxu0 0.0
  %2091 = vmatprep.subr.mxu0 0.0
  %2092 = vmatpush1.msra.mxu0 0.0
  %2093 = vmatprep.subr.mxu0 0.0
  %2094 = vmatpush1.msra.mxu0 0.0
  %2095 = vmatprep.subr.mxu0 0.0
  %2096 = vmatpush1.msra.mxu0 0.0
  %2097 = vmatprep.subr.mxu0 0.0
  %2098 = vmatpush1.msra.mxu0 0.0
  %2099 = vmatprep.subr.mxu0 0.0
  %2100 = vmatpush1.msra.mxu0 0.0
  %2101 = vmatprep.subr.mxu0 0.0
  %2102 = vmatpush1.msra.mxu0 0.0
  %2103 = vmatprep.subr.mxu0 0.0
  %2104 = vmatpush1.msra.mxu0 0.0
  %2105 = vmatprep.subr.mxu0 0.0
  %2106 = vmatpush1.msra.mxu0 0.0
  %2107 = vmatprep.subr.mxu0 0.0
  %2108 = vmatpush1.msra.mxu0 0.0
  %2109 = vmatprep.subr.mxu0 0.0
  %2110 = vmatpush1.msra.mxu0 0.0
  %2111 = vmatprep.subr.mxu0 0.0
  %2112 = vmatpush1.msra.mxu0 0.0
  %2113 = vmatprep.subr.mxu0 0.0
  %2114 = vmatpush1.msra.mxu0 0.0
  %2115 = vmatprep.subr.mxu0 0.0
  %2116 = vmatpush1.msra.mxu0 0.0
  %2117 = vmatprep.subr.mxu0 0.0
  %2118 = vmatpush1.msra.mxu0 0.0
  %2119 = vmatprep.subr.mxu0 0.0
  %2120 = vmatpush1.msra.mxu0 0.0
  %2121 = vmatprep.subr.mxu0 0.0
  %2122 = vmatpush1.msra.mxu0 0.0
  %2123 = vmatprep.subr.mxu0 0.0
  %2124 = vmatpush1.msra.mxu0 0.0
  %2125 = vmatprep.mubr.f32.mxu0 0.0
  %2126 = vmatmul.mubr.f32.gmra.mrb[0].mxu0 %v2059
  %v2127 = vpop.f32.mrb[0].mxu0
  %v2128 = vadd.f32 0.0, %v2127
  %v2129 = vpop.f32.mrb[0].mxu0
  %v2130 = vadd.f32 0.0, %v2129
  %2131 = vdwg.mxu0
  %2132 = vmatprep.subr.mxu0 %v2053
  %2133 = vmatpush1.msra.mxu0 %v2052
  %2134 = vmatprep.subr.mxu0 0.0
  %2135 = vmatpush1.msra.mxu0 0.0
  %2136 = vmatprep.subr.mxu0 0.0
  %2137 = vmatpush1.msra.mxu0 0.0
  %2138 = vmatprep.subr.mxu0 0.0
  %2139 = vmatpush1.msra.mxu0 0.0
  %2140 = vmatprep.subr.mxu0 0.0
  %2141 = vmatpush1.msra.mxu0 0.0
  %2142 = vmatprep.subr.mxu0 0.0
  %2143 = vmatpush1.msra.mxu0 0.0
  %2144 = vmatprep.subr.mxu0 0.0
  %2145 = vmatpush1.msra.mxu0 0.0
  %2146 = vmatprep.subr.mxu0 0.0
  %2147 = vmatpush1.msra.mxu0 0.0
  %2148 = vmatprep.subr.mxu0 0.0
  %2149 = vmatpush1.msra.mxu0 0.0
  %2150 = vmatprep.subr.mxu0 0.0
  %2151 = vmatpush1.msra.mxu0 0.0
  %2152 = vmatprep.subr.mxu0 0.0
  %2153 = vmatpush1.msra.mxu0 0.0
  %2154 = vmatprep.subr.mxu0 0.0
  %2155 = vmatpush1.msra.mxu0 0.0
  %2156 = vmatprep.subr.mxu0 0.0
  %2157 = vmatpush1.msra.mxu0 0.0
  %2158 = vmatprep.subr.mxu0 0.0
  %2159 = vmatpush1.msra.mxu0 0.0
  %2160 = vmatprep.subr.mxu0 0.0
  %2161 = vmatpush1.msra.mxu0 0.0
  %2162 = vmatprep.subr.mxu0 0.0
  %2163 = vmatpush1.msra.mxu0 0.0
  %2164 = vmatprep.subr.mxu0 0.0
  %2165 = vmatpush1.msra.mxu0 0.0
  %2166 = vmatprep.subr.mxu0 0.0
  %2167 = vmatpush1.msra.mxu0 0.0
  %2168 = vmatprep.subr.mxu0 0.0
  %2169 = vmatpush1.msra.mxu0 0.0
  %2170 = vmatprep.subr.mxu0 0.0
  %2171 = vmatpush1.msra.mxu0 0.0
  %2172 = vmatprep.subr.mxu0 0.0
  %2173 = vmatpush1.msra.mxu0 0.0
  %2174 = vmatprep.subr.mxu0 0.0
  %2175 = vmatpush1.msra.mxu0 0.0
  %2176 = vmatprep.subr.mxu0 0.0
  %2177 = vmatpush1.msra.mxu0 0.0
  %2178 = vmatprep.subr.mxu0 0.0
  %2179 = vmatpush1.msra.mxu0 0.0
  %2180 = vmatprep.subr.mxu0 0.0
  %2181 = vmatpush1.msra.mxu0 0.0
  %2182 = vmatprep.subr.mxu0 0.0
  %2183 = vmatpush1.msra.mxu0 0.0
  %2184 = vmatprep.subr.mxu0 0.0
  %2185 = vmatpush1.msra.mxu0 0.0
  %2186 = vmatprep.subr.mxu0 0.0
  %2187 = vmatpush1.msra.mxu0 0.0
  %2188 = vmatprep.subr.mxu0 0.0
  %2189 = vmatpush1.msra.mxu0 0.0
  %2190 = vmatprep.subr.mxu0 0.0
  %2191 = vmatpush1.msra.mxu0 0.0
  %2192 = vmatprep.subr.mxu0 0.0
  %2193 = vmatpush1.msra.mxu0 0.0
  %2194 = vmatprep.subr.mxu0 0.0
  %2195 = vmatpush1.msra.mxu0 0.0
  %2196 = vmatprep.mubr.f32.mxu0 0.0
  %2197 = vmatmul.mubr.f32.gmra.mrb[0].mxu0 %v2059
  %v2198 = vpop.f32.mrb[0].mxu0
  %v2199 = vadd.f32 0.0, %v2198
  %v2200 = vpop.f32.mrb[0].mxu0
  %v2201 = vadd.f32 0.0, %v2200
  %2202 = vdwg.mxu0
  %v2203 = vadd.f32 %v2033, %v2128
  %v2204 = vadd.f32 %v2034, %v2130
  %v2205 = vadd.f32 %v2035, %v2199
  %v2206 = vadd.f32 %v2036, %v2201
  %s2207 = scalar_lea.vmem %s1, 104
  %v2208 = vld [vmem:[%s2207] sm:$0xff]
  %2209 = vrot.lane.b32.xlu0 %v14, 93
  %v2210 = vpop.permute.xlu0 %2209
  %2211 = vrot.lane.b32.xlu0 %v15, 93
  %v2212 = vpop.permute.xlu0 %2211
  %2213 = vrot.lane.b32.xlu0 %v16, 93
  %v2214 = vpop.permute.xlu0 %2213
  %2215 = vrot.lane.b32.xlu0 %v17, 93
  %v2216 = vpop.permute.xlu0 %2215
  %2217 = vrot.lane.b32.xlu0 %v18, 93
  %v2218 = vpop.permute.xlu0 %2217
  %vm2219 = vcmask 760832
  %v2220 = vsel %vm2219, %v2210, %v2212
  %v2221 = vsel %vm2219, %v2212, %v2214
  %v2222 = vsel %vm2219, %v2214, %v2216
  %v2223 = vsel %vm2219, %v2216, %v2218
  %v2229 = vsel %vm46, %v2208, 0
  %2231 = vmatprep.subr.mxu0 %v2221
  %2232 = vmatpush1.msra.mxu0 %v2220
  %2233 = vmatprep.subr.mxu0 0.0
  %2234 = vmatpush1.msra.mxu0 0.0
  %2235 = vmatprep.subr.mxu0 0.0
  %2236 = vmatpush1.msra.mxu0 0.0
  %2237 = vmatprep.subr.mxu0 0.0
  %2238 = vmatpush1.msra.mxu0 0.0
  %2239 = vmatprep.subr.mxu0 0.0
  %2240 = vmatpush1.msra.mxu0 0.0
  %2241 = vmatprep.subr.mxu0 0.0
  %2242 = vmatpush1.msra.mxu0 0.0
  %2243 = vmatprep.subr.mxu0 0.0
  %2244 = vmatpush1.msra.mxu0 0.0
  %2245 = vmatprep.subr.mxu0 0.0
  %2246 = vmatpush1.msra.mxu0 0.0
  %2247 = vmatprep.subr.mxu0 0.0
  %2248 = vmatpush1.msra.mxu0 0.0
  %2249 = vmatprep.subr.mxu0 0.0
  %2250 = vmatpush1.msra.mxu0 0.0
  %2251 = vmatprep.subr.mxu0 0.0
  %2252 = vmatpush1.msra.mxu0 0.0
  %2253 = vmatprep.subr.mxu0 0.0
  %2254 = vmatpush1.msra.mxu0 0.0
  %2255 = vmatprep.subr.mxu0 0.0
  %2256 = vmatpush1.msra.mxu0 0.0
  %2257 = vmatprep.subr.mxu0 0.0
  %2258 = vmatpush1.msra.mxu0 0.0
  %2259 = vmatprep.subr.mxu0 0.0
  %2260 = vmatpush1.msra.mxu0 0.0
  %2261 = vmatprep.subr.mxu0 0.0
  %2262 = vmatpush1.msra.mxu0 0.0
  %2263 = vmatprep.subr.mxu0 0.0
  %2264 = vmatpush1.msra.mxu0 0.0
  %2265 = vmatprep.subr.mxu0 0.0
  %2266 = vmatpush1.msra.mxu0 0.0
  %2267 = vmatprep.subr.mxu0 0.0
  %2268 = vmatpush1.msra.mxu0 0.0
  %2269 = vmatprep.subr.mxu0 0.0
  %2270 = vmatpush1.msra.mxu0 0.0
  %2271 = vmatprep.subr.mxu0 0.0
  %2272 = vmatpush1.msra.mxu0 0.0
  %2273 = vmatprep.subr.mxu0 0.0
  %2274 = vmatpush1.msra.mxu0 0.0
  %2275 = vmatprep.subr.mxu0 0.0
  %2276 = vmatpush1.msra.mxu0 0.0
  %2277 = vmatprep.subr.mxu0 0.0
  %2278 = vmatpush1.msra.mxu0 0.0
  %2279 = vmatprep.subr.mxu0 0.0
  %2280 = vmatpush1.msra.mxu0 0.0
  %2281 = vmatprep.subr.mxu0 0.0
  %2282 = vmatpush1.msra.mxu0 0.0
  %2283 = vmatprep.subr.mxu0 0.0
  %2284 = vmatpush1.msra.mxu0 0.0
  %2285 = vmatprep.subr.mxu0 0.0
  %2286 = vmatpush1.msra.mxu0 0.0
  %2287 = vmatprep.subr.mxu0 0.0
  %2288 = vmatpush1.msra.mxu0 0.0
  %2289 = vmatprep.subr.mxu0 0.0
  %2290 = vmatpush1.msra.mxu0 0.0
  %2291 = vmatprep.subr.mxu0 0.0
  %2292 = vmatpush1.msra.mxu0 0.0
  %2293 = vmatprep.subr.mxu0 0.0
  %2294 = vmatpush1.msra.mxu0 0.0
  %2295 = vmatprep.mubr.f32.mxu0 0.0
  %2296 = vmatmul.mubr.f32.gmra.mrb[0].mxu0 %v2229
  %v2297 = vpop.f32.mrb[0].mxu0
  %v2298 = vadd.f32 0.0, %v2297
  %v2299 = vpop.f32.mrb[0].mxu0
  %v2300 = vadd.f32 0.0, %v2299
  %2301 = vdwg.mxu0
  %2302 = vmatprep.subr.mxu0 %v2223
  %2303 = vmatpush1.msra.mxu0 %v2222
  %2304 = vmatprep.subr.mxu0 0.0
  %2305 = vmatpush1.msra.mxu0 0.0
  %2306 = vmatprep.subr.mxu0 0.0
  %2307 = vmatpush1.msra.mxu0 0.0
  %2308 = vmatprep.subr.mxu0 0.0
  %2309 = vmatpush1.msra.mxu0 0.0
  %2310 = vmatprep.subr.mxu0 0.0
  %2311 = vmatpush1.msra.mxu0 0.0
  %2312 = vmatprep.subr.mxu0 0.0
  %2313 = vmatpush1.msra.mxu0 0.0
  %2314 = vmatprep.subr.mxu0 0.0
  %2315 = vmatpush1.msra.mxu0 0.0
  %2316 = vmatprep.subr.mxu0 0.0
  %2317 = vmatpush1.msra.mxu0 0.0
  %2318 = vmatprep.subr.mxu0 0.0
  %2319 = vmatpush1.msra.mxu0 0.0
  %2320 = vmatprep.subr.mxu0 0.0
  %2321 = vmatpush1.msra.mxu0 0.0
  %2322 = vmatprep.subr.mxu0 0.0
  %2323 = vmatpush1.msra.mxu0 0.0
  %2324 = vmatprep.subr.mxu0 0.0
  %2325 = vmatpush1.msra.mxu0 0.0
  %2326 = vmatprep.subr.mxu0 0.0
  %2327 = vmatpush1.msra.mxu0 0.0
  %2328 = vmatprep.subr.mxu0 0.0
  %2329 = vmatpush1.msra.mxu0 0.0
  %2330 = vmatprep.subr.mxu0 0.0
  %2331 = vmatpush1.msra.mxu0 0.0
  %2332 = vmatprep.subr.mxu0 0.0
  %2333 = vmatpush1.msra.mxu0 0.0
  %2334 = vmatprep.subr.mxu0 0.0
  %2335 = vmatpush1.msra.mxu0 0.0
  %2336 = vmatprep.subr.mxu0 0.0
  %2337 = vmatpush1.msra.mxu0 0.0
  %2338 = vmatprep.subr.mxu0 0.0
  %2339 = vmatpush1.msra.mxu0 0.0
  %2340 = vmatprep.subr.mxu0 0.0
  %2341 = vmatpush1.msra.mxu0 0.0
  %2342 = vmatprep.subr.mxu0 0.0
  %2343 = vmatpush1.msra.mxu0 0.0
  %2344 = vmatprep.subr.mxu0 0.0
  %2345 = vmatpush1.msra.mxu0 0.0
  %2346 = vmatprep.subr.mxu0 0.0
  %2347 = vmatpush1.msra.mxu0 0.0
  %2348 = vmatprep.subr.mxu0 0.0
  %2349 = vmatpush1.msra.mxu0 0.0
  %2350 = vmatprep.subr.mxu0 0.0
  %2351 = vmatpush1.msra.mxu0 0.0
  %2352 = vmatprep.subr.mxu0 0.0
  %2353 = vmatpush1.msra.mxu0 0.0
  %2354 = vmatprep.subr.mxu0 0.0
  %2355 = vmatpush1.msra.mxu0 0.0
  %2356 = vmatprep.subr.mxu0 0.0
  %2357 = vmatpush1.msra.mxu0 0.0
  %2358 = vmatprep.subr.mxu0 0.0
  %2359 = vmatpush1.msra.mxu0 0.0
  %2360 = vmatprep.subr.mxu0 0.0
  %2361 = vmatpush1.msra.mxu0 0.0
  %2362 = vmatprep.subr.mxu0 0.0
  %2363 = vmatpush1.msra.mxu0 0.0
  %2364 = vmatprep.subr.mxu0 0.0
  %2365 = vmatpush1.msra.mxu0 0.0
  %2366 = vmatprep.mubr.f32.mxu0 0.0
  %2367 = vmatmul.mubr.f32.gmra.mrb[0].mxu0 %v2229
  %v2368 = vpop.f32.mrb[0].mxu0
  %v2369 = vadd.f32 0.0, %v2368
  %v2370 = vpop.f32.mrb[0].mxu0
  %v2371 = vadd.f32 0.0, %v2370
  %2372 = vdwg.mxu0
  %v2373 = vadd.f32 %v2203, %v2298
  %v2374 = vadd.f32 %v2204, %v2300
  %v2375 = vadd.f32 %v2205, %v2369
  %v2376 = vadd.f32 %v2206, %v2371
  %s2377 = scalar_lea.vmem %s1, 112
  %v2378 = vld [vmem:[%s2377] sm:$0xff]
  %2379 = vrot.lane.b32.xlu0 %v14, 92
  %v2380 = vpop.permute.xlu0 %2379
  %2381 = vrot.lane.b32.xlu0 %v15, 92
  %v2382 = vpop.permute.xlu0 %2381
  %2383 = vrot.lane.b32.xlu0 %v16, 92
  %v2384 = vpop.permute.xlu0 %2383
  %2385 = vrot.lane.b32.xlu0 %v17, 92
  %v2386 = vpop.permute.xlu0 %2385
  %2387 = vrot.lane.b32.xlu0 %v18, 92
  %v2388 = vpop.permute.xlu0 %2387
  %vm2389 = vcmask 752640
  %v2390 = vsel %vm2389, %v2380, %v2382
  %v2391 = vsel %vm2389, %v2382, %v2384
  %v2392 = vsel %vm2389, %v2384, %v2386
  %v2393 = vsel %vm2389, %v2386, %v2388
  %v2399 = vsel %vm46, %v2378, 0
  %2401 = vmatprep.subr.mxu0 %v2391
  %2402 = vmatpush1.msra.mxu0 %v2390
  %2403 = vmatprep.subr.mxu0 0.0
  %2404 = vmatpush1.msra.mxu0 0.0
  %2405 = vmatprep.subr.mxu0 0.0
  %2406 = vmatpush1.msra.mxu0 0.0
  %2407 = vmatprep.subr.mxu0 0.0
  %2408 = vmatpush1.msra.mxu0 0.0
  %2409 = vmatprep.subr.mxu0 0.0
  %2410 = vmatpush1.msra.mxu0 0.0
  %2411 = vmatprep.subr.mxu0 0.0
  %2412 = vmatpush1.msra.mxu0 0.0
  %2413 = vmatprep.subr.mxu0 0.0
  %2414 = vmatpush1.msra.mxu0 0.0
  %2415 = vmatprep.subr.mxu0 0.0
  %2416 = vmatpush1.msra.mxu0 0.0
  %2417 = vmatprep.subr.mxu0 0.0
  %2418 = vmatpush1.msra.mxu0 0.0
  %2419 = vmatprep.subr.mxu0 0.0
  %2420 = vmatpush1.msra.mxu0 0.0
  %2421 = vmatprep.subr.mxu0 0.0
  %2422 = vmatpush1.msra.mxu0 0.0
  %2423 = vmatprep.subr.mxu0 0.0
  %2424 = vmatpush1.msra.mxu0 0.0
  %2425 = vmatprep.subr.mxu0 0.0
  %2426 = vmatpush1.msra.mxu0 0.0
  %2427 = vmatprep.subr.mxu0 0.0
  %2428 = vmatpush1.msra.mxu0 0.0
  %2429 = vmatprep.subr.mxu0 0.0
  %2430 = vmatpush1.msra.mxu0 0.0
  %2431 = vmatprep.subr.mxu0 0.0
  %2432 = vmatpush1.msra.mxu0 0.0
  %2433 = vmatprep.subr.mxu0 0.0
  %2434 = vmatpush1.msra.mxu0 0.0
  %2435 = vmatprep.subr.mxu0 0.0
  %2436 = vmatpush1.msra.mxu0 0.0
  %2437 = vmatprep.subr.mxu0 0.0
  %2438 = vmatpush1.msra.mxu0 0.0
  %2439 = vmatprep.subr.mxu0 0.0
  %2440 = vmatpush1.msra.mxu0 0.0
  %2441 = vmatprep.subr.mxu0 0.0
  %2442 = vmatpush1.msra.mxu0 0.0
  %2443 = vmatprep.subr.mxu0 0.0
  %2444 = vmatpush1.msra.mxu0 0.0
  %2445 = vmatprep.subr.mxu0 0.0
  %2446 = vmatpush1.msra.mxu0 0.0
  %2447 = vmatprep.subr.mxu0 0.0
  %2448 = vmatpush1.msra.mxu0 0.0
  %2449 = vmatprep.subr.mxu0 0.0
  %2450 = vmatpush1.msra.mxu0 0.0
  %2451 = vmatprep.subr.mxu0 0.0
  %2452 = vmatpush1.msra.mxu0 0.0
  %2453 = vmatprep.subr.mxu0 0.0
  %2454 = vmatpush1.msra.mxu0 0.0
  %2455 = vmatprep.subr.mxu0 0.0
  %2456 = vmatpush1.msra.mxu0 0.0
  %2457 = vmatprep.subr.mxu0 0.0
  %2458 = vmatpush1.msra.mxu0 0.0
  %2459 = vmatprep.subr.mxu0 0.0
  %2460 = vmatpush1.msra.mxu0 0.0
  %2461 = vmatprep.subr.mxu0 0.0
  %2462 = vmatpush1.msra.mxu0 0.0
  %2463 = vmatprep.subr.mxu0 0.0
  %2464 = vmatpush1.msra.mxu0 0.0
  %2465 = vmatprep.mubr.f32.mxu0 0.0
  %2466 = vmatmul.mubr.f32.gmra.mrb[0].mxu0 %v2399
  %v2467 = vpop.f32.mrb[0].mxu0
  %v2468 = vadd.f32 0.0, %v2467
  %v2469 = vpop.f32.mrb[0].mxu0
  %v2470 = vadd.f32 0.0, %v2469
  %2471 = vdwg.mxu0
  %2472 = vmatprep.subr.mxu0 %v2393
  %2473 = vmatpush1.msra.mxu0 %v2392
  %2474 = vmatprep.subr.mxu0 0.0
  %2475 = vmatpush1.msra.mxu0 0.0
  %2476 = vmatprep.subr.mxu0 0.0
  %2477 = vmatpush1.msra.mxu0 0.0
  %2478 = vmatprep.subr.mxu0 0.0
  %2479 = vmatpush1.msra.mxu0 0.0
  %2480 = vmatprep.subr.mxu0 0.0
  %2481 = vmatpush1.msra.mxu0 0.0
  %2482 = vmatprep.subr.mxu0 0.0
  %2483 = vmatpush1.msra.mxu0 0.0
  %2484 = vmatprep.subr.mxu0 0.0
  %2485 = vmatpush1.msra.mxu0 0.0
  %2486 = vmatprep.subr.mxu0 0.0
  %2487 = vmatpush1.msra.mxu0 0.0
  %2488 = vmatprep.subr.mxu0 0.0
  %2489 = vmatpush1.msra.mxu0 0.0
  %2490 = vmatprep.subr.mxu0 0.0
  %2491 = vmatpush1.msra.mxu0 0.0
  %2492 = vmatprep.subr.mxu0 0.0
  %2493 = vmatpush1.msra.mxu0 0.0
  %2494 = vmatprep.subr.mxu0 0.0
  %2495 = vmatpush1.msra.mxu0 0.0
  %2496 = vmatprep.subr.mxu0 0.0
  %2497 = vmatpush1.msra.mxu0 0.0
  %2498 = vmatprep.subr.mxu0 0.0
  %2499 = vmatpush1.msra.mxu0 0.0
  %2500 = vmatprep.subr.mxu0 0.0
  %2501 = vmatpush1.msra.mxu0 0.0
  %2502 = vmatprep.subr.mxu0 0.0
  %2503 = vmatpush1.msra.mxu0 0.0
  %2504 = vmatprep.subr.mxu0 0.0
  %2505 = vmatpush1.msra.mxu0 0.0
  %2506 = vmatprep.subr.mxu0 0.0
  %2507 = vmatpush1.msra.mxu0 0.0
  %2508 = vmatprep.subr.mxu0 0.0
  %2509 = vmatpush1.msra.mxu0 0.0
  %2510 = vmatprep.subr.mxu0 0.0
  %2511 = vmatpush1.msra.mxu0 0.0
  %2512 = vmatprep.subr.mxu0 0.0
  %2513 = vmatpush1.msra.mxu0 0.0
  %2514 = vmatprep.subr.mxu0 0.0
  %2515 = vmatpush1.msra.mxu0 0.0
  %2516 = vmatprep.subr.mxu0 0.0
  %2517 = vmatpush1.msra.mxu0 0.0
  %2518 = vmatprep.subr.mxu0 0.0
  %2519 = vmatpush1.msra.mxu0 0.0
  %2520 = vmatprep.subr.mxu0 0.0
  %2521 = vmatpush1.msra.mxu0 0.0
  %2522 = vmatprep.subr.mxu0 0.0
  %2523 = vmatpush1.msra.mxu0 0.0
  %2524 = vmatprep.subr.mxu0 0.0
  %2525 = vmatpush1.msra.mxu0 0.0
  %2526 = vmatprep.subr.mxu0 0.0
  %2527 = vmatpush1.msra.mxu0 0.0
  %2528 = vmatprep.subr.mxu0 0.0
  %2529 = vmatpush1.msra.mxu0 0.0
  %2530 = vmatprep.subr.mxu0 0.0
  %2531 = vmatpush1.msra.mxu0 0.0
  %2532 = vmatprep.subr.mxu0 0.0
  %2533 = vmatpush1.msra.mxu0 0.0
  %2534 = vmatprep.subr.mxu0 0.0
  %2535 = vmatpush1.msra.mxu0 0.0
  %2536 = vmatprep.mubr.f32.mxu0 0.0
  %2537 = vmatmul.mubr.f32.gmra.mrb[0].mxu0 %v2399
  %v2538 = vpop.f32.mrb[0].mxu0
  %v2539 = vadd.f32 0.0, %v2538
  %v2540 = vpop.f32.mrb[0].mxu0
  %v2541 = vadd.f32 0.0, %v2540
  %2542 = vdwg.mxu0
  %v2543 = vadd.f32 %v2373, %v2468
  %v2544 = vadd.f32 %v2374, %v2470
  %v2545 = vadd.f32 %v2375, %v2539
  %v2546 = vadd.f32 %v2376, %v2541
  %s2547 = scalar_lea.vmem %s1, 120
  %v2548 = vld [vmem:[%s2547] sm:$0xff]
  %2549 = vrot.lane.b32.xlu0 %v14, 80
  %v2550 = vpop.permute.xlu0 %2549
  %2551 = vrot.lane.b32.xlu0 %v15, 80
  %v2552 = vpop.permute.xlu0 %2551
  %2553 = vrot.lane.b32.xlu0 %v16, 80
  %v2554 = vpop.permute.xlu0 %2553
  %2555 = vrot.lane.b32.xlu0 %v17, 80
  %v2556 = vpop.permute.xlu0 %2555
  %2557 = vrot.lane.b32.xlu0 %v18, 80
  %v2558 = vpop.permute.xlu0 %2557
  %vm2559 = vcmask 654336
  %v2560 = vsel %vm2559, %v2550, %v2552
  %v2561 = vsel %vm2559, %v2552, %v2554
  %v2562 = vsel %vm2559, %v2554, %v2556
  %v2563 = vsel %vm2559, %v2556, %v2558
  %v2569 = vsel %vm46, %v2548, 0
  %2571 = vmatprep.subr.mxu0 %v2561
  %2572 = vmatpush1.msra.mxu0 %v2560
  %2573 = vmatprep.subr.mxu0 0.0
  %2574 = vmatpush1.msra.mxu0 0.0
  %2575 = vmatprep.subr.mxu0 0.0
  %2576 = vmatpush1.msra.mxu0 0.0
  %2577 = vmatprep.subr.mxu0 0.0
  %2578 = vmatpush1.msra.mxu0 0.0
  %2579 = vmatprep.subr.mxu0 0.0
  %2580 = vmatpush1.msra.mxu0 0.0
  %2581 = vmatprep.subr.mxu0 0.0
  %2582 = vmatpush1.msra.mxu0 0.0
  %2583 = vmatprep.subr.mxu0 0.0
  %2584 = vmatpush1.msra.mxu0 0.0
  %2585 = vmatprep.subr.mxu0 0.0
  %2586 = vmatpush1.msra.mxu0 0.0
  %2587 = vmatprep.subr.mxu0 0.0
  %2588 = vmatpush1.msra.mxu0 0.0
  %2589 = vmatprep.subr.mxu0 0.0
  %2590 = vmatpush1.msra.mxu0 0.0
  %2591 = vmatprep.subr.mxu0 0.0
  %2592 = vmatpush1.msra.mxu0 0.0
  %2593 = vmatprep.subr.mxu0 0.0
  %2594 = vmatpush1.msra.mxu0 0.0
  %2595 = vmatprep.subr.mxu0 0.0
  %2596 = vmatpush1.msra.mxu0 0.0
  %2597 = vmatprep.subr.mxu0 0.0
  %2598 = vmatpush1.msra.mxu0 0.0
  %2599 = vmatprep.subr.mxu0 0.0
  %2600 = vmatpush1.msra.mxu0 0.0
  %2601 = vmatprep.subr.mxu0 0.0
  %2602 = vmatpush1.msra.mxu0 0.0
  %2603 = vmatprep.subr.mxu0 0.0
  %2604 = vmatpush1.msra.mxu0 0.0
  %2605 = vmatprep.subr.mxu0 0.0
  %2606 = vmatpush1.msra.mxu0 0.0
  %2607 = vmatprep.subr.mxu0 0.0
  %2608 = vmatpush1.msra.mxu0 0.0
  %2609 = vmatprep.subr.mxu0 0.0
  %2610 = vmatpush1.msra.mxu0 0.0
  %2611 = vmatprep.subr.mxu0 0.0
  %2612 = vmatpush1.msra.mxu0 0.0
  %2613 = vmatprep.subr.mxu0 0.0
  %2614 = vmatpush1.msra.mxu0 0.0
  %2615 = vmatprep.subr.mxu0 0.0
  %2616 = vmatpush1.msra.mxu0 0.0
  %2617 = vmatprep.subr.mxu0 0.0
  %2618 = vmatpush1.msra.mxu0 0.0
  %2619 = vmatprep.subr.mxu0 0.0
  %2620 = vmatpush1.msra.mxu0 0.0
  %2621 = vmatprep.subr.mxu0 0.0
  %2622 = vmatpush1.msra.mxu0 0.0
  %2623 = vmatprep.subr.mxu0 0.0
  %2624 = vmatpush1.msra.mxu0 0.0
  %2625 = vmatprep.subr.mxu0 0.0
  %2626 = vmatpush1.msra.mxu0 0.0
  %2627 = vmatprep.subr.mxu0 0.0
  %2628 = vmatpush1.msra.mxu0 0.0
  %2629 = vmatprep.subr.mxu0 0.0
  %2630 = vmatpush1.msra.mxu0 0.0
  %2631 = vmatprep.subr.mxu0 0.0
  %2632 = vmatpush1.msra.mxu0 0.0
  %2633 = vmatprep.subr.mxu0 0.0
  %2634 = vmatpush1.msra.mxu0 0.0
  %2635 = vmatprep.mubr.f32.mxu0 0.0
  %2636 = vmatmul.mubr.f32.gmra.mrb[0].mxu0 %v2569
  %v2637 = vpop.f32.mrb[0].mxu0
  %v2638 = vadd.f32 0.0, %v2637
  %v2639 = vpop.f32.mrb[0].mxu0
  %v2640 = vadd.f32 0.0, %v2639
  %2641 = vdwg.mxu0
  %2642 = vmatprep.subr.mxu0 %v2563
  %2643 = vmatpush1.msra.mxu0 %v2562
  %2644 = vmatprep.subr.mxu0 0.0
  %2645 = vmatpush1.msra.mxu0 0.0
  %2646 = vmatprep.subr.mxu0 0.0
  %2647 = vmatpush1.msra.mxu0 0.0
  %2648 = vmatprep.subr.mxu0 0.0
  %2649 = vmatpush1.msra.mxu0 0.0
  %2650 = vmatprep.subr.mxu0 0.0
  %2651 = vmatpush1.msra.mxu0 0.0
  %2652 = vmatprep.subr.mxu0 0.0
  %2653 = vmatpush1.msra.mxu0 0.0
  %2654 = vmatprep.subr.mxu0 0.0
  %2655 = vmatpush1.msra.mxu0 0.0
  %2656 = vmatprep.subr.mxu0 0.0
  %2657 = vmatpush1.msra.mxu0 0.0
  %2658 = vmatprep.subr.mxu0 0.0
  %2659 = vmatpush1.msra.mxu0 0.0
  %2660 = vmatprep.subr.mxu0 0.0
  %2661 = vmatpush1.msra.mxu0 0.0
  %2662 = vmatprep.subr.mxu0 0.0
  %2663 = vmatpush1.msra.mxu0 0.0
  %2664 = vmatprep.subr.mxu0 0.0
  %2665 = vmatpush1.msra.mxu0 0.0
  %2666 = vmatprep.subr.mxu0 0.0
  %2667 = vmatpush1.msra.mxu0 0.0
  %2668 = vmatprep.subr.mxu0 0.0
  %2669 = vmatpush1.msra.mxu0 0.0
  %2670 = vmatprep.subr.mxu0 0.0
  %2671 = vmatpush1.msra.mxu0 0.0
  %2672 = vmatprep.subr.mxu0 0.0
  %2673 = vmatpush1.msra.mxu0 0.0
  %2674 = vmatprep.subr.mxu0 0.0
  %2675 = vmatpush1.msra.mxu0 0.0
  %2676 = vmatprep.subr.mxu0 0.0
  %2677 = vmatpush1.msra.mxu0 0.0
  %2678 = vmatprep.subr.mxu0 0.0
  %2679 = vmatpush1.msra.mxu0 0.0
  %2680 = vmatprep.subr.mxu0 0.0
  %2681 = vmatpush1.msra.mxu0 0.0
  %2682 = vmatprep.subr.mxu0 0.0
  %2683 = vmatpush1.msra.mxu0 0.0
  %2684 = vmatprep.subr.mxu0 0.0
  %2685 = vmatpush1.msra.mxu0 0.0
  %2686 = vmatprep.subr.mxu0 0.0
  %2687 = vmatpush1.msra.mxu0 0.0
  %2688 = vmatprep.subr.mxu0 0.0
  %2689 = vmatpush1.msra.mxu0 0.0
  %2690 = vmatprep.subr.mxu0 0.0
  %2691 = vmatpush1.msra.mxu0 0.0
  %2692 = vmatprep.subr.mxu0 0.0
  %2693 = vmatpush1.msra.mxu0 0.0
  %2694 = vmatprep.subr.mxu0 0.0
  %2695 = vmatpush1.msra.mxu0 0.0
  %2696 = vmatprep.subr.mxu0 0.0
  %2697 = vmatpush1.msra.mxu0 0.0
  %2698 = vmatprep.subr.mxu0 0.0
  %2699 = vmatpush1.msra.mxu0 0.0
  %2700 = vmatprep.subr.mxu0 0.0
  %2701 = vmatpush1.msra.mxu0 0.0
  %2702 = vmatprep.subr.mxu0 0.0
  %2703 = vmatpush1.msra.mxu0 0.0
  %2704 = vmatprep.subr.mxu0 0.0
  %2705 = vmatpush1.msra.mxu0 0.0
  %2706 = vmatprep.mubr.f32.mxu0 0.0
  %2707 = vmatmul.mubr.f32.gmra.mrb[0].mxu0 %v2569
  %v2708 = vpop.f32.mrb[0].mxu0
  %v2709 = vadd.f32 0.0, %v2708
  %v2710 = vpop.f32.mrb[0].mxu0
  %v2711 = vadd.f32 0.0, %v2710
  %2712 = vdwg.mxu0
  %v2713 = vadd.f32 %v2543, %v2638
  %v2714 = vadd.f32 %v2544, %v2640
  %v2715 = vadd.f32 %v2545, %v2709
  %v2716 = vadd.f32 %v2546, %v2711
  %s2717 = scalar_lea.vmem %s1, 128
  %v2718 = vld [vmem:[%s2717] sm:$0xff]
  %2719 = vrot.lane.b32.xlu0 %v14, 79
  %v2720 = vpop.permute.xlu0 %2719
  %2721 = vrot.lane.b32.xlu0 %v15, 79
  %v2722 = vpop.permute.xlu0 %2721
  %2723 = vrot.lane.b32.xlu0 %v16, 79
  %v2724 = vpop.permute.xlu0 %2723
  %2725 = vrot.lane.b32.xlu0 %v17, 79
  %v2726 = vpop.permute.xlu0 %2725
  %2727 = vrot.lane.b32.xlu0 %v18, 79
  %v2728 = vpop.permute.xlu0 %2727
  %vm2729 = vcmask 646144
  %v2730 = vsel %vm2729, %v2720, %v2722
  %v2731 = vsel %vm2729, %v2722, %v2724
  %v2732 = vsel %vm2729, %v2724, %v2726
  %v2733 = vsel %vm2729, %v2726, %v2728
  %v2739 = vsel %vm46, %v2718, 0
  %2741 = vmatprep.subr.mxu0 %v2731
  %2742 = vmatpush1.msra.mxu0 %v2730
  %2743 = vmatprep.subr.mxu0 0.0
  %2744 = vmatpush1.msra.mxu0 0.0
  %2745 = vmatprep.subr.mxu0 0.0
  %2746 = vmatpush1.msra.mxu0 0.0
  %2747 = vmatprep.subr.mxu0 0.0
  %2748 = vmatpush1.msra.mxu0 0.0
  %2749 = vmatprep.subr.mxu0 0.0
  %2750 = vmatpush1.msra.mxu0 0.0
  %2751 = vmatprep.subr.mxu0 0.0
  %2752 = vmatpush1.msra.mxu0 0.0
  %2753 = vmatprep.subr.mxu0 0.0
  %2754 = vmatpush1.msra.mxu0 0.0
  %2755 = vmatprep.subr.mxu0 0.0
  %2756 = vmatpush1.msra.mxu0 0.0
  %2757 = vmatprep.subr.mxu0 0.0
  %2758 = vmatpush1.msra.mxu0 0.0
  %2759 = vmatprep.subr.mxu0 0.0
  %2760 = vmatpush1.msra.mxu0 0.0
  %2761 = vmatprep.subr.mxu0 0.0
  %2762 = vmatpush1.msra.mxu0 0.0
  %2763 = vmatprep.subr.mxu0 0.0
  %2764 = vmatpush1.msra.mxu0 0.0
  %2765 = vmatprep.subr.mxu0 0.0
  %2766 = vmatpush1.msra.mxu0 0.0
  %2767 = vmatprep.subr.mxu0 0.0
  %2768 = vmatpush1.msra.mxu0 0.0
  %2769 = vmatprep.subr.mxu0 0.0
  %2770 = vmatpush1.msra.mxu0 0.0
  %2771 = vmatprep.subr.mxu0 0.0
  %2772 = vmatpush1.msra.mxu0 0.0
  %2773 = vmatprep.subr.mxu0 0.0
  %2774 = vmatpush1.msra.mxu0 0.0
  %2775 = vmatprep.subr.mxu0 0.0
  %2776 = vmatpush1.msra.mxu0 0.0
  %2777 = vmatprep.subr.mxu0 0.0
  %2778 = vmatpush1.msra.mxu0 0.0
  %2779 = vmatprep.subr.mxu0 0.0
  %2780 = vmatpush1.msra.mxu0 0.0
  %2781 = vmatprep.subr.mxu0 0.0
  %2782 = vmatpush1.msra.mxu0 0.0
  %2783 = vmatprep.subr.mxu0 0.0
  %2784 = vmatpush1.msra.mxu0 0.0
  %2785 = vmatprep.subr.mxu0 0.0
  %2786 = vmatpush1.msra.mxu0 0.0
  %2787 = vmatprep.subr.mxu0 0.0
  %2788 = vmatpush1.msra.mxu0 0.0
  %2789 = vmatprep.subr.mxu0 0.0
  %2790 = vmatpush1.msra.mxu0 0.0
  %2791 = vmatprep.subr.mxu0 0.0
  %2792 = vmatpush1.msra.mxu0 0.0
  %2793 = vmatprep.subr.mxu0 0.0
  %2794 = vmatpush1.msra.mxu0 0.0
  %2795 = vmatprep.subr.mxu0 0.0
  %2796 = vmatpush1.msra.mxu0 0.0
  %2797 = vmatprep.subr.mxu0 0.0
  %2798 = vmatpush1.msra.mxu0 0.0
  %2799 = vmatprep.subr.mxu0 0.0
  %2800 = vmatpush1.msra.mxu0 0.0
  %2801 = vmatprep.subr.mxu0 0.0
  %2802 = vmatpush1.msra.mxu0 0.0
  %2803 = vmatprep.subr.mxu0 0.0
  %2804 = vmatpush1.msra.mxu0 0.0
  %2805 = vmatprep.mubr.f32.mxu0 0.0
  %2806 = vmatmul.mubr.f32.gmra.mrb[0].mxu0 %v2739
  %v2807 = vpop.f32.mrb[0].mxu0
  %v2808 = vadd.f32 0.0, %v2807
  %v2809 = vpop.f32.mrb[0].mxu0
  %v2810 = vadd.f32 0.0, %v2809
  %2811 = vdwg.mxu0
  %2812 = vmatprep.subr.mxu0 %v2733
  %2813 = vmatpush1.msra.mxu0 %v2732
  %2814 = vmatprep.subr.mxu0 0.0
  %2815 = vmatpush1.msra.mxu0 0.0
  %2816 = vmatprep.subr.mxu0 0.0
  %2817 = vmatpush1.msra.mxu0 0.0
  %2818 = vmatprep.subr.mxu0 0.0
  %2819 = vmatpush1.msra.mxu0 0.0
  %2820 = vmatprep.subr.mxu0 0.0
  %2821 = vmatpush1.msra.mxu0 0.0
  %2822 = vmatprep.subr.mxu0 0.0
  %2823 = vmatpush1.msra.mxu0 0.0
  %2824 = vmatprep.subr.mxu0 0.0
  %2825 = vmatpush1.msra.mxu0 0.0
  %2826 = vmatprep.subr.mxu0 0.0
  %2827 = vmatpush1.msra.mxu0 0.0
  %2828 = vmatprep.subr.mxu0 0.0
  %2829 = vmatpush1.msra.mxu0 0.0
  %2830 = vmatprep.subr.mxu0 0.0
  %2831 = vmatpush1.msra.mxu0 0.0
  %2832 = vmatprep.subr.mxu0 0.0
  %2833 = vmatpush1.msra.mxu0 0.0
  %2834 = vmatprep.subr.mxu0 0.0
  %2835 = vmatpush1.msra.mxu0 0.0
  %2836 = vmatprep.subr.mxu0 0.0
  %2837 = vmatpush1.msra.mxu0 0.0
  %2838 = vmatprep.subr.mxu0 0.0
  %2839 = vmatpush1.msra.mxu0 0.0
  %2840 = vmatprep.subr.mxu0 0.0
  %2841 = vmatpush1.msra.mxu0 0.0
  %2842 = vmatprep.subr.mxu0 0.0
  %2843 = vmatpush1.msra.mxu0 0.0
  %2844 = vmatprep.subr.mxu0 0.0
  %2845 = vmatpush1.msra.mxu0 0.0
  %2846 = vmatprep.subr.mxu0 0.0
  %2847 = vmatpush1.msra.mxu0 0.0
  %2848 = vmatprep.subr.mxu0 0.0
  %2849 = vmatpush1.msra.mxu0 0.0
  %2850 = vmatprep.subr.mxu0 0.0
  %2851 = vmatpush1.msra.mxu0 0.0
  %2852 = vmatprep.subr.mxu0 0.0
  %2853 = vmatpush1.msra.mxu0 0.0
  %2854 = vmatprep.subr.mxu0 0.0
  %2855 = vmatpush1.msra.mxu0 0.0
  %2856 = vmatprep.subr.mxu0 0.0
  %2857 = vmatpush1.msra.mxu0 0.0
  %2858 = vmatprep.subr.mxu0 0.0
  %2859 = vmatpush1.msra.mxu0 0.0
  %2860 = vmatprep.subr.mxu0 0.0
  %2861 = vmatpush1.msra.mxu0 0.0
  %2862 = vmatprep.subr.mxu0 0.0
  %2863 = vmatpush1.msra.mxu0 0.0
  %2864 = vmatprep.subr.mxu0 0.0
  %2865 = vmatpush1.msra.mxu0 0.0
  %2866 = vmatprep.subr.mxu0 0.0
  %2867 = vmatpush1.msra.mxu0 0.0
  %2868 = vmatprep.subr.mxu0 0.0
  %2869 = vmatpush1.msra.mxu0 0.0
  %2870 = vmatprep.subr.mxu0 0.0
  %2871 = vmatpush1.msra.mxu0 0.0
  %2872 = vmatprep.subr.mxu0 0.0
  %2873 = vmatpush1.msra.mxu0 0.0
  %2874 = vmatprep.subr.mxu0 0.0
  %2875 = vmatpush1.msra.mxu0 0.0
  %2876 = vmatprep.mubr.f32.mxu0 0.0
  %2877 = vmatmul.mubr.f32.gmra.mrb[0].mxu0 %v2739
  %v2878 = vpop.f32.mrb[0].mxu0
  %v2879 = vadd.f32 0.0, %v2878
  %v2880 = vpop.f32.mrb[0].mxu0
  %v2881 = vadd.f32 0.0, %v2880
  %2882 = vdwg.mxu0
  %v2883 = vadd.f32 %v2713, %v2808
  %v2884 = vadd.f32 %v2714, %v2810
  %v2885 = vadd.f32 %v2715, %v2879
  %v2886 = vadd.f32 %v2716, %v2881
  %s2887 = scalar_lea.vmem %s1, 136
  %v2888 = vld [vmem:[%s2887] sm:$0xff]
  %2889 = vrot.lane.b32.xlu0 %v14, 78
  %v2890 = vpop.permute.xlu0 %2889
  %2891 = vrot.lane.b32.xlu0 %v15, 78
  %v2892 = vpop.permute.xlu0 %2891
  %2893 = vrot.lane.b32.xlu0 %v16, 78
  %v2894 = vpop.permute.xlu0 %2893
  %2895 = vrot.lane.b32.xlu0 %v17, 78
  %v2896 = vpop.permute.xlu0 %2895
  %2897 = vrot.lane.b32.xlu0 %v18, 78
  %v2898 = vpop.permute.xlu0 %2897
  %vm2899 = vcmask 637952
  %v2900 = vsel %vm2899, %v2890, %v2892
  %v2901 = vsel %vm2899, %v2892, %v2894
  %v2902 = vsel %vm2899, %v2894, %v2896
  %v2903 = vsel %vm2899, %v2896, %v2898
  %v2909 = vsel %vm46, %v2888, 0
  %2911 = vmatprep.subr.mxu0 %v2901
  %2912 = vmatpush1.msra.mxu0 %v2900
  %2913 = vmatprep.subr.mxu0 0.0
  %2914 = vmatpush1.msra.mxu0 0.0
  %2915 = vmatprep.subr.mxu0 0.0
  %2916 = vmatpush1.msra.mxu0 0.0
  %2917 = vmatprep.subr.mxu0 0.0
  %2918 = vmatpush1.msra.mxu0 0.0
  %2919 = vmatprep.subr.mxu0 0.0
  %2920 = vmatpush1.msra.mxu0 0.0
  %2921 = vmatprep.subr.mxu0 0.0
  %2922 = vmatpush1.msra.mxu0 0.0
  %2923 = vmatprep.subr.mxu0 0.0
  %2924 = vmatpush1.msra.mxu0 0.0
  %2925 = vmatprep.subr.mxu0 0.0
  %2926 = vmatpush1.msra.mxu0 0.0
  %2927 = vmatprep.subr.mxu0 0.0
  %2928 = vmatpush1.msra.mxu0 0.0
  %2929 = vmatprep.subr.mxu0 0.0
  %2930 = vmatpush1.msra.mxu0 0.0
  %2931 = vmatprep.subr.mxu0 0.0
  %2932 = vmatpush1.msra.mxu0 0.0
  %2933 = vmatprep.subr.mxu0 0.0
  %2934 = vmatpush1.msra.mxu0 0.0
  %2935 = vmatprep.subr.mxu0 0.0
  %2936 = vmatpush1.msra.mxu0 0.0
  %2937 = vmatprep.subr.mxu0 0.0
  %2938 = vmatpush1.msra.mxu0 0.0
  %2939 = vmatprep.subr.mxu0 0.0
  %2940 = vmatpush1.msra.mxu0 0.0
  %2941 = vmatprep.subr.mxu0 0.0
  %2942 = vmatpush1.msra.mxu0 0.0
  %2943 = vmatprep.subr.mxu0 0.0
  %2944 = vmatpush1.msra.mxu0 0.0
  %2945 = vmatprep.subr.mxu0 0.0
  %2946 = vmatpush1.msra.mxu0 0.0
  %2947 = vmatprep.subr.mxu0 0.0
  %2948 = vmatpush1.msra.mxu0 0.0
  %2949 = vmatprep.subr.mxu0 0.0
  %2950 = vmatpush1.msra.mxu0 0.0
  %2951 = vmatprep.subr.mxu0 0.0
  %2952 = vmatpush1.msra.mxu0 0.0
  %2953 = vmatprep.subr.mxu0 0.0
  %2954 = vmatpush1.msra.mxu0 0.0
  %2955 = vmatprep.subr.mxu0 0.0
  %2956 = vmatpush1.msra.mxu0 0.0
  %2957 = vmatprep.subr.mxu0 0.0
  %2958 = vmatpush1.msra.mxu0 0.0
  %2959 = vmatprep.subr.mxu0 0.0
  %2960 = vmatpush1.msra.mxu0 0.0
  %2961 = vmatprep.subr.mxu0 0.0
  %2962 = vmatpush1.msra.mxu0 0.0
  %2963 = vmatprep.subr.mxu0 0.0
  %2964 = vmatpush1.msra.mxu0 0.0
  %2965 = vmatprep.subr.mxu0 0.0
  %2966 = vmatpush1.msra.mxu0 0.0
  %2967 = vmatprep.subr.mxu0 0.0
  %2968 = vmatpush1.msra.mxu0 0.0
  %2969 = vmatprep.subr.mxu0 0.0
  %2970 = vmatpush1.msra.mxu0 0.0
  %2971 = vmatprep.subr.mxu0 0.0
  %2972 = vmatpush1.msra.mxu0 0.0
  %2973 = vmatprep.subr.mxu0 0.0
  %2974 = vmatpush1.msra.mxu0 0.0
  %2975 = vmatprep.mubr.f32.mxu0 0.0
  %2976 = vmatmul.mubr.f32.gmra.mrb[0].mxu0 %v2909
  %v2977 = vpop.f32.mrb[0].mxu0
  %v2978 = vadd.f32 0.0, %v2977
  %v2979 = vpop.f32.mrb[0].mxu0
  %v2980 = vadd.f32 0.0, %v2979
  %2981 = vdwg.mxu0
  %2982 = vmatprep.subr.mxu0 %v2903
  %2983 = vmatpush1.msra.mxu0 %v2902
  %2984 = vmatprep.subr.mxu0 0.0
  %2985 = vmatpush1.msra.mxu0 0.0
  %2986 = vmatprep.subr.mxu0 0.0
  %2987 = vmatpush1.msra.mxu0 0.0
  %2988 = vmatprep.subr.mxu0 0.0
  %2989 = vmatpush1.msra.mxu0 0.0
  %2990 = vmatprep.subr.mxu0 0.0
  %2991 = vmatpush1.msra.mxu0 0.0
  %2992 = vmatprep.subr.mxu0 0.0
  %2993 = vmatpush1.msra.mxu0 0.0
  %2994 = vmatprep.subr.mxu0 0.0
  %2995 = vmatpush1.msra.mxu0 0.0
  %2996 = vmatprep.subr.mxu0 0.0
  %2997 = vmatpush1.msra.mxu0 0.0
  %2998 = vmatprep.subr.mxu0 0.0
  %2999 = vmatpush1.msra.mxu0 0.0
  %3000 = vmatprep.subr.mxu0 0.0
  %3001 = vmatpush1.msra.mxu0 0.0
  %3002 = vmatprep.subr.mxu0 0.0
  %3003 = vmatpush1.msra.mxu0 0.0
  %3004 = vmatprep.subr.mxu0 0.0
  %3005 = vmatpush1.msra.mxu0 0.0
  %3006 = vmatprep.subr.mxu0 0.0
  %3007 = vmatpush1.msra.mxu0 0.0
  %3008 = vmatprep.subr.mxu0 0.0
  %3009 = vmatpush1.msra.mxu0 0.0
  %3010 = vmatprep.subr.mxu0 0.0
  %3011 = vmatpush1.msra.mxu0 0.0
  %3012 = vmatprep.subr.mxu0 0.0
  %3013 = vmatpush1.msra.mxu0 0.0
  %3014 = vmatprep.subr.mxu0 0.0
  %3015 = vmatpush1.msra.mxu0 0.0
  %3016 = vmatprep.subr.mxu0 0.0
  %3017 = vmatpush1.msra.mxu0 0.0
  %3018 = vmatprep.subr.mxu0 0.0
  %3019 = vmatpush1.msra.mxu0 0.0
  %3020 = vmatprep.subr.mxu0 0.0
  %3021 = vmatpush1.msra.mxu0 0.0
  %3022 = vmatprep.subr.mxu0 0.0
  %3023 = vmatpush1.msra.mxu0 0.0
  %3024 = vmatprep.subr.mxu0 0.0
  %3025 = vmatpush1.msra.mxu0 0.0
  %3026 = vmatprep.subr.mxu0 0.0
  %3027 = vmatpush1.msra.mxu0 0.0
  %3028 = vmatprep.subr.mxu0 0.0
  %3029 = vmatpush1.msra.mxu0 0.0
  %3030 = vmatprep.subr.mxu0 0.0
  %3031 = vmatpush1.msra.mxu0 0.0
  %3032 = vmatprep.subr.mxu0 0.0
  %3033 = vmatpush1.msra.mxu0 0.0
  %3034 = vmatprep.subr.mxu0 0.0
  %3035 = vmatpush1.msra.mxu0 0.0
  %3036 = vmatprep.subr.mxu0 0.0
  %3037 = vmatpush1.msra.mxu0 0.0
  %3038 = vmatprep.subr.mxu0 0.0
  %3039 = vmatpush1.msra.mxu0 0.0
  %3040 = vmatprep.subr.mxu0 0.0
  %3041 = vmatpush1.msra.mxu0 0.0
  %3042 = vmatprep.subr.mxu0 0.0
  %3043 = vmatpush1.msra.mxu0 0.0
  %3044 = vmatprep.subr.mxu0 0.0
  %3045 = vmatpush1.msra.mxu0 0.0
  %3046 = vmatprep.mubr.f32.mxu0 0.0
  %3047 = vmatmul.mubr.f32.gmra.mrb[0].mxu0 %v2909
  %v3048 = vpop.f32.mrb[0].mxu0
  %v3049 = vadd.f32 0.0, %v3048
  %v3050 = vpop.f32.mrb[0].mxu0
  %v3051 = vadd.f32 0.0, %v3050
  %3052 = vdwg.mxu0
  %v3053 = vadd.f32 %v2883, %v2978
  %v3054 = vadd.f32 %v2884, %v2980
  %v3055 = vadd.f32 %v2885, %v3049
  %v3056 = vadd.f32 %v2886, %v3051
  %s3057 = scalar_lea.vmem %s1, 144
  %v3058 = vld [vmem:[%s3057] sm:$0xff]
  %3059 = vrot.lane.b32.xlu0 %v14, 77
  %v3060 = vpop.permute.xlu0 %3059
  %3061 = vrot.lane.b32.xlu0 %v15, 77
  %v3062 = vpop.permute.xlu0 %3061
  %3063 = vrot.lane.b32.xlu0 %v16, 77
  %v3064 = vpop.permute.xlu0 %3063
  %3065 = vrot.lane.b32.xlu0 %v17, 77
  %v3066 = vpop.permute.xlu0 %3065
  %3067 = vrot.lane.b32.xlu0 %v18, 77
  %v3068 = vpop.permute.xlu0 %3067
  %vm3069 = vcmask 629760
  %v3070 = vsel %vm3069, %v3060, %v3062
  %v3071 = vsel %vm3069, %v3062, %v3064
  %v3072 = vsel %vm3069, %v3064, %v3066
  %v3073 = vsel %vm3069, %v3066, %v3068
  %v3079 = vsel %vm46, %v3058, 0
  %3081 = vmatprep.subr.mxu0 %v3071
  %3082 = vmatpush1.msra.mxu0 %v3070
  %3083 = vmatprep.subr.mxu0 0.0
  %3084 = vmatpush1.msra.mxu0 0.0
  %3085 = vmatprep.subr.mxu0 0.0
  %3086 = vmatpush1.msra.mxu0 0.0
  %3087 = vmatprep.subr.mxu0 0.0
  %3088 = vmatpush1.msra.mxu0 0.0
  %3089 = vmatprep.subr.mxu0 0.0
  %3090 = vmatpush1.msra.mxu0 0.0
  %3091 = vmatprep.subr.mxu0 0.0
  %3092 = vmatpush1.msra.mxu0 0.0
  %3093 = vmatprep.subr.mxu0 0.0
  %3094 = vmatpush1.msra.mxu0 0.0
  %3095 = vmatprep.subr.mxu0 0.0
  %3096 = vmatpush1.msra.mxu0 0.0
  %3097 = vmatprep.subr.mxu0 0.0
  %3098 = vmatpush1.msra.mxu0 0.0
  %3099 = vmatprep.subr.mxu0 0.0
  %3100 = vmatpush1.msra.mxu0 0.0
  %3101 = vmatprep.subr.mxu0 0.0
  %3102 = vmatpush1.msra.mxu0 0.0
  %3103 = vmatprep.subr.mxu0 0.0
  %3104 = vmatpush1.msra.mxu0 0.0
  %3105 = vmatprep.subr.mxu0 0.0
  %3106 = vmatpush1.msra.mxu0 0.0
  %3107 = vmatprep.subr.mxu0 0.0
  %3108 = vmatpush1.msra.mxu0 0.0
  %3109 = vmatprep.subr.mxu0 0.0
  %3110 = vmatpush1.msra.mxu0 0.0
  %3111 = vmatprep.subr.mxu0 0.0
  %3112 = vmatpush1.msra.mxu0 0.0
  %3113 = vmatprep.subr.mxu0 0.0
  %3114 = vmatpush1.msra.mxu0 0.0
  %3115 = vmatprep.subr.mxu0 0.0
  %3116 = vmatpush1.msra.mxu0 0.0
  %3117 = vmatprep.subr.mxu0 0.0
  %3118 = vmatpush1.msra.mxu0 0.0
  %3119 = vmatprep.subr.mxu0 0.0
  %3120 = vmatpush1.msra.mxu0 0.0
  %3121 = vmatprep.subr.mxu0 0.0
  %3122 = vmatpush1.msra.mxu0 0.0
  %3123 = vmatprep.subr.mxu0 0.0
  %3124 = vmatpush1.msra.mxu0 0.0
  %3125 = vmatprep.subr.mxu0 0.0
  %3126 = vmatpush1.msra.mxu0 0.0
  %3127 = vmatprep.subr.mxu0 0.0
  %3128 = vmatpush1.msra.mxu0 0.0
  %3129 = vmatprep.subr.mxu0 0.0
  %3130 = vmatpush1.msra.mxu0 0.0
  %3131 = vmatprep.subr.mxu0 0.0
  %3132 = vmatpush1.msra.mxu0 0.0
  %3133 = vmatprep.subr.mxu0 0.0
  %3134 = vmatpush1.msra.mxu0 0.0
  %3135 = vmatprep.subr.mxu0 0.0
  %3136 = vmatpush1.msra.mxu0 0.0
  %3137 = vmatprep.subr.mxu0 0.0
  %3138 = vmatpush1.msra.mxu0 0.0
  %3139 = vmatprep.subr.mxu0 0.0
  %3140 = vmatpush1.msra.mxu0 0.0
  %3141 = vmatprep.subr.mxu0 0.0
  %3142 = vmatpush1.msra.mxu0 0.0
  %3143 = vmatprep.subr.mxu0 0.0
  %3144 = vmatpush1.msra.mxu0 0.0
  %3145 = vmatprep.mubr.f32.mxu0 0.0
  %3146 = vmatmul.mubr.f32.gmra.mrb[0].mxu0 %v3079
  %v3147 = vpop.f32.mrb[0].mxu0
  %v3148 = vadd.f32 0.0, %v3147
  %v3149 = vpop.f32.mrb[0].mxu0
  %v3150 = vadd.f32 0.0, %v3149
  %3151 = vdwg.mxu0
  %3152 = vmatprep.subr.mxu0 %v3073
  %3153 = vmatpush1.msra.mxu0 %v3072
  %3154 = vmatprep.subr.mxu0 0.0
  %3155 = vmatpush1.msra.mxu0 0.0
  %3156 = vmatprep.subr.mxu0 0.0
  %3157 = vmatpush1.msra.mxu0 0.0
  %3158 = vmatprep.subr.mxu0 0.0
  %3159 = vmatpush1.msra.mxu0 0.0
  %3160 = vmatprep.subr.mxu0 0.0
  %3161 = vmatpush1.msra.mxu0 0.0
  %3162 = vmatprep.subr.mxu0 0.0
  %3163 = vmatpush1.msra.mxu0 0.0
  %3164 = vmatprep.subr.mxu0 0.0
  %3165 = vmatpush1.msra.mxu0 0.0
  %3166 = vmatprep.subr.mxu0 0.0
  %3167 = vmatpush1.msra.mxu0 0.0
  %3168 = vmatprep.subr.mxu0 0.0
  %3169 = vmatpush1.msra.mxu0 0.0
  %3170 = vmatprep.subr.mxu0 0.0
  %3171 = vmatpush1.msra.mxu0 0.0
  %3172 = vmatprep.subr.mxu0 0.0
  %3173 = vmatpush1.msra.mxu0 0.0
  %3174 = vmatprep.subr.mxu0 0.0
  %3175 = vmatpush1.msra.mxu0 0.0
  %3176 = vmatprep.subr.mxu0 0.0
  %3177 = vmatpush1.msra.mxu0 0.0
  %3178 = vmatprep.subr.mxu0 0.0
  %3179 = vmatpush1.msra.mxu0 0.0
  %3180 = vmatprep.subr.mxu0 0.0
  %3181 = vmatpush1.msra.mxu0 0.0
  %3182 = vmatprep.subr.mxu0 0.0
  %3183 = vmatpush1.msra.mxu0 0.0
  %3184 = vmatprep.subr.mxu0 0.0
  %3185 = vmatpush1.msra.mxu0 0.0
  %3186 = vmatprep.subr.mxu0 0.0
  %3187 = vmatpush1.msra.mxu0 0.0
  %3188 = vmatprep.subr.mxu0 0.0
  %3189 = vmatpush1.msra.mxu0 0.0
  %3190 = vmatprep.subr.mxu0 0.0
  %3191 = vmatpush1.msra.mxu0 0.0
  %3192 = vmatprep.subr.mxu0 0.0
  %3193 = vmatpush1.msra.mxu0 0.0
  %3194 = vmatprep.subr.mxu0 0.0
  %3195 = vmatpush1.msra.mxu0 0.0
  %3196 = vmatprep.subr.mxu0 0.0
  %3197 = vmatpush1.msra.mxu0 0.0
  %3198 = vmatprep.subr.mxu0 0.0
  %3199 = vmatpush1.msra.mxu0 0.0
  %3200 = vmatprep.subr.mxu0 0.0
  %3201 = vmatpush1.msra.mxu0 0.0
  %3202 = vmatprep.subr.mxu0 0.0
  %3203 = vmatpush1.msra.mxu0 0.0
  %3204 = vmatprep.subr.mxu0 0.0
  %3205 = vmatpush1.msra.mxu0 0.0
  %3206 = vmatprep.subr.mxu0 0.0
  %3207 = vmatpush1.msra.mxu0 0.0
  %3208 = vmatprep.subr.mxu0 0.0
  %3209 = vmatpush1.msra.mxu0 0.0
  %3210 = vmatprep.subr.mxu0 0.0
  %3211 = vmatpush1.msra.mxu0 0.0
  %3212 = vmatprep.subr.mxu0 0.0
  %3213 = vmatpush1.msra.mxu0 0.0
  %3214 = vmatprep.subr.mxu0 0.0
  %3215 = vmatpush1.msra.mxu0 0.0
  %3216 = vmatprep.mubr.f32.mxu0 0.0
  %3217 = vmatmul.mubr.f32.gmra.mrb[0].mxu0 %v3079
  %v3218 = vpop.f32.mrb[0].mxu0
  %v3219 = vadd.f32 0.0, %v3218
  %v3220 = vpop.f32.mrb[0].mxu0
  %v3221 = vadd.f32 0.0, %v3220
  %3222 = vdwg.mxu0
  %v3223 = vadd.f32 %v3053, %v3148
  %v3224 = vadd.f32 %v3054, %v3150
  %v3225 = vadd.f32 %v3055, %v3219
  %v3226 = vadd.f32 %v3056, %v3221
  %s3227 = scalar_lea.vmem %s1, 152
  %v3228 = vld [vmem:[%s3227] sm:$0xff]
  %3229 = vrot.lane.b32.xlu0 %v14, 76
  %v3230 = vpop.permute.xlu0 %3229
  %3231 = vrot.lane.b32.xlu0 %v15, 76
  %v3232 = vpop.permute.xlu0 %3231
  %3233 = vrot.lane.b32.xlu0 %v16, 76
  %v3234 = vpop.permute.xlu0 %3233
  %3235 = vrot.lane.b32.xlu0 %v17, 76
  %v3236 = vpop.permute.xlu0 %3235
  %3237 = vrot.lane.b32.xlu0 %v18, 76
  %v3238 = vpop.permute.xlu0 %3237
  %vm3239 = vcmask 621568
  %v3240 = vsel %vm3239, %v3230, %v3232
  %v3241 = vsel %vm3239, %v3232, %v3234
  %v3242 = vsel %vm3239, %v3234, %v3236
  %v3243 = vsel %vm3239, %v3236, %v3238
  %v3249 = vsel %vm46, %v3228, 0
  %3251 = vmatprep.subr.mxu0 %v3241
  %3252 = vmatpush1.msra.mxu0 %v3240
  %3253 = vmatprep.subr.mxu0 0.0
  %3254 = vmatpush1.msra.mxu0 0.0
  %3255 = vmatprep.subr.mxu0 0.0
  %3256 = vmatpush1.msra.mxu0 0.0
  %3257 = vmatprep.subr.mxu0 0.0
  %3258 = vmatpush1.msra.mxu0 0.0
  %3259 = vmatprep.subr.mxu0 0.0
  %3260 = vmatpush1.msra.mxu0 0.0
  %3261 = vmatprep.subr.mxu0 0.0
  %3262 = vmatpush1.msra.mxu0 0.0
  %3263 = vmatprep.subr.mxu0 0.0
  %3264 = vmatpush1.msra.mxu0 0.0
  %3265 = vmatprep.subr.mxu0 0.0
  %3266 = vmatpush1.msra.mxu0 0.0
  %3267 = vmatprep.subr.mxu0 0.0
  %3268 = vmatpush1.msra.mxu0 0.0
  %3269 = vmatprep.subr.mxu0 0.0
  %3270 = vmatpush1.msra.mxu0 0.0
  %3271 = vmatprep.subr.mxu0 0.0
  %3272 = vmatpush1.msra.mxu0 0.0
  %3273 = vmatprep.subr.mxu0 0.0
  %3274 = vmatpush1.msra.mxu0 0.0
  %3275 = vmatprep.subr.mxu0 0.0
  %3276 = vmatpush1.msra.mxu0 0.0
  %3277 = vmatprep.subr.mxu0 0.0
  %3278 = vmatpush1.msra.mxu0 0.0
  %3279 = vmatprep.subr.mxu0 0.0
  %3280 = vmatpush1.msra.mxu0 0.0
  %3281 = vmatprep.subr.mxu0 0.0
  %3282 = vmatpush1.msra.mxu0 0.0
  %3283 = vmatprep.subr.mxu0 0.0
  %3284 = vmatpush1.msra.mxu0 0.0
  %3285 = vmatprep.subr.mxu0 0.0
  %3286 = vmatpush1.msra.mxu0 0.0
  %3287 = vmatprep.subr.mxu0 0.0
  %3288 = vmatpush1.msra.mxu0 0.0
  %3289 = vmatprep.subr.mxu0 0.0
  %3290 = vmatpush1.msra.mxu0 0.0
  %3291 = vmatprep.subr.mxu0 0.0
  %3292 = vmatpush1.msra.mxu0 0.0
  %3293 = vmatprep.subr.mxu0 0.0
  %3294 = vmatpush1.msra.mxu0 0.0
  %3295 = vmatprep.subr.mxu0 0.0
  %3296 = vmatpush1.msra.mxu0 0.0
  %3297 = vmatprep.subr.mxu0 0.0
  %3298 = vmatpush1.msra.mxu0 0.0
  %3299 = vmatprep.subr.mxu0 0.0
  %3300 = vmatpush1.msra.mxu0 0.0
  %3301 = vmatprep.subr.mxu0 0.0
  %3302 = vmatpush1.msra.mxu0 0.0
  %3303 = vmatprep.subr.mxu0 0.0
  %3304 = vmatpush1.msra.mxu0 0.0
  %3305 = vmatprep.subr.mxu0 0.0
  %3306 = vmatpush1.msra.mxu0 0.0
  %3307 = vmatprep.subr.mxu0 0.0
  %3308 = vmatpush1.msra.mxu0 0.0
  %3309 = vmatprep.subr.mxu0 0.0
  %3310 = vmatpush1.msra.mxu0 0.0
  %3311 = vmatprep.subr.mxu0 0.0
  %3312 = vmatpush1.msra.mxu0 0.0
  %3313 = vmatprep.subr.mxu0 0.0
  %3314 = vmatpush1.msra.mxu0 0.0
  %3315 = vmatprep.mubr.f32.mxu0 0.0
  %3316 = vmatmul.mubr.f32.gmra.mrb[0].mxu0 %v3249
  %v3317 = vpop.f32.mrb[0].mxu0
  %v3318 = vadd.f32 0.0, %v3317
  %v3319 = vpop.f32.mrb[0].mxu0
  %v3320 = vadd.f32 0.0, %v3319
  %3321 = vdwg.mxu0
  %3322 = vmatprep.subr.mxu0 %v3243
  %3323 = vmatpush1.msra.mxu0 %v3242
  %3324 = vmatprep.subr.mxu0 0.0
  %3325 = vmatpush1.msra.mxu0 0.0
  %3326 = vmatprep.subr.mxu0 0.0
  %3327 = vmatpush1.msra.mxu0 0.0
  %3328 = vmatprep.subr.mxu0 0.0
  %3329 = vmatpush1.msra.mxu0 0.0
  %3330 = vmatprep.subr.mxu0 0.0
  %3331 = vmatpush1.msra.mxu0 0.0
  %3332 = vmatprep.subr.mxu0 0.0
  %3333 = vmatpush1.msra.mxu0 0.0
  %3334 = vmatprep.subr.mxu0 0.0
  %3335 = vmatpush1.msra.mxu0 0.0
  %3336 = vmatprep.subr.mxu0 0.0
  %3337 = vmatpush1.msra.mxu0 0.0
  %3338 = vmatprep.subr.mxu0 0.0
  %3339 = vmatpush1.msra.mxu0 0.0
  %3340 = vmatprep.subr.mxu0 0.0
  %3341 = vmatpush1.msra.mxu0 0.0
  %3342 = vmatprep.subr.mxu0 0.0
  %3343 = vmatpush1.msra.mxu0 0.0
  %3344 = vmatprep.subr.mxu0 0.0
  %3345 = vmatpush1.msra.mxu0 0.0
  %3346 = vmatprep.subr.mxu0 0.0
  %3347 = vmatpush1.msra.mxu0 0.0
  %3348 = vmatprep.subr.mxu0 0.0
  %3349 = vmatpush1.msra.mxu0 0.0
  %3350 = vmatprep.subr.mxu0 0.0
  %3351 = vmatpush1.msra.mxu0 0.0
  %3352 = vmatprep.subr.mxu0 0.0
  %3353 = vmatpush1.msra.mxu0 0.0
  %3354 = vmatprep.subr.mxu0 0.0
  %3355 = vmatpush1.msra.mxu0 0.0
  %3356 = vmatprep.subr.mxu0 0.0
  %3357 = vmatpush1.msra.mxu0 0.0
  %3358 = vmatprep.subr.mxu0 0.0
  %3359 = vmatpush1.msra.mxu0 0.0
  %3360 = vmatprep.subr.mxu0 0.0
  %3361 = vmatpush1.msra.mxu0 0.0
  %3362 = vmatprep.subr.mxu0 0.0
  %3363 = vmatpush1.msra.mxu0 0.0
  %3364 = vmatprep.subr.mxu0 0.0
  %3365 = vmatpush1.msra.mxu0 0.0
  %3366 = vmatprep.subr.mxu0 0.0
  %3367 = vmatpush1.msra.mxu0 0.0
  %3368 = vmatprep.subr.mxu0 0.0
  %3369 = vmatpush1.msra.mxu0 0.0
  %3370 = vmatprep.subr.mxu0 0.0
  %3371 = vmatpush1.msra.mxu0 0.0
  %3372 = vmatprep.subr.mxu0 0.0
  %3373 = vmatpush1.msra.mxu0 0.0
  %3374 = vmatprep.subr.mxu0 0.0
  %3375 = vmatpush1.msra.mxu0 0.0
  %3376 = vmatprep.subr.mxu0 0.0
  %3377 = vmatpush1.msra.mxu0 0.0
  %3378 = vmatprep.subr.mxu0 0.0
  %3379 = vmatpush1.msra.mxu0 0.0
  %3380 = vmatprep.subr.mxu0 0.0
  %3381 = vmatpush1.msra.mxu0 0.0
  %3382 = vmatprep.subr.mxu0 0.0
  %3383 = vmatpush1.msra.mxu0 0.0
  %3384 = vmatprep.subr.mxu0 0.0
  %3385 = vmatpush1.msra.mxu0 0.0
  %3386 = vmatprep.mubr.f32.mxu0 0.0
  %3387 = vmatmul.mubr.f32.gmra.mrb[0].mxu0 %v3249
  %v3388 = vpop.f32.mrb[0].mxu0
  %v3389 = vadd.f32 0.0, %v3388
  %v3390 = vpop.f32.mrb[0].mxu0
  %v3391 = vadd.f32 0.0, %v3390
  %3392 = vdwg.mxu0
  %v3393 = vadd.f32 %v3223, %v3318
  %v3394 = vadd.f32 %v3224, %v3320
  %v3395 = vadd.f32 %v3225, %v3389
  %v3396 = vadd.f32 %v3226, %v3391
  %s3397 = scalar_lea.vmem %s1, 160
  %v3398 = vld [vmem:[%s3397] sm:$0xff]
  %3399 = vrot.lane.b32.xlu0 %v14, 64
  %v3400 = vpop.permute.xlu0 %3399
  %3401 = vrot.lane.b32.xlu0 %v15, 64
  %v3402 = vpop.permute.xlu0 %3401
  %3403 = vrot.lane.b32.xlu0 %v16, 64
  %v3404 = vpop.permute.xlu0 %3403
  %3405 = vrot.lane.b32.xlu0 %v17, 64
  %v3406 = vpop.permute.xlu0 %3405
  %3407 = vrot.lane.b32.xlu0 %v18, 64
  %v3408 = vpop.permute.xlu0 %3407
  %vm3409 = vcmask 523264
  %v3410 = vsel %vm3409, %v3400, %v3402
  %v3411 = vsel %vm3409, %v3402, %v3404
  %v3412 = vsel %vm3409, %v3404, %v3406
  %v3413 = vsel %vm3409, %v3406, %v3408
  %v3419 = vsel %vm46, %v3398, 0
  %3421 = vmatprep.subr.mxu0 %v3411
  %3422 = vmatpush1.msra.mxu0 %v3410
  %3423 = vmatprep.subr.mxu0 0.0
  %3424 = vmatpush1.msra.mxu0 0.0
  %3425 = vmatprep.subr.mxu0 0.0
  %3426 = vmatpush1.msra.mxu0 0.0
  %3427 = vmatprep.subr.mxu0 0.0
  %3428 = vmatpush1.msra.mxu0 0.0
  %3429 = vmatprep.subr.mxu0 0.0
  %3430 = vmatpush1.msra.mxu0 0.0
  %3431 = vmatprep.subr.mxu0 0.0
  %3432 = vmatpush1.msra.mxu0 0.0
  %3433 = vmatprep.subr.mxu0 0.0
  %3434 = vmatpush1.msra.mxu0 0.0
  %3435 = vmatprep.subr.mxu0 0.0
  %3436 = vmatpush1.msra.mxu0 0.0
  %3437 = vmatprep.subr.mxu0 0.0
  %3438 = vmatpush1.msra.mxu0 0.0
  %3439 = vmatprep.subr.mxu0 0.0
  %3440 = vmatpush1.msra.mxu0 0.0
  %3441 = vmatprep.subr.mxu0 0.0
  %3442 = vmatpush1.msra.mxu0 0.0
  %3443 = vmatprep.subr.mxu0 0.0
  %3444 = vmatpush1.msra.mxu0 0.0
  %3445 = vmatprep.subr.mxu0 0.0
  %3446 = vmatpush1.msra.mxu0 0.0
  %3447 = vmatprep.subr.mxu0 0.0
  %3448 = vmatpush1.msra.mxu0 0.0
  %3449 = vmatprep.subr.mxu0 0.0
  %3450 = vmatpush1.msra.mxu0 0.0
  %3451 = vmatprep.subr.mxu0 0.0
  %3452 = vmatpush1.msra.mxu0 0.0
  %3453 = vmatprep.subr.mxu0 0.0
  %3454 = vmatpush1.msra.mxu0 0.0
  %3455 = vmatprep.subr.mxu0 0.0
  %3456 = vmatpush1.msra.mxu0 0.0
  %3457 = vmatprep.subr.mxu0 0.0
  %3458 = vmatpush1.msra.mxu0 0.0
  %3459 = vmatprep.subr.mxu0 0.0
  %3460 = vmatpush1.msra.mxu0 0.0
  %3461 = vmatprep.subr.mxu0 0.0
  %3462 = vmatpush1.msra.mxu0 0.0
  %3463 = vmatprep.subr.mxu0 0.0
  %3464 = vmatpush1.msra.mxu0 0.0
  %3465 = vmatprep.subr.mxu0 0.0
  %3466 = vmatpush1.msra.mxu0 0.0
  %3467 = vmatprep.subr.mxu0 0.0
  %3468 = vmatpush1.msra.mxu0 0.0
  %3469 = vmatprep.subr.mxu0 0.0
  %3470 = vmatpush1.msra.mxu0 0.0
  %3471 = vmatprep.subr.mxu0 0.0
  %3472 = vmatpush1.msra.mxu0 0.0
  %3473 = vmatprep.subr.mxu0 0.0
  %3474 = vmatpush1.msra.mxu0 0.0
  %3475 = vmatprep.subr.mxu0 0.0
  %3476 = vmatpush1.msra.mxu0 0.0
  %3477 = vmatprep.subr.mxu0 0.0
  %3478 = vmatpush1.msra.mxu0 0.0
  %3479 = vmatprep.subr.mxu0 0.0
  %3480 = vmatpush1.msra.mxu0 0.0
  %3481 = vmatprep.subr.mxu0 0.0
  %3482 = vmatpush1.msra.mxu0 0.0
  %3483 = vmatprep.subr.mxu0 0.0
  %3484 = vmatpush1.msra.mxu0 0.0
  %3485 = vmatprep.mubr.f32.mxu0 0.0
  %3486 = vmatmul.mubr.f32.gmra.mrb[0].mxu0 %v3419
  %v3487 = vpop.f32.mrb[0].mxu0
  %v3488 = vadd.f32 0.0, %v3487
  %v3489 = vpop.f32.mrb[0].mxu0
  %v3490 = vadd.f32 0.0, %v3489
  %3491 = vdwg.mxu0
  %3492 = vmatprep.subr.mxu0 %v3413
  %3493 = vmatpush1.msra.mxu0 %v3412
  %3494 = vmatprep.subr.mxu0 0.0
  %3495 = vmatpush1.msra.mxu0 0.0
  %3496 = vmatprep.subr.mxu0 0.0
  %3497 = vmatpush1.msra.mxu0 0.0
  %3498 = vmatprep.subr.mxu0 0.0
  %3499 = vmatpush1.msra.mxu0 0.0
  %3500 = vmatprep.subr.mxu0 0.0
  %3501 = vmatpush1.msra.mxu0 0.0
  %3502 = vmatprep.subr.mxu0 0.0
  %3503 = vmatpush1.msra.mxu0 0.0
  %3504 = vmatprep.subr.mxu0 0.0
  %3505 = vmatpush1.msra.mxu0 0.0
  %3506 = vmatprep.subr.mxu0 0.0
  %3507 = vmatpush1.msra.mxu0 0.0
  %3508 = vmatprep.subr.mxu0 0.0
  %3509 = vmatpush1.msra.mxu0 0.0
  %3510 = vmatprep.subr.mxu0 0.0
  %3511 = vmatpush1.msra.mxu0 0.0
  %3512 = vmatprep.subr.mxu0 0.0
  %3513 = vmatpush1.msra.mxu0 0.0
  %3514 = vmatprep.subr.mxu0 0.0
  %3515 = vmatpush1.msra.mxu0 0.0
  %3516 = vmatprep.subr.mxu0 0.0
  %3517 = vmatpush1.msra.mxu0 0.0
  %3518 = vmatprep.subr.mxu0 0.0
  %3519 = vmatpush1.msra.mxu0 0.0
  %3520 = vmatprep.subr.mxu0 0.0
  %3521 = vmatpush1.msra.mxu0 0.0
  %3522 = vmatprep.subr.mxu0 0.0
  %3523 = vmatpush1.msra.mxu0 0.0
  %3524 = vmatprep.subr.mxu0 0.0
  %3525 = vmatpush1.msra.mxu0 0.0
  %3526 = vmatprep.subr.mxu0 0.0
  %3527 = vmatpush1.msra.mxu0 0.0
  %3528 = vmatprep.subr.mxu0 0.0
  %3529 = vmatpush1.msra.mxu0 0.0
  %3530 = vmatprep.subr.mxu0 0.0
  %3531 = vmatpush1.msra.mxu0 0.0
  %3532 = vmatprep.subr.mxu0 0.0
  %3533 = vmatpush1.msra.mxu0 0.0
  %3534 = vmatprep.subr.mxu0 0.0
  %3535 = vmatpush1.msra.mxu0 0.0
  %3536 = vmatprep.subr.mxu0 0.0
  %3537 = vmatpush1.msra.mxu0 0.0
  %3538 = vmatprep.subr.mxu0 0.0
  %3539 = vmatpush1.msra.mxu0 0.0
  %3540 = vmatprep.subr.mxu0 0.0
  %3541 = vmatpush1.msra.mxu0 0.0
  %3542 = vmatprep.subr.mxu0 0.0
  %3543 = vmatpush1.msra.mxu0 0.0
  %3544 = vmatprep.subr.mxu0 0.0
  %3545 = vmatpush1.msra.mxu0 0.0
  %3546 = vmatprep.subr.mxu0 0.0
  %3547 = vmatpush1.msra.mxu0 0.0
  %3548 = vmatprep.subr.mxu0 0.0
  %3549 = vmatpush1.msra.mxu0 0.0
  %3550 = vmatprep.subr.mxu0 0.0
  %3551 = vmatpush1.msra.mxu0 0.0
  %3552 = vmatprep.subr.mxu0 0.0
  %3553 = vmatpush1.msra.mxu0 0.0
  %3554 = vmatprep.subr.mxu0 0.0
  %3555 = vmatpush1.msra.mxu0 0.0
  %3556 = vmatprep.mubr.f32.mxu0 0.0
  %3557 = vmatmul.mubr.f32.gmra.mrb[0].mxu0 %v3419
  %v3558 = vpop.f32.mrb[0].mxu0
  %v3559 = vadd.f32 0.0, %v3558
  %v3560 = vpop.f32.mrb[0].mxu0
  %v3561 = vadd.f32 0.0, %v3560
  %3562 = vdwg.mxu0
  %v3563 = vadd.f32 %v3393, %v3488
  %v3564 = vadd.f32 %v3394, %v3490
  %v3565 = vadd.f32 %v3395, %v3559
  %v3566 = vadd.f32 %v3396, %v3561
  %s3567 = scalar_lea.vmem %s1, 168
  %v3568 = vld [vmem:[%s3567] sm:$0xff]
  %3569 = vrot.lane.b32.xlu0 %v14, 63
  %v3570 = vpop.permute.xlu0 %3569
  %3571 = vrot.lane.b32.xlu0 %v15, 63
  %v3572 = vpop.permute.xlu0 %3571
  %3573 = vrot.lane.b32.xlu0 %v16, 63
  %v3574 = vpop.permute.xlu0 %3573
  %3575 = vrot.lane.b32.xlu0 %v17, 63
  %v3576 = vpop.permute.xlu0 %3575
  %3577 = vrot.lane.b32.xlu0 %v18, 63
  %v3578 = vpop.permute.xlu0 %3577
  %vm3579 = vcmask 515072
  %v3580 = vsel %vm3579, %v3570, %v3572
  %v3581 = vsel %vm3579, %v3572, %v3574
  %v3582 = vsel %vm3579, %v3574, %v3576
  %v3583 = vsel %vm3579, %v3576, %v3578
  %v3589 = vsel %vm46, %v3568, 0
  %3591 = vmatprep.subr.mxu0 %v3581
  %3592 = vmatpush1.msra.mxu0 %v3580
  %3593 = vmatprep.subr.mxu0 0.0
  %3594 = vmatpush1.msra.mxu0 0.0
  %3595 = vmatprep.subr.mxu0 0.0
  %3596 = vmatpush1.msra.mxu0 0.0
  %3597 = vmatprep.subr.mxu0 0.0
  %3598 = vmatpush1.msra.mxu0 0.0
  %3599 = vmatprep.subr.mxu0 0.0
  %3600 = vmatpush1.msra.mxu0 0.0
  %3601 = vmatprep.subr.mxu0 0.0
  %3602 = vmatpush1.msra.mxu0 0.0
  %3603 = vmatprep.subr.mxu0 0.0
  %3604 = vmatpush1.msra.mxu0 0.0
  %3605 = vmatprep.subr.mxu0 0.0
  %3606 = vmatpush1.msra.mxu0 0.0
  %3607 = vmatprep.subr.mxu0 0.0
  %3608 = vmatpush1.msra.mxu0 0.0
  %3609 = vmatprep.subr.mxu0 0.0
  %3610 = vmatpush1.msra.mxu0 0.0
  %3611 = vmatprep.subr.mxu0 0.0
  %3612 = vmatpush1.msra.mxu0 0.0
  %3613 = vmatprep.subr.mxu0 0.0
  %3614 = vmatpush1.msra.mxu0 0.0
  %3615 = vmatprep.subr.mxu0 0.0
  %3616 = vmatpush1.msra.mxu0 0.0
  %3617 = vmatprep.subr.mxu0 0.0
  %3618 = vmatpush1.msra.mxu0 0.0
  %3619 = vmatprep.subr.mxu0 0.0
  %3620 = vmatpush1.msra.mxu0 0.0
  %3621 = vmatprep.subr.mxu0 0.0
  %3622 = vmatpush1.msra.mxu0 0.0
  %3623 = vmatprep.subr.mxu0 0.0
  %3624 = vmatpush1.msra.mxu0 0.0
  %3625 = vmatprep.subr.mxu0 0.0
  %3626 = vmatpush1.msra.mxu0 0.0
  %3627 = vmatprep.subr.mxu0 0.0
  %3628 = vmatpush1.msra.mxu0 0.0
  %3629 = vmatprep.subr.mxu0 0.0
  %3630 = vmatpush1.msra.mxu0 0.0
  %3631 = vmatprep.subr.mxu0 0.0
  %3632 = vmatpush1.msra.mxu0 0.0
  %3633 = vmatprep.subr.mxu0 0.0
  %3634 = vmatpush1.msra.mxu0 0.0
  %3635 = vmatprep.subr.mxu0 0.0
  %3636 = vmatpush1.msra.mxu0 0.0
  %3637 = vmatprep.subr.mxu0 0.0
  %3638 = vmatpush1.msra.mxu0 0.0
  %3639 = vmatprep.subr.mxu0 0.0
  %3640 = vmatpush1.msra.mxu0 0.0
  %3641 = vmatprep.subr.mxu0 0.0
  %3642 = vmatpush1.msra.mxu0 0.0
  %3643 = vmatprep.subr.mxu0 0.0
  %3644 = vmatpush1.msra.mxu0 0.0
  %3645 = vmatprep.subr.mxu0 0.0
  %3646 = vmatpush1.msra.mxu0 0.0
  %3647 = vmatprep.subr.mxu0 0.0
  %3648 = vmatpush1.msra.mxu0 0.0
  %3649 = vmatprep.subr.mxu0 0.0
  %3650 = vmatpush1.msra.mxu0 0.0
  %3651 = vmatprep.subr.mxu0 0.0
  %3652 = vmatpush1.msra.mxu0 0.0
  %3653 = vmatprep.subr.mxu0 0.0
  %3654 = vmatpush1.msra.mxu0 0.0
  %3655 = vmatprep.mubr.f32.mxu0 0.0
  %3656 = vmatmul.mubr.f32.gmra.mrb[0].mxu0 %v3589
  %v3657 = vpop.f32.mrb[0].mxu0
  %v3658 = vadd.f32 0.0, %v3657
  %v3659 = vpop.f32.mrb[0].mxu0
  %v3660 = vadd.f32 0.0, %v3659
  %3661 = vdwg.mxu0
  %3662 = vmatprep.subr.mxu0 %v3583
  %3663 = vmatpush1.msra.mxu0 %v3582
  %3664 = vmatprep.subr.mxu0 0.0
  %3665 = vmatpush1.msra.mxu0 0.0
  %3666 = vmatprep.subr.mxu0 0.0
  %3667 = vmatpush1.msra.mxu0 0.0
  %3668 = vmatprep.subr.mxu0 0.0
  %3669 = vmatpush1.msra.mxu0 0.0
  %3670 = vmatprep.subr.mxu0 0.0
  %3671 = vmatpush1.msra.mxu0 0.0
  %3672 = vmatprep.subr.mxu0 0.0
  %3673 = vmatpush1.msra.mxu0 0.0
  %3674 = vmatprep.subr.mxu0 0.0
  %3675 = vmatpush1.msra.mxu0 0.0
  %3676 = vmatprep.subr.mxu0 0.0
  %3677 = vmatpush1.msra.mxu0 0.0
  %3678 = vmatprep.subr.mxu0 0.0
  %3679 = vmatpush1.msra.mxu0 0.0
  %3680 = vmatprep.subr.mxu0 0.0
  %3681 = vmatpush1.msra.mxu0 0.0
  %3682 = vmatprep.subr.mxu0 0.0
  %3683 = vmatpush1.msra.mxu0 0.0
  %3684 = vmatprep.subr.mxu0 0.0
  %3685 = vmatpush1.msra.mxu0 0.0
  %3686 = vmatprep.subr.mxu0 0.0
  %3687 = vmatpush1.msra.mxu0 0.0
  %3688 = vmatprep.subr.mxu0 0.0
  %3689 = vmatpush1.msra.mxu0 0.0
  %3690 = vmatprep.subr.mxu0 0.0
  %3691 = vmatpush1.msra.mxu0 0.0
  %3692 = vmatprep.subr.mxu0 0.0
  %3693 = vmatpush1.msra.mxu0 0.0
  %3694 = vmatprep.subr.mxu0 0.0
  %3695 = vmatpush1.msra.mxu0 0.0
  %3696 = vmatprep.subr.mxu0 0.0
  %3697 = vmatpush1.msra.mxu0 0.0
  %3698 = vmatprep.subr.mxu0 0.0
  %3699 = vmatpush1.msra.mxu0 0.0
  %3700 = vmatprep.subr.mxu0 0.0
  %3701 = vmatpush1.msra.mxu0 0.0
  %3702 = vmatprep.subr.mxu0 0.0
  %3703 = vmatpush1.msra.mxu0 0.0
  %3704 = vmatprep.subr.mxu0 0.0
  %3705 = vmatpush1.msra.mxu0 0.0
  %3706 = vmatprep.subr.mxu0 0.0
  %3707 = vmatpush1.msra.mxu0 0.0
  %3708 = vmatprep.subr.mxu0 0.0
  %3709 = vmatpush1.msra.mxu0 0.0
  %3710 = vmatprep.subr.mxu0 0.0
  %3711 = vmatpush1.msra.mxu0 0.0
  %3712 = vmatprep.subr.mxu0 0.0
  %3713 = vmatpush1.msra.mxu0 0.0
  %3714 = vmatprep.subr.mxu0 0.0
  %3715 = vmatpush1.msra.mxu0 0.0
  %3716 = vmatprep.subr.mxu0 0.0
  %3717 = vmatpush1.msra.mxu0 0.0
  %3718 = vmatprep.subr.mxu0 0.0
  %3719 = vmatpush1.msra.mxu0 0.0
  %3720 = vmatprep.subr.mxu0 0.0
  %3721 = vmatpush1.msra.mxu0 0.0
  %3722 = vmatprep.subr.mxu0 0.0
  %3723 = vmatpush1.msra.mxu0 0.0
  %3724 = vmatprep.subr.mxu0 0.0
  %3725 = vmatpush1.msra.mxu0 0.0
  %3726 = vmatprep.mubr.f32.mxu0 0.0
  %3727 = vmatmul.mubr.f32.gmra.mrb[0].mxu0 %v3589
  %v3728 = vpop.f32.mrb[0].mxu0
  %v3729 = vadd.f32 0.0, %v3728
  %v3730 = vpop.f32.mrb[0].mxu0
  %v3731 = vadd.f32 0.0, %v3730
  %3732 = vdwg.mxu0
  %v3733 = vadd.f32 %v3563, %v3658
  %v3734 = vadd.f32 %v3564, %v3660
  %v3735 = vadd.f32 %v3565, %v3729
  %v3736 = vadd.f32 %v3566, %v3731
  %s3737 = scalar_lea.vmem %s1, 176
  %v3738 = vld [vmem:[%s3737] sm:$0xff]
  %3739 = vrot.lane.b32.xlu0 %v14, 62
  %v3740 = vpop.permute.xlu0 %3739
  %3741 = vrot.lane.b32.xlu0 %v15, 62
  %v3742 = vpop.permute.xlu0 %3741
  %3743 = vrot.lane.b32.xlu0 %v16, 62
  %v3744 = vpop.permute.xlu0 %3743
  %3745 = vrot.lane.b32.xlu0 %v17, 62
  %v3746 = vpop.permute.xlu0 %3745
  %3747 = vrot.lane.b32.xlu0 %v18, 62
  %v3748 = vpop.permute.xlu0 %3747
  %vm3749 = vcmask 506880
  %v3750 = vsel %vm3749, %v3740, %v3742
  %v3751 = vsel %vm3749, %v3742, %v3744
  %v3752 = vsel %vm3749, %v3744, %v3746
  %v3753 = vsel %vm3749, %v3746, %v3748
  %v3759 = vsel %vm46, %v3738, 0
  %3761 = vmatprep.subr.mxu0 %v3751
  %3762 = vmatpush1.msra.mxu0 %v3750
  %3763 = vmatprep.subr.mxu0 0.0
  %3764 = vmatpush1.msra.mxu0 0.0
  %3765 = vmatprep.subr.mxu0 0.0
  %3766 = vmatpush1.msra.mxu0 0.0
  %3767 = vmatprep.subr.mxu0 0.0
  %3768 = vmatpush1.msra.mxu0 0.0
  %3769 = vmatprep.subr.mxu0 0.0
  %3770 = vmatpush1.msra.mxu0 0.0
  %3771 = vmatprep.subr.mxu0 0.0
  %3772 = vmatpush1.msra.mxu0 0.0
  %3773 = vmatprep.subr.mxu0 0.0
  %3774 = vmatpush1.msra.mxu0 0.0
  %3775 = vmatprep.subr.mxu0 0.0
  %3776 = vmatpush1.msra.mxu0 0.0
  %3777 = vmatprep.subr.mxu0 0.0
  %3778 = vmatpush1.msra.mxu0 0.0
  %3779 = vmatprep.subr.mxu0 0.0
  %3780 = vmatpush1.msra.mxu0 0.0
  %3781 = vmatprep.subr.mxu0 0.0
  %3782 = vmatpush1.msra.mxu0 0.0
  %3783 = vmatprep.subr.mxu0 0.0
  %3784 = vmatpush1.msra.mxu0 0.0
  %3785 = vmatprep.subr.mxu0 0.0
  %3786 = vmatpush1.msra.mxu0 0.0
  %3787 = vmatprep.subr.mxu0 0.0
  %3788 = vmatpush1.msra.mxu0 0.0
  %3789 = vmatprep.subr.mxu0 0.0
  %3790 = vmatpush1.msra.mxu0 0.0
  %3791 = vmatprep.subr.mxu0 0.0
  %3792 = vmatpush1.msra.mxu0 0.0
  %3793 = vmatprep.subr.mxu0 0.0
  %3794 = vmatpush1.msra.mxu0 0.0
  %3795 = vmatprep.subr.mxu0 0.0
  %3796 = vmatpush1.msra.mxu0 0.0
  %3797 = vmatprep.subr.mxu0 0.0
  %3798 = vmatpush1.msra.mxu0 0.0
  %3799 = vmatprep.subr.mxu0 0.0
  %3800 = vmatpush1.msra.mxu0 0.0
  %3801 = vmatprep.subr.mxu0 0.0
  %3802 = vmatpush1.msra.mxu0 0.0
  %3803 = vmatprep.subr.mxu0 0.0
  %3804 = vmatpush1.msra.mxu0 0.0
  %3805 = vmatprep.subr.mxu0 0.0
  %3806 = vmatpush1.msra.mxu0 0.0
  %3807 = vmatprep.subr.mxu0 0.0
  %3808 = vmatpush1.msra.mxu0 0.0
  %3809 = vmatprep.subr.mxu0 0.0
  %3810 = vmatpush1.msra.mxu0 0.0
  %3811 = vmatprep.subr.mxu0 0.0
  %3812 = vmatpush1.msra.mxu0 0.0
  %3813 = vmatprep.subr.mxu0 0.0
  %3814 = vmatpush1.msra.mxu0 0.0
  %3815 = vmatprep.subr.mxu0 0.0
  %3816 = vmatpush1.msra.mxu0 0.0
  %3817 = vmatprep.subr.mxu0 0.0
  %3818 = vmatpush1.msra.mxu0 0.0
  %3819 = vmatprep.subr.mxu0 0.0
  %3820 = vmatpush1.msra.mxu0 0.0
  %3821 = vmatprep.subr.mxu0 0.0
  %3822 = vmatpush1.msra.mxu0 0.0
  %3823 = vmatprep.subr.mxu0 0.0
  %3824 = vmatpush1.msra.mxu0 0.0
  %3825 = vmatprep.mubr.f32.mxu0 0.0
  %3826 = vmatmul.mubr.f32.gmra.mrb[0].mxu0 %v3759
  %v3827 = vpop.f32.mrb[0].mxu0
  %v3828 = vadd.f32 0.0, %v3827
  %v3829 = vpop.f32.mrb[0].mxu0
  %v3830 = vadd.f32 0.0, %v3829
  %3831 = vdwg.mxu0
  %3832 = vmatprep.subr.mxu0 %v3753
  %3833 = vmatpush1.msra.mxu0 %v3752
  %3834 = vmatprep.subr.mxu0 0.0
  %3835 = vmatpush1.msra.mxu0 0.0
  %3836 = vmatprep.subr.mxu0 0.0
  %3837 = vmatpush1.msra.mxu0 0.0
  %3838 = vmatprep.subr.mxu0 0.0
  %3839 = vmatpush1.msra.mxu0 0.0
  %3840 = vmatprep.subr.mxu0 0.0
  %3841 = vmatpush1.msra.mxu0 0.0
  %3842 = vmatprep.subr.mxu0 0.0
  %3843 = vmatpush1.msra.mxu0 0.0
  %3844 = vmatprep.subr.mxu0 0.0
  %3845 = vmatpush1.msra.mxu0 0.0
  %3846 = vmatprep.subr.mxu0 0.0
  %3847 = vmatpush1.msra.mxu0 0.0
  %3848 = vmatprep.subr.mxu0 0.0
  %3849 = vmatpush1.msra.mxu0 0.0
  %3850 = vmatprep.subr.mxu0 0.0
  %3851 = vmatpush1.msra.mxu0 0.0
  %3852 = vmatprep.subr.mxu0 0.0
  %3853 = vmatpush1.msra.mxu0 0.0
  %3854 = vmatprep.subr.mxu0 0.0
  %3855 = vmatpush1.msra.mxu0 0.0
  %3856 = vmatprep.subr.mxu0 0.0
  %3857 = vmatpush1.msra.mxu0 0.0
  %3858 = vmatprep.subr.mxu0 0.0
  %3859 = vmatpush1.msra.mxu0 0.0
  %3860 = vmatprep.subr.mxu0 0.0
  %3861 = vmatpush1.msra.mxu0 0.0
  %3862 = vmatprep.subr.mxu0 0.0
  %3863 = vmatpush1.msra.mxu0 0.0
  %3864 = vmatprep.subr.mxu0 0.0
  %3865 = vmatpush1.msra.mxu0 0.0
  %3866 = vmatprep.subr.mxu0 0.0
  %3867 = vmatpush1.msra.mxu0 0.0
  %3868 = vmatprep.subr.mxu0 0.0
  %3869 = vmatpush1.msra.mxu0 0.0
  %3870 = vmatprep.subr.mxu0 0.0
  %3871 = vmatpush1.msra.mxu0 0.0
  %3872 = vmatprep.subr.mxu0 0.0
  %3873 = vmatpush1.msra.mxu0 0.0
  %3874 = vmatprep.subr.mxu0 0.0
  %3875 = vmatpush1.msra.mxu0 0.0
  %3876 = vmatprep.subr.mxu0 0.0
  %3877 = vmatpush1.msra.mxu0 0.0
  %3878 = vmatprep.subr.mxu0 0.0
  %3879 = vmatpush1.msra.mxu0 0.0
  %3880 = vmatprep.subr.mxu0 0.0
  %3881 = vmatpush1.msra.mxu0 0.0
  %3882 = vmatprep.subr.mxu0 0.0
  %3883 = vmatpush1.msra.mxu0 0.0
  %3884 = vmatprep.subr.mxu0 0.0
  %3885 = vmatpush1.msra.mxu0 0.0
  %3886 = vmatprep.subr.mxu0 0.0
  %3887 = vmatpush1.msra.mxu0 0.0
  %3888 = vmatprep.subr.mxu0 0.0
  %3889 = vmatpush1.msra.mxu0 0.0
  %3890 = vmatprep.subr.mxu0 0.0
  %3891 = vmatpush1.msra.mxu0 0.0
  %3892 = vmatprep.subr.mxu0 0.0
  %3893 = vmatpush1.msra.mxu0 0.0
  %3894 = vmatprep.subr.mxu0 0.0
  %3895 = vmatpush1.msra.mxu0 0.0
  %3896 = vmatprep.mubr.f32.mxu0 0.0
  %3897 = vmatmul.mubr.f32.gmra.mrb[0].mxu0 %v3759
  %v3898 = vpop.f32.mrb[0].mxu0
  %v3899 = vadd.f32 0.0, %v3898
  %v3900 = vpop.f32.mrb[0].mxu0
  %v3901 = vadd.f32 0.0, %v3900
  %3902 = vdwg.mxu0
  %v3903 = vadd.f32 %v3733, %v3828
  %v3904 = vadd.f32 %v3734, %v3830
  %v3905 = vadd.f32 %v3735, %v3899
  %v3906 = vadd.f32 %v3736, %v3901
  %s3907 = scalar_lea.vmem %s1, 184
  %v3908 = vld [vmem:[%s3907] sm:$0xff]
  %3909 = vrot.lane.b32.xlu0 %v14, 61
  %v3910 = vpop.permute.xlu0 %3909
  %3911 = vrot.lane.b32.xlu0 %v15, 61
  %v3912 = vpop.permute.xlu0 %3911
  %3913 = vrot.lane.b32.xlu0 %v16, 61
  %v3914 = vpop.permute.xlu0 %3913
  %3915 = vrot.lane.b32.xlu0 %v17, 61
  %v3916 = vpop.permute.xlu0 %3915
  %3917 = vrot.lane.b32.xlu0 %v18, 61
  %v3918 = vpop.permute.xlu0 %3917
  %vm3919 = vcmask 498688
  %v3920 = vsel %vm3919, %v3910, %v3912
  %v3921 = vsel %vm3919, %v3912, %v3914
  %v3922 = vsel %vm3919, %v3914, %v3916
  %v3923 = vsel %vm3919, %v3916, %v3918
  %v3929 = vsel %vm46, %v3908, 0
  %3931 = vmatprep.subr.mxu0 %v3921
  %3932 = vmatpush1.msra.mxu0 %v3920
  %3933 = vmatprep.subr.mxu0 0.0
  %3934 = vmatpush1.msra.mxu0 0.0
  %3935 = vmatprep.subr.mxu0 0.0
  %3936 = vmatpush1.msra.mxu0 0.0
  %3937 = vmatprep.subr.mxu0 0.0
  %3938 = vmatpush1.msra.mxu0 0.0
  %3939 = vmatprep.subr.mxu0 0.0
  %3940 = vmatpush1.msra.mxu0 0.0
  %3941 = vmatprep.subr.mxu0 0.0
  %3942 = vmatpush1.msra.mxu0 0.0
  %3943 = vmatprep.subr.mxu0 0.0
  %3944 = vmatpush1.msra.mxu0 0.0
  %3945 = vmatprep.subr.mxu0 0.0
  %3946 = vmatpush1.msra.mxu0 0.0
  %3947 = vmatprep.subr.mxu0 0.0
  %3948 = vmatpush1.msra.mxu0 0.0
  %3949 = vmatprep.subr.mxu0 0.0
  %3950 = vmatpush1.msra.mxu0 0.0
  %3951 = vmatprep.subr.mxu0 0.0
  %3952 = vmatpush1.msra.mxu0 0.0
  %3953 = vmatprep.subr.mxu0 0.0
  %3954 = vmatpush1.msra.mxu0 0.0
  %3955 = vmatprep.subr.mxu0 0.0
  %3956 = vmatpush1.msra.mxu0 0.0
  %3957 = vmatprep.subr.mxu0 0.0
  %3958 = vmatpush1.msra.mxu0 0.0
  %3959 = vmatprep.subr.mxu0 0.0
  %3960 = vmatpush1.msra.mxu0 0.0
  %3961 = vmatprep.subr.mxu0 0.0
  %3962 = vmatpush1.msra.mxu0 0.0
  %3963 = vmatprep.subr.mxu0 0.0
  %3964 = vmatpush1.msra.mxu0 0.0
  %3965 = vmatprep.subr.mxu0 0.0
  %3966 = vmatpush1.msra.mxu0 0.0
  %3967 = vmatprep.subr.mxu0 0.0
  %3968 = vmatpush1.msra.mxu0 0.0
  %3969 = vmatprep.subr.mxu0 0.0
  %3970 = vmatpush1.msra.mxu0 0.0
  %3971 = vmatprep.subr.mxu0 0.0
  %3972 = vmatpush1.msra.mxu0 0.0
  %3973 = vmatprep.subr.mxu0 0.0
  %3974 = vmatpush1.msra.mxu0 0.0
  %3975 = vmatprep.subr.mxu0 0.0
  %3976 = vmatpush1.msra.mxu0 0.0
  %3977 = vmatprep.subr.mxu0 0.0
  %3978 = vmatpush1.msra.mxu0 0.0
  %3979 = vmatprep.subr.mxu0 0.0
  %3980 = vmatpush1.msra.mxu0 0.0
  %3981 = vmatprep.subr.mxu0 0.0
  %3982 = vmatpush1.msra.mxu0 0.0
  %3983 = vmatprep.subr.mxu0 0.0
  %3984 = vmatpush1.msra.mxu0 0.0
  %3985 = vmatprep.subr.mxu0 0.0
  %3986 = vmatpush1.msra.mxu0 0.0
  %3987 = vmatprep.subr.mxu0 0.0
  %3988 = vmatpush1.msra.mxu0 0.0
  %3989 = vmatprep.subr.mxu0 0.0
  %3990 = vmatpush1.msra.mxu0 0.0
  %3991 = vmatprep.subr.mxu0 0.0
  %3992 = vmatpush1.msra.mxu0 0.0
  %3993 = vmatprep.subr.mxu0 0.0
  %3994 = vmatpush1.msra.mxu0 0.0
  %3995 = vmatprep.mubr.f32.mxu0 0.0
  %3996 = vmatmul.mubr.f32.gmra.mrb[0].mxu0 %v3929
  %v3997 = vpop.f32.mrb[0].mxu0
  %v3998 = vadd.f32 0.0, %v3997
  %v3999 = vpop.f32.mrb[0].mxu0
  %v4000 = vadd.f32 0.0, %v3999
  %4001 = vdwg.mxu0
  %4002 = vmatprep.subr.mxu0 %v3923
  %4003 = vmatpush1.msra.mxu0 %v3922
  %4004 = vmatprep.subr.mxu0 0.0
  %4005 = vmatpush1.msra.mxu0 0.0
  %4006 = vmatprep.subr.mxu0 0.0
  %4007 = vmatpush1.msra.mxu0 0.0
  %4008 = vmatprep.subr.mxu0 0.0
  %4009 = vmatpush1.msra.mxu0 0.0
  %4010 = vmatprep.subr.mxu0 0.0
  %4011 = vmatpush1.msra.mxu0 0.0
  %4012 = vmatprep.subr.mxu0 0.0
  %4013 = vmatpush1.msra.mxu0 0.0
  %4014 = vmatprep.subr.mxu0 0.0
  %4015 = vmatpush1.msra.mxu0 0.0
  %4016 = vmatprep.subr.mxu0 0.0
  %4017 = vmatpush1.msra.mxu0 0.0
  %4018 = vmatprep.subr.mxu0 0.0
  %4019 = vmatpush1.msra.mxu0 0.0
  %4020 = vmatprep.subr.mxu0 0.0
  %4021 = vmatpush1.msra.mxu0 0.0
  %4022 = vmatprep.subr.mxu0 0.0
  %4023 = vmatpush1.msra.mxu0 0.0
  %4024 = vmatprep.subr.mxu0 0.0
  %4025 = vmatpush1.msra.mxu0 0.0
  %4026 = vmatprep.subr.mxu0 0.0
  %4027 = vmatpush1.msra.mxu0 0.0
  %4028 = vmatprep.subr.mxu0 0.0
  %4029 = vmatpush1.msra.mxu0 0.0
  %4030 = vmatprep.subr.mxu0 0.0
  %4031 = vmatpush1.msra.mxu0 0.0
  %4032 = vmatprep.subr.mxu0 0.0
  %4033 = vmatpush1.msra.mxu0 0.0
  %4034 = vmatprep.subr.mxu0 0.0
  %4035 = vmatpush1.msra.mxu0 0.0
  %4036 = vmatprep.subr.mxu0 0.0
  %4037 = vmatpush1.msra.mxu0 0.0
  %4038 = vmatprep.subr.mxu0 0.0
  %4039 = vmatpush1.msra.mxu0 0.0
  %4040 = vmatprep.subr.mxu0 0.0
  %4041 = vmatpush1.msra.mxu0 0.0
  %4042 = vmatprep.subr.mxu0 0.0
  %4043 = vmatpush1.msra.mxu0 0.0
  %4044 = vmatprep.subr.mxu0 0.0
  %4045 = vmatpush1.msra.mxu0 0.0
  %4046 = vmatprep.subr.mxu0 0.0
  %4047 = vmatpush1.msra.mxu0 0.0
  %4048 = vmatprep.subr.mxu0 0.0
  %4049 = vmatpush1.msra.mxu0 0.0
  %4050 = vmatprep.subr.mxu0 0.0
  %4051 = vmatpush1.msra.mxu0 0.0
  %4052 = vmatprep.subr.mxu0 0.0
  %4053 = vmatpush1.msra.mxu0 0.0
  %4054 = vmatprep.subr.mxu0 0.0
  %4055 = vmatpush1.msra.mxu0 0.0
  %4056 = vmatprep.subr.mxu0 0.0
  %4057 = vmatpush1.msra.mxu0 0.0
  %4058 = vmatprep.subr.mxu0 0.0
  %4059 = vmatpush1.msra.mxu0 0.0
  %4060 = vmatprep.subr.mxu0 0.0
  %4061 = vmatpush1.msra.mxu0 0.0
  %4062 = vmatprep.subr.mxu0 0.0
  %4063 = vmatpush1.msra.mxu0 0.0
  %4064 = vmatprep.subr.mxu0 0.0
  %4065 = vmatpush1.msra.mxu0 0.0
  %4066 = vmatprep.mubr.f32.mxu0 0.0
  %4067 = vmatmul.mubr.f32.gmra.mrb[0].mxu0 %v3929
  %v4068 = vpop.f32.mrb[0].mxu0
  %v4069 = vadd.f32 0.0, %v4068
  %v4070 = vpop.f32.mrb[0].mxu0
  %v4071 = vadd.f32 0.0, %v4070
  %4072 = vdwg.mxu0
  %v4073 = vadd.f32 %v3903, %v3998
  %v4074 = vadd.f32 %v3904, %v4000
  %v4075 = vadd.f32 %v3905, %v4069
  %v4076 = vadd.f32 %v3906, %v4071
  %s4077 = scalar_lea.vmem %s1, 192
  %v4078 = vld [vmem:[%s4077] sm:$0xff]
  %4079 = vrot.lane.b32.xlu0 %v14, 60
  %v4080 = vpop.permute.xlu0 %4079
  %4081 = vrot.lane.b32.xlu0 %v15, 60
  %v4082 = vpop.permute.xlu0 %4081
  %4083 = vrot.lane.b32.xlu0 %v16, 60
  %v4084 = vpop.permute.xlu0 %4083
  %4085 = vrot.lane.b32.xlu0 %v17, 60
  %v4086 = vpop.permute.xlu0 %4085
  %4087 = vrot.lane.b32.xlu0 %v18, 60
  %v4088 = vpop.permute.xlu0 %4087
  %vm4089 = vcmask 490496
  %v4090 = vsel %vm4089, %v4080, %v4082
  %v4091 = vsel %vm4089, %v4082, %v4084
  %v4092 = vsel %vm4089, %v4084, %v4086
  %v4093 = vsel %vm4089, %v4086, %v4088
  %v4099 = vsel %vm46, %v4078, 0
  %4101 = vmatprep.subr.mxu0 %v4091
  %4102 = vmatpush1.msra.mxu0 %v4090
  %4103 = vmatprep.subr.mxu0 0.0
  %4104 = vmatpush1.msra.mxu0 0.0
  %4105 = vmatprep.subr.mxu0 0.0
  %4106 = vmatpush1.msra.mxu0 0.0
  %4107 = vmatprep.subr.mxu0 0.0
  %4108 = vmatpush1.msra.mxu0 0.0
  %4109 = vmatprep.subr.mxu0 0.0
  %4110 = vmatpush1.msra.mxu0 0.0
  %4111 = vmatprep.subr.mxu0 0.0
  %4112 = vmatpush1.msra.mxu0 0.0
  %4113 = vmatprep.subr.mxu0 0.0
  %4114 = vmatpush1.msra.mxu0 0.0
  %4115 = vmatprep.subr.mxu0 0.0
  %4116 = vmatpush1.msra.mxu0 0.0
  %4117 = vmatprep.subr.mxu0 0.0
  %4118 = vmatpush1.msra.mxu0 0.0
  %4119 = vmatprep.subr.mxu0 0.0
  %4120 = vmatpush1.msra.mxu0 0.0
  %4121 = vmatprep.subr.mxu0 0.0
  %4122 = vmatpush1.msra.mxu0 0.0
  %4123 = vmatprep.subr.mxu0 0.0
  %4124 = vmatpush1.msra.mxu0 0.0
  %4125 = vmatprep.subr.mxu0 0.0
  %4126 = vmatpush1.msra.mxu0 0.0
  %4127 = vmatprep.subr.mxu0 0.0
  %4128 = vmatpush1.msra.mxu0 0.0
  %4129 = vmatprep.subr.mxu0 0.0
  %4130 = vmatpush1.msra.mxu0 0.0
  %4131 = vmatprep.subr.mxu0 0.0
  %4132 = vmatpush1.msra.mxu0 0.0
  %4133 = vmatprep.subr.mxu0 0.0
  %4134 = vmatpush1.msra.mxu0 0.0
  %4135 = vmatprep.subr.mxu0 0.0
  %4136 = vmatpush1.msra.mxu0 0.0
  %4137 = vmatprep.subr.mxu0 0.0
  %4138 = vmatpush1.msra.mxu0 0.0
  %4139 = vmatprep.subr.mxu0 0.0
  %4140 = vmatpush1.msra.mxu0 0.0
  %4141 = vmatprep.subr.mxu0 0.0
  %4142 = vmatpush1.msra.mxu0 0.0
  %4143 = vmatprep.subr.mxu0 0.0
  %4144 = vmatpush1.msra.mxu0 0.0
  %4145 = vmatprep.subr.mxu0 0.0
  %4146 = vmatpush1.msra.mxu0 0.0
  %4147 = vmatprep.subr.mxu0 0.0
  %4148 = vmatpush1.msra.mxu0 0.0
  %4149 = vmatprep.subr.mxu0 0.0
  %4150 = vmatpush1.msra.mxu0 0.0
  %4151 = vmatprep.subr.mxu0 0.0
  %4152 = vmatpush1.msra.mxu0 0.0
  %4153 = vmatprep.subr.mxu0 0.0
  %4154 = vmatpush1.msra.mxu0 0.0
  %4155 = vmatprep.subr.mxu0 0.0
  %4156 = vmatpush1.msra.mxu0 0.0
  %4157 = vmatprep.subr.mxu0 0.0
  %4158 = vmatpush1.msra.mxu0 0.0
  %4159 = vmatprep.subr.mxu0 0.0
  %4160 = vmatpush1.msra.mxu0 0.0
  %4161 = vmatprep.subr.mxu0 0.0
  %4162 = vmatpush1.msra.mxu0 0.0
  %4163 = vmatprep.subr.mxu0 0.0
  %4164 = vmatpush1.msra.mxu0 0.0
  %4165 = vmatprep.mubr.f32.mxu0 0.0
  %4166 = vmatmul.mubr.f32.gmra.mrb[0].mxu0 %v4099
  %v4167 = vpop.f32.mrb[0].mxu0
  %v4168 = vadd.f32 0.0, %v4167
  %v4169 = vpop.f32.mrb[0].mxu0
  %v4170 = vadd.f32 0.0, %v4169
  %4171 = vdwg.mxu0
  %4172 = vmatprep.subr.mxu0 %v4093
  %4173 = vmatpush1.msra.mxu0 %v4092
  %4174 = vmatprep.subr.mxu0 0.0
  %4175 = vmatpush1.msra.mxu0 0.0
  %4176 = vmatprep.subr.mxu0 0.0
  %4177 = vmatpush1.msra.mxu0 0.0
  %4178 = vmatprep.subr.mxu0 0.0
  %4179 = vmatpush1.msra.mxu0 0.0
  %4180 = vmatprep.subr.mxu0 0.0
  %4181 = vmatpush1.msra.mxu0 0.0
  %4182 = vmatprep.subr.mxu0 0.0
  %4183 = vmatpush1.msra.mxu0 0.0
  %4184 = vmatprep.subr.mxu0 0.0
  %4185 = vmatpush1.msra.mxu0 0.0
  %4186 = vmatprep.subr.mxu0 0.0
  %4187 = vmatpush1.msra.mxu0 0.0
  %4188 = vmatprep.subr.mxu0 0.0
  %4189 = vmatpush1.msra.mxu0 0.0
  %4190 = vmatprep.subr.mxu0 0.0
  %4191 = vmatpush1.msra.mxu0 0.0
  %4192 = vmatprep.subr.mxu0 0.0
  %4193 = vmatpush1.msra.mxu0 0.0
  %4194 = vmatprep.subr.mxu0 0.0
  %4195 = vmatpush1.msra.mxu0 0.0
  %4196 = vmatprep.subr.mxu0 0.0
  %4197 = vmatpush1.msra.mxu0 0.0
  %4198 = vmatprep.subr.mxu0 0.0
  %4199 = vmatpush1.msra.mxu0 0.0
  %4200 = vmatprep.subr.mxu0 0.0
  %4201 = vmatpush1.msra.mxu0 0.0
  %4202 = vmatprep.subr.mxu0 0.0
  %4203 = vmatpush1.msra.mxu0 0.0
  %4204 = vmatprep.subr.mxu0 0.0
  %4205 = vmatpush1.msra.mxu0 0.0
  %4206 = vmatprep.subr.mxu0 0.0
  %4207 = vmatpush1.msra.mxu0 0.0
  %4208 = vmatprep.subr.mxu0 0.0
  %4209 = vmatpush1.msra.mxu0 0.0
  %4210 = vmatprep.subr.mxu0 0.0
  %4211 = vmatpush1.msra.mxu0 0.0
  %4212 = vmatprep.subr.mxu0 0.0
  %4213 = vmatpush1.msra.mxu0 0.0
  %4214 = vmatprep.subr.mxu0 0.0
  %4215 = vmatpush1.msra.mxu0 0.0
  %4216 = vmatprep.subr.mxu0 0.0
  %4217 = vmatpush1.msra.mxu0 0.0
  %4218 = vmatprep.subr.mxu0 0.0
  %4219 = vmatpush1.msra.mxu0 0.0
  %4220 = vmatprep.subr.mxu0 0.0
  %4221 = vmatpush1.msra.mxu0 0.0
  %4222 = vmatprep.subr.mxu0 0.0
  %4223 = vmatpush1.msra.mxu0 0.0
  %4224 = vmatprep.subr.mxu0 0.0
  %4225 = vmatpush1.msra.mxu0 0.0
  %4226 = vmatprep.subr.mxu0 0.0
  %4227 = vmatpush1.msra.mxu0 0.0
  %4228 = vmatprep.subr.mxu0 0.0
  %4229 = vmatpush1.msra.mxu0 0.0
  %4230 = vmatprep.subr.mxu0 0.0
  %4231 = vmatpush1.msra.mxu0 0.0
  %4232 = vmatprep.subr.mxu0 0.0
  %4233 = vmatpush1.msra.mxu0 0.0
  %4234 = vmatprep.subr.mxu0 0.0
  %4235 = vmatpush1.msra.mxu0 0.0
  %4236 = vmatprep.mubr.f32.mxu0 0.0
  %4237 = vmatmul.mubr.f32.gmra.mrb[0].mxu0 %v4099
  %v4238 = vpop.f32.mrb[0].mxu0
  %v4239 = vadd.f32 0.0, %v4238
  %v4240 = vpop.f32.mrb[0].mxu0
  %v4241 = vadd.f32 0.0, %v4240
  %4242 = vdwg.mxu0
  %v4243 = vadd.f32 %v4073, %v4168
  %v4244 = vadd.f32 %v4074, %v4170
  %v4245 = vadd.f32 %v4075, %v4239
  %v4246 = vadd.f32 %v4076, %v4241
  %v4247 = vld [vmem:[%s2] sm:$0xff]
  %4249 = vset.pattern.permute.xlu0 0
  %4250 = vperm.xlu0 %4249, %v4247
  %v4251 = vpop.permute.xlu0 %4250
  %v4253 = vadd.f32 %v4243, %v4251
  %v4254 = vadd.f32 %v4244, %v4251
  %v4255 = vadd.f32 %v4245, %v4251
  %v4256 = vadd.f32 %v4246, %v4251
  %v4257 = vmax.f32 %v4253, 0.0
  %v4258 = vmax.f32 %v4254, 0.0
  %v4259 = vmax.f32 %v4255, 0.0
  %v4260 = vmax.f32 %v4256, 0.0
  %4266 = vrot.lane.b32.xlu0 %v4257, 127
  %v4267 = vpop.permute.xlu0 %4266
  %4268 = vrot.lane.b32.xlu0 %v4258, 127
  %v4269 = vpop.permute.xlu0 %4268
  %4270 = vrot.lane.b32.xlu0 %v4259, 127
  %v4271 = vpop.permute.xlu0 %4270
  %4272 = vrot.lane.b32.xlu0 %v4260, 127
  %v4273 = vpop.permute.xlu0 %4272
  %4274 = vrot.lane.b32.xlu0 0.0, 127
  %v4275 = vpop.permute.xlu0 %4274
  %v4276 = vsel %vm37, %v4267, %v4269
  %v4277 = vsel %vm37, %v4269, %v4271
  %v4278 = vsel %vm37, %v4271, %v4273
  %v4279 = vsel %vm37, %v4273, %v4275
  %4284 = vmatprep.subr.mxu0 %v4277
  %4285 = vmatpush1.msra.mxu0 %v4276
  %4286 = vmatprep.subr.mxu0 0.0
  %4287 = vmatpush1.msra.mxu0 0.0
  %4288 = vmatprep.subr.mxu0 0.0
  %4289 = vmatpush1.msra.mxu0 0.0
  %4290 = vmatprep.subr.mxu0 0.0
  %4291 = vmatpush1.msra.mxu0 0.0
  %4292 = vmatprep.subr.mxu0 0.0
  %4293 = vmatpush1.msra.mxu0 0.0
  %4294 = vmatprep.subr.mxu0 0.0
  %4295 = vmatpush1.msra.mxu0 0.0
  %4296 = vmatprep.subr.mxu0 0.0
  %4297 = vmatpush1.msra.mxu0 0.0
  %4298 = vmatprep.subr.mxu0 0.0
  %4299 = vmatpush1.msra.mxu0 0.0
  %4300 = vmatprep.subr.mxu0 0.0
  %4301 = vmatpush1.msra.mxu0 0.0
  %4302 = vmatprep.subr.mxu0 0.0
  %4303 = vmatpush1.msra.mxu0 0.0
  %4304 = vmatprep.subr.mxu0 0.0
  %4305 = vmatpush1.msra.mxu0 0.0
  %4306 = vmatprep.subr.mxu0 0.0
  %4307 = vmatpush1.msra.mxu0 0.0
  %4308 = vmatprep.subr.mxu0 0.0
  %4309 = vmatpush1.msra.mxu0 0.0
  %4310 = vmatprep.subr.mxu0 0.0
  %4311 = vmatpush1.msra.mxu0 0.0
  %4312 = vmatprep.subr.mxu0 0.0
  %4313 = vmatpush1.msra.mxu0 0.0
  %4314 = vmatprep.subr.mxu0 0.0
  %4315 = vmatpush1.msra.mxu0 0.0
  %4316 = vmatprep.subr.mxu0 0.0
  %4317 = vmatpush1.msra.mxu0 0.0
  %4318 = vmatprep.subr.mxu0 0.0
  %4319 = vmatpush1.msra.mxu0 0.0
  %4320 = vmatprep.subr.mxu0 0.0
  %4321 = vmatpush1.msra.mxu0 0.0
  %4322 = vmatprep.subr.mxu0 0.0
  %4323 = vmatpush1.msra.mxu0 0.0
  %4324 = vmatprep.subr.mxu0 0.0
  %4325 = vmatpush1.msra.mxu0 0.0
  %4326 = vmatprep.subr.mxu0 0.0
  %4327 = vmatpush1.msra.mxu0 0.0
  %4328 = vmatprep.subr.mxu0 0.0
  %4329 = vmatpush1.msra.mxu0 0.0
  %4330 = vmatprep.subr.mxu0 0.0
  %4331 = vmatpush1.msra.mxu0 0.0
  %4332 = vmatprep.subr.mxu0 0.0
  %4333 = vmatpush1.msra.mxu0 0.0
  %4334 = vmatprep.subr.mxu0 0.0
  %4335 = vmatpush1.msra.mxu0 0.0
  %4336 = vmatprep.subr.mxu0 0.0
  %4337 = vmatpush1.msra.mxu0 0.0
  %4338 = vmatprep.subr.mxu0 0.0
  %4339 = vmatpush1.msra.mxu0 0.0
  %4340 = vmatprep.subr.mxu0 0.0
  %4341 = vmatpush1.msra.mxu0 0.0
  %4342 = vmatprep.subr.mxu0 0.0
  %4343 = vmatpush1.msra.mxu0 0.0
  %4344 = vmatprep.subr.mxu0 0.0
  %4345 = vmatpush1.msra.mxu0 0.0
  %4346 = vmatprep.subr.mxu0 0.0
  %4347 = vmatpush1.msra.mxu0 0.0
  %4348 = vmatprep.mubr.f32.mxu0 0.0
  %4349 = vmatmul.mubr.f32.gmra.mrb[0].mxu0 %v48
  %v4350 = vpop.f32.mrb[0].mxu0
  %v4351 = vadd.f32 0.0, %v4350
  %v4352 = vpop.f32.mrb[0].mxu0
  %v4353 = vadd.f32 0.0, %v4352
  %4354 = vdwg.mxu0
  %4355 = vmatprep.subr.mxu0 %v4279
  %4356 = vmatpush1.msra.mxu0 %v4278
  %4357 = vmatprep.subr.mxu0 0.0
  %4358 = vmatpush1.msra.mxu0 0.0
  %4359 = vmatprep.subr.mxu0 0.0
  %4360 = vmatpush1.msra.mxu0 0.0
  %4361 = vmatprep.subr.mxu0 0.0
  %4362 = vmatpush1.msra.mxu0 0.0
  %4363 = vmatprep.subr.mxu0 0.0
  %4364 = vmatpush1.msra.mxu0 0.0
  %4365 = vmatprep.subr.mxu0 0.0
  %4366 = vmatpush1.msra.mxu0 0.0
  %4367 = vmatprep.subr.mxu0 0.0
  %4368 = vmatpush1.msra.mxu0 0.0
  %4369 = vmatprep.subr.mxu0 0.0
  %4370 = vmatpush1.msra.mxu0 0.0
  %4371 = vmatprep.subr.mxu0 0.0
  %4372 = vmatpush1.msra.mxu0 0.0
  %4373 = vmatprep.subr.mxu0 0.0
  %4374 = vmatpush1.msra.mxu0 0.0
  %4375 = vmatprep.subr.mxu0 0.0
  %4376 = vmatpush1.msra.mxu0 0.0
  %4377 = vmatprep.subr.mxu0 0.0
  %4378 = vmatpush1.msra.mxu0 0.0
  %4379 = vmatprep.subr.mxu0 0.0
  %4380 = vmatpush1.msra.mxu0 0.0
  %4381 = vmatprep.subr.mxu0 0.0
  %4382 = vmatpush1.msra.mxu0 0.0
  %4383 = vmatprep.subr.mxu0 0.0
  %4384 = vmatpush1.msra.mxu0 0.0
  %4385 = vmatprep.subr.mxu0 0.0
  %4386 = vmatpush1.msra.mxu0 0.0
  %4387 = vmatprep.subr.mxu0 0.0
  %4388 = vmatpush1.msra.mxu0 0.0
  %4389 = vmatprep.subr.mxu0 0.0
  %4390 = vmatpush1.msra.mxu0 0.0
  %4391 = vmatprep.subr.mxu0 0.0
  %4392 = vmatpush1.msra.mxu0 0.0
  %4393 = vmatprep.subr.mxu0 0.0
  %4394 = vmatpush1.msra.mxu0 0.0
  %4395 = vmatprep.subr.mxu0 0.0
  %4396 = vmatpush1.msra.mxu0 0.0
  %4397 = vmatprep.subr.mxu0 0.0
  %4398 = vmatpush1.msra.mxu0 0.0
  %4399 = vmatprep.subr.mxu0 0.0
  %4400 = vmatpush1.msra.mxu0 0.0
  %4401 = vmatprep.subr.mxu0 0.0
  %4402 = vmatpush1.msra.mxu0 0.0
  %4403 = vmatprep.subr.mxu0 0.0
  %4404 = vmatpush1.msra.mxu0 0.0
  %4405 = vmatprep.subr.mxu0 0.0
  %4406 = vmatpush1.msra.mxu0 0.0
  %4407 = vmatprep.subr.mxu0 0.0
  %4408 = vmatpush1.msra.mxu0 0.0
  %4409 = vmatprep.subr.mxu0 0.0
  %4410 = vmatpush1.msra.mxu0 0.0
  %4411 = vmatprep.subr.mxu0 0.0
  %4412 = vmatpush1.msra.mxu0 0.0
  %4413 = vmatprep.subr.mxu0 0.0
  %4414 = vmatpush1.msra.mxu0 0.0
  %4415 = vmatprep.subr.mxu0 0.0
  %4416 = vmatpush1.msra.mxu0 0.0
  %4417 = vmatprep.subr.mxu0 0.0
  %4418 = vmatpush1.msra.mxu0 0.0
  %4419 = vmatprep.mubr.f32.mxu0 0.0
  %4420 = vmatmul.mubr.f32.gmra.mrb[0].mxu0 %v48
  %v4421 = vpop.f32.mrb[0].mxu0
  %v4422 = vadd.f32 0.0, %v4421
  %v4423 = vpop.f32.mrb[0].mxu0
  %v4424 = vadd.f32 0.0, %v4423
  %4425 = vdwg.mxu0
  %4426 = vmatprep.subr.mxu0 %v4258
  %4427 = vmatpush1.msra.mxu0 %v4257
  %4428 = vmatprep.subr.mxu0 0.0
  %4429 = vmatpush1.msra.mxu0 0.0
  %4430 = vmatprep.subr.mxu0 0.0
  %4431 = vmatpush1.msra.mxu0 0.0
  %4432 = vmatprep.subr.mxu0 0.0
  %4433 = vmatpush1.msra.mxu0 0.0
  %4434 = vmatprep.subr.mxu0 0.0
  %4435 = vmatpush1.msra.mxu0 0.0
  %4436 = vmatprep.subr.mxu0 0.0
  %4437 = vmatpush1.msra.mxu0 0.0
  %4438 = vmatprep.subr.mxu0 0.0
  %4439 = vmatpush1.msra.mxu0 0.0
  %4440 = vmatprep.subr.mxu0 0.0
  %4441 = vmatpush1.msra.mxu0 0.0
  %4442 = vmatprep.subr.mxu0 0.0
  %4443 = vmatpush1.msra.mxu0 0.0
  %4444 = vmatprep.subr.mxu0 0.0
  %4445 = vmatpush1.msra.mxu0 0.0
  %4446 = vmatprep.subr.mxu0 0.0
  %4447 = vmatpush1.msra.mxu0 0.0
  %4448 = vmatprep.subr.mxu0 0.0
  %4449 = vmatpush1.msra.mxu0 0.0
  %4450 = vmatprep.subr.mxu0 0.0
  %4451 = vmatpush1.msra.mxu0 0.0
  %4452 = vmatprep.subr.mxu0 0.0
  %4453 = vmatpush1.msra.mxu0 0.0
  %4454 = vmatprep.subr.mxu0 0.0
  %4455 = vmatpush1.msra.mxu0 0.0
  %4456 = vmatprep.subr.mxu0 0.0
  %4457 = vmatpush1.msra.mxu0 0.0
  %4458 = vmatprep.subr.mxu0 0.0
  %4459 = vmatpush1.msra.mxu0 0.0
  %4460 = vmatprep.subr.mxu0 0.0
  %4461 = vmatpush1.msra.mxu0 0.0
  %4462 = vmatprep.subr.mxu0 0.0
  %4463 = vmatpush1.msra.mxu0 0.0
  %4464 = vmatprep.subr.mxu0 0.0
  %4465 = vmatpush1.msra.mxu0 0.0
  %4466 = vmatprep.subr.mxu0 0.0
  %4467 = vmatpush1.msra.mxu0 0.0
  %4468 = vmatprep.subr.mxu0 0.0
  %4469 = vmatpush1.msra.mxu0 0.0
  %4470 = vmatprep.subr.mxu0 0.0
  %4471 = vmatpush1.msra.mxu0 0.0
  %4472 = vmatprep.subr.mxu0 0.0
  %4473 = vmatpush1.msra.mxu0 0.0
  %4474 = vmatprep.subr.mxu0 0.0
  %4475 = vmatpush1.msra.mxu0 0.0
  %4476 = vmatprep.subr.mxu0 0.0
  %4477 = vmatpush1.msra.mxu0 0.0
  %4478 = vmatprep.subr.mxu0 0.0
  %4479 = vmatpush1.msra.mxu0 0.0
  %4480 = vmatprep.subr.mxu0 0.0
  %4481 = vmatpush1.msra.mxu0 0.0
  %4482 = vmatprep.subr.mxu0 0.0
  %4483 = vmatpush1.msra.mxu0 0.0
  %4484 = vmatprep.subr.mxu0 0.0
  %4485 = vmatpush1.msra.mxu0 0.0
  %4486 = vmatprep.subr.mxu0 0.0
  %4487 = vmatpush1.msra.mxu0 0.0
  %4488 = vmatprep.subr.mxu0 0.0
  %4489 = vmatpush1.msra.mxu0 0.0
  %4490 = vmatprep.mubr.f32.mxu0 0.0
  %4491 = vmatmul.mubr.f32.gmra.mrb[0].mxu0 %v193
  %v4492 = vpop.f32.mrb[0].mxu0
  %v4493 = vadd.f32 %v4351, %v4492
  %v4494 = vpop.f32.mrb[0].mxu0
  %v4495 = vadd.f32 %v4353, %v4494
  %4496 = vdwg.mxu0
  %4497 = vmatprep.subr.mxu0 %v4260
  %4498 = vmatpush1.msra.mxu0 %v4259
  %4499 = vmatprep.subr.mxu0 0.0
  %4500 = vmatpush1.msra.mxu0 0.0
  %4501 = vmatprep.subr.mxu0 0.0
  %4502 = vmatpush1.msra.mxu0 0.0
  %4503 = vmatprep.subr.mxu0 0.0
  %4504 = vmatpush1.msra.mxu0 0.0
  %4505 = vmatprep.subr.mxu0 0.0
  %4506 = vmatpush1.msra.mxu0 0.0
  %4507 = vmatprep.subr.mxu0 0.0
  %4508 = vmatpush1.msra.mxu0 0.0
  %4509 = vmatprep.subr.mxu0 0.0
  %4510 = vmatpush1.msra.mxu0 0.0
  %4511 = vmatprep.subr.mxu0 0.0
  %4512 = vmatpush1.msra.mxu0 0.0
  %4513 = vmatprep.subr.mxu0 0.0
  %4514 = vmatpush1.msra.mxu0 0.0
  %4515 = vmatprep.subr.mxu0 0.0
  %4516 = vmatpush1.msra.mxu0 0.0
  %4517 = vmatprep.subr.mxu0 0.0
  %4518 = vmatpush1.msra.mxu0 0.0
  %4519 = vmatprep.subr.mxu0 0.0
  %4520 = vmatpush1.msra.mxu0 0.0
  %4521 = vmatprep.subr.mxu0 0.0
  %4522 = vmatpush1.msra.mxu0 0.0
  %4523 = vmatprep.subr.mxu0 0.0
  %4524 = vmatpush1.msra.mxu0 0.0
  %4525 = vmatprep.subr.mxu0 0.0
  %4526 = vmatpush1.msra.mxu0 0.0
  %4527 = vmatprep.subr.mxu0 0.0
  %4528 = vmatpush1.msra.mxu0 0.0
  %4529 = vmatprep.subr.mxu0 0.0
  %4530 = vmatpush1.msra.mxu0 0.0
  %4531 = vmatprep.subr.mxu0 0.0
  %4532 = vmatpush1.msra.mxu0 0.0
  %4533 = vmatprep.subr.mxu0 0.0
  %4534 = vmatpush1.msra.mxu0 0.0
  %4535 = vmatprep.subr.mxu0 0.0
  %4536 = vmatpush1.msra.mxu0 0.0
  %4537 = vmatprep.subr.mxu0 0.0
  %4538 = vmatpush1.msra.mxu0 0.0
  %4539 = vmatprep.subr.mxu0 0.0
  %4540 = vmatpush1.msra.mxu0 0.0
  %4541 = vmatprep.subr.mxu0 0.0
  %4542 = vmatpush1.msra.mxu0 0.0
  %4543 = vmatprep.subr.mxu0 0.0
  %4544 = vmatpush1.msra.mxu0 0.0
  %4545 = vmatprep.subr.mxu0 0.0
  %4546 = vmatpush1.msra.mxu0 0.0
  %4547 = vmatprep.subr.mxu0 0.0
  %4548 = vmatpush1.msra.mxu0 0.0
  %4549 = vmatprep.subr.mxu0 0.0
  %4550 = vmatpush1.msra.mxu0 0.0
  %4551 = vmatprep.subr.mxu0 0.0
  %4552 = vmatpush1.msra.mxu0 0.0
  %4553 = vmatprep.subr.mxu0 0.0
  %4554 = vmatpush1.msra.mxu0 0.0
  %4555 = vmatprep.subr.mxu0 0.0
  %4556 = vmatpush1.msra.mxu0 0.0
  %4557 = vmatprep.subr.mxu0 0.0
  %4558 = vmatpush1.msra.mxu0 0.0
  %4559 = vmatprep.subr.mxu0 0.0
  %4560 = vmatpush1.msra.mxu0 0.0
  %4561 = vmatprep.mubr.f32.mxu0 0.0
  %4562 = vmatmul.mubr.f32.gmra.mrb[0].mxu0 %v193
  %v4563 = vpop.f32.mrb[0].mxu0
  %v4564 = vadd.f32 %v4422, %v4563
  %v4565 = vpop.f32.mrb[0].mxu0
  %v4566 = vadd.f32 %v4424, %v4565
  %4567 = vdwg.mxu0
  %4568 = vrot.lane.b32.xlu0 %v4257, 126
  %v4569 = vpop.permute.xlu0 %4568
  %4570 = vrot.lane.b32.xlu0 %v4258, 126
  %v4571 = vpop.permute.xlu0 %4570
  %4572 = vrot.lane.b32.xlu0 %v4259, 126
  %v4573 = vpop.permute.xlu0 %4572
  %4574 = vrot.lane.b32.xlu0 %v4260, 126
  %v4575 = vpop.permute.xlu0 %4574
  %4576 = vrot.lane.b32.xlu0 0.0, 126
  %v4577 = vpop.permute.xlu0 %4576
  %v4578 = vsel %vm349, %v4569, %v4571
  %v4579 = vsel %vm349, %v4571, %v4573
  %v4580 = vsel %vm349, %v4573, %v4575
  %v4581 = vsel %vm349, %v4575, %v4577
  %4586 = vmatprep.subr.mxu0 %v4579
  %4587 = vmatpush1.msra.mxu0 %v4578
  %4588 = vmatprep.subr.mxu0 0.0
  %4589 = vmatpush1.msra.mxu0 0.0
  %4590 = vmatprep.subr.mxu0 0.0
  %4591 = vmatpush1.msra.mxu0 0.0
  %4592 = vmatprep.subr.mxu0 0.0
  %4593 = vmatpush1.msra.mxu0 0.0
  %4594 = vmatprep.subr.mxu0 0.0
  %4595 = vmatpush1.msra.mxu0 0.0
  %4596 = vmatprep.subr.mxu0 0.0
  %4597 = vmatpush1.msra.mxu0 0.0
  %4598 = vmatprep.subr.mxu0 0.0
  %4599 = vmatpush1.msra.mxu0 0.0
  %4600 = vmatprep.subr.mxu0 0.0
  %4601 = vmatpush1.msra.mxu0 0.0
  %4602 = vmatprep.subr.mxu0 0.0
  %4603 = vmatpush1.msra.mxu0 0.0
  %4604 = vmatprep.subr.mxu0 0.0
  %4605 = vmatpush1.msra.mxu0 0.0
  %4606 = vmatprep.subr.mxu0 0.0
  %4607 = vmatpush1.msra.mxu0 0.0
  %4608 = vmatprep.subr.mxu0 0.0
  %4609 = vmatpush1.msra.mxu0 0.0
  %4610 = vmatprep.subr.mxu0 0.0
  %4611 = vmatpush1.msra.mxu0 0.0
  %4612 = vmatprep.subr.mxu0 0.0
  %4613 = vmatpush1.msra.mxu0 0.0
  %4614 = vmatprep.subr.mxu0 0.0
  %4615 = vmatpush1.msra.mxu0 0.0
  %4616 = vmatprep.subr.mxu0 0.0
  %4617 = vmatpush1.msra.mxu0 0.0
  %4618 = vmatprep.subr.mxu0 0.0
  %4619 = vmatpush1.msra.mxu0 0.0
  %4620 = vmatprep.subr.mxu0 0.0
  %4621 = vmatpush1.msra.mxu0 0.0
  %4622 = vmatprep.subr.mxu0 0.0
  %4623 = vmatpush1.msra.mxu0 0.0
  %4624 = vmatprep.subr.mxu0 0.0
  %4625 = vmatpush1.msra.mxu0 0.0
  %4626 = vmatprep.subr.mxu0 0.0
  %4627 = vmatpush1.msra.mxu0 0.0
  %4628 = vmatprep.subr.mxu0 0.0
  %4629 = vmatpush1.msra.mxu0 0.0
  %4630 = vmatprep.subr.mxu0 0.0
  %4631 = vmatpush1.msra.mxu0 0.0
  %4632 = vmatprep.subr.mxu0 0.0
  %4633 = vmatpush1.msra.mxu0 0.0
  %4634 = vmatprep.subr.mxu0 0.0
  %4635 = vmatpush1.msra.mxu0 0.0
  %4636 = vmatprep.subr.mxu0 0.0
  %4637 = vmatpush1.msra.mxu0 0.0
  %4638 = vmatprep.subr.mxu0 0.0
  %4639 = vmatpush1.msra.mxu0 0.0
  %4640 = vmatprep.subr.mxu0 0.0
  %4641 = vmatpush1.msra.mxu0 0.0
  %4642 = vmatprep.subr.mxu0 0.0
  %4643 = vmatpush1.msra.mxu0 0.0
  %4644 = vmatprep.subr.mxu0 0.0
  %4645 = vmatpush1.msra.mxu0 0.0
  %4646 = vmatprep.subr.mxu0 0.0
  %4647 = vmatpush1.msra.mxu0 0.0
  %4648 = vmatprep.subr.mxu0 0.0
  %4649 = vmatpush1.msra.mxu0 0.0
  %4650 = vmatprep.mubr.f32.mxu0 0.0
  %4651 = vmatmul.mubr.f32.gmra.mrb[0].mxu0 %v359
  %v4652 = vpop.f32.mrb[0].mxu0
  %v4653 = vadd.f32 0.0, %v4652
  %v4654 = vpop.f32.mrb[0].mxu0
  %v4655 = vadd.f32 0.0, %v4654
  %4656 = vdwg.mxu0
  %4657 = vmatprep.subr.mxu0 %v4581
  %4658 = vmatpush1.msra.mxu0 %v4580
  %4659 = vmatprep.subr.mxu0 0.0
  %4660 = vmatpush1.msra.mxu0 0.0
  %4661 = vmatprep.subr.mxu0 0.0
  %4662 = vmatpush1.msra.mxu0 0.0
  %4663 = vmatprep.subr.mxu0 0.0
  %4664 = vmatpush1.msra.mxu0 0.0
  %4665 = vmatprep.subr.mxu0 0.0
  %4666 = vmatpush1.msra.mxu0 0.0
  %4667 = vmatprep.subr.mxu0 0.0
  %4668 = vmatpush1.msra.mxu0 0.0
  %4669 = vmatprep.subr.mxu0 0.0
  %4670 = vmatpush1.msra.mxu0 0.0
  %4671 = vmatprep.subr.mxu0 0.0
  %4672 = vmatpush1.msra.mxu0 0.0
  %4673 = vmatprep.subr.mxu0 0.0
  %4674 = vmatpush1.msra.mxu0 0.0
  %4675 = vmatprep.subr.mxu0 0.0
  %4676 = vmatpush1.msra.mxu0 0.0
  %4677 = vmatprep.subr.mxu0 0.0
  %4678 = vmatpush1.msra.mxu0 0.0
  %4679 = vmatprep.subr.mxu0 0.0
  %4680 = vmatpush1.msra.mxu0 0.0
  %4681 = vmatprep.subr.mxu0 0.0
  %4682 = vmatpush1.msra.mxu0 0.0
  %4683 = vmatprep.subr.mxu0 0.0
  %4684 = vmatpush1.msra.mxu0 0.0
  %4685 = vmatprep.subr.mxu0 0.0
  %4686 = vmatpush1.msra.mxu0 0.0
  %4687 = vmatprep.subr.mxu0 0.0
  %4688 = vmatpush1.msra.mxu0 0.0
  %4689 = vmatprep.subr.mxu0 0.0
  %4690 = vmatpush1.msra.mxu0 0.0
  %4691 = vmatprep.subr.mxu0 0.0
  %4692 = vmatpush1.msra.mxu0 0.0
  %4693 = vmatprep.subr.mxu0 0.0
  %4694 = vmatpush1.msra.mxu0 0.0
  %4695 = vmatprep.subr.mxu0 0.0
  %4696 = vmatpush1.msra.mxu0 0.0
  %4697 = vmatprep.subr.mxu0 0.0
  %4698 = vmatpush1.msra.mxu0 0.0
  %4699 = vmatprep.subr.mxu0 0.0
  %4700 = vmatpush1.msra.mxu0 0.0
  %4701 = vmatprep.subr.mxu0 0.0
  %4702 = vmatpush1.msra.mxu0 0.0
  %4703 = vmatprep.subr.mxu0 0.0
  %4704 = vmatpush1.msra.mxu0 0.0
  %4705 = vmatprep.subr.mxu0 0.0
  %4706 = vmatpush1.msra.mxu0 0.0
  %4707 = vmatprep.subr.mxu0 0.0
  %4708 = vmatpush1.msra.mxu0 0.0
  %4709 = vmatprep.subr.mxu0 0.0
  %4710 = vmatpush1.msra.mxu0 0.0
  %4711 = vmatprep.subr.mxu0 0.0
  %4712 = vmatpush1.msra.mxu0 0.0
  %4713 = vmatprep.subr.mxu0 0.0
  %4714 = vmatpush1.msra.mxu0 0.0
  %4715 = vmatprep.subr.mxu0 0.0
  %4716 = vmatpush1.msra.mxu0 0.0
  %4717 = vmatprep.subr.mxu0 0.0
  %4718 = vmatpush1.msra.mxu0 0.0
  %4719 = vmatprep.subr.mxu0 0.0
  %4720 = vmatpush1.msra.mxu0 0.0
  %4721 = vmatprep.mubr.f32.mxu0 0.0
  %4722 = vmatmul.mubr.f32.gmra.mrb[0].mxu0 %v359
  %v4723 = vpop.f32.mrb[0].mxu0
  %v4724 = vadd.f32 0.0, %v4723
  %v4725 = vpop.f32.mrb[0].mxu0
  %v4726 = vadd.f32 0.0, %v4725
  %4727 = vdwg.mxu0
  %v4728 = vadd.f32 %v4493, %v4653
  %v4729 = vadd.f32 %v4495, %v4655
  %v4730 = vadd.f32 %v4564, %v4724
  %v4731 = vadd.f32 %v4566, %v4726
  %4732 = vrot.lane.b32.xlu0 %v4257, 125
  %v4733 = vpop.permute.xlu0 %4732
  %4734 = vrot.lane.b32.xlu0 %v4258, 125
  %v4735 = vpop.permute.xlu0 %4734
  %4736 = vrot.lane.b32.xlu0 %v4259, 125
  %v4737 = vpop.permute.xlu0 %4736
  %4738 = vrot.lane.b32.xlu0 %v4260, 125
  %v4739 = vpop.permute.xlu0 %4738
  %4740 = vrot.lane.b32.xlu0 0.0, 125
  %v4741 = vpop.permute.xlu0 %4740
  %v4742 = vsel %vm519, %v4733, %v4735
  %v4743 = vsel %vm519, %v4735, %v4737
  %v4744 = vsel %vm519, %v4737, %v4739
  %v4745 = vsel %vm519, %v4739, %v4741
  %4750 = vmatprep.subr.mxu0 %v4743
  %4751 = vmatpush1.msra.mxu0 %v4742
  %4752 = vmatprep.subr.mxu0 0.0
  %4753 = vmatpush1.msra.mxu0 0.0
  %4754 = vmatprep.subr.mxu0 0.0
  %4755 = vmatpush1.msra.mxu0 0.0
  %4756 = vmatprep.subr.mxu0 0.0
  %4757 = vmatpush1.msra.mxu0 0.0
  %4758 = vmatprep.subr.mxu0 0.0
  %4759 = vmatpush1.msra.mxu0 0.0
  %4760 = vmatprep.subr.mxu0 0.0
  %4761 = vmatpush1.msra.mxu0 0.0
  %4762 = vmatprep.subr.mxu0 0.0
  %4763 = vmatpush1.msra.mxu0 0.0
  %4764 = vmatprep.subr.mxu0 0.0
  %4765 = vmatpush1.msra.mxu0 0.0
  %4766 = vmatprep.subr.mxu0 0.0
  %4767 = vmatpush1.msra.mxu0 0.0
  %4768 = vmatprep.subr.mxu0 0.0
  %4769 = vmatpush1.msra.mxu0 0.0
  %4770 = vmatprep.subr.mxu0 0.0
  %4771 = vmatpush1.msra.mxu0 0.0
  %4772 = vmatprep.subr.mxu0 0.0
  %4773 = vmatpush1.msra.mxu0 0.0
  %4774 = vmatprep.subr.mxu0 0.0
  %4775 = vmatpush1.msra.mxu0 0.0
  %4776 = vmatprep.subr.mxu0 0.0
  %4777 = vmatpush1.msra.mxu0 0.0
  %4778 = vmatprep.subr.mxu0 0.0
  %4779 = vmatpush1.msra.mxu0 0.0
  %4780 = vmatprep.subr.mxu0 0.0
  %4781 = vmatpush1.msra.mxu0 0.0
  %4782 = vmatprep.subr.mxu0 0.0
  %4783 = vmatpush1.msra.mxu0 0.0
  %4784 = vmatprep.subr.mxu0 0.0
  %4785 = vmatpush1.msra.mxu0 0.0
  %4786 = vmatprep.subr.mxu0 0.0
  %4787 = vmatpush1.msra.mxu0 0.0
  %4788 = vmatprep.subr.mxu0 0.0
  %4789 = vmatpush1.msra.mxu0 0.0
  %4790 = vmatprep.subr.mxu0 0.0
  %4791 = vmatpush1.msra.mxu0 0.0
  %4792 = vmatprep.subr.mxu0 0.0
  %4793 = vmatpush1.msra.mxu0 0.0
  %4794 = vmatprep.subr.mxu0 0.0
  %4795 = vmatpush1.msra.mxu0 0.0
  %4796 = vmatprep.subr.mxu0 0.0
  %4797 = vmatpush1.msra.mxu0 0.0
  %4798 = vmatprep.subr.mxu0 0.0
  %4799 = vmatpush1.msra.mxu0 0.0
  %4800 = vmatprep.subr.mxu0 0.0
  %4801 = vmatpush1.msra.mxu0 0.0
  %4802 = vmatprep.subr.mxu0 0.0
  %4803 = vmatpush1.msra.mxu0 0.0
  %4804 = vmatprep.subr.mxu0 0.0
  %4805 = vmatpush1.msra.mxu0 0.0
  %4806 = vmatprep.subr.mxu0 0.0
  %4807 = vmatpush1.msra.mxu0 0.0
  %4808 = vmatprep.subr.mxu0 0.0
  %4809 = vmatpush1.msra.mxu0 0.0
  %4810 = vmatprep.subr.mxu0 0.0
  %4811 = vmatpush1.msra.mxu0 0.0
  %4812 = vmatprep.subr.mxu0 0.0
  %4813 = vmatpush1.msra.mxu0 0.0
  %4814 = vmatprep.mubr.f32.mxu0 0.0
  %4815 = vmatmul.mubr.f32.gmra.mrb[0].mxu0 %v529
  %v4816 = vpop.f32.mrb[0].mxu0
  %v4817 = vadd.f32 0.0, %v4816
  %v4818 = vpop.f32.mrb[0].mxu0
  %v4819 = vadd.f32 0.0, %v4818
  %4820 = vdwg.mxu0
  %4821 = vmatprep.subr.mxu0 %v4745
  %4822 = vmatpush1.msra.mxu0 %v4744
  %4823 = vmatprep.subr.mxu0 0.0
  %4824 = vmatpush1.msra.mxu0 0.0
  %4825 = vmatprep.subr.mxu0 0.0
  %4826 = vmatpush1.msra.mxu0 0.0
  %4827 = vmatprep.subr.mxu0 0.0
  %4828 = vmatpush1.msra.mxu0 0.0
  %4829 = vmatprep.subr.mxu0 0.0
  %4830 = vmatpush1.msra.mxu0 0.0
  %4831 = vmatprep.subr.mxu0 0.0
  %4832 = vmatpush1.msra.mxu0 0.0
  %4833 = vmatprep.subr.mxu0 0.0
  %4834 = vmatpush1.msra.mxu0 0.0
  %4835 = vmatprep.subr.mxu0 0.0
  %4836 = vmatpush1.msra.mxu0 0.0
  %4837 = vmatprep.subr.mxu0 0.0
  %4838 = vmatpush1.msra.mxu0 0.0
  %4839 = vmatprep.subr.mxu0 0.0
  %4840 = vmatpush1.msra.mxu0 0.0
  %4841 = vmatprep.subr.mxu0 0.0
  %4842 = vmatpush1.msra.mxu0 0.0
  %4843 = vmatprep.subr.mxu0 0.0
  %4844 = vmatpush1.msra.mxu0 0.0
  %4845 = vmatprep.subr.mxu0 0.0
  %4846 = vmatpush1.msra.mxu0 0.0
  %4847 = vmatprep.subr.mxu0 0.0
  %4848 = vmatpush1.msra.mxu0 0.0
  %4849 = vmatprep.subr.mxu0 0.0
  %4850 = vmatpush1.msra.mxu0 0.0
  %4851 = vmatprep.subr.mxu0 0.0
  %4852 = vmatpush1.msra.mxu0 0.0
  %4853 = vmatprep.subr.mxu0 0.0
  %4854 = vmatpush1.msra.mxu0 0.0
  %4855 = vmatprep.subr.mxu0 0.0
  %4856 = vmatpush1.msra.mxu0 0.0
  %4857 = vmatprep.subr.mxu0 0.0
  %4858 = vmatpush1.msra.mxu0 0.0
  %4859 = vmatprep.subr.mxu0 0.0
  %4860 = vmatpush1.msra.mxu0 0.0
  %4861 = vmatprep.subr.mxu0 0.0
  %4862 = vmatpush1.msra.mxu0 0.0
  %4863 = vmatprep.subr.mxu0 0.0
  %4864 = vmatpush1.msra.mxu0 0.0
  %4865 = vmatprep.subr.mxu0 0.0
  %4866 = vmatpush1.msra.mxu0 0.0
  %4867 = vmatprep.subr.mxu0 0.0
  %4868 = vmatpush1.msra.mxu0 0.0
  %4869 = vmatprep.subr.mxu0 0.0
  %4870 = vmatpush1.msra.mxu0 0.0
  %4871 = vmatprep.subr.mxu0 0.0
  %4872 = vmatpush1.msra.mxu0 0.0
  %4873 = vmatprep.subr.mxu0 0.0
  %4874 = vmatpush1.msra.mxu0 0.0
  %4875 = vmatprep.subr.mxu0 0.0
  %4876 = vmatpush1.msra.mxu0 0.0
  %4877 = vmatprep.subr.mxu0 0.0
  %4878 = vmatpush1.msra.mxu0 0.0
  %4879 = vmatprep.subr.mxu0 0.0
  %4880 = vmatpush1.msra.mxu0 0.0
  %4881 = vmatprep.subr.mxu0 0.0
  %4882 = vmatpush1.msra.mxu0 0.0
  %4883 = vmatprep.subr.mxu0 0.0
  %4884 = vmatpush1.msra.mxu0 0.0
  %4885 = vmatprep.mubr.f32.mxu0 0.0
  %4886 = vmatmul.mubr.f32.gmra.mrb[0].mxu0 %v529
  %v4887 = vpop.f32.mrb[0].mxu0
  %v4888 = vadd.f32 0.0, %v4887
  %v4889 = vpop.f32.mrb[0].mxu0
  %v4890 = vadd.f32 0.0, %v4889
  %4891 = vdwg.mxu0
  %v4892 = vadd.f32 %v4728, %v4817
  %v4893 = vadd.f32 %v4729, %v4819
  %v4894 = vadd.f32 %v4730, %v4888
  %v4895 = vadd.f32 %v4731, %v4890
  %4896 = vrot.lane.b32.xlu0 %v4257, 124
  %v4897 = vpop.permute.xlu0 %4896
  %4898 = vrot.lane.b32.xlu0 %v4258, 124
  %v4899 = vpop.permute.xlu0 %4898
  %4900 = vrot.lane.b32.xlu0 %v4259, 124
  %v4901 = vpop.permute.xlu0 %4900
  %4902 = vrot.lane.b32.xlu0 %v4260, 124
  %v4903 = vpop.permute.xlu0 %4902
  %4904 = vrot.lane.b32.xlu0 0.0, 124
  %v4905 = vpop.permute.xlu0 %4904
  %v4906 = vsel %vm689, %v4897, %v4899
  %v4907 = vsel %vm689, %v4899, %v4901
  %v4908 = vsel %vm689, %v4901, %v4903
  %v4909 = vsel %vm689, %v4903, %v4905
  %4914 = vmatprep.subr.mxu0 %v4907
  %4915 = vmatpush1.msra.mxu0 %v4906
  %4916 = vmatprep.subr.mxu0 0.0
  %4917 = vmatpush1.msra.mxu0 0.0
  %4918 = vmatprep.subr.mxu0 0.0
  %4919 = vmatpush1.msra.mxu0 0.0
  %4920 = vmatprep.subr.mxu0 0.0
  %4921 = vmatpush1.msra.mxu0 0.0
  %4922 = vmatprep.subr.mxu0 0.0
  %4923 = vmatpush1.msra.mxu0 0.0
  %4924 = vmatprep.subr.mxu0 0.0
  %4925 = vmatpush1.msra.mxu0 0.0
  %4926 = vmatprep.subr.mxu0 0.0
  %4927 = vmatpush1.msra.mxu0 0.0
  %4928 = vmatprep.subr.mxu0 0.0
  %4929 = vmatpush1.msra.mxu0 0.0
  %4930 = vmatprep.subr.mxu0 0.0
  %4931 = vmatpush1.msra.mxu0 0.0
  %4932 = vmatprep.subr.mxu0 0.0
  %4933 = vmatpush1.msra.mxu0 0.0
  %4934 = vmatprep.subr.mxu0 0.0
  %4935 = vmatpush1.msra.mxu0 0.0
  %4936 = vmatprep.subr.mxu0 0.0
  %4937 = vmatpush1.msra.mxu0 0.0
  %4938 = vmatprep.subr.mxu0 0.0
  %4939 = vmatpush1.msra.mxu0 0.0
  %4940 = vmatprep.subr.mxu0 0.0
  %4941 = vmatpush1.msra.mxu0 0.0
  %4942 = vmatprep.subr.mxu0 0.0
  %4943 = vmatpush1.msra.mxu0 0.0
  %4944 = vmatprep.subr.mxu0 0.0
  %4945 = vmatpush1.msra.mxu0 0.0
  %4946 = vmatprep.subr.mxu0 0.0
  %4947 = vmatpush1.msra.mxu0 0.0
  %4948 = vmatprep.subr.mxu0 0.0
  %4949 = vmatpush1.msra.mxu0 0.0
  %4950 = vmatprep.subr.mxu0 0.0
  %4951 = vmatpush1.msra.mxu0 0.0
  %4952 = vmatprep.subr.mxu0 0.0
  %4953 = vmatpush1.msra.mxu0 0.0
  %4954 = vmatprep.subr.mxu0 0.0
  %4955 = vmatpush1.msra.mxu0 0.0
  %4956 = vmatprep.subr.mxu0 0.0
  %4957 = vmatpush1.msra.mxu0 0.0
  %4958 = vmatprep.subr.mxu0 0.0
  %4959 = vmatpush1.msra.mxu0 0.0
  %4960 = vmatprep.subr.mxu0 0.0
  %4961 = vmatpush1.msra.mxu0 0.0
  %4962 = vmatprep.subr.mxu0 0.0
  %4963 = vmatpush1.msra.mxu0 0.0
  %4964 = vmatprep.subr.mxu0 0.0
  %4965 = vmatpush1.msra.mxu0 0.0
  %4966 = vmatprep.subr.mxu0 0.0
  %4967 = vmatpush1.msra.mxu0 0.0
  %4968 = vmatprep.subr.mxu0 0.0
  %4969 = vmatpush1.msra.mxu0 0.0
  %4970 = vmatprep.subr.mxu0 0.0
  %4971 = vmatpush1.msra.mxu0 0.0
  %4972 = vmatprep.subr.mxu0 0.0
  %4973 = vmatpush1.msra.mxu0 0.0
  %4974 = vmatprep.subr.mxu0 0.0
  %4975 = vmatpush1.msra.mxu0 0.0
  %4976 = vmatprep.subr.mxu0 0.0
  %4977 = vmatpush1.msra.mxu0 0.0
  %4978 = vmatprep.mubr.f32.mxu0 0.0
  %4979 = vmatmul.mubr.f32.gmra.mrb[0].mxu0 %v699
  %v4980 = vpop.f32.mrb[0].mxu0
  %v4981 = vadd.f32 0.0, %v4980
  %v4982 = vpop.f32.mrb[0].mxu0
  %v4983 = vadd.f32 0.0, %v4982
  %4984 = vdwg.mxu0
  %4985 = vmatprep.subr.mxu0 %v4909
  %4986 = vmatpush1.msra.mxu0 %v4908
  %4987 = vmatprep.subr.mxu0 0.0
  %4988 = vmatpush1.msra.mxu0 0.0
  %4989 = vmatprep.subr.mxu0 0.0
  %4990 = vmatpush1.msra.mxu0 0.0
  %4991 = vmatprep.subr.mxu0 0.0
  %4992 = vmatpush1.msra.mxu0 0.0
  %4993 = vmatprep.subr.mxu0 0.0
  %4994 = vmatpush1.msra.mxu0 0.0
  %4995 = vmatprep.subr.mxu0 0.0
  %4996 = vmatpush1.msra.mxu0 0.0
  %4997 = vmatprep.subr.mxu0 0.0
  %4998 = vmatpush1.msra.mxu0 0.0
  %4999 = vmatprep.subr.mxu0 0.0
  %5000 = vmatpush1.msra.mxu0 0.0
  %5001 = vmatprep.subr.mxu0 0.0
  %5002 = vmatpush1.msra.mxu0 0.0
  %5003 = vmatprep.subr.mxu0 0.0
  %5004 = vmatpush1.msra.mxu0 0.0
  %5005 = vmatprep.subr.mxu0 0.0
  %5006 = vmatpush1.msra.mxu0 0.0
  %5007 = vmatprep.subr.mxu0 0.0
  %5008 = vmatpush1.msra.mxu0 0.0
  %5009 = vmatprep.subr.mxu0 0.0
  %5010 = vmatpush1.msra.mxu0 0.0
  %5011 = vmatprep.subr.mxu0 0.0
  %5012 = vmatpush1.msra.mxu0 0.0
  %5013 = vmatprep.subr.mxu0 0.0
  %5014 = vmatpush1.msra.mxu0 0.0
  %5015 = vmatprep.subr.mxu0 0.0
  %5016 = vmatpush1.msra.mxu0 0.0
  %5017 = vmatprep.subr.mxu0 0.0
  %5018 = vmatpush1.msra.mxu0 0.0
  %5019 = vmatprep.subr.mxu0 0.0
  %5020 = vmatpush1.msra.mxu0 0.0
  %5021 = vmatprep.subr.mxu0 0.0
  %5022 = vmatpush1.msra.mxu0 0.0
  %5023 = vmatprep.subr.mxu0 0.0
  %5024 = vmatpush1.msra.mxu0 0.0
  %5025 = vmatprep.subr.mxu0 0.0
  %5026 = vmatpush1.msra.mxu0 0.0
  %5027 = vmatprep.subr.mxu0 0.0
  %5028 = vmatpush1.msra.mxu0 0.0
  %5029 = vmatprep.subr.mxu0 0.0
  %5030 = vmatpush1.msra.mxu0 0.0
  %5031 = vmatprep.subr.mxu0 0.0
  %5032 = vmatpush1.msra.mxu0 0.0
  %5033 = vmatprep.subr.mxu0 0.0
  %5034 = vmatpush1.msra.mxu0 0.0
  %5035 = vmatprep.subr.mxu0 0.0
  %5036 = vmatpush1.msra.mxu0 0.0
  %5037 = vmatprep.subr.mxu0 0.0
  %5038 = vmatpush1.msra.mxu0 0.0
  %5039 = vmatprep.subr.mxu0 0.0
  %5040 = vmatpush1.msra.mxu0 0.0
  %5041 = vmatprep.subr.mxu0 0.0
  %5042 = vmatpush1.msra.mxu0 0.0
  %5043 = vmatprep.subr.mxu0 0.0
  %5044 = vmatpush1.msra.mxu0 0.0
  %5045 = vmatprep.subr.mxu0 0.0
  %5046 = vmatpush1.msra.mxu0 0.0
  %5047 = vmatprep.subr.mxu0 0.0
  %5048 = vmatpush1.msra.mxu0 0.0
  %5049 = vmatprep.mubr.f32.mxu0 0.0
  %5050 = vmatmul.mubr.f32.gmra.mrb[0].mxu0 %v699
  %v5051 = vpop.f32.mrb[0].mxu0
  %v5052 = vadd.f32 0.0, %v5051
  %v5053 = vpop.f32.mrb[0].mxu0
  %v5054 = vadd.f32 0.0, %v5053
  %5055 = vdwg.mxu0
  %v5056 = vadd.f32 %v4892, %v4981
  %v5057 = vadd.f32 %v4893, %v4983
  %v5058 = vadd.f32 %v4894, %v5052
  %v5059 = vadd.f32 %v4895, %v5054
  %5060 = vrot.lane.b32.xlu0 %v4257, 112
  %v5061 = vpop.permute.xlu0 %5060
  %5062 = vrot.lane.b32.xlu0 %v4258, 112
  %v5063 = vpop.permute.xlu0 %5062
  %5064 = vrot.lane.b32.xlu0 %v4259, 112
  %v5065 = vpop.permute.xlu0 %5064
  %5066 = vrot.lane.b32.xlu0 %v4260, 112
  %v5067 = vpop.permute.xlu0 %5066
  %5068 = vrot.lane.b32.xlu0 0.0, 112
  %v5069 = vpop.permute.xlu0 %5068
  %v5070 = vsel %vm859, %v5061, %v5063
  %v5071 = vsel %vm859, %v5063, %v5065
  %v5072 = vsel %vm859, %v5065, %v5067
  %v5073 = vsel %vm859, %v5067, %v5069
  %5078 = vmatprep.subr.mxu0 %v5071
  %5079 = vmatpush1.msra.mxu0 %v5070
  %5080 = vmatprep.subr.mxu0 0.0
  %5081 = vmatpush1.msra.mxu0 0.0
  %5082 = vmatprep.subr.mxu0 0.0
  %5083 = vmatpush1.msra.mxu0 0.0
  %5084 = vmatprep.subr.mxu0 0.0
  %5085 = vmatpush1.msra.mxu0 0.0
  %5086 = vmatprep.subr.mxu0 0.0
  %5087 = vmatpush1.msra.mxu0 0.0
  %5088 = vmatprep.subr.mxu0 0.0
  %5089 = vmatpush1.msra.mxu0 0.0
  %5090 = vmatprep.subr.mxu0 0.0
  %5091 = vmatpush1.msra.mxu0 0.0
  %5092 = vmatprep.subr.mxu0 0.0
  %5093 = vmatpush1.msra.mxu0 0.0
  %5094 = vmatprep.subr.mxu0 0.0
  %5095 = vmatpush1.msra.mxu0 0.0
  %5096 = vmatprep.subr.mxu0 0.0
  %5097 = vmatpush1.msra.mxu0 0.0
  %5098 = vmatprep.subr.mxu0 0.0
  %5099 = vmatpush1.msra.mxu0 0.0
  %5100 = vmatprep.subr.mxu0 0.0
  %5101 = vmatpush1.msra.mxu0 0.0
  %5102 = vmatprep.subr.mxu0 0.0
  %5103 = vmatpush1.msra.mxu0 0.0
  %5104 = vmatprep.subr.mxu0 0.0
  %5105 = vmatpush1.msra.mxu0 0.0
  %5106 = vmatprep.subr.mxu0 0.0
  %5107 = vmatpush1.msra.mxu0 0.0
  %5108 = vmatprep.subr.mxu0 0.0
  %5109 = vmatpush1.msra.mxu0 0.0
  %5110 = vmatprep.subr.mxu0 0.0
  %5111 = vmatpush1.msra.mxu0 0.0
  %5112 = vmatprep.subr.mxu0 0.0
  %5113 = vmatpush1.msra.mxu0 0.0
  %5114 = vmatprep.subr.mxu0 0.0
  %5115 = vmatpush1.msra.mxu0 0.0
  %5116 = vmatprep.subr.mxu0 0.0
  %5117 = vmatpush1.msra.mxu0 0.0
  %5118 = vmatprep.subr.mxu0 0.0
  %5119 = vmatpush1.msra.mxu0 0.0
  %5120 = vmatprep.subr.mxu0 0.0
  %5121 = vmatpush1.msra.mxu0 0.0
  %5122 = vmatprep.subr.mxu0 0.0
  %5123 = vmatpush1.msra.mxu0 0.0
  %5124 = vmatprep.subr.mxu0 0.0
  %5125 = vmatpush1.msra.mxu0 0.0
  %5126 = vmatprep.subr.mxu0 0.0
  %5127 = vmatpush1.msra.mxu0 0.0
  %5128 = vmatprep.subr.mxu0 0.0
  %5129 = vmatpush1.msra.mxu0 0.0
  %5130 = vmatprep.subr.mxu0 0.0
  %5131 = vmatpush1.msra.mxu0 0.0
  %5132 = vmatprep.subr.mxu0 0.0
  %5133 = vmatpush1.msra.mxu0 0.0
  %5134 = vmatprep.subr.mxu0 0.0
  %5135 = vmatpush1.msra.mxu0 0.0
  %5136 = vmatprep.subr.mxu0 0.0
  %5137 = vmatpush1.msra.mxu0 0.0
  %5138 = vmatprep.subr.mxu0 0.0
  %5139 = vmatpush1.msra.mxu0 0.0
  %5140 = vmatprep.subr.mxu0 0.0
  %5141 = vmatpush1.msra.mxu0 0.0
  %5142 = vmatprep.mubr.f32.mxu0 0.0
  %5143 = vmatmul.mubr.f32.gmra.mrb[0].mxu0 %v869
  %v5144 = vpop.f32.mrb[0].mxu0
  %v5145 = vadd.f32 0.0, %v5144
  %v5146 = vpop.f32.mrb[0].mxu0
  %v5147 = vadd.f32 0.0, %v5146
  %5148 = vdwg.mxu0
  %5149 = vmatprep.subr.mxu0 %v5073
  %5150 = vmatpush1.msra.mxu0 %v5072
  %5151 = vmatprep.subr.mxu0 0.0
  %5152 = vmatpush1.msra.mxu0 0.0
  %5153 = vmatprep.subr.mxu0 0.0
  %5154 = vmatpush1.msra.mxu0 0.0
  %5155 = vmatprep.subr.mxu0 0.0
  %5156 = vmatpush1.msra.mxu0 0.0
  %5157 = vmatprep.subr.mxu0 0.0
  %5158 = vmatpush1.msra.mxu0 0.0
  %5159 = vmatprep.subr.mxu0 0.0
  %5160 = vmatpush1.msra.mxu0 0.0
  %5161 = vmatprep.subr.mxu0 0.0
  %5162 = vmatpush1.msra.mxu0 0.0
  %5163 = vmatprep.subr.mxu0 0.0
  %5164 = vmatpush1.msra.mxu0 0.0
  %5165 = vmatprep.subr.mxu0 0.0
  %5166 = vmatpush1.msra.mxu0 0.0
  %5167 = vmatprep.subr.mxu0 0.0
  %5168 = vmatpush1.msra.mxu0 0.0
  %5169 = vmatprep.subr.mxu0 0.0
  %5170 = vmatpush1.msra.mxu0 0.0
  %5171 = vmatprep.subr.mxu0 0.0
  %5172 = vmatpush1.msra.mxu0 0.0
  %5173 = vmatprep.subr.mxu0 0.0
  %5174 = vmatpush1.msra.mxu0 0.0
  %5175 = vmatprep.subr.mxu0 0.0
  %5176 = vmatpush1.msra.mxu0 0.0
  %5177 = vmatprep.subr.mxu0 0.0
  %5178 = vmatpush1.msra.mxu0 0.0
  %5179 = vmatprep.subr.mxu0 0.0
  %5180 = vmatpush1.msra.mxu0 0.0
  %5181 = vmatprep.subr.mxu0 0.0
  %5182 = vmatpush1.msra.mxu0 0.0
  %5183 = vmatprep.subr.mxu0 0.0
  %5184 = vmatpush1.msra.mxu0 0.0
  %5185 = vmatprep.subr.mxu0 0.0
  %5186 = vmatpush1.msra.mxu0 0.0
  %5187 = vmatprep.subr.mxu0 0.0
  %5188 = vmatpush1.msra.mxu0 0.0
  %5189 = vmatprep.subr.mxu0 0.0
  %5190 = vmatpush1.msra.mxu0 0.0
  %5191 = vmatprep.subr.mxu0 0.0
  %5192 = vmatpush1.msra.mxu0 0.0
  %5193 = vmatprep.subr.mxu0 0.0
  %5194 = vmatpush1.msra.mxu0 0.0
  %5195 = vmatprep.subr.mxu0 0.0
  %5196 = vmatpush1.msra.mxu0 0.0
  %5197 = vmatprep.subr.mxu0 0.0
  %5198 = vmatpush1.msra.mxu0 0.0
  %5199 = vmatprep.subr.mxu0 0.0
  %5200 = vmatpush1.msra.mxu0 0.0
  %5201 = vmatprep.subr.mxu0 0.0
  %5202 = vmatpush1.msra.mxu0 0.0
  %5203 = vmatprep.subr.mxu0 0.0
  %5204 = vmatpush1.msra.mxu0 0.0
  %5205 = vmatprep.subr.mxu0 0.0
  %5206 = vmatpush1.msra.mxu0 0.0
  %5207 = vmatprep.subr.mxu0 0.0
  %5208 = vmatpush1.msra.mxu0 0.0
  %5209 = vmatprep.subr.mxu0 0.0
  %5210 = vmatpush1.msra.mxu0 0.0
  %5211 = vmatprep.subr.mxu0 0.0
  %5212 = vmatpush1.msra.mxu0 0.0
  %5213 = vmatprep.mubr.f32.mxu0 0.0
  %5214 = vmatmul.mubr.f32.gmra.mrb[0].mxu0 %v869
  %v5215 = vpop.f32.mrb[0].mxu0
  %v5216 = vadd.f32 0.0, %v5215
  %v5217 = vpop.f32.mrb[0].mxu0
  %v5218 = vadd.f32 0.0, %v5217
  %5219 = vdwg.mxu0
  %v5220 = vadd.f32 %v5056, %v5145
  %v5221 = vadd.f32 %v5057, %v5147
  %v5222 = vadd.f32 %v5058, %v5216
  %v5223 = vadd.f32 %v5059, %v5218
  %5224 = vrot.lane.b32.xlu0 %v4257, 111
  %v5225 = vpop.permute.xlu0 %5224
  %5226 = vrot.lane.b32.xlu0 %v4258, 111
  %v5227 = vpop.permute.xlu0 %5226
  %5228 = vrot.lane.b32.xlu0 %v4259, 111
  %v5229 = vpop.permute.xlu0 %5228
  %5230 = vrot.lane.b32.xlu0 %v4260, 111
  %v5231 = vpop.permute.xlu0 %5230
  %5232 = vrot.lane.b32.xlu0 0.0, 111
  %v5233 = vpop.permute.xlu0 %5232
  %v5234 = vsel %vm1029, %v5225, %v5227
  %v5235 = vsel %vm1029, %v5227, %v5229
  %v5236 = vsel %vm1029, %v5229, %v5231
  %v5237 = vsel %vm1029, %v5231, %v5233
  %5242 = vmatprep.subr.mxu0 %v5235
  %5243 = vmatpush1.msra.mxu0 %v5234
  %5244 = vmatprep.subr.mxu0 0.0
  %5245 = vmatpush1.msra.mxu0 0.0
  %5246 = vmatprep.subr.mxu0 0.0
  %5247 = vmatpush1.msra.mxu0 0.0
  %5248 = vmatprep.subr.mxu0 0.0
  %5249 = vmatpush1.msra.mxu0 0.0
  %5250 = vmatprep.subr.mxu0 0.0
  %5251 = vmatpush1.msra.mxu0 0.0
  %5252 = vmatprep.subr.mxu0 0.0
  %5253 = vmatpush1.msra.mxu0 0.0
  %5254 = vmatprep.subr.mxu0 0.0
  %5255 = vmatpush1.msra.mxu0 0.0
  %5256 = vmatprep.subr.mxu0 0.0
  %5257 = vmatpush1.msra.mxu0 0.0
  %5258 = vmatprep.subr.mxu0 0.0
  %5259 = vmatpush1.msra.mxu0 0.0
  %5260 = vmatprep.subr.mxu0 0.0
  %5261 = vmatpush1.msra.mxu0 0.0
  %5262 = vmatprep.subr.mxu0 0.0
  %5263 = vmatpush1.msra.mxu0 0.0
  %5264 = vmatprep.subr.mxu0 0.0
  %5265 = vmatpush1.msra.mxu0 0.0
  %5266 = vmatprep.subr.mxu0 0.0
  %5267 = vmatpush1.msra.mxu0 0.0
  %5268 = vmatprep.subr.mxu0 0.0
  %5269 = vmatpush1.msra.mxu0 0.0
  %5270 = vmatprep.subr.mxu0 0.0
  %5271 = vmatpush1.msra.mxu0 0.0
  %5272 = vmatprep.subr.mxu0 0.0
  %5273 = vmatpush1.msra.mxu0 0.0
  %5274 = vmatprep.subr.mxu0 0.0
  %5275 = vmatpush1.msra.mxu0 0.0
  %5276 = vmatprep.subr.mxu0 0.0
  %5277 = vmatpush1.msra.mxu0 0.0
  %5278 = vmatprep.subr.mxu0 0.0
  %5279 = vmatpush1.msra.mxu0 0.0
  %5280 = vmatprep.subr.mxu0 0.0
  %5281 = vmatpush1.msra.mxu0 0.0
  %5282 = vmatprep.subr.mxu0 0.0
  %5283 = vmatpush1.msra.mxu0 0.0
  %5284 = vmatprep.subr.mxu0 0.0
  %5285 = vmatpush1.msra.mxu0 0.0
  %5286 = vmatprep.subr.mxu0 0.0
  %5287 = vmatpush1.msra.mxu0 0.0
  %5288 = vmatprep.subr.mxu0 0.0
  %5289 = vmatpush1.msra.mxu0 0.0
  %5290 = vmatprep.subr.mxu0 0.0
  %5291 = vmatpush1.msra.mxu0 0.0
  %5292 = vmatprep.subr.mxu0 0.0
  %5293 = vmatpush1.msra.mxu0 0.0
  %5294 = vmatprep.subr.mxu0 0.0
  %5295 = vmatpush1.msra.mxu0 0.0
  %5296 = vmatprep.subr.mxu0 0.0
  %5297 = vmatpush1.msra.mxu0 0.0
  %5298 = vmatprep.subr.mxu0 0.0
  %5299 = vmatpush1.msra.mxu0 0.0
  %5300 = vmatprep.subr.mxu0 0.0
  %5301 = vmatpush1.msra.mxu0 0.0
  %5302 = vmatprep.subr.mxu0 0.0
  %5303 = vmatpush1.msra.mxu0 0.0
  %5304 = vmatprep.subr.mxu0 0.0
  %5305 = vmatpush1.msra.mxu0 0.0
  %5306 = vmatprep.mubr.f32.mxu0 0.0
  %5307 = vmatmul.mubr.f32.gmra.mrb[0].mxu0 %v1039
  %v5308 = vpop.f32.mrb[0].mxu0
  %v5309 = vadd.f32 0.0, %v5308
  %v5310 = vpop.f32.mrb[0].mxu0
  %v5311 = vadd.f32 0.0, %v5310
  %5312 = vdwg.mxu0
  %5313 = vmatprep.subr.mxu0 %v5237
  %5314 = vmatpush1.msra.mxu0 %v5236
  %5315 = vmatprep.subr.mxu0 0.0
  %5316 = vmatpush1.msra.mxu0 0.0
  %5317 = vmatprep.subr.mxu0 0.0
  %5318 = vmatpush1.msra.mxu0 0.0
  %5319 = vmatprep.subr.mxu0 0.0
  %5320 = vmatpush1.msra.mxu0 0.0
  %5321 = vmatprep.subr.mxu0 0.0
  %5322 = vmatpush1.msra.mxu0 0.0
  %5323 = vmatprep.subr.mxu0 0.0
  %5324 = vmatpush1.msra.mxu0 0.0
  %5325 = vmatprep.subr.mxu0 0.0
  %5326 = vmatpush1.msra.mxu0 0.0
  %5327 = vmatprep.subr.mxu0 0.0
  %5328 = vmatpush1.msra.mxu0 0.0
  %5329 = vmatprep.subr.mxu0 0.0
  %5330 = vmatpush1.msra.mxu0 0.0
  %5331 = vmatprep.subr.mxu0 0.0
  %5332 = vmatpush1.msra.mxu0 0.0
  %5333 = vmatprep.subr.mxu0 0.0
  %5334 = vmatpush1.msra.mxu0 0.0
  %5335 = vmatprep.subr.mxu0 0.0
  %5336 = vmatpush1.msra.mxu0 0.0
  %5337 = vmatprep.subr.mxu0 0.0
  %5338 = vmatpush1.msra.mxu0 0.0
  %5339 = vmatprep.subr.mxu0 0.0
  %5340 = vmatpush1.msra.mxu0 0.0
  %5341 = vmatprep.subr.mxu0 0.0
  %5342 = vmatpush1.msra.mxu0 0.0
  %5343 = vmatprep.subr.mxu0 0.0
  %5344 = vmatpush1.msra.mxu0 0.0
  %5345 = vmatprep.subr.mxu0 0.0
  %5346 = vmatpush1.msra.mxu0 0.0
  %5347 = vmatprep.subr.mxu0 0.0
  %5348 = vmatpush1.msra.mxu0 0.0
  %5349 = vmatprep.subr.mxu0 0.0
  %5350 = vmatpush1.msra.mxu0 0.0
  %5351 = vmatprep.subr.mxu0 0.0
  %5352 = vmatpush1.msra.mxu0 0.0
  %5353 = vmatprep.subr.mxu0 0.0
  %5354 = vmatpush1.msra.mxu0 0.0
  %5355 = vmatprep.subr.mxu0 0.0
  %5356 = vmatpush1.msra.mxu0 0.0
  %5357 = vmatprep.subr.mxu0 0.0
  %5358 = vmatpush1.msra.mxu0 0.0
  %5359 = vmatprep.subr.mxu0 0.0
  %5360 = vmatpush1.msra.mxu0 0.0
  %5361 = vmatprep.subr.mxu0 0.0
  %5362 = vmatpush1.msra.mxu0 0.0
  %5363 = vmatprep.subr.mxu0 0.0
  %5364 = vmatpush1.msra.mxu0 0.0
  %5365 = vmatprep.subr.mxu0 0.0
  %5366 = vmatpush1.msra.mxu0 0.0
  %5367 = vmatprep.subr.mxu0 0.0
  %5368 = vmatpush1.msra.mxu0 0.0
  %5369 = vmatprep.subr.mxu0 0.0
  %5370 = vmatpush1.msra.mxu0 0.0
  %5371 = vmatprep.subr.mxu0 0.0
  %5372 = vmatpush1.msra.mxu0 0.0
  %5373 = vmatprep.subr.mxu0 0.0
  %5374 = vmatpush1.msra.mxu0 0.0
  %5375 = vmatprep.subr.mxu0 0.0
  %5376 = vmatpush1.msra.mxu0 0.0
  %5377 = vmatprep.mubr.f32.mxu0 0.0
  %5378 = vmatmul.mubr.f32.gmra.mrb[0].mxu0 %v1039
  %v5379 = vpop.f32.mrb[0].mxu0
  %v5380 = vadd.f32 0.0, %v5379
  %v5381 = vpop.f32.mrb[0].mxu0
  %v5382 = vadd.f32 0.0, %v5381
  %5383 = vdwg.mxu0
  %v5384 = vadd.f32 %v5220, %v5309
  %v5385 = vadd.f32 %v5221, %v5311
  %v5386 = vadd.f32 %v5222, %v5380
  %v5387 = vadd.f32 %v5223, %v5382
  %5388 = vrot.lane.b32.xlu0 %v4257, 110
  %v5389 = vpop.permute.xlu0 %5388
  %5390 = vrot.lane.b32.xlu0 %v4258, 110
  %v5391 = vpop.permute.xlu0 %5390
  %5392 = vrot.lane.b32.xlu0 %v4259, 110
  %v5393 = vpop.permute.xlu0 %5392
  %5394 = vrot.lane.b32.xlu0 %v4260, 110
  %v5395 = vpop.permute.xlu0 %5394
  %5396 = vrot.lane.b32.xlu0 0.0, 110
  %v5397 = vpop.permute.xlu0 %5396
  %v5398 = vsel %vm1199, %v5389, %v5391
  %v5399 = vsel %vm1199, %v5391, %v5393
  %v5400 = vsel %vm1199, %v5393, %v5395
  %v5401 = vsel %vm1199, %v5395, %v5397
  %5406 = vmatprep.subr.mxu0 %v5399
  %5407 = vmatpush1.msra.mxu0 %v5398
  %5408 = vmatprep.subr.mxu0 0.0
  %5409 = vmatpush1.msra.mxu0 0.0
  %5410 = vmatprep.subr.mxu0 0.0
  %5411 = vmatpush1.msra.mxu0 0.0
  %5412 = vmatprep.subr.mxu0 0.0
  %5413 = vmatpush1.msra.mxu0 0.0
  %5414 = vmatprep.subr.mxu0 0.0
  %5415 = vmatpush1.msra.mxu0 0.0
  %5416 = vmatprep.subr.mxu0 0.0
  %5417 = vmatpush1.msra.mxu0 0.0
  %5418 = vmatprep.subr.mxu0 0.0
  %5419 = vmatpush1.msra.mxu0 0.0
  %5420 = vmatprep.subr.mxu0 0.0
  %5421 = vmatpush1.msra.mxu0 0.0
  %5422 = vmatprep.subr.mxu0 0.0
  %5423 = vmatpush1.msra.mxu0 0.0
  %5424 = vmatprep.subr.mxu0 0.0
  %5425 = vmatpush1.msra.mxu0 0.0
  %5426 = vmatprep.subr.mxu0 0.0
  %5427 = vmatpush1.msra.mxu0 0.0
  %5428 = vmatprep.subr.mxu0 0.0
  %5429 = vmatpush1.msra.mxu0 0.0
  %5430 = vmatprep.subr.mxu0 0.0
  %5431 = vmatpush1.msra.mxu0 0.0
  %5432 = vmatprep.subr.mxu0 0.0
  %5433 = vmatpush1.msra.mxu0 0.0
  %5434 = vmatprep.subr.mxu0 0.0
  %5435 = vmatpush1.msra.mxu0 0.0
  %5436 = vmatprep.subr.mxu0 0.0
  %5437 = vmatpush1.msra.mxu0 0.0
  %5438 = vmatprep.subr.mxu0 0.0
  %5439 = vmatpush1.msra.mxu0 0.0
  %5440 = vmatprep.subr.mxu0 0.0
  %5441 = vmatpush1.msra.mxu0 0.0
  %5442 = vmatprep.subr.mxu0 0.0
  %5443 = vmatpush1.msra.mxu0 0.0
  %5444 = vmatprep.subr.mxu0 0.0
  %5445 = vmatpush1.msra.mxu0 0.0
  %5446 = vmatprep.subr.mxu0 0.0
  %5447 = vmatpush1.msra.mxu0 0.0
  %5448 = vmatprep.subr.mxu0 0.0
  %5449 = vmatpush1.msra.mxu0 0.0
  %5450 = vmatprep.subr.mxu0 0.0
  %5451 = vmatpush1.msra.mxu0 0.0
  %5452 = vmatprep.subr.mxu0 0.0
  %5453 = vmatpush1.msra.mxu0 0.0
  %5454 = vmatprep.subr.mxu0 0.0
  %5455 = vmatpush1.msra.mxu0 0.0
  %5456 = vmatprep.subr.mxu0 0.0
  %5457 = vmatpush1.msra.mxu0 0.0
  %5458 = vmatprep.subr.mxu0 0.0
  %5459 = vmatpush1.msra.mxu0 0.0
  %5460 = vmatprep.subr.mxu0 0.0
  %5461 = vmatpush1.msra.mxu0 0.0
  %5462 = vmatprep.subr.mxu0 0.0
  %5463 = vmatpush1.msra.mxu0 0.0
  %5464 = vmatprep.subr.mxu0 0.0
  %5465 = vmatpush1.msra.mxu0 0.0
  %5466 = vmatprep.subr.mxu0 0.0
  %5467 = vmatpush1.msra.mxu0 0.0
  %5468 = vmatprep.subr.mxu0 0.0
  %5469 = vmatpush1.msra.mxu0 0.0
  %5470 = vmatprep.mubr.f32.mxu0 0.0
  %5471 = vmatmul.mubr.f32.gmra.mrb[0].mxu0 %v1209
  %v5472 = vpop.f32.mrb[0].mxu0
  %v5473 = vadd.f32 0.0, %v5472
  %v5474 = vpop.f32.mrb[0].mxu0
  %v5475 = vadd.f32 0.0, %v5474
  %5476 = vdwg.mxu0
  %5477 = vmatprep.subr.mxu0 %v5401
  %5478 = vmatpush1.msra.mxu0 %v5400
  %5479 = vmatprep.subr.mxu0 0.0
  %5480 = vmatpush1.msra.mxu0 0.0
  %5481 = vmatprep.subr.mxu0 0.0
  %5482 = vmatpush1.msra.mxu0 0.0
  %5483 = vmatprep.subr.mxu0 0.0
  %5484 = vmatpush1.msra.mxu0 0.0
  %5485 = vmatprep.subr.mxu0 0.0
  %5486 = vmatpush1.msra.mxu0 0.0
  %5487 = vmatprep.subr.mxu0 0.0
  %5488 = vmatpush1.msra.mxu0 0.0
  %5489 = vmatprep.subr.mxu0 0.0
  %5490 = vmatpush1.msra.mxu0 0.0
  %5491 = vmatprep.subr.mxu0 0.0
  %5492 = vmatpush1.msra.mxu0 0.0
  %5493 = vmatprep.subr.mxu0 0.0
  %5494 = vmatpush1.msra.mxu0 0.0
  %5495 = vmatprep.subr.mxu0 0.0
  %5496 = vmatpush1.msra.mxu0 0.0
  %5497 = vmatprep.subr.mxu0 0.0
  %5498 = vmatpush1.msra.mxu0 0.0
  %5499 = vmatprep.subr.mxu0 0.0
  %5500 = vmatpush1.msra.mxu0 0.0
  %5501 = vmatprep.subr.mxu0 0.0
  %5502 = vmatpush1.msra.mxu0 0.0
  %5503 = vmatprep.subr.mxu0 0.0
  %5504 = vmatpush1.msra.mxu0 0.0
  %5505 = vmatprep.subr.mxu0 0.0
  %5506 = vmatpush1.msra.mxu0 0.0
  %5507 = vmatprep.subr.mxu0 0.0
  %5508 = vmatpush1.msra.mxu0 0.0
  %5509 = vmatprep.subr.mxu0 0.0
  %5510 = vmatpush1.msra.mxu0 0.0
  %5511 = vmatprep.subr.mxu0 0.0
  %5512 = vmatpush1.msra.mxu0 0.0
  %5513 = vmatprep.subr.mxu0 0.0
  %5514 = vmatpush1.msra.mxu0 0.0
  %5515 = vmatprep.subr.mxu0 0.0
  %5516 = vmatpush1.msra.mxu0 0.0
  %5517 = vmatprep.subr.mxu0 0.0
  %5518 = vmatpush1.msra.mxu0 0.0
  %5519 = vmatprep.subr.mxu0 0.0
  %5520 = vmatpush1.msra.mxu0 0.0
  %5521 = vmatprep.subr.mxu0 0.0
  %5522 = vmatpush1.msra.mxu0 0.0
  %5523 = vmatprep.subr.mxu0 0.0
  %5524 = vmatpush1.msra.mxu0 0.0
  %5525 = vmatprep.subr.mxu0 0.0
  %5526 = vmatpush1.msra.mxu0 0.0
  %5527 = vmatprep.subr.mxu0 0.0
  %5528 = vmatpush1.msra.mxu0 0.0
  %5529 = vmatprep.subr.mxu0 0.0
  %5530 = vmatpush1.msra.mxu0 0.0
  %5531 = vmatprep.subr.mxu0 0.0
  %5532 = vmatpush1.msra.mxu0 0.0
  %5533 = vmatprep.subr.mxu0 0.0
  %5534 = vmatpush1.msra.mxu0 0.0
  %5535 = vmatprep.subr.mxu0 0.0
  %5536 = vmatpush1.msra.mxu0 0.0
  %5537 = vmatprep.subr.mxu0 0.0
  %5538 = vmatpush1.msra.mxu0 0.0
  %5539 = vmatprep.subr.mxu0 0.0
  %5540 = vmatpush1.msra.mxu0 0.0
  %5541 = vmatprep.mubr.f32.mxu0 0.0
  %5542 = vmatmul.mubr.f32.gmra.mrb[0].mxu0 %v1209
  %v5543 = vpop.f32.mrb[0].mxu0
  %v5544 = vadd.f32 0.0, %v5543
  %v5545 = vpop.f32.mrb[0].mxu0
  %v5546 = vadd.f32 0.0, %v5545
  %5547 = vdwg.mxu0
  %v5548 = vadd.f32 %v5384, %v5473
  %v5549 = vadd.f32 %v5385, %v5475
  %v5550 = vadd.f32 %v5386, %v5544
  %v5551 = vadd.f32 %v5387, %v5546
  %5552 = vrot.lane.b32.xlu0 %v4257, 109
  %v5553 = vpop.permute.xlu0 %5552
  %5554 = vrot.lane.b32.xlu0 %v4258, 109
  %v5555 = vpop.permute.xlu0 %5554
  %5556 = vrot.lane.b32.xlu0 %v4259, 109
  %v5557 = vpop.permute.xlu0 %5556
  %5558 = vrot.lane.b32.xlu0 %v4260, 109
  %v5559 = vpop.permute.xlu0 %5558
  %5560 = vrot.lane.b32.xlu0 0.0, 109
  %v5561 = vpop.permute.xlu0 %5560
  %v5562 = vsel %vm1369, %v5553, %v5555
  %v5563 = vsel %vm1369, %v5555, %v5557
  %v5564 = vsel %vm1369, %v5557, %v5559
  %v5565 = vsel %vm1369, %v5559, %v5561
  %5570 = vmatprep.subr.mxu0 %v5563
  %5571 = vmatpush1.msra.mxu0 %v5562
  %5572 = vmatprep.subr.mxu0 0.0
  %5573 = vmatpush1.msra.mxu0 0.0
  %5574 = vmatprep.subr.mxu0 0.0
  %5575 = vmatpush1.msra.mxu0 0.0
  %5576 = vmatprep.subr.mxu0 0.0
  %5577 = vmatpush1.msra.mxu0 0.0
  %5578 = vmatprep.subr.mxu0 0.0
  %5579 = vmatpush1.msra.mxu0 0.0
  %5580 = vmatprep.subr.mxu0 0.0
  %5581 = vmatpush1.msra.mxu0 0.0
  %5582 = vmatprep.subr.mxu0 0.0
  %5583 = vmatpush1.msra.mxu0 0.0
  %5584 = vmatprep.subr.mxu0 0.0
  %5585 = vmatpush1.msra.mxu0 0.0
  %5586 = vmatprep.subr.mxu0 0.0
  %5587 = vmatpush1.msra.mxu0 0.0
  %5588 = vmatprep.subr.mxu0 0.0
  %5589 = vmatpush1.msra.mxu0 0.0
  %5590 = vmatprep.subr.mxu0 0.0
  %5591 = vmatpush1.msra.mxu0 0.0
  %5592 = vmatprep.subr.mxu0 0.0
  %5593 = vmatpush1.msra.mxu0 0.0
  %5594 = vmatprep.subr.mxu0 0.0
  %5595 = vmatpush1.msra.mxu0 0.0
  %5596 = vmatprep.subr.mxu0 0.0
  %5597 = vmatpush1.msra.mxu0 0.0
  %5598 = vmatprep.subr.mxu0 0.0
  %5599 = vmatpush1.msra.mxu0 0.0
  %5600 = vmatprep.subr.mxu0 0.0
  %5601 = vmatpush1.msra.mxu0 0.0
  %5602 = vmatprep.subr.mxu0 0.0
  %5603 = vmatpush1.msra.mxu0 0.0
  %5604 = vmatprep.subr.mxu0 0.0
  %5605 = vmatpush1.msra.mxu0 0.0
  %5606 = vmatprep.subr.mxu0 0.0
  %5607 = vmatpush1.msra.mxu0 0.0
  %5608 = vmatprep.subr.mxu0 0.0
  %5609 = vmatpush1.msra.mxu0 0.0
  %5610 = vmatprep.subr.mxu0 0.0
  %5611 = vmatpush1.msra.mxu0 0.0
  %5612 = vmatprep.subr.mxu0 0.0
  %5613 = vmatpush1.msra.mxu0 0.0
  %5614 = vmatprep.subr.mxu0 0.0
  %5615 = vmatpush1.msra.mxu0 0.0
  %5616 = vmatprep.subr.mxu0 0.0
  %5617 = vmatpush1.msra.mxu0 0.0
  %5618 = vmatprep.subr.mxu0 0.0
  %5619 = vmatpush1.msra.mxu0 0.0
  %5620 = vmatprep.subr.mxu0 0.0
  %5621 = vmatpush1.msra.mxu0 0.0
  %5622 = vmatprep.subr.mxu0 0.0
  %5623 = vmatpush1.msra.mxu0 0.0
  %5624 = vmatprep.subr.mxu0 0.0
  %5625 = vmatpush1.msra.mxu0 0.0
  %5626 = vmatprep.subr.mxu0 0.0
  %5627 = vmatpush1.msra.mxu0 0.0
  %5628 = vmatprep.subr.mxu0 0.0
  %5629 = vmatpush1.msra.mxu0 0.0
  %5630 = vmatprep.subr.mxu0 0.0
  %5631 = vmatpush1.msra.mxu0 0.0
  %5632 = vmatprep.subr.mxu0 0.0
  %5633 = vmatpush1.msra.mxu0 0.0
  %5634 = vmatprep.mubr.f32.mxu0 0.0
  %5635 = vmatmul.mubr.f32.gmra.mrb[0].mxu0 %v1379
  %v5636 = vpop.f32.mrb[0].mxu0
  %v5637 = vadd.f32 0.0, %v5636
  %v5638 = vpop.f32.mrb[0].mxu0
  %v5639 = vadd.f32 0.0, %v5638
  %5640 = vdwg.mxu0
  %5641 = vmatprep.subr.mxu0 %v5565
  %5642 = vmatpush1.msra.mxu0 %v5564
  %5643 = vmatprep.subr.mxu0 0.0
  %5644 = vmatpush1.msra.mxu0 0.0
  %5645 = vmatprep.subr.mxu0 0.0
  %5646 = vmatpush1.msra.mxu0 0.0
  %5647 = vmatprep.subr.mxu0 0.0
  %5648 = vmatpush1.msra.mxu0 0.0
  %5649 = vmatprep.subr.mxu0 0.0
  %5650 = vmatpush1.msra.mxu0 0.0
  %5651 = vmatprep.subr.mxu0 0.0
  %5652 = vmatpush1.msra.mxu0 0.0
  %5653 = vmatprep.subr.mxu0 0.0
  %5654 = vmatpush1.msra.mxu0 0.0
  %5655 = vmatprep.subr.mxu0 0.0
  %5656 = vmatpush1.msra.mxu0 0.0
  %5657 = vmatprep.subr.mxu0 0.0
  %5658 = vmatpush1.msra.mxu0 0.0
  %5659 = vmatprep.subr.mxu0 0.0
  %5660 = vmatpush1.msra.mxu0 0.0
  %5661 = vmatprep.subr.mxu0 0.0
  %5662 = vmatpush1.msra.mxu0 0.0
  %5663 = vmatprep.subr.mxu0 0.0
  %5664 = vmatpush1.msra.mxu0 0.0
  %5665 = vmatprep.subr.mxu0 0.0
  %5666 = vmatpush1.msra.mxu0 0.0
  %5667 = vmatprep.subr.mxu0 0.0
  %5668 = vmatpush1.msra.mxu0 0.0
  %5669 = vmatprep.subr.mxu0 0.0
  %5670 = vmatpush1.msra.mxu0 0.0
  %5671 = vmatprep.subr.mxu0 0.0
  %5672 = vmatpush1.msra.mxu0 0.0
  %5673 = vmatprep.subr.mxu0 0.0
  %5674 = vmatpush1.msra.mxu0 0.0
  %5675 = vmatprep.subr.mxu0 0.0
  %5676 = vmatpush1.msra.mxu0 0.0
  %5677 = vmatprep.subr.mxu0 0.0
  %5678 = vmatpush1.msra.mxu0 0.0
  %5679 = vmatprep.subr.mxu0 0.0
  %5680 = vmatpush1.msra.mxu0 0.0
  %5681 = vmatprep.subr.mxu0 0.0
  %5682 = vmatpush1.msra.mxu0 0.0
  %5683 = vmatprep.subr.mxu0 0.0
  %5684 = vmatpush1.msra.mxu0 0.0
  %5685 = vmatprep.subr.mxu0 0.0
  %5686 = vmatpush1.msra.mxu0 0.0
  %5687 = vmatprep.subr.mxu0 0.0
  %5688 = vmatpush1.msra.mxu0 0.0
  %5689 = vmatprep.subr.mxu0 0.0
  %5690 = vmatpush1.msra.mxu0 0.0
  %5691 = vmatprep.subr.mxu0 0.0
  %5692 = vmatpush1.msra.mxu0 0.0
  %5693 = vmatprep.subr.mxu0 0.0
  %5694 = vmatpush1.msra.mxu0 0.0
  %5695 = vmatprep.subr.mxu0 0.0
  %5696 = vmatpush1.msra.mxu0 0.0
  %5697 = vmatprep.subr.mxu0 0.0
  %5698 = vmatpush1.msra.mxu0 0.0
  %5699 = vmatprep.subr.mxu0 0.0
  %5700 = vmatpush1.msra.mxu0 0.0
  %5701 = vmatprep.subr.mxu0 0.0
  %5702 = vmatpush1.msra.mxu0 0.0
  %5703 = vmatprep.subr.mxu0 0.0
  %5704 = vmatpush1.msra.mxu0 0.0
  %5705 = vmatprep.mubr.f32.mxu0 0.0
  %5706 = vmatmul.mubr.f32.gmra.mrb[0].mxu0 %v1379
  %v5707 = vpop.f32.mrb[0].mxu0
  %v5708 = vadd.f32 0.0, %v5707
  %v5709 = vpop.f32.mrb[0].mxu0
  %v5710 = vadd.f32 0.0, %v5709
  %5711 = vdwg.mxu0
  %v5712 = vadd.f32 %v5548, %v5637
  %v5713 = vadd.f32 %v5549, %v5639
  %v5714 = vadd.f32 %v5550, %v5708
  %v5715 = vadd.f32 %v5551, %v5710
  %5716 = vrot.lane.b32.xlu0 %v4257, 108
  %v5717 = vpop.permute.xlu0 %5716
  %5718 = vrot.lane.b32.xlu0 %v4258, 108
  %v5719 = vpop.permute.xlu0 %5718
  %5720 = vrot.lane.b32.xlu0 %v4259, 108
  %v5721 = vpop.permute.xlu0 %5720
  %5722 = vrot.lane.b32.xlu0 %v4260, 108
  %v5723 = vpop.permute.xlu0 %5722
  %5724 = vrot.lane.b32.xlu0 0.0, 108
  %v5725 = vpop.permute.xlu0 %5724
  %v5726 = vsel %vm1539, %v5717, %v5719
  %v5727 = vsel %vm1539, %v5719, %v5721
  %v5728 = vsel %vm1539, %v5721, %v5723
  %v5729 = vsel %vm1539, %v5723, %v5725
  %5734 = vmatprep.subr.mxu0 %v5727
  %5735 = vmatpush1.msra.mxu0 %v5726
  %5736 = vmatprep.subr.mxu0 0.0
  %5737 = vmatpush1.msra.mxu0 0.0
  %5738 = vmatprep.subr.mxu0 0.0
  %5739 = vmatpush1.msra.mxu0 0.0
  %5740 = vmatprep.subr.mxu0 0.0
  %5741 = vmatpush1.msra.mxu0 0.0
  %5742 = vmatprep.subr.mxu0 0.0
  %5743 = vmatpush1.msra.mxu0 0.0
  %5744 = vmatprep.subr.mxu0 0.0
  %5745 = vmatpush1.msra.mxu0 0.0
  %5746 = vmatprep.subr.mxu0 0.0
  %5747 = vmatpush1.msra.mxu0 0.0
  %5748 = vmatprep.subr.mxu0 0.0
  %5749 = vmatpush1.msra.mxu0 0.0
  %5750 = vmatprep.subr.mxu0 0.0
  %5751 = vmatpush1.msra.mxu0 0.0
  %5752 = vmatprep.subr.mxu0 0.0
  %5753 = vmatpush1.msra.mxu0 0.0
  %5754 = vmatprep.subr.mxu0 0.0
  %5755 = vmatpush1.msra.mxu0 0.0
  %5756 = vmatprep.subr.mxu0 0.0
  %5757 = vmatpush1.msra.mxu0 0.0
  %5758 = vmatprep.subr.mxu0 0.0
  %5759 = vmatpush1.msra.mxu0 0.0
  %5760 = vmatprep.subr.mxu0 0.0
  %5761 = vmatpush1.msra.mxu0 0.0
  %5762 = vmatprep.subr.mxu0 0.0
  %5763 = vmatpush1.msra.mxu0 0.0
  %5764 = vmatprep.subr.mxu0 0.0
  %5765 = vmatpush1.msra.mxu0 0.0
  %5766 = vmatprep.subr.mxu0 0.0
  %5767 = vmatpush1.msra.mxu0 0.0
  %5768 = vmatprep.subr.mxu0 0.0
  %5769 = vmatpush1.msra.mxu0 0.0
  %5770 = vmatprep.subr.mxu0 0.0
  %5771 = vmatpush1.msra.mxu0 0.0
  %5772 = vmatprep.subr.mxu0 0.0
  %5773 = vmatpush1.msra.mxu0 0.0
  %5774 = vmatprep.subr.mxu0 0.0
  %5775 = vmatpush1.msra.mxu0 0.0
  %5776 = vmatprep.subr.mxu0 0.0
  %5777 = vmatpush1.msra.mxu0 0.0
  %5778 = vmatprep.subr.mxu0 0.0
  %5779 = vmatpush1.msra.mxu0 0.0
  %5780 = vmatprep.subr.mxu0 0.0
  %5781 = vmatpush1.msra.mxu0 0.0
  %5782 = vmatprep.subr.mxu0 0.0
  %5783 = vmatpush1.msra.mxu0 0.0
  %5784 = vmatprep.subr.mxu0 0.0
  %5785 = vmatpush1.msra.mxu0 0.0
  %5786 = vmatprep.subr.mxu0 0.0
  %5787 = vmatpush1.msra.mxu0 0.0
  %5788 = vmatprep.subr.mxu0 0.0
  %5789 = vmatpush1.msra.mxu0 0.0
  %5790 = vmatprep.subr.mxu0 0.0
  %5791 = vmatpush1.msra.mxu0 0.0
  %5792 = vmatprep.subr.mxu0 0.0
  %5793 = vmatpush1.msra.mxu0 0.0
  %5794 = vmatprep.subr.mxu0 0.0
  %5795 = vmatpush1.msra.mxu0 0.0
  %5796 = vmatprep.subr.mxu0 0.0
  %5797 = vmatpush1.msra.mxu0 0.0
  %5798 = vmatprep.mubr.f32.mxu0 0.0
  %5799 = vmatmul.mubr.f32.gmra.mrb[0].mxu0 %v1549
  %v5800 = vpop.f32.mrb[0].mxu0
  %v5801 = vadd.f32 0.0, %v5800
  %v5802 = vpop.f32.mrb[0].mxu0
  %v5803 = vadd.f32 0.0, %v5802
  %5804 = vdwg.mxu0
  %5805 = vmatprep.subr.mxu0 %v5729
  %5806 = vmatpush1.msra.mxu0 %v5728
  %5807 = vmatprep.subr.mxu0 0.0
  %5808 = vmatpush1.msra.mxu0 0.0
  %5809 = vmatprep.subr.mxu0 0.0
  %5810 = vmatpush1.msra.mxu0 0.0
  %5811 = vmatprep.subr.mxu0 0.0
  %5812 = vmatpush1.msra.mxu0 0.0
  %5813 = vmatprep.subr.mxu0 0.0
  %5814 = vmatpush1.msra.mxu0 0.0
  %5815 = vmatprep.subr.mxu0 0.0
  %5816 = vmatpush1.msra.mxu0 0.0
  %5817 = vmatprep.subr.mxu0 0.0
  %5818 = vmatpush1.msra.mxu0 0.0
  %5819 = vmatprep.subr.mxu0 0.0
  %5820 = vmatpush1.msra.mxu0 0.0
  %5821 = vmatprep.subr.mxu0 0.0
  %5822 = vmatpush1.msra.mxu0 0.0
  %5823 = vmatprep.subr.mxu0 0.0
  %5824 = vmatpush1.msra.mxu0 0.0
  %5825 = vmatprep.subr.mxu0 0.0
  %5826 = vmatpush1.msra.mxu0 0.0
  %5827 = vmatprep.subr.mxu0 0.0
  %5828 = vmatpush1.msra.mxu0 0.0
  %5829 = vmatprep.subr.mxu0 0.0
  %5830 = vmatpush1.msra.mxu0 0.0
  %5831 = vmatprep.subr.mxu0 0.0
  %5832 = vmatpush1.msra.mxu0 0.0
  %5833 = vmatprep.subr.mxu0 0.0
  %5834 = vmatpush1.msra.mxu0 0.0
  %5835 = vmatprep.subr.mxu0 0.0
  %5836 = vmatpush1.msra.mxu0 0.0
  %5837 = vmatprep.subr.mxu0 0.0
  %5838 = vmatpush1.msra.mxu0 0.0
  %5839 = vmatprep.subr.mxu0 0.0
  %5840 = vmatpush1.msra.mxu0 0.0
  %5841 = vmatprep.subr.mxu0 0.0
  %5842 = vmatpush1.msra.mxu0 0.0
  %5843 = vmatprep.subr.mxu0 0.0
  %5844 = vmatpush1.msra.mxu0 0.0
  %5845 = vmatprep.subr.mxu0 0.0
  %5846 = vmatpush1.msra.mxu0 0.0
  %5847 = vmatprep.subr.mxu0 0.0
  %5848 = vmatpush1.msra.mxu0 0.0
  %5849 = vmatprep.subr.mxu0 0.0
  %5850 = vmatpush1.msra.mxu0 0.0
  %5851 = vmatprep.subr.mxu0 0.0
  %5852 = vmatpush1.msra.mxu0 0.0
  %5853 = vmatprep.subr.mxu0 0.0
  %5854 = vmatpush1.msra.mxu0 0.0
  %5855 = vmatprep.subr.mxu0 0.0
  %5856 = vmatpush1.msra.mxu0 0.0
  %5857 = vmatprep.subr.mxu0 0.0
  %5858 = vmatpush1.msra.mxu0 0.0
  %5859 = vmatprep.subr.mxu0 0.0
  %5860 = vmatpush1.msra.mxu0 0.0
  %5861 = vmatprep.subr.mxu0 0.0
  %5862 = vmatpush1.msra.mxu0 0.0
  %5863 = vmatprep.subr.mxu0 0.0
  %5864 = vmatpush1.msra.mxu0 0.0
  %5865 = vmatprep.subr.mxu0 0.0
  %5866 = vmatpush1.msra.mxu0 0.0
  %5867 = vmatprep.subr.mxu0 0.0
  %5868 = vmatpush1.msra.mxu0 0.0
  %5869 = vmatprep.mubr.f32.mxu0 0.0
  %5870 = vmatmul.mubr.f32.gmra.mrb[0].mxu0 %v1549
  %v5871 = vpop.f32.mrb[0].mxu0
  %v5872 = vadd.f32 0.0, %v5871
  %v5873 = vpop.f32.mrb[0].mxu0
  %v5874 = vadd.f32 0.0, %v5873
  %5875 = vdwg.mxu0
  %v5876 = vadd.f32 %v5712, %v5801
  %v5877 = vadd.f32 %v5713, %v5803
  %v5878 = vadd.f32 %v5714, %v5872
  %v5879 = vadd.f32 %v5715, %v5874
  %5880 = vrot.lane.b32.xlu0 %v4257, 96
  %v5881 = vpop.permute.xlu0 %5880
  %5882 = vrot.lane.b32.xlu0 %v4258, 96
  %v5883 = vpop.permute.xlu0 %5882
  %5884 = vrot.lane.b32.xlu0 %v4259, 96
  %v5885 = vpop.permute.xlu0 %5884
  %5886 = vrot.lane.b32.xlu0 %v4260, 96
  %v5887 = vpop.permute.xlu0 %5886
  %5888 = vrot.lane.b32.xlu0 0.0, 96
  %v5889 = vpop.permute.xlu0 %5888
  %v5890 = vsel %vm1709, %v5881, %v5883
  %v5891 = vsel %vm1709, %v5883, %v5885
  %v5892 = vsel %vm1709, %v5885, %v5887
  %v5893 = vsel %vm1709, %v5887, %v5889
  %5898 = vmatprep.subr.mxu0 %v5891
  %5899 = vmatpush1.msra.mxu0 %v5890
  %5900 = vmatprep.subr.mxu0 0.0
  %5901 = vmatpush1.msra.mxu0 0.0
  %5902 = vmatprep.subr.mxu0 0.0
  %5903 = vmatpush1.msra.mxu0 0.0
  %5904 = vmatprep.subr.mxu0 0.0
  %5905 = vmatpush1.msra.mxu0 0.0
  %5906 = vmatprep.subr.mxu0 0.0
  %5907 = vmatpush1.msra.mxu0 0.0
  %5908 = vmatprep.subr.mxu0 0.0
  %5909 = vmatpush1.msra.mxu0 0.0
  %5910 = vmatprep.subr.mxu0 0.0
  %5911 = vmatpush1.msra.mxu0 0.0
  %5912 = vmatprep.subr.mxu0 0.0
  %5913 = vmatpush1.msra.mxu0 0.0
  %5914 = vmatprep.subr.mxu0 0.0
  %5915 = vmatpush1.msra.mxu0 0.0
  %5916 = vmatprep.subr.mxu0 0.0
  %5917 = vmatpush1.msra.mxu0 0.0
  %5918 = vmatprep.subr.mxu0 0.0
  %5919 = vmatpush1.msra.mxu0 0.0
  %5920 = vmatprep.subr.mxu0 0.0
  %5921 = vmatpush1.msra.mxu0 0.0
  %5922 = vmatprep.subr.mxu0 0.0
  %5923 = vmatpush1.msra.mxu0 0.0
  %5924 = vmatprep.subr.mxu0 0.0
  %5925 = vmatpush1.msra.mxu0 0.0
  %5926 = vmatprep.subr.mxu0 0.0
  %5927 = vmatpush1.msra.mxu0 0.0
  %5928 = vmatprep.subr.mxu0 0.0
  %5929 = vmatpush1.msra.mxu0 0.0
  %5930 = vmatprep.subr.mxu0 0.0
  %5931 = vmatpush1.msra.mxu0 0.0
  %5932 = vmatprep.subr.mxu0 0.0
  %5933 = vmatpush1.msra.mxu0 0.0
  %5934 = vmatprep.subr.mxu0 0.0
  %5935 = vmatpush1.msra.mxu0 0.0
  %5936 = vmatprep.subr.mxu0 0.0
  %5937 = vmatpush1.msra.mxu0 0.0
  %5938 = vmatprep.subr.mxu0 0.0
  %5939 = vmatpush1.msra.mxu0 0.0
  %5940 = vmatprep.subr.mxu0 0.0
  %5941 = vmatpush1.msra.mxu0 0.0
  %5942 = vmatprep.subr.mxu0 0.0
  %5943 = vmatpush1.msra.mxu0 0.0
  %5944 = vmatprep.subr.mxu0 0.0
  %5945 = vmatpush1.msra.mxu0 0.0
  %5946 = vmatprep.subr.mxu0 0.0
  %5947 = vmatpush1.msra.mxu0 0.0
  %5948 = vmatprep.subr.mxu0 0.0
  %5949 = vmatpush1.msra.mxu0 0.0
  %5950 = vmatprep.subr.mxu0 0.0
  %5951 = vmatpush1.msra.mxu0 0.0
  %5952 = vmatprep.subr.mxu0 0.0
  %5953 = vmatpush1.msra.mxu0 0.0
  %5954 = vmatprep.subr.mxu0 0.0
  %5955 = vmatpush1.msra.mxu0 0.0
  %5956 = vmatprep.subr.mxu0 0.0
  %5957 = vmatpush1.msra.mxu0 0.0
  %5958 = vmatprep.subr.mxu0 0.0
  %5959 = vmatpush1.msra.mxu0 0.0
  %5960 = vmatprep.subr.mxu0 0.0
  %5961 = vmatpush1.msra.mxu0 0.0
  %5962 = vmatprep.mubr.f32.mxu0 0.0
  %5963 = vmatmul.mubr.f32.gmra.mrb[0].mxu0 %v1719
  %v5964 = vpop.f32.mrb[0].mxu0
  %v5965 = vadd.f32 0.0, %v5964
  %v5966 = vpop.f32.mrb[0].mxu0
  %v5967 = vadd.f32 0.0, %v5966
  %5968 = vdwg.mxu0
  %5969 = vmatprep.subr.mxu0 %v5893
  %5970 = vmatpush1.msra.mxu0 %v5892
  %5971 = vmatprep.subr.mxu0 0.0
  %5972 = vmatpush1.msra.mxu0 0.0
  %5973 = vmatprep.subr.mxu0 0.0
  %5974 = vmatpush1.msra.mxu0 0.0
  %5975 = vmatprep.subr.mxu0 0.0
  %5976 = vmatpush1.msra.mxu0 0.0
  %5977 = vmatprep.subr.mxu0 0.0
  %5978 = vmatpush1.msra.mxu0 0.0
  %5979 = vmatprep.subr.mxu0 0.0
  %5980 = vmatpush1.msra.mxu0 0.0
  %5981 = vmatprep.subr.mxu0 0.0
  %5982 = vmatpush1.msra.mxu0 0.0
  %5983 = vmatprep.subr.mxu0 0.0
  %5984 = vmatpush1.msra.mxu0 0.0
  %5985 = vmatprep.subr.mxu0 0.0
  %5986 = vmatpush1.msra.mxu0 0.0
  %5987 = vmatprep.subr.mxu0 0.0
  %5988 = vmatpush1.msra.mxu0 0.0
  %5989 = vmatprep.subr.mxu0 0.0
  %5990 = vmatpush1.msra.mxu0 0.0
  %5991 = vmatprep.subr.mxu0 0.0
  %5992 = vmatpush1.msra.mxu0 0.0
  %5993 = vmatprep.subr.mxu0 0.0
  %5994 = vmatpush1.msra.mxu0 0.0
  %5995 = vmatprep.subr.mxu0 0.0
  %5996 = vmatpush1.msra.mxu0 0.0
  %5997 = vmatprep.subr.mxu0 0.0
  %5998 = vmatpush1.msra.mxu0 0.0
  %5999 = vmatprep.subr.mxu0 0.0
  %6000 = vmatpush1.msra.mxu0 0.0
  %6001 = vmatprep.subr.mxu0 0.0
  %6002 = vmatpush1.msra.mxu0 0.0
  %6003 = vmatprep.subr.mxu0 0.0
  %6004 = vmatpush1.msra.mxu0 0.0
  %6005 = vmatprep.subr.mxu0 0.0
  %6006 = vmatpush1.msra.mxu0 0.0
  %6007 = vmatprep.subr.mxu0 0.0
  %6008 = vmatpush1.msra.mxu0 0.0
  %6009 = vmatprep.subr.mxu0 0.0
  %6010 = vmatpush1.msra.mxu0 0.0
  %6011 = vmatprep.subr.mxu0 0.0
  %6012 = vmatpush1.msra.mxu0 0.0
  %6013 = vmatprep.subr.mxu0 0.0
  %6014 = vmatpush1.msra.mxu0 0.0
  %6015 = vmatprep.subr.mxu0 0.0
  %6016 = vmatpush1.msra.mxu0 0.0
  %6017 = vmatprep.subr.mxu0 0.0
  %6018 = vmatpush1.msra.mxu0 0.0
  %6019 = vmatprep.subr.mxu0 0.0
  %6020 = vmatpush1.msra.mxu0 0.0
  %6021 = vmatprep.subr.mxu0 0.0
  %6022 = vmatpush1.msra.mxu0 0.0
  %6023 = vmatprep.subr.mxu0 0.0
  %6024 = vmatpush1.msra.mxu0 0.0
  %6025 = vmatprep.subr.mxu0 0.0
  %6026 = vmatpush1.msra.mxu0 0.0
  %6027 = vmatprep.subr.mxu0 0.0
  %6028 = vmatpush1.msra.mxu0 0.0
  %6029 = vmatprep.subr.mxu0 0.0
  %6030 = vmatpush1.msra.mxu0 0.0
  %6031 = vmatprep.subr.mxu0 0.0
  %6032 = vmatpush1.msra.mxu0 0.0
  %6033 = vmatprep.mubr.f32.mxu0 0.0
  %6034 = vmatmul.mubr.f32.gmra.mrb[0].mxu0 %v1719
  %v6035 = vpop.f32.mrb[0].mxu0
  %v6036 = vadd.f32 0.0, %v6035
  %v6037 = vpop.f32.mrb[0].mxu0
  %v6038 = vadd.f32 0.0, %v6037
  %6039 = vdwg.mxu0
  %v6040 = vadd.f32 %v5876, %v5965
  %v6041 = vadd.f32 %v5877, %v5967
  %v6042 = vadd.f32 %v5878, %v6036
  %v6043 = vadd.f32 %v5879, %v6038
  %6044 = vrot.lane.b32.xlu0 %v4257, 95
  %v6045 = vpop.permute.xlu0 %6044
  %6046 = vrot.lane.b32.xlu0 %v4258, 95
  %v6047 = vpop.permute.xlu0 %6046
  %6048 = vrot.lane.b32.xlu0 %v4259, 95
  %v6049 = vpop.permute.xlu0 %6048
  %6050 = vrot.lane.b32.xlu0 %v4260, 95
  %v6051 = vpop.permute.xlu0 %6050
  %6052 = vrot.lane.b32.xlu0 0.0, 95
  %v6053 = vpop.permute.xlu0 %6052
  %v6054 = vsel %vm1879, %v6045, %v6047
  %v6055 = vsel %vm1879, %v6047, %v6049
  %v6056 = vsel %vm1879, %v6049, %v6051
  %v6057 = vsel %vm1879, %v6051, %v6053
  %6062 = vmatprep.subr.mxu0 %v6055
  %6063 = vmatpush1.msra.mxu0 %v6054
  %6064 = vmatprep.subr.mxu0 0.0
  %6065 = vmatpush1.msra.mxu0 0.0
  %6066 = vmatprep.subr.mxu0 0.0
  %6067 = vmatpush1.msra.mxu0 0.0
  %6068 = vmatprep.subr.mxu0 0.0
  %6069 = vmatpush1.msra.mxu0 0.0
  %6070 = vmatprep.subr.mxu0 0.0
  %6071 = vmatpush1.msra.mxu0 0.0
  %6072 = vmatprep.subr.mxu0 0.0
  %6073 = vmatpush1.msra.mxu0 0.0
  %6074 = vmatprep.subr.mxu0 0.0
  %6075 = vmatpush1.msra.mxu0 0.0
  %6076 = vmatprep.subr.mxu0 0.0
  %6077 = vmatpush1.msra.mxu0 0.0
  %6078 = vmatprep.subr.mxu0 0.0
  %6079 = vmatpush1.msra.mxu0 0.0
  %6080 = vmatprep.subr.mxu0 0.0
  %6081 = vmatpush1.msra.mxu0 0.0
  %6082 = vmatprep.subr.mxu0 0.0
  %6083 = vmatpush1.msra.mxu0 0.0
  %6084 = vmatprep.subr.mxu0 0.0
  %6085 = vmatpush1.msra.mxu0 0.0
  %6086 = vmatprep.subr.mxu0 0.0
  %6087 = vmatpush1.msra.mxu0 0.0
  %6088 = vmatprep.subr.mxu0 0.0
  %6089 = vmatpush1.msra.mxu0 0.0
  %6090 = vmatprep.subr.mxu0 0.0
  %6091 = vmatpush1.msra.mxu0 0.0
  %6092 = vmatprep.subr.mxu0 0.0
  %6093 = vmatpush1.msra.mxu0 0.0
  %6094 = vmatprep.subr.mxu0 0.0
  %6095 = vmatpush1.msra.mxu0 0.0
  %6096 = vmatprep.subr.mxu0 0.0
  %6097 = vmatpush1.msra.mxu0 0.0
  %6098 = vmatprep.subr.mxu0 0.0
  %6099 = vmatpush1.msra.mxu0 0.0
  %6100 = vmatprep.subr.mxu0 0.0
  %6101 = vmatpush1.msra.mxu0 0.0
  %6102 = vmatprep.subr.mxu0 0.0
  %6103 = vmatpush1.msra.mxu0 0.0
  %6104 = vmatprep.subr.mxu0 0.0
  %6105 = vmatpush1.msra.mxu0 0.0
  %6106 = vmatprep.subr.mxu0 0.0
  %6107 = vmatpush1.msra.mxu0 0.0
  %6108 = vmatprep.subr.mxu0 0.0
  %6109 = vmatpush1.msra.mxu0 0.0
  %6110 = vmatprep.subr.mxu0 0.0
  %6111 = vmatpush1.msra.mxu0 0.0
  %6112 = vmatprep.subr.mxu0 0.0
  %6113 = vmatpush1.msra.mxu0 0.0
  %6114 = vmatprep.subr.mxu0 0.0
  %6115 = vmatpush1.msra.mxu0 0.0
  %6116 = vmatprep.subr.mxu0 0.0
  %6117 = vmatpush1.msra.mxu0 0.0
  %6118 = vmatprep.subr.mxu0 0.0
  %6119 = vmatpush1.msra.mxu0 0.0
  %6120 = vmatprep.subr.mxu0 0.0
  %6121 = vmatpush1.msra.mxu0 0.0
  %6122 = vmatprep.subr.mxu0 0.0
  %6123 = vmatpush1.msra.mxu0 0.0
  %6124 = vmatprep.subr.mxu0 0.0
  %6125 = vmatpush1.msra.mxu0 0.0
  %6126 = vmatprep.mubr.f32.mxu0 0.0
  %6127 = vmatmul.mubr.f32.gmra.mrb[0].mxu0 %v1889
  %v6128 = vpop.f32.mrb[0].mxu0
  %v6129 = vadd.f32 0.0, %v6128
  %v6130 = vpop.f32.mrb[0].mxu0
  %v6131 = vadd.f32 0.0, %v6130
  %6132 = vdwg.mxu0
  %6133 = vmatprep.subr.mxu0 %v6057
  %6134 = vmatpush1.msra.mxu0 %v6056
  %6135 = vmatprep.subr.mxu0 0.0
  %6136 = vmatpush1.msra.mxu0 0.0
  %6137 = vmatprep.subr.mxu0 0.0
  %6138 = vmatpush1.msra.mxu0 0.0
  %6139 = vmatprep.subr.mxu0 0.0
  %6140 = vmatpush1.msra.mxu0 0.0
  %6141 = vmatprep.subr.mxu0 0.0
  %6142 = vmatpush1.msra.mxu0 0.0
  %6143 = vmatprep.subr.mxu0 0.0
  %6144 = vmatpush1.msra.mxu0 0.0
  %6145 = vmatprep.subr.mxu0 0.0
  %6146 = vmatpush1.msra.mxu0 0.0
  %6147 = vmatprep.subr.mxu0 0.0
  %6148 = vmatpush1.msra.mxu0 0.0
  %6149 = vmatprep.subr.mxu0 0.0
  %6150 = vmatpush1.msra.mxu0 0.0
  %6151 = vmatprep.subr.mxu0 0.0
  %6152 = vmatpush1.msra.mxu0 0.0
  %6153 = vmatprep.subr.mxu0 0.0
  %6154 = vmatpush1.msra.mxu0 0.0
  %6155 = vmatprep.subr.mxu0 0.0
  %6156 = vmatpush1.msra.mxu0 0.0
  %6157 = vmatprep.subr.mxu0 0.0
  %6158 = vmatpush1.msra.mxu0 0.0
  %6159 = vmatprep.subr.mxu0 0.0
  %6160 = vmatpush1.msra.mxu0 0.0
  %6161 = vmatprep.subr.mxu0 0.0
  %6162 = vmatpush1.msra.mxu0 0.0
  %6163 = vmatprep.subr.mxu0 0.0
  %6164 = vmatpush1.msra.mxu0 0.0
  %6165 = vmatprep.subr.mxu0 0.0
  %6166 = vmatpush1.msra.mxu0 0.0
  %6167 = vmatprep.subr.mxu0 0.0
  %6168 = vmatpush1.msra.mxu0 0.0
  %6169 = vmatprep.subr.mxu0 0.0
  %6170 = vmatpush1.msra.mxu0 0.0
  %6171 = vmatprep.subr.mxu0 0.0
  %6172 = vmatpush1.msra.mxu0 0.0
  %6173 = vmatprep.subr.mxu0 0.0
  %6174 = vmatpush1.msra.mxu0 0.0
  %6175 = vmatprep.subr.mxu0 0.0
  %6176 = vmatpush1.msra.mxu0 0.0
  %6177 = vmatprep.subr.mxu0 0.0
  %6178 = vmatpush1.msra.mxu0 0.0
  %6179 = vmatprep.subr.mxu0 0.0
  %6180 = vmatpush1.msra.mxu0 0.0
  %6181 = vmatprep.subr.mxu0 0.0
  %6182 = vmatpush1.msra.mxu0 0.0
  %6183 = vmatprep.subr.mxu0 0.0
  %6184 = vmatpush1.msra.mxu0 0.0
  %6185 = vmatprep.subr.mxu0 0.0
  %6186 = vmatpush1.msra.mxu0 0.0
  %6187 = vmatprep.subr.mxu0 0.0
  %6188 = vmatpush1.msra.mxu0 0.0
  %6189 = vmatprep.subr.mxu0 0.0
  %6190 = vmatpush1.msra.mxu0 0.0
  %6191 = vmatprep.subr.mxu0 0.0
  %6192 = vmatpush1.msra.mxu0 0.0
  %6193 = vmatprep.subr.mxu0 0.0
  %6194 = vmatpush1.msra.mxu0 0.0
  %6195 = vmatprep.subr.mxu0 0.0
  %6196 = vmatpush1.msra.mxu0 0.0
  %6197 = vmatprep.mubr.f32.mxu0 0.0
  %6198 = vmatmul.mubr.f32.gmra.mrb[0].mxu0 %v1889
  %v6199 = vpop.f32.mrb[0].mxu0
  %v6200 = vadd.f32 0.0, %v6199
  %v6201 = vpop.f32.mrb[0].mxu0
  %v6202 = vadd.f32 0.0, %v6201
  %6203 = vdwg.mxu0
  %v6204 = vadd.f32 %v6040, %v6129
  %v6205 = vadd.f32 %v6041, %v6131
  %v6206 = vadd.f32 %v6042, %v6200
  %v6207 = vadd.f32 %v6043, %v6202
  %6208 = vrot.lane.b32.xlu0 %v4257, 94
  %v6209 = vpop.permute.xlu0 %6208
  %6210 = vrot.lane.b32.xlu0 %v4258, 94
  %v6211 = vpop.permute.xlu0 %6210
  %6212 = vrot.lane.b32.xlu0 %v4259, 94
  %v6213 = vpop.permute.xlu0 %6212
  %6214 = vrot.lane.b32.xlu0 %v4260, 94
  %v6215 = vpop.permute.xlu0 %6214
  %6216 = vrot.lane.b32.xlu0 0.0, 94
  %v6217 = vpop.permute.xlu0 %6216
  %v6218 = vsel %vm2049, %v6209, %v6211
  %v6219 = vsel %vm2049, %v6211, %v6213
  %v6220 = vsel %vm2049, %v6213, %v6215
  %v6221 = vsel %vm2049, %v6215, %v6217
  %6226 = vmatprep.subr.mxu0 %v6219
  %6227 = vmatpush1.msra.mxu0 %v6218
  %6228 = vmatprep.subr.mxu0 0.0
  %6229 = vmatpush1.msra.mxu0 0.0
  %6230 = vmatprep.subr.mxu0 0.0
  %6231 = vmatpush1.msra.mxu0 0.0
  %6232 = vmatprep.subr.mxu0 0.0
  %6233 = vmatpush1.msra.mxu0 0.0
  %6234 = vmatprep.subr.mxu0 0.0
  %6235 = vmatpush1.msra.mxu0 0.0
  %6236 = vmatprep.subr.mxu0 0.0
  %6237 = vmatpush1.msra.mxu0 0.0
  %6238 = vmatprep.subr.mxu0 0.0
  %6239 = vmatpush1.msra.mxu0 0.0
  %6240 = vmatprep.subr.mxu0 0.0
  %6241 = vmatpush1.msra.mxu0 0.0
  %6242 = vmatprep.subr.mxu0 0.0
  %6243 = vmatpush1.msra.mxu0 0.0
  %6244 = vmatprep.subr.mxu0 0.0
  %6245 = vmatpush1.msra.mxu0 0.0
  %6246 = vmatprep.subr.mxu0 0.0
  %6247 = vmatpush1.msra.mxu0 0.0
  %6248 = vmatprep.subr.mxu0 0.0
  %6249 = vmatpush1.msra.mxu0 0.0
  %6250 = vmatprep.subr.mxu0 0.0
  %6251 = vmatpush1.msra.mxu0 0.0
  %6252 = vmatprep.subr.mxu0 0.0
  %6253 = vmatpush1.msra.mxu0 0.0
  %6254 = vmatprep.subr.mxu0 0.0
  %6255 = vmatpush1.msra.mxu0 0.0
  %6256 = vmatprep.subr.mxu0 0.0
  %6257 = vmatpush1.msra.mxu0 0.0
  %6258 = vmatprep.subr.mxu0 0.0
  %6259 = vmatpush1.msra.mxu0 0.0
  %6260 = vmatprep.subr.mxu0 0.0
  %6261 = vmatpush1.msra.mxu0 0.0
  %6262 = vmatprep.subr.mxu0 0.0
  %6263 = vmatpush1.msra.mxu0 0.0
  %6264 = vmatprep.subr.mxu0 0.0
  %6265 = vmatpush1.msra.mxu0 0.0
  %6266 = vmatprep.subr.mxu0 0.0
  %6267 = vmatpush1.msra.mxu0 0.0
  %6268 = vmatprep.subr.mxu0 0.0
  %6269 = vmatpush1.msra.mxu0 0.0
  %6270 = vmatprep.subr.mxu0 0.0
  %6271 = vmatpush1.msra.mxu0 0.0
  %6272 = vmatprep.subr.mxu0 0.0
  %6273 = vmatpush1.msra.mxu0 0.0
  %6274 = vmatprep.subr.mxu0 0.0
  %6275 = vmatpush1.msra.mxu0 0.0
  %6276 = vmatprep.subr.mxu0 0.0
  %6277 = vmatpush1.msra.mxu0 0.0
  %6278 = vmatprep.subr.mxu0 0.0
  %6279 = vmatpush1.msra.mxu0 0.0
  %6280 = vmatprep.subr.mxu0 0.0
  %6281 = vmatpush1.msra.mxu0 0.0
  %6282 = vmatprep.subr.mxu0 0.0
  %6283 = vmatpush1.msra.mxu0 0.0
  %6284 = vmatprep.subr.mxu0 0.0
  %6285 = vmatpush1.msra.mxu0 0.0
  %6286 = vmatprep.subr.mxu0 0.0
  %6287 = vmatpush1.msra.mxu0 0.0
  %6288 = vmatprep.subr.mxu0 0.0
  %6289 = vmatpush1.msra.mxu0 0.0
  %6290 = vmatprep.mubr.f32.mxu0 0.0
  %6291 = vmatmul.mubr.f32.gmra.mrb[0].mxu0 %v2059
  %v6292 = vpop.f32.mrb[0].mxu0
  %v6293 = vadd.f32 0.0, %v6292
  %v6294 = vpop.f32.mrb[0].mxu0
  %v6295 = vadd.f32 0.0, %v6294
  %6296 = vdwg.mxu0
  %6297 = vmatprep.subr.mxu0 %v6221
  %6298 = vmatpush1.msra.mxu0 %v6220
  %6299 = vmatprep.subr.mxu0 0.0
  %6300 = vmatpush1.msra.mxu0 0.0
  %6301 = vmatprep.subr.mxu0 0.0
  %6302 = vmatpush1.msra.mxu0 0.0
  %6303 = vmatprep.subr.mxu0 0.0
  %6304 = vmatpush1.msra.mxu0 0.0
  %6305 = vmatprep.subr.mxu0 0.0
  %6306 = vmatpush1.msra.mxu0 0.0
  %6307 = vmatprep.subr.mxu0 0.0
  %6308 = vmatpush1.msra.mxu0 0.0
  %6309 = vmatprep.subr.mxu0 0.0
  %6310 = vmatpush1.msra.mxu0 0.0
  %6311 = vmatprep.subr.mxu0 0.0
  %6312 = vmatpush1.msra.mxu0 0.0
  %6313 = vmatprep.subr.mxu0 0.0
  %6314 = vmatpush1.msra.mxu0 0.0
  %6315 = vmatprep.subr.mxu0 0.0
  %6316 = vmatpush1.msra.mxu0 0.0
  %6317 = vmatprep.subr.mxu0 0.0
  %6318 = vmatpush1.msra.mxu0 0.0
  %6319 = vmatprep.subr.mxu0 0.0
  %6320 = vmatpush1.msra.mxu0 0.0
  %6321 = vmatprep.subr.mxu0 0.0
  %6322 = vmatpush1.msra.mxu0 0.0
  %6323 = vmatprep.subr.mxu0 0.0
  %6324 = vmatpush1.msra.mxu0 0.0
  %6325 = vmatprep.subr.mxu0 0.0
  %6326 = vmatpush1.msra.mxu0 0.0
  %6327 = vmatprep.subr.mxu0 0.0
  %6328 = vmatpush1.msra.mxu0 0.0
  %6329 = vmatprep.subr.mxu0 0.0
  %6330 = vmatpush1.msra.mxu0 0.0
  %6331 = vmatprep.subr.mxu0 0.0
  %6332 = vmatpush1.msra.mxu0 0.0
  %6333 = vmatprep.subr.mxu0 0.0
  %6334 = vmatpush1.msra.mxu0 0.0
  %6335 = vmatprep.subr.mxu0 0.0
  %6336 = vmatpush1.msra.mxu0 0.0
  %6337 = vmatprep.subr.mxu0 0.0
  %6338 = vmatpush1.msra.mxu0 0.0
  %6339 = vmatprep.subr.mxu0 0.0
  %6340 = vmatpush1.msra.mxu0 0.0
  %6341 = vmatprep.subr.mxu0 0.0
  %6342 = vmatpush1.msra.mxu0 0.0
  %6343 = vmatprep.subr.mxu0 0.0
  %6344 = vmatpush1.msra.mxu0 0.0
  %6345 = vmatprep.subr.mxu0 0.0
  %6346 = vmatpush1.msra.mxu0 0.0
  %6347 = vmatprep.subr.mxu0 0.0
  %6348 = vmatpush1.msra.mxu0 0.0
  %6349 = vmatprep.subr.mxu0 0.0
  %6350 = vmatpush1.msra.mxu0 0.0
  %6351 = vmatprep.subr.mxu0 0.0
  %6352 = vmatpush1.msra.mxu0 0.0
  %6353 = vmatprep.subr.mxu0 0.0
  %6354 = vmatpush1.msra.mxu0 0.0
  %6355 = vmatprep.subr.mxu0 0.0
  %6356 = vmatpush1.msra.mxu0 0.0
  %6357 = vmatprep.subr.mxu0 0.0
  %6358 = vmatpush1.msra.mxu0 0.0
  %6359 = vmatprep.subr.mxu0 0.0
  %6360 = vmatpush1.msra.mxu0 0.0
  %6361 = vmatprep.mubr.f32.mxu0 0.0
  %6362 = vmatmul.mubr.f32.gmra.mrb[0].mxu0 %v2059
  %v6363 = vpop.f32.mrb[0].mxu0
  %v6364 = vadd.f32 0.0, %v6363
  %v6365 = vpop.f32.mrb[0].mxu0
  %v6366 = vadd.f32 0.0, %v6365
  %6367 = vdwg.mxu0
  %v6368 = vadd.f32 %v6204, %v6293
  %v6369 = vadd.f32 %v6205, %v6295
  %v6370 = vadd.f32 %v6206, %v6364
  %v6371 = vadd.f32 %v6207, %v6366
  %6372 = vrot.lane.b32.xlu0 %v4257, 93
  %v6373 = vpop.permute.xlu0 %6372
  %6374 = vrot.lane.b32.xlu0 %v4258, 93
  %v6375 = vpop.permute.xlu0 %6374
  %6376 = vrot.lane.b32.xlu0 %v4259, 93
  %v6377 = vpop.permute.xlu0 %6376
  %6378 = vrot.lane.b32.xlu0 %v4260, 93
  %v6379 = vpop.permute.xlu0 %6378
  %6380 = vrot.lane.b32.xlu0 0.0, 93
  %v6381 = vpop.permute.xlu0 %6380
  %v6382 = vsel %vm2219, %v6373, %v6375
  %v6383 = vsel %vm2219, %v6375, %v6377
  %v6384 = vsel %vm2219, %v6377, %v6379
  %v6385 = vsel %vm2219, %v6379, %v6381
  %6390 = vmatprep.subr.mxu0 %v6383
  %6391 = vmatpush1.msra.mxu0 %v6382
  %6392 = vmatprep.subr.mxu0 0.0
  %6393 = vmatpush1.msra.mxu0 0.0
  %6394 = vmatprep.subr.mxu0 0.0
  %6395 = vmatpush1.msra.mxu0 0.0
  %6396 = vmatprep.subr.mxu0 0.0
  %6397 = vmatpush1.msra.mxu0 0.0
  %6398 = vmatprep.subr.mxu0 0.0
  %6399 = vmatpush1.msra.mxu0 0.0
  %6400 = vmatprep.subr.mxu0 0.0
  %6401 = vmatpush1.msra.mxu0 0.0
  %6402 = vmatprep.subr.mxu0 0.0
  %6403 = vmatpush1.msra.mxu0 0.0
  %6404 = vmatprep.subr.mxu0 0.0
  %6405 = vmatpush1.msra.mxu0 0.0
  %6406 = vmatprep.subr.mxu0 0.0
  %6407 = vmatpush1.msra.mxu0 0.0
  %6408 = vmatprep.subr.mxu0 0.0
  %6409 = vmatpush1.msra.mxu0 0.0
  %6410 = vmatprep.subr.mxu0 0.0
  %6411 = vmatpush1.msra.mxu0 0.0
  %6412 = vmatprep.subr.mxu0 0.0
  %6413 = vmatpush1.msra.mxu0 0.0
  %6414 = vmatprep.subr.mxu0 0.0
  %6415 = vmatpush1.msra.mxu0 0.0
  %6416 = vmatprep.subr.mxu0 0.0
  %6417 = vmatpush1.msra.mxu0 0.0
  %6418 = vmatprep.subr.mxu0 0.0
  %6419 = vmatpush1.msra.mxu0 0.0
  %6420 = vmatprep.subr.mxu0 0.0
  %6421 = vmatpush1.msra.mxu0 0.0
  %6422 = vmatprep.subr.mxu0 0.0
  %6423 = vmatpush1.msra.mxu0 0.0
  %6424 = vmatprep.subr.mxu0 0.0
  %6425 = vmatpush1.msra.mxu0 0.0
  %6426 = vmatprep.subr.mxu0 0.0
  %6427 = vmatpush1.msra.mxu0 0.0
  %6428 = vmatprep.subr.mxu0 0.0
  %6429 = vmatpush1.msra.mxu0 0.0
  %6430 = vmatprep.subr.mxu0 0.0
  %6431 = vmatpush1.msra.mxu0 0.0
  %6432 = vmatprep.subr.mxu0 0.0
  %6433 = vmatpush1.msra.mxu0 0.0
  %6434 = vmatprep.subr.mxu0 0.0
  %6435 = vmatpush1.msra.mxu0 0.0
  %6436 = vmatprep.subr.mxu0 0.0
  %6437 = vmatpush1.msra.mxu0 0.0
  %6438 = vmatprep.subr.mxu0 0.0
  %6439 = vmatpush1.msra.mxu0 0.0
  %6440 = vmatprep.subr.mxu0 0.0
  %6441 = vmatpush1.msra.mxu0 0.0
  %6442 = vmatprep.subr.mxu0 0.0
  %6443 = vmatpush1.msra.mxu0 0.0
  %6444 = vmatprep.subr.mxu0 0.0
  %6445 = vmatpush1.msra.mxu0 0.0
  %6446 = vmatprep.subr.mxu0 0.0
  %6447 = vmatpush1.msra.mxu0 0.0
  %6448 = vmatprep.subr.mxu0 0.0
  %6449 = vmatpush1.msra.mxu0 0.0
  %6450 = vmatprep.subr.mxu0 0.0
  %6451 = vmatpush1.msra.mxu0 0.0
  %6452 = vmatprep.subr.mxu0 0.0
  %6453 = vmatpush1.msra.mxu0 0.0
  %6454 = vmatprep.mubr.f32.mxu0 0.0
  %6455 = vmatmul.mubr.f32.gmra.mrb[0].mxu0 %v2229
  %v6456 = vpop.f32.mrb[0].mxu0
  %v6457 = vadd.f32 0.0, %v6456
  %v6458 = vpop.f32.mrb[0].mxu0
  %v6459 = vadd.f32 0.0, %v6458
  %6460 = vdwg.mxu0
  %6461 = vmatprep.subr.mxu0 %v6385
  %6462 = vmatpush1.msra.mxu0 %v6384
  %6463 = vmatprep.subr.mxu0 0.0
  %6464 = vmatpush1.msra.mxu0 0.0
  %6465 = vmatprep.subr.mxu0 0.0
  %6466 = vmatpush1.msra.mxu0 0.0
  %6467 = vmatprep.subr.mxu0 0.0
  %6468 = vmatpush1.msra.mxu0 0.0
  %6469 = vmatprep.subr.mxu0 0.0
  %6470 = vmatpush1.msra.mxu0 0.0
  %6471 = vmatprep.subr.mxu0 0.0
  %6472 = vmatpush1.msra.mxu0 0.0
  %6473 = vmatprep.subr.mxu0 0.0
  %6474 = vmatpush1.msra.mxu0 0.0
  %6475 = vmatprep.subr.mxu0 0.0
  %6476 = vmatpush1.msra.mxu0 0.0
  %6477 = vmatprep.subr.mxu0 0.0
  %6478 = vmatpush1.msra.mxu0 0.0
  %6479 = vmatprep.subr.mxu0 0.0
  %6480 = vmatpush1.msra.mxu0 0.0
  %6481 = vmatprep.subr.mxu0 0.0
  %6482 = vmatpush1.msra.mxu0 0.0
  %6483 = vmatprep.subr.mxu0 0.0
  %6484 = vmatpush1.msra.mxu0 0.0
  %6485 = vmatprep.subr.mxu0 0.0
  %6486 = vmatpush1.msra.mxu0 0.0
  %6487 = vmatprep.subr.mxu0 0.0
  %6488 = vmatpush1.msra.mxu0 0.0
  %6489 = vmatprep.subr.mxu0 0.0
  %6490 = vmatpush1.msra.mxu0 0.0
  %6491 = vmatprep.subr.mxu0 0.0
  %6492 = vmatpush1.msra.mxu0 0.0
  %6493 = vmatprep.subr.mxu0 0.0
  %6494 = vmatpush1.msra.mxu0 0.0
  %6495 = vmatprep.subr.mxu0 0.0
  %6496 = vmatpush1.msra.mxu0 0.0
  %6497 = vmatprep.subr.mxu0 0.0
  %6498 = vmatpush1.msra.mxu0 0.0
  %6499 = vmatprep.subr.mxu0 0.0
  %6500 = vmatpush1.msra.mxu0 0.0
  %6501 = vmatprep.subr.mxu0 0.0
  %6502 = vmatpush1.msra.mxu0 0.0
  %6503 = vmatprep.subr.mxu0 0.0
  %6504 = vmatpush1.msra.mxu0 0.0
  %6505 = vmatprep.subr.mxu0 0.0
  %6506 = vmatpush1.msra.mxu0 0.0
  %6507 = vmatprep.subr.mxu0 0.0
  %6508 = vmatpush1.msra.mxu0 0.0
  %6509 = vmatprep.subr.mxu0 0.0
  %6510 = vmatpush1.msra.mxu0 0.0
  %6511 = vmatprep.subr.mxu0 0.0
  %6512 = vmatpush1.msra.mxu0 0.0
  %6513 = vmatprep.subr.mxu0 0.0
  %6514 = vmatpush1.msra.mxu0 0.0
  %6515 = vmatprep.subr.mxu0 0.0
  %6516 = vmatpush1.msra.mxu0 0.0
  %6517 = vmatprep.subr.mxu0 0.0
  %6518 = vmatpush1.msra.mxu0 0.0
  %6519 = vmatprep.subr.mxu0 0.0
  %6520 = vmatpush1.msra.mxu0 0.0
  %6521 = vmatprep.subr.mxu0 0.0
  %6522 = vmatpush1.msra.mxu0 0.0
  %6523 = vmatprep.subr.mxu0 0.0
  %6524 = vmatpush1.msra.mxu0 0.0
  %6525 = vmatprep.mubr.f32.mxu0 0.0
  %6526 = vmatmul.mubr.f32.gmra.mrb[0].mxu0 %v2229
  %v6527 = vpop.f32.mrb[0].mxu0
  %v6528 = vadd.f32 0.0, %v6527
  %v6529 = vpop.f32.mrb[0].mxu0
  %v6530 = vadd.f32 0.0, %v6529
  %6531 = vdwg.mxu0
  %v6532 = vadd.f32 %v6368, %v6457
  %v6533 = vadd.f32 %v6369, %v6459
  %v6534 = vadd.f32 %v6370, %v6528
  %v6535 = vadd.f32 %v6371, %v6530
  %6536 = vrot.lane.b32.xlu0 %v4257, 92
  %v6537 = vpop.permute.xlu0 %6536
  %6538 = vrot.lane.b32.xlu0 %v4258, 92
  %v6539 = vpop.permute.xlu0 %6538
  %6540 = vrot.lane.b32.xlu0 %v4259, 92
  %v6541 = vpop.permute.xlu0 %6540
  %6542 = vrot.lane.b32.xlu0 %v4260, 92
  %v6543 = vpop.permute.xlu0 %6542
  %6544 = vrot.lane.b32.xlu0 0.0, 92
  %v6545 = vpop.permute.xlu0 %6544
  %v6546 = vsel %vm2389, %v6537, %v6539
  %v6547 = vsel %vm2389, %v6539, %v6541
  %v6548 = vsel %vm2389, %v6541, %v6543
  %v6549 = vsel %vm2389, %v6543, %v6545
  %6554 = vmatprep.subr.mxu0 %v6547
  %6555 = vmatpush1.msra.mxu0 %v6546
  %6556 = vmatprep.subr.mxu0 0.0
  %6557 = vmatpush1.msra.mxu0 0.0
  %6558 = vmatprep.subr.mxu0 0.0
  %6559 = vmatpush1.msra.mxu0 0.0
  %6560 = vmatprep.subr.mxu0 0.0
  %6561 = vmatpush1.msra.mxu0 0.0
  %6562 = vmatprep.subr.mxu0 0.0
  %6563 = vmatpush1.msra.mxu0 0.0
  %6564 = vmatprep.subr.mxu0 0.0
  %6565 = vmatpush1.msra.mxu0 0.0
  %6566 = vmatprep.subr.mxu0 0.0
  %6567 = vmatpush1.msra.mxu0 0.0
  %6568 = vmatprep.subr.mxu0 0.0
  %6569 = vmatpush1.msra.mxu0 0.0
  %6570 = vmatprep.subr.mxu0 0.0
  %6571 = vmatpush1.msra.mxu0 0.0
  %6572 = vmatprep.subr.mxu0 0.0
  %6573 = vmatpush1.msra.mxu0 0.0
  %6574 = vmatprep.subr.mxu0 0.0
  %6575 = vmatpush1.msra.mxu0 0.0
  %6576 = vmatprep.subr.mxu0 0.0
  %6577 = vmatpush1.msra.mxu0 0.0
  %6578 = vmatprep.subr.mxu0 0.0
  %6579 = vmatpush1.msra.mxu0 0.0
  %6580 = vmatprep.subr.mxu0 0.0
  %6581 = vmatpush1.msra.mxu0 0.0
  %6582 = vmatprep.subr.mxu0 0.0
  %6583 = vmatpush1.msra.mxu0 0.0
  %6584 = vmatprep.subr.mxu0 0.0
  %6585 = vmatpush1.msra.mxu0 0.0
  %6586 = vmatprep.subr.mxu0 0.0
  %6587 = vmatpush1.msra.mxu0 0.0
  %6588 = vmatprep.subr.mxu0 0.0
  %6589 = vmatpush1.msra.mxu0 0.0
  %6590 = vmatprep.subr.mxu0 0.0
  %6591 = vmatpush1.msra.mxu0 0.0
  %6592 = vmatprep.subr.mxu0 0.0
  %6593 = vmatpush1.msra.mxu0 0.0
  %6594 = vmatprep.subr.mxu0 0.0
  %6595 = vmatpush1.msra.mxu0 0.0
  %6596 = vmatprep.subr.mxu0 0.0
  %6597 = vmatpush1.msra.mxu0 0.0
  %6598 = vmatprep.subr.mxu0 0.0
  %6599 = vmatpush1.msra.mxu0 0.0
  %6600 = vmatprep.subr.mxu0 0.0
  %6601 = vmatpush1.msra.mxu0 0.0
  %6602 = vmatprep.subr.mxu0 0.0
  %6603 = vmatpush1.msra.mxu0 0.0
  %6604 = vmatprep.subr.mxu0 0.0
  %6605 = vmatpush1.msra.mxu0 0.0
  %6606 = vmatprep.subr.mxu0 0.0
  %6607 = vmatpush1.msra.mxu0 0.0
  %6608 = vmatprep.subr.mxu0 0.0
  %6609 = vmatpush1.msra.mxu0 0.0
  %6610 = vmatprep.subr.mxu0 0.0
  %6611 = vmatpush1.msra.mxu0 0.0
  %6612 = vmatprep.subr.mxu0 0.0
  %6613 = vmatpush1.msra.mxu0 0.0
  %6614 = vmatprep.subr.mxu0 0.0
  %6615 = vmatpush1.msra.mxu0 0.0
  %6616 = vmatprep.subr.mxu0 0.0
  %6617 = vmatpush1.msra.mxu0 0.0
  %6618 = vmatprep.mubr.f32.mxu0 0.0
  %6619 = vmatmul.mubr.f32.gmra.mrb[0].mxu0 %v2399
  %v6620 = vpop.f32.mrb[0].mxu0
  %v6621 = vadd.f32 0.0, %v6620
  %v6622 = vpop.f32.mrb[0].mxu0
  %v6623 = vadd.f32 0.0, %v6622
  %6624 = vdwg.mxu0
  %6625 = vmatprep.subr.mxu0 %v6549
  %6626 = vmatpush1.msra.mxu0 %v6548
  %6627 = vmatprep.subr.mxu0 0.0
  %6628 = vmatpush1.msra.mxu0 0.0
  %6629 = vmatprep.subr.mxu0 0.0
  %6630 = vmatpush1.msra.mxu0 0.0
  %6631 = vmatprep.subr.mxu0 0.0
  %6632 = vmatpush1.msra.mxu0 0.0
  %6633 = vmatprep.subr.mxu0 0.0
  %6634 = vmatpush1.msra.mxu0 0.0
  %6635 = vmatprep.subr.mxu0 0.0
  %6636 = vmatpush1.msra.mxu0 0.0
  %6637 = vmatprep.subr.mxu0 0.0
  %6638 = vmatpush1.msra.mxu0 0.0
  %6639 = vmatprep.subr.mxu0 0.0
  %6640 = vmatpush1.msra.mxu0 0.0
  %6641 = vmatprep.subr.mxu0 0.0
  %6642 = vmatpush1.msra.mxu0 0.0
  %6643 = vmatprep.subr.mxu0 0.0
  %6644 = vmatpush1.msra.mxu0 0.0
  %6645 = vmatprep.subr.mxu0 0.0
  %6646 = vmatpush1.msra.mxu0 0.0
  %6647 = vmatprep.subr.mxu0 0.0
  %6648 = vmatpush1.msra.mxu0 0.0
  %6649 = vmatprep.subr.mxu0 0.0
  %6650 = vmatpush1.msra.mxu0 0.0
  %6651 = vmatprep.subr.mxu0 0.0
  %6652 = vmatpush1.msra.mxu0 0.0
  %6653 = vmatprep.subr.mxu0 0.0
  %6654 = vmatpush1.msra.mxu0 0.0
  %6655 = vmatprep.subr.mxu0 0.0
  %6656 = vmatpush1.msra.mxu0 0.0
  %6657 = vmatprep.subr.mxu0 0.0
  %6658 = vmatpush1.msra.mxu0 0.0
  %6659 = vmatprep.subr.mxu0 0.0
  %6660 = vmatpush1.msra.mxu0 0.0
  %6661 = vmatprep.subr.mxu0 0.0
  %6662 = vmatpush1.msra.mxu0 0.0
  %6663 = vmatprep.subr.mxu0 0.0
  %6664 = vmatpush1.msra.mxu0 0.0
  %6665 = vmatprep.subr.mxu0 0.0
  %6666 = vmatpush1.msra.mxu0 0.0
  %6667 = vmatprep.subr.mxu0 0.0
  %6668 = vmatpush1.msra.mxu0 0.0
  %6669 = vmatprep.subr.mxu0 0.0
  %6670 = vmatpush1.msra.mxu0 0.0
  %6671 = vmatprep.subr.mxu0 0.0
  %6672 = vmatpush1.msra.mxu0 0.0
  %6673 = vmatprep.subr.mxu0 0.0
  %6674 = vmatpush1.msra.mxu0 0.0
  %6675 = vmatprep.subr.mxu0 0.0
  %6676 = vmatpush1.msra.mxu0 0.0
  %6677 = vmatprep.subr.mxu0 0.0
  %6678 = vmatpush1.msra.mxu0 0.0
  %6679 = vmatprep.subr.mxu0 0.0
  %6680 = vmatpush1.msra.mxu0 0.0
  %6681 = vmatprep.subr.mxu0 0.0
  %6682 = vmatpush1.msra.mxu0 0.0
  %6683 = vmatprep.subr.mxu0 0.0
  %6684 = vmatpush1.msra.mxu0 0.0
  %6685 = vmatprep.subr.mxu0 0.0
  %6686 = vmatpush1.msra.mxu0 0.0
  %6687 = vmatprep.subr.mxu0 0.0
  %6688 = vmatpush1.msra.mxu0 0.0
  %6689 = vmatprep.mubr.f32.mxu0 0.0
  %6690 = vmatmul.mubr.f32.gmra.mrb[0].mxu0 %v2399
  %v6691 = vpop.f32.mrb[0].mxu0
  %v6692 = vadd.f32 0.0, %v6691
  %v6693 = vpop.f32.mrb[0].mxu0
  %v6694 = vadd.f32 0.0, %v6693
  %6695 = vdwg.mxu0
  %v6696 = vadd.f32 %v6532, %v6621
  %v6697 = vadd.f32 %v6533, %v6623
  %v6698 = vadd.f32 %v6534, %v6692
  %v6699 = vadd.f32 %v6535, %v6694
  %6700 = vrot.lane.b32.xlu0 %v4257, 80
  %v6701 = vpop.permute.xlu0 %6700
  %6702 = vrot.lane.b32.xlu0 %v4258, 80
  %v6703 = vpop.permute.xlu0 %6702
  %6704 = vrot.lane.b32.xlu0 %v4259, 80
  %v6705 = vpop.permute.xlu0 %6704
  %6706 = vrot.lane.b32.xlu0 %v4260, 80
  %v6707 = vpop.permute.xlu0 %6706
  %6708 = vrot.lane.b32.xlu0 0.0, 80
  %v6709 = vpop.permute.xlu0 %6708
  %v6710 = vsel %vm2559, %v6701, %v6703
  %v6711 = vsel %vm2559, %v6703, %v6705
  %v6712 = vsel %vm2559, %v6705, %v6707
  %v6713 = vsel %vm2559, %v6707, %v6709
  %6718 = vmatprep.subr.mxu0 %v6711
  %6719 = vmatpush1.msra.mxu0 %v6710
  %6720 = vmatprep.subr.mxu0 0.0
  %6721 = vmatpush1.msra.mxu0 0.0
  %6722 = vmatprep.subr.mxu0 0.0
  %6723 = vmatpush1.msra.mxu0 0.0
  %6724 = vmatprep.subr.mxu0 0.0
  %6725 = vmatpush1.msra.mxu0 0.0
  %6726 = vmatprep.subr.mxu0 0.0
  %6727 = vmatpush1.msra.mxu0 0.0
  %6728 = vmatprep.subr.mxu0 0.0
  %6729 = vmatpush1.msra.mxu0 0.0
  %6730 = vmatprep.subr.mxu0 0.0
  %6731 = vmatpush1.msra.mxu0 0.0
  %6732 = vmatprep.subr.mxu0 0.0
  %6733 = vmatpush1.msra.mxu0 0.0
  %6734 = vmatprep.subr.mxu0 0.0
  %6735 = vmatpush1.msra.mxu0 0.0
  %6736 = vmatprep.subr.mxu0 0.0
  %6737 = vmatpush1.msra.mxu0 0.0
  %6738 = vmatprep.subr.mxu0 0.0
  %6739 = vmatpush1.msra.mxu0 0.0
  %6740 = vmatprep.subr.mxu0 0.0
  %6741 = vmatpush1.msra.mxu0 0.0
  %6742 = vmatprep.subr.mxu0 0.0
  %6743 = vmatpush1.msra.mxu0 0.0
  %6744 = vmatprep.subr.mxu0 0.0
  %6745 = vmatpush1.msra.mxu0 0.0
  %6746 = vmatprep.subr.mxu0 0.0
  %6747 = vmatpush1.msra.mxu0 0.0
  %6748 = vmatprep.subr.mxu0 0.0
  %6749 = vmatpush1.msra.mxu0 0.0
  %6750 = vmatprep.subr.mxu0 0.0
  %6751 = vmatpush1.msra.mxu0 0.0
  %6752 = vmatprep.subr.mxu0 0.0
  %6753 = vmatpush1.msra.mxu0 0.0
  %6754 = vmatprep.subr.mxu0 0.0
  %6755 = vmatpush1.msra.mxu0 0.0
  %6756 = vmatprep.subr.mxu0 0.0
  %6757 = vmatpush1.msra.mxu0 0.0
  %6758 = vmatprep.subr.mxu0 0.0
  %6759 = vmatpush1.msra.mxu0 0.0
  %6760 = vmatprep.subr.mxu0 0.0
  %6761 = vmatpush1.msra.mxu0 0.0
  %6762 = vmatprep.subr.mxu0 0.0
  %6763 = vmatpush1.msra.mxu0 0.0
  %6764 = vmatprep.subr.mxu0 0.0
  %6765 = vmatpush1.msra.mxu0 0.0
  %6766 = vmatprep.subr.mxu0 0.0
  %6767 = vmatpush1.msra.mxu0 0.0
  %6768 = vmatprep.subr.mxu0 0.0
  %6769 = vmatpush1.msra.mxu0 0.0
  %6770 = vmatprep.subr.mxu0 0.0
  %6771 = vmatpush1.msra.mxu0 0.0
  %6772 = vmatprep.subr.mxu0 0.0
  %6773 = vmatpush1.msra.mxu0 0.0
  %6774 = vmatprep.subr.mxu0 0.0
  %6775 = vmatpush1.msra.mxu0 0.0
  %6776 = vmatprep.subr.mxu0 0.0
  %6777 = vmatpush1.msra.mxu0 0.0
  %6778 = vmatprep.subr.mxu0 0.0
  %6779 = vmatpush1.msra.mxu0 0.0
  %6780 = vmatprep.subr.mxu0 0.0
  %6781 = vmatpush1.msra.mxu0 0.0
  %6782 = vmatprep.mubr.f32.mxu0 0.0
  %6783 = vmatmul.mubr.f32.gmra.mrb[0].mxu0 %v2569
  %v6784 = vpop.f32.mrb[0].mxu0
  %v6785 = vadd.f32 0.0, %v6784
  %v6786 = vpop.f32.mrb[0].mxu0
  %v6787 = vadd.f32 0.0, %v6786
  %6788 = vdwg.mxu0
  %6789 = vmatprep.subr.mxu0 %v6713
  %6790 = vmatpush1.msra.mxu0 %v6712
  %6791 = vmatprep.subr.mxu0 0.0
  %6792 = vmatpush1.msra.mxu0 0.0
  %6793 = vmatprep.subr.mxu0 0.0
  %6794 = vmatpush1.msra.mxu0 0.0
  %6795 = vmatprep.subr.mxu0 0.0
  %6796 = vmatpush1.msra.mxu0 0.0
  %6797 = vmatprep.subr.mxu0 0.0
  %6798 = vmatpush1.msra.mxu0 0.0
  %6799 = vmatprep.subr.mxu0 0.0
  %6800 = vmatpush1.msra.mxu0 0.0
  %6801 = vmatprep.subr.mxu0 0.0
  %6802 = vmatpush1.msra.mxu0 0.0
  %6803 = vmatprep.subr.mxu0 0.0
  %6804 = vmatpush1.msra.mxu0 0.0
  %6805 = vmatprep.subr.mxu0 0.0
  %6806 = vmatpush1.msra.mxu0 0.0
  %6807 = vmatprep.subr.mxu0 0.0
  %6808 = vmatpush1.msra.mxu0 0.0
  %6809 = vmatprep.subr.mxu0 0.0
  %6810 = vmatpush1.msra.mxu0 0.0
  %6811 = vmatprep.subr.mxu0 0.0
  %6812 = vmatpush1.msra.mxu0 0.0
  %6813 = vmatprep.subr.mxu0 0.0
  %6814 = vmatpush1.msra.mxu0 0.0
  %6815 = vmatprep.subr.mxu0 0.0
  %6816 = vmatpush1.msra.mxu0 0.0
  %6817 = vmatprep.subr.mxu0 0.0
  %6818 = vmatpush1.msra.mxu0 0.0
  %6819 = vmatprep.subr.mxu0 0.0
  %6820 = vmatpush1.msra.mxu0 0.0
  %6821 = vmatprep.subr.mxu0 0.0
  %6822 = vmatpush1.msra.mxu0 0.0
  %6823 = vmatprep.subr.mxu0 0.0
  %6824 = vmatpush1.msra.mxu0 0.0
  %6825 = vmatprep.subr.mxu0 0.0
  %6826 = vmatpush1.msra.mxu0 0.0
  %6827 = vmatprep.subr.mxu0 0.0
  %6828 = vmatpush1.msra.mxu0 0.0
  %6829 = vmatprep.subr.mxu0 0.0
  %6830 = vmatpush1.msra.mxu0 0.0
  %6831 = vmatprep.subr.mxu0 0.0
  %6832 = vmatpush1.msra.mxu0 0.0
  %6833 = vmatprep.subr.mxu0 0.0
  %6834 = vmatpush1.msra.mxu0 0.0
  %6835 = vmatprep.subr.mxu0 0.0
  %6836 = vmatpush1.msra.mxu0 0.0
  %6837 = vmatprep.subr.mxu0 0.0
  %6838 = vmatpush1.msra.mxu0 0.0
  %6839 = vmatprep.subr.mxu0 0.0
  %6840 = vmatpush1.msra.mxu0 0.0
  %6841 = vmatprep.subr.mxu0 0.0
  %6842 = vmatpush1.msra.mxu0 0.0
  %6843 = vmatprep.subr.mxu0 0.0
  %6844 = vmatpush1.msra.mxu0 0.0
  %6845 = vmatprep.subr.mxu0 0.0
  %6846 = vmatpush1.msra.mxu0 0.0
  %6847 = vmatprep.subr.mxu0 0.0
  %6848 = vmatpush1.msra.mxu0 0.0
  %6849 = vmatprep.subr.mxu0 0.0
  %6850 = vmatpush1.msra.mxu0 0.0
  %6851 = vmatprep.subr.mxu0 0.0
  %6852 = vmatpush1.msra.mxu0 0.0
  %6853 = vmatprep.mubr.f32.mxu0 0.0
  %6854 = vmatmul.mubr.f32.gmra.mrb[0].mxu0 %v2569
  %v6855 = vpop.f32.mrb[0].mxu0
  %v6856 = vadd.f32 0.0, %v6855
  %v6857 = vpop.f32.mrb[0].mxu0
  %v6858 = vadd.f32 0.0, %v6857
  %6859 = vdwg.mxu0
  %v6860 = vadd.f32 %v6696, %v6785
  %v6861 = vadd.f32 %v6697, %v6787
  %v6862 = vadd.f32 %v6698, %v6856
  %v6863 = vadd.f32 %v6699, %v6858
  %6864 = vrot.lane.b32.xlu0 %v4257, 79
  %v6865 = vpop.permute.xlu0 %6864
  %6866 = vrot.lane.b32.xlu0 %v4258, 79
  %v6867 = vpop.permute.xlu0 %6866
  %6868 = vrot.lane.b32.xlu0 %v4259, 79
  %v6869 = vpop.permute.xlu0 %6868
  %6870 = vrot.lane.b32.xlu0 %v4260, 79
  %v6871 = vpop.permute.xlu0 %6870
  %6872 = vrot.lane.b32.xlu0 0.0, 79
  %v6873 = vpop.permute.xlu0 %6872
  %v6874 = vsel %vm2729, %v6865, %v6867
  %v6875 = vsel %vm2729, %v6867, %v6869
  %v6876 = vsel %vm2729, %v6869, %v6871
  %v6877 = vsel %vm2729, %v6871, %v6873
  %6882 = vmatprep.subr.mxu0 %v6875
  %6883 = vmatpush1.msra.mxu0 %v6874
  %6884 = vmatprep.subr.mxu0 0.0
  %6885 = vmatpush1.msra.mxu0 0.0
  %6886 = vmatprep.subr.mxu0 0.0
  %6887 = vmatpush1.msra.mxu0 0.0
  %6888 = vmatprep.subr.mxu0 0.0
  %6889 = vmatpush1.msra.mxu0 0.0
  %6890 = vmatprep.subr.mxu0 0.0
  %6891 = vmatpush1.msra.mxu0 0.0
  %6892 = vmatprep.subr.mxu0 0.0
  %6893 = vmatpush1.msra.mxu0 0.0
  %6894 = vmatprep.subr.mxu0 0.0
  %6895 = vmatpush1.msra.mxu0 0.0
  %6896 = vmatprep.subr.mxu0 0.0
  %6897 = vmatpush1.msra.mxu0 0.0
  %6898 = vmatprep.subr.mxu0 0.0
  %6899 = vmatpush1.msra.mxu0 0.0
  %6900 = vmatprep.subr.mxu0 0.0
  %6901 = vmatpush1.msra.mxu0 0.0
  %6902 = vmatprep.subr.mxu0 0.0
  %6903 = vmatpush1.msra.mxu0 0.0
  %6904 = vmatprep.subr.mxu0 0.0
  %6905 = vmatpush1.msra.mxu0 0.0
  %6906 = vmatprep.subr.mxu0 0.0
  %6907 = vmatpush1.msra.mxu0 0.0
  %6908 = vmatprep.subr.mxu0 0.0
  %6909 = vmatpush1.msra.mxu0 0.0
  %6910 = vmatprep.subr.mxu0 0.0
  %6911 = vmatpush1.msra.mxu0 0.0
  %6912 = vmatprep.subr.mxu0 0.0
  %6913 = vmatpush1.msra.mxu0 0.0
  %6914 = vmatprep.subr.mxu0 0.0
  %6915 = vmatpush1.msra.mxu0 0.0
  %6916 = vmatprep.subr.mxu0 0.0
  %6917 = vmatpush1.msra.mxu0 0.0
  %6918 = vmatprep.subr.mxu0 0.0
  %6919 = vmatpush1.msra.mxu0 0.0
  %6920 = vmatprep.subr.mxu0 0.0
  %6921 = vmatpush1.msra.mxu0 0.0
  %6922 = vmatprep.subr.mxu0 0.0
  %6923 = vmatpush1.msra.mxu0 0.0
  %6924 = vmatprep.subr.mxu0 0.0
  %6925 = vmatpush1.msra.mxu0 0.0
  %6926 = vmatprep.subr.mxu0 0.0
  %6927 = vmatpush1.msra.mxu0 0.0
  %6928 = vmatprep.subr.mxu0 0.0
  %6929 = vmatpush1.msra.mxu0 0.0
  %6930 = vmatprep.subr.mxu0 0.0
  %6931 = vmatpush1.msra.mxu0 0.0
  %6932 = vmatprep.subr.mxu0 0.0
  %6933 = vmatpush1.msra.mxu0 0.0
  %6934 = vmatprep.subr.mxu0 0.0
  %6935 = vmatpush1.msra.mxu0 0.0
  %6936 = vmatprep.subr.mxu0 0.0
  %6937 = vmatpush1.msra.mxu0 0.0
  %6938 = vmatprep.subr.mxu0 0.0
  %6939 = vmatpush1.msra.mxu0 0.0
  %6940 = vmatprep.subr.mxu0 0.0
  %6941 = vmatpush1.msra.mxu0 0.0
  %6942 = vmatprep.subr.mxu0 0.0
  %6943 = vmatpush1.msra.mxu0 0.0
  %6944 = vmatprep.subr.mxu0 0.0
  %6945 = vmatpush1.msra.mxu0 0.0
  %6946 = vmatprep.mubr.f32.mxu0 0.0
  %6947 = vmatmul.mubr.f32.gmra.mrb[0].mxu0 %v2739
  %v6948 = vpop.f32.mrb[0].mxu0
  %v6949 = vadd.f32 0.0, %v6948
  %v6950 = vpop.f32.mrb[0].mxu0
  %v6951 = vadd.f32 0.0, %v6950
  %6952 = vdwg.mxu0
  %6953 = vmatprep.subr.mxu0 %v6877
  %6954 = vmatpush1.msra.mxu0 %v6876
  %6955 = vmatprep.subr.mxu0 0.0
  %6956 = vmatpush1.msra.mxu0 0.0
  %6957 = vmatprep.subr.mxu0 0.0
  %6958 = vmatpush1.msra.mxu0 0.0
  %6959 = vmatprep.subr.mxu0 0.0
  %6960 = vmatpush1.msra.mxu0 0.0
  %6961 = vmatprep.subr.mxu0 0.0
  %6962 = vmatpush1.msra.mxu0 0.0
  %6963 = vmatprep.subr.mxu0 0.0
  %6964 = vmatpush1.msra.mxu0 0.0
  %6965 = vmatprep.subr.mxu0 0.0
  %6966 = vmatpush1.msra.mxu0 0.0
  %6967 = vmatprep.subr.mxu0 0.0
  %6968 = vmatpush1.msra.mxu0 0.0
  %6969 = vmatprep.subr.mxu0 0.0
  %6970 = vmatpush1.msra.mxu0 0.0
  %6971 = vmatprep.subr.mxu0 0.0
  %6972 = vmatpush1.msra.mxu0 0.0
  %6973 = vmatprep.subr.mxu0 0.0
  %6974 = vmatpush1.msra.mxu0 0.0
  %6975 = vmatprep.subr.mxu0 0.0
  %6976 = vmatpush1.msra.mxu0 0.0
  %6977 = vmatprep.subr.mxu0 0.0
  %6978 = vmatpush1.msra.mxu0 0.0
  %6979 = vmatprep.subr.mxu0 0.0
  %6980 = vmatpush1.msra.mxu0 0.0
  %6981 = vmatprep.subr.mxu0 0.0
  %6982 = vmatpush1.msra.mxu0 0.0
  %6983 = vmatprep.subr.mxu0 0.0
  %6984 = vmatpush1.msra.mxu0 0.0
  %6985 = vmatprep.subr.mxu0 0.0
  %6986 = vmatpush1.msra.mxu0 0.0
  %6987 = vmatprep.subr.mxu0 0.0
  %6988 = vmatpush1.msra.mxu0 0.0
  %6989 = vmatprep.subr.mxu0 0.0
  %6990 = vmatpush1.msra.mxu0 0.0
  %6991 = vmatprep.subr.mxu0 0.0
  %6992 = vmatpush1.msra.mxu0 0.0
  %6993 = vmatprep.subr.mxu0 0.0
  %6994 = vmatpush1.msra.mxu0 0.0
  %6995 = vmatprep.subr.mxu0 0.0
  %6996 = vmatpush1.msra.mxu0 0.0
  %6997 = vmatprep.subr.mxu0 0.0
  %6998 = vmatpush1.msra.mxu0 0.0
  %6999 = vmatprep.subr.mxu0 0.0
  %7000 = vmatpush1.msra.mxu0 0.0
  %7001 = vmatprep.subr.mxu0 0.0
  %7002 = vmatpush1.msra.mxu0 0.0
  %7003 = vmatprep.subr.mxu0 0.0
  %7004 = vmatpush1.msra.mxu0 0.0
  %7005 = vmatprep.subr.mxu0 0.0
  %7006 = vmatpush1.msra.mxu0 0.0
  %7007 = vmatprep.subr.mxu0 0.0
  %7008 = vmatpush1.msra.mxu0 0.0
  %7009 = vmatprep.subr.mxu0 0.0
  %7010 = vmatpush1.msra.mxu0 0.0
  %7011 = vmatprep.subr.mxu0 0.0
  %7012 = vmatpush1.msra.mxu0 0.0
  %7013 = vmatprep.subr.mxu0 0.0
  %7014 = vmatpush1.msra.mxu0 0.0
  %7015 = vmatprep.subr.mxu0 0.0
  %7016 = vmatpush1.msra.mxu0 0.0
  %7017 = vmatprep.mubr.f32.mxu0 0.0
  %7018 = vmatmul.mubr.f32.gmra.mrb[0].mxu0 %v2739
  %v7019 = vpop.f32.mrb[0].mxu0
  %v7020 = vadd.f32 0.0, %v7019
  %v7021 = vpop.f32.mrb[0].mxu0
  %v7022 = vadd.f32 0.0, %v7021
  %7023 = vdwg.mxu0
  %v7024 = vadd.f32 %v6860, %v6949
  %v7025 = vadd.f32 %v6861, %v6951
  %v7026 = vadd.f32 %v6862, %v7020
  %v7027 = vadd.f32 %v6863, %v7022
  %7028 = vrot.lane.b32.xlu0 %v4257, 78
  %v7029 = vpop.permute.xlu0 %7028
  %7030 = vrot.lane.b32.xlu0 %v4258, 78
  %v7031 = vpop.permute.xlu0 %7030
  %7032 = vrot.lane.b32.xlu0 %v4259, 78
  %v7033 = vpop.permute.xlu0 %7032
  %7034 = vrot.lane.b32.xlu0 %v4260, 78
  %v7035 = vpop.permute.xlu0 %7034
  %7036 = vrot.lane.b32.xlu0 0.0, 78
  %v7037 = vpop.permute.xlu0 %7036
  %v7038 = vsel %vm2899, %v7029, %v7031
  %v7039 = vsel %vm2899, %v7031, %v7033
  %v7040 = vsel %vm2899, %v7033, %v7035
  %v7041 = vsel %vm2899, %v7035, %v7037
  %7046 = vmatprep.subr.mxu0 %v7039
  %7047 = vmatpush1.msra.mxu0 %v7038
  %7048 = vmatprep.subr.mxu0 0.0
  %7049 = vmatpush1.msra.mxu0 0.0
  %7050 = vmatprep.subr.mxu0 0.0
  %7051 = vmatpush1.msra.mxu0 0.0
  %7052 = vmatprep.subr.mxu0 0.0
  %7053 = vmatpush1.msra.mxu0 0.0
  %7054 = vmatprep.subr.mxu0 0.0
  %7055 = vmatpush1.msra.mxu0 0.0
  %7056 = vmatprep.subr.mxu0 0.0
  %7057 = vmatpush1.msra.mxu0 0.0
  %7058 = vmatprep.subr.mxu0 0.0
  %7059 = vmatpush1.msra.mxu0 0.0
  %7060 = vmatprep.subr.mxu0 0.0
  %7061 = vmatpush1.msra.mxu0 0.0
  %7062 = vmatprep.subr.mxu0 0.0
  %7063 = vmatpush1.msra.mxu0 0.0
  %7064 = vmatprep.subr.mxu0 0.0
  %7065 = vmatpush1.msra.mxu0 0.0
  %7066 = vmatprep.subr.mxu0 0.0
  %7067 = vmatpush1.msra.mxu0 0.0
  %7068 = vmatprep.subr.mxu0 0.0
  %7069 = vmatpush1.msra.mxu0 0.0
  %7070 = vmatprep.subr.mxu0 0.0
  %7071 = vmatpush1.msra.mxu0 0.0
  %7072 = vmatprep.subr.mxu0 0.0
  %7073 = vmatpush1.msra.mxu0 0.0
  %7074 = vmatprep.subr.mxu0 0.0
  %7075 = vmatpush1.msra.mxu0 0.0
  %7076 = vmatprep.subr.mxu0 0.0
  %7077 = vmatpush1.msra.mxu0 0.0
  %7078 = vmatprep.subr.mxu0 0.0
  %7079 = vmatpush1.msra.mxu0 0.0
  %7080 = vmatprep.subr.mxu0 0.0
  %7081 = vmatpush1.msra.mxu0 0.0
  %7082 = vmatprep.subr.mxu0 0.0
  %7083 = vmatpush1.msra.mxu0 0.0
  %7084 = vmatprep.subr.mxu0 0.0
  %7085 = vmatpush1.msra.mxu0 0.0
  %7086 = vmatprep.subr.mxu0 0.0
  %7087 = vmatpush1.msra.mxu0 0.0
  %7088 = vmatprep.subr.mxu0 0.0
  %7089 = vmatpush1.msra.mxu0 0.0
  %7090 = vmatprep.subr.mxu0 0.0
  %7091 = vmatpush1.msra.mxu0 0.0
  %7092 = vmatprep.subr.mxu0 0.0
  %7093 = vmatpush1.msra.mxu0 0.0
  %7094 = vmatprep.subr.mxu0 0.0
  %7095 = vmatpush1.msra.mxu0 0.0
  %7096 = vmatprep.subr.mxu0 0.0
  %7097 = vmatpush1.msra.mxu0 0.0
  %7098 = vmatprep.subr.mxu0 0.0
  %7099 = vmatpush1.msra.mxu0 0.0
  %7100 = vmatprep.subr.mxu0 0.0
  %7101 = vmatpush1.msra.mxu0 0.0
  %7102 = vmatprep.subr.mxu0 0.0
  %7103 = vmatpush1.msra.mxu0 0.0
  %7104 = vmatprep.subr.mxu0 0.0
  %7105 = vmatpush1.msra.mxu0 0.0
  %7106 = vmatprep.subr.mxu0 0.0
  %7107 = vmatpush1.msra.mxu0 0.0
  %7108 = vmatprep.subr.mxu0 0.0
  %7109 = vmatpush1.msra.mxu0 0.0
  %7110 = vmatprep.mubr.f32.mxu0 0.0
  %7111 = vmatmul.mubr.f32.gmra.mrb[0].mxu0 %v2909
  %v7112 = vpop.f32.mrb[0].mxu0
  %v7113 = vadd.f32 0.0, %v7112
  %v7114 = vpop.f32.mrb[0].mxu0
  %v7115 = vadd.f32 0.0, %v7114
  %7116 = vdwg.mxu0
  %7117 = vmatprep.subr.mxu0 %v7041
  %7118 = vmatpush1.msra.mxu0 %v7040
  %7119 = vmatprep.subr.mxu0 0.0
  %7120 = vmatpush1.msra.mxu0 0.0
  %7121 = vmatprep.subr.mxu0 0.0
  %7122 = vmatpush1.msra.mxu0 0.0
  %7123 = vmatprep.subr.mxu0 0.0
  %7124 = vmatpush1.msra.mxu0 0.0
  %7125 = vmatprep.subr.mxu0 0.0
  %7126 = vmatpush1.msra.mxu0 0.0
  %7127 = vmatprep.subr.mxu0 0.0
  %7128 = vmatpush1.msra.mxu0 0.0
  %7129 = vmatprep.subr.mxu0 0.0
  %7130 = vmatpush1.msra.mxu0 0.0
  %7131 = vmatprep.subr.mxu0 0.0
  %7132 = vmatpush1.msra.mxu0 0.0
  %7133 = vmatprep.subr.mxu0 0.0
  %7134 = vmatpush1.msra.mxu0 0.0
  %7135 = vmatprep.subr.mxu0 0.0
  %7136 = vmatpush1.msra.mxu0 0.0
  %7137 = vmatprep.subr.mxu0 0.0
  %7138 = vmatpush1.msra.mxu0 0.0
  %7139 = vmatprep.subr.mxu0 0.0
  %7140 = vmatpush1.msra.mxu0 0.0
  %7141 = vmatprep.subr.mxu0 0.0
  %7142 = vmatpush1.msra.mxu0 0.0
  %7143 = vmatprep.subr.mxu0 0.0
  %7144 = vmatpush1.msra.mxu0 0.0
  %7145 = vmatprep.subr.mxu0 0.0
  %7146 = vmatpush1.msra.mxu0 0.0
  %7147 = vmatprep.subr.mxu0 0.0
  %7148 = vmatpush1.msra.mxu0 0.0
  %7149 = vmatprep.subr.mxu0 0.0
  %7150 = vmatpush1.msra.mxu0 0.0
  %7151 = vmatprep.subr.mxu0 0.0
  %7152 = vmatpush1.msra.mxu0 0.0
  %7153 = vmatprep.subr.mxu0 0.0
  %7154 = vmatpush1.msra.mxu0 0.0
  %7155 = vmatprep.subr.mxu0 0.0
  %7156 = vmatpush1.msra.mxu0 0.0
  %7157 = vmatprep.subr.mxu0 0.0
  %7158 = vmatpush1.msra.mxu0 0.0
  %7159 = vmatprep.subr.mxu0 0.0
  %7160 = vmatpush1.msra.mxu0 0.0
  %7161 = vmatprep.subr.mxu0 0.0
  %7162 = vmatpush1.msra.mxu0 0.0
  %7163 = vmatprep.subr.mxu0 0.0
  %7164 = vmatpush1.msra.mxu0 0.0
  %7165 = vmatprep.subr.mxu0 0.0
  %7166 = vmatpush1.msra.mxu0 0.0
  %7167 = vmatprep.subr.mxu0 0.0
  %7168 = vmatpush1.msra.mxu0 0.0
  %7169 = vmatprep.subr.mxu0 0.0
  %7170 = vmatpush1.msra.mxu0 0.0
  %7171 = vmatprep.subr.mxu0 0.0
  %7172 = vmatpush1.msra.mxu0 0.0
  %7173 = vmatprep.subr.mxu0 0.0
  %7174 = vmatpush1.msra.mxu0 0.0
  %7175 = vmatprep.subr.mxu0 0.0
  %7176 = vmatpush1.msra.mxu0 0.0
  %7177 = vmatprep.subr.mxu0 0.0
  %7178 = vmatpush1.msra.mxu0 0.0
  %7179 = vmatprep.subr.mxu0 0.0
  %7180 = vmatpush1.msra.mxu0 0.0
  %7181 = vmatprep.mubr.f32.mxu0 0.0
  %7182 = vmatmul.mubr.f32.gmra.mrb[0].mxu0 %v2909
  %v7183 = vpop.f32.mrb[0].mxu0
  %v7184 = vadd.f32 0.0, %v7183
  %v7185 = vpop.f32.mrb[0].mxu0
  %v7186 = vadd.f32 0.0, %v7185
  %7187 = vdwg.mxu0
  %v7188 = vadd.f32 %v7024, %v7113
  %v7189 = vadd.f32 %v7025, %v7115
  %v7190 = vadd.f32 %v7026, %v7184
  %v7191 = vadd.f32 %v7027, %v7186
  %7192 = vrot.lane.b32.xlu0 %v4257, 77
  %v7193 = vpop.permute.xlu0 %7192
  %7194 = vrot.lane.b32.xlu0 %v4258, 77
  %v7195 = vpop.permute.xlu0 %7194
  %7196 = vrot.lane.b32.xlu0 %v4259, 77
  %v7197 = vpop.permute.xlu0 %7196
  %7198 = vrot.lane.b32.xlu0 %v4260, 77
  %v7199 = vpop.permute.xlu0 %7198
  %7200 = vrot.lane.b32.xlu0 0.0, 77
  %v7201 = vpop.permute.xlu0 %7200
  %v7202 = vsel %vm3069, %v7193, %v7195
  %v7203 = vsel %vm3069, %v7195, %v7197
  %v7204 = vsel %vm3069, %v7197, %v7199
  %v7205 = vsel %vm3069, %v7199, %v7201
  %7210 = vmatprep.subr.mxu0 %v7203
  %7211 = vmatpush1.msra.mxu0 %v7202
  %7212 = vmatprep.subr.mxu0 0.0
  %7213 = vmatpush1.msra.mxu0 0.0
  %7214 = vmatprep.subr.mxu0 0.0
  %7215 = vmatpush1.msra.mxu0 0.0
  %7216 = vmatprep.subr.mxu0 0.0
  %7217 = vmatpush1.msra.mxu0 0.0
  %7218 = vmatprep.subr.mxu0 0.0
  %7219 = vmatpush1.msra.mxu0 0.0
  %7220 = vmatprep.subr.mxu0 0.0
  %7221 = vmatpush1.msra.mxu0 0.0
  %7222 = vmatprep.subr.mxu0 0.0
  %7223 = vmatpush1.msra.mxu0 0.0
  %7224 = vmatprep.subr.mxu0 0.0
  %7225 = vmatpush1.msra.mxu0 0.0
  %7226 = vmatprep.subr.mxu0 0.0
  %7227 = vmatpush1.msra.mxu0 0.0
  %7228 = vmatprep.subr.mxu0 0.0
  %7229 = vmatpush1.msra.mxu0 0.0
  %7230 = vmatprep.subr.mxu0 0.0
  %7231 = vmatpush1.msra.mxu0 0.0
  %7232 = vmatprep.subr.mxu0 0.0
  %7233 = vmatpush1.msra.mxu0 0.0
  %7234 = vmatprep.subr.mxu0 0.0
  %7235 = vmatpush1.msra.mxu0 0.0
  %7236 = vmatprep.subr.mxu0 0.0
  %7237 = vmatpush1.msra.mxu0 0.0
  %7238 = vmatprep.subr.mxu0 0.0
  %7239 = vmatpush1.msra.mxu0 0.0
  %7240 = vmatprep.subr.mxu0 0.0
  %7241 = vmatpush1.msra.mxu0 0.0
  %7242 = vmatprep.subr.mxu0 0.0
  %7243 = vmatpush1.msra.mxu0 0.0
  %7244 = vmatprep.subr.mxu0 0.0
  %7245 = vmatpush1.msra.mxu0 0.0
  %7246 = vmatprep.subr.mxu0 0.0
  %7247 = vmatpush1.msra.mxu0 0.0
  %7248 = vmatprep.subr.mxu0 0.0
  %7249 = vmatpush1.msra.mxu0 0.0
  %7250 = vmatprep.subr.mxu0 0.0
  %7251 = vmatpush1.msra.mxu0 0.0
  %7252 = vmatprep.subr.mxu0 0.0
  %7253 = vmatpush1.msra.mxu0 0.0
  %7254 = vmatprep.subr.mxu0 0.0
  %7255 = vmatpush1.msra.mxu0 0.0
  %7256 = vmatprep.subr.mxu0 0.0
  %7257 = vmatpush1.msra.mxu0 0.0
  %7258 = vmatprep.subr.mxu0 0.0
  %7259 = vmatpush1.msra.mxu0 0.0
  %7260 = vmatprep.subr.mxu0 0.0
  %7261 = vmatpush1.msra.mxu0 0.0
  %7262 = vmatprep.subr.mxu0 0.0
  %7263 = vmatpush1.msra.mxu0 0.0
  %7264 = vmatprep.subr.mxu0 0.0
  %7265 = vmatpush1.msra.mxu0 0.0
  %7266 = vmatprep.subr.mxu0 0.0
  %7267 = vmatpush1.msra.mxu0 0.0
  %7268 = vmatprep.subr.mxu0 0.0
  %7269 = vmatpush1.msra.mxu0 0.0
  %7270 = vmatprep.subr.mxu0 0.0
  %7271 = vmatpush1.msra.mxu0 0.0
  %7272 = vmatprep.subr.mxu0 0.0
  %7273 = vmatpush1.msra.mxu0 0.0
  %7274 = vmatprep.mubr.f32.mxu0 0.0
  %7275 = vmatmul.mubr.f32.gmra.mrb[0].mxu0 %v3079
  %v7276 = vpop.f32.mrb[0].mxu0
  %v7277 = vadd.f32 0.0, %v7276
  %v7278 = vpop.f32.mrb[0].mxu0
  %v7279 = vadd.f32 0.0, %v7278
  %7280 = vdwg.mxu0
  %7281 = vmatprep.subr.mxu0 %v7205
  %7282 = vmatpush1.msra.mxu0 %v7204
  %7283 = vmatprep.subr.mxu0 0.0
  %7284 = vmatpush1.msra.mxu0 0.0
  %7285 = vmatprep.subr.mxu0 0.0
  %7286 = vmatpush1.msra.mxu0 0.0
  %7287 = vmatprep.subr.mxu0 0.0
  %7288 = vmatpush1.msra.mxu0 0.0
  %7289 = vmatprep.subr.mxu0 0.0
  %7290 = vmatpush1.msra.mxu0 0.0
  %7291 = vmatprep.subr.mxu0 0.0
  %7292 = vmatpush1.msra.mxu0 0.0
  %7293 = vmatprep.subr.mxu0 0.0
  %7294 = vmatpush1.msra.mxu0 0.0
  %7295 = vmatprep.subr.mxu0 0.0
  %7296 = vmatpush1.msra.mxu0 0.0
  %7297 = vmatprep.subr.mxu0 0.0
  %7298 = vmatpush1.msra.mxu0 0.0
  %7299 = vmatprep.subr.mxu0 0.0
  %7300 = vmatpush1.msra.mxu0 0.0
  %7301 = vmatprep.subr.mxu0 0.0
  %7302 = vmatpush1.msra.mxu0 0.0
  %7303 = vmatprep.subr.mxu0 0.0
  %7304 = vmatpush1.msra.mxu0 0.0
  %7305 = vmatprep.subr.mxu0 0.0
  %7306 = vmatpush1.msra.mxu0 0.0
  %7307 = vmatprep.subr.mxu0 0.0
  %7308 = vmatpush1.msra.mxu0 0.0
  %7309 = vmatprep.subr.mxu0 0.0
  %7310 = vmatpush1.msra.mxu0 0.0
  %7311 = vmatprep.subr.mxu0 0.0
  %7312 = vmatpush1.msra.mxu0 0.0
  %7313 = vmatprep.subr.mxu0 0.0
  %7314 = vmatpush1.msra.mxu0 0.0
  %7315 = vmatprep.subr.mxu0 0.0
  %7316 = vmatpush1.msra.mxu0 0.0
  %7317 = vmatprep.subr.mxu0 0.0
  %7318 = vmatpush1.msra.mxu0 0.0
  %7319 = vmatprep.subr.mxu0 0.0
  %7320 = vmatpush1.msra.mxu0 0.0
  %7321 = vmatprep.subr.mxu0 0.0
  %7322 = vmatpush1.msra.mxu0 0.0
  %7323 = vmatprep.subr.mxu0 0.0
  %7324 = vmatpush1.msra.mxu0 0.0
  %7325 = vmatprep.subr.mxu0 0.0
  %7326 = vmatpush1.msra.mxu0 0.0
  %7327 = vmatprep.subr.mxu0 0.0
  %7328 = vmatpush1.msra.mxu0 0.0
  %7329 = vmatprep.subr.mxu0 0.0
  %7330 = vmatpush1.msra.mxu0 0.0
  %7331 = vmatprep.subr.mxu0 0.0
  %7332 = vmatpush1.msra.mxu0 0.0
  %7333 = vmatprep.subr.mxu0 0.0
  %7334 = vmatpush1.msra.mxu0 0.0
  %7335 = vmatprep.subr.mxu0 0.0
  %7336 = vmatpush1.msra.mxu0 0.0
  %7337 = vmatprep.subr.mxu0 0.0
  %7338 = vmatpush1.msra.mxu0 0.0
  %7339 = vmatprep.subr.mxu0 0.0
  %7340 = vmatpush1.msra.mxu0 0.0
  %7341 = vmatprep.subr.mxu0 0.0
  %7342 = vmatpush1.msra.mxu0 0.0
  %7343 = vmatprep.subr.mxu0 0.0
  %7344 = vmatpush1.msra.mxu0 0.0
  %7345 = vmatprep.mubr.f32.mxu0 0.0
  %7346 = vmatmul.mubr.f32.gmra.mrb[0].mxu0 %v3079
  %v7347 = vpop.f32.mrb[0].mxu0
  %v7348 = vadd.f32 0.0, %v7347
  %v7349 = vpop.f32.mrb[0].mxu0
  %v7350 = vadd.f32 0.0, %v7349
  %7351 = vdwg.mxu0
  %v7352 = vadd.f32 %v7188, %v7277
  %v7353 = vadd.f32 %v7189, %v7279
  %v7354 = vadd.f32 %v7190, %v7348
  %v7355 = vadd.f32 %v7191, %v7350
  %7356 = vrot.lane.b32.xlu0 %v4257, 76
  %v7357 = vpop.permute.xlu0 %7356
  %7358 = vrot.lane.b32.xlu0 %v4258, 76
  %v7359 = vpop.permute.xlu0 %7358
  %7360 = vrot.lane.b32.xlu0 %v4259, 76
  %v7361 = vpop.permute.xlu0 %7360
  %7362 = vrot.lane.b32.xlu0 %v4260, 76
  %v7363 = vpop.permute.xlu0 %7362
  %7364 = vrot.lane.b32.xlu0 0.0, 76
  %v7365 = vpop.permute.xlu0 %7364
  %v7366 = vsel %vm3239, %v7357, %v7359
  %v7367 = vsel %vm3239, %v7359, %v7361
  %v7368 = vsel %vm3239, %v7361, %v7363
  %v7369 = vsel %vm3239, %v7363, %v7365
  %7374 = vmatprep.subr.mxu0 %v7367
  %7375 = vmatpush1.msra.mxu0 %v7366
  %7376 = vmatprep.subr.mxu0 0.0
  %7377 = vmatpush1.msra.mxu0 0.0
  %7378 = vmatprep.subr.mxu0 0.0
  %7379 = vmatpush1.msra.mxu0 0.0
  %7380 = vmatprep.subr.mxu0 0.0
  %7381 = vmatpush1.msra.mxu0 0.0
  %7382 = vmatprep.subr.mxu0 0.0
  %7383 = vmatpush1.msra.mxu0 0.0
  %7384 = vmatprep.subr.mxu0 0.0
  %7385 = vmatpush1.msra.mxu0 0.0
  %7386 = vmatprep.subr.mxu0 0.0
  %7387 = vmatpush1.msra.mxu0 0.0
  %7388 = vmatprep.subr.mxu0 0.0
  %7389 = vmatpush1.msra.mxu0 0.0
  %7390 = vmatprep.subr.mxu0 0.0
  %7391 = vmatpush1.msra.mxu0 0.0
  %7392 = vmatprep.subr.mxu0 0.0
  %7393 = vmatpush1.msra.mxu0 0.0
  %7394 = vmatprep.subr.mxu0 0.0
  %7395 = vmatpush1.msra.mxu0 0.0
  %7396 = vmatprep.subr.mxu0 0.0
  %7397 = vmatpush1.msra.mxu0 0.0
  %7398 = vmatprep.subr.mxu0 0.0
  %7399 = vmatpush1.msra.mxu0 0.0
  %7400 = vmatprep.subr.mxu0 0.0
  %7401 = vmatpush1.msra.mxu0 0.0
  %7402 = vmatprep.subr.mxu0 0.0
  %7403 = vmatpush1.msra.mxu0 0.0
  %7404 = vmatprep.subr.mxu0 0.0
  %7405 = vmatpush1.msra.mxu0 0.0
  %7406 = vmatprep.subr.mxu0 0.0
  %7407 = vmatpush1.msra.mxu0 0.0
  %7408 = vmatprep.subr.mxu0 0.0
  %7409 = vmatpush1.msra.mxu0 0.0
  %7410 = vmatprep.subr.mxu0 0.0
  %7411 = vmatpush1.msra.mxu0 0.0
  %7412 = vmatprep.subr.mxu0 0.0
  %7413 = vmatpush1.msra.mxu0 0.0
  %7414 = vmatprep.subr.mxu0 0.0
  %7415 = vmatpush1.msra.mxu0 0.0
  %7416 = vmatprep.subr.mxu0 0.0
  %7417 = vmatpush1.msra.mxu0 0.0
  %7418 = vmatprep.subr.mxu0 0.0
  %7419 = vmatpush1.msra.mxu0 0.0
  %7420 = vmatprep.subr.mxu0 0.0
  %7421 = vmatpush1.msra.mxu0 0.0
  %7422 = vmatprep.subr.mxu0 0.0
  %7423 = vmatpush1.msra.mxu0 0.0
  %7424 = vmatprep.subr.mxu0 0.0
  %7425 = vmatpush1.msra.mxu0 0.0
  %7426 = vmatprep.subr.mxu0 0.0
  %7427 = vmatpush1.msra.mxu0 0.0
  %7428 = vmatprep.subr.mxu0 0.0
  %7429 = vmatpush1.msra.mxu0 0.0
  %7430 = vmatprep.subr.mxu0 0.0
  %7431 = vmatpush1.msra.mxu0 0.0
  %7432 = vmatprep.subr.mxu0 0.0
  %7433 = vmatpush1.msra.mxu0 0.0
  %7434 = vmatprep.subr.mxu0 0.0
  %7435 = vmatpush1.msra.mxu0 0.0
  %7436 = vmatprep.subr.mxu0 0.0
  %7437 = vmatpush1.msra.mxu0 0.0
  %7438 = vmatprep.mubr.f32.mxu0 0.0
  %7439 = vmatmul.mubr.f32.gmra.mrb[0].mxu0 %v3249
  %v7440 = vpop.f32.mrb[0].mxu0
  %v7441 = vadd.f32 0.0, %v7440
  %v7442 = vpop.f32.mrb[0].mxu0
  %v7443 = vadd.f32 0.0, %v7442
  %7444 = vdwg.mxu0
  %7445 = vmatprep.subr.mxu0 %v7369
  %7446 = vmatpush1.msra.mxu0 %v7368
  %7447 = vmatprep.subr.mxu0 0.0
  %7448 = vmatpush1.msra.mxu0 0.0
  %7449 = vmatprep.subr.mxu0 0.0
  %7450 = vmatpush1.msra.mxu0 0.0
  %7451 = vmatprep.subr.mxu0 0.0
  %7452 = vmatpush1.msra.mxu0 0.0
  %7453 = vmatprep.subr.mxu0 0.0
  %7454 = vmatpush1.msra.mxu0 0.0
  %7455 = vmatprep.subr.mxu0 0.0
  %7456 = vmatpush1.msra.mxu0 0.0
  %7457 = vmatprep.subr.mxu0 0.0
  %7458 = vmatpush1.msra.mxu0 0.0
  %7459 = vmatprep.subr.mxu0 0.0
  %7460 = vmatpush1.msra.mxu0 0.0
  %7461 = vmatprep.subr.mxu0 0.0
  %7462 = vmatpush1.msra.mxu0 0.0
  %7463 = vmatprep.subr.mxu0 0.0
  %7464 = vmatpush1.msra.mxu0 0.0
  %7465 = vmatprep.subr.mxu0 0.0
  %7466 = vmatpush1.msra.mxu0 0.0
  %7467 = vmatprep.subr.mxu0 0.0
  %7468 = vmatpush1.msra.mxu0 0.0
  %7469 = vmatprep.subr.mxu0 0.0
  %7470 = vmatpush1.msra.mxu0 0.0
  %7471 = vmatprep.subr.mxu0 0.0
  %7472 = vmatpush1.msra.mxu0 0.0
  %7473 = vmatprep.subr.mxu0 0.0
  %7474 = vmatpush1.msra.mxu0 0.0
  %7475 = vmatprep.subr.mxu0 0.0
  %7476 = vmatpush1.msra.mxu0 0.0
  %7477 = vmatprep.subr.mxu0 0.0
  %7478 = vmatpush1.msra.mxu0 0.0
  %7479 = vmatprep.subr.mxu0 0.0
  %7480 = vmatpush1.msra.mxu0 0.0
  %7481 = vmatprep.subr.mxu0 0.0
  %7482 = vmatpush1.msra.mxu0 0.0
  %7483 = vmatprep.subr.mxu0 0.0
  %7484 = vmatpush1.msra.mxu0 0.0
  %7485 = vmatprep.subr.mxu0 0.0
  %7486 = vmatpush1.msra.mxu0 0.0
  %7487 = vmatprep.subr.mxu0 0.0
  %7488 = vmatpush1.msra.mxu0 0.0
  %7489 = vmatprep.subr.mxu0 0.0
  %7490 = vmatpush1.msra.mxu0 0.0
  %7491 = vmatprep.subr.mxu0 0.0
  %7492 = vmatpush1.msra.mxu0 0.0
  %7493 = vmatprep.subr.mxu0 0.0
  %7494 = vmatpush1.msra.mxu0 0.0
  %7495 = vmatprep.subr.mxu0 0.0
  %7496 = vmatpush1.msra.mxu0 0.0
  %7497 = vmatprep.subr.mxu0 0.0
  %7498 = vmatpush1.msra.mxu0 0.0
  %7499 = vmatprep.subr.mxu0 0.0
  %7500 = vmatpush1.msra.mxu0 0.0
  %7501 = vmatprep.subr.mxu0 0.0
  %7502 = vmatpush1.msra.mxu0 0.0
  %7503 = vmatprep.subr.mxu0 0.0
  %7504 = vmatpush1.msra.mxu0 0.0
  %7505 = vmatprep.subr.mxu0 0.0
  %7506 = vmatpush1.msra.mxu0 0.0
  %7507 = vmatprep.subr.mxu0 0.0
  %7508 = vmatpush1.msra.mxu0 0.0
  %7509 = vmatprep.mubr.f32.mxu0 0.0
  %7510 = vmatmul.mubr.f32.gmra.mrb[0].mxu0 %v3249
  %v7511 = vpop.f32.mrb[0].mxu0
  %v7512 = vadd.f32 0.0, %v7511
  %v7513 = vpop.f32.mrb[0].mxu0
  %v7514 = vadd.f32 0.0, %v7513
  %7515 = vdwg.mxu0
  %v7516 = vadd.f32 %v7352, %v7441
  %v7517 = vadd.f32 %v7353, %v7443
  %v7518 = vadd.f32 %v7354, %v7512
  %v7519 = vadd.f32 %v7355, %v7514
  %7520 = vrot.lane.b32.xlu0 %v4257, 64
  %v7521 = vpop.permute.xlu0 %7520
  %7522 = vrot.lane.b32.xlu0 %v4258, 64
  %v7523 = vpop.permute.xlu0 %7522
  %7524 = vrot.lane.b32.xlu0 %v4259, 64
  %v7525 = vpop.permute.xlu0 %7524
  %7526 = vrot.lane.b32.xlu0 %v4260, 64
  %v7527 = vpop.permute.xlu0 %7526
  %7528 = vrot.lane.b32.xlu0 0.0, 64
  %v7529 = vpop.permute.xlu0 %7528
  %v7530 = vsel %vm3409, %v7521, %v7523
  %v7531 = vsel %vm3409, %v7523, %v7525
  %v7532 = vsel %vm3409, %v7525, %v7527
  %v7533 = vsel %vm3409, %v7527, %v7529
  %7538 = vmatprep.subr.mxu0 %v7531
  %7539 = vmatpush1.msra.mxu0 %v7530
  %7540 = vmatprep.subr.mxu0 0.0
  %7541 = vmatpush1.msra.mxu0 0.0
  %7542 = vmatprep.subr.mxu0 0.0
  %7543 = vmatpush1.msra.mxu0 0.0
  %7544 = vmatprep.subr.mxu0 0.0
  %7545 = vmatpush1.msra.mxu0 0.0
  %7546 = vmatprep.subr.mxu0 0.0
  %7547 = vmatpush1.msra.mxu0 0.0
  %7548 = vmatprep.subr.mxu0 0.0
  %7549 = vmatpush1.msra.mxu0 0.0
  %7550 = vmatprep.subr.mxu0 0.0
  %7551 = vmatpush1.msra.mxu0 0.0
  %7552 = vmatprep.subr.mxu0 0.0
  %7553 = vmatpush1.msra.mxu0 0.0
  %7554 = vmatprep.subr.mxu0 0.0
  %7555 = vmatpush1.msra.mxu0 0.0
  %7556 = vmatprep.subr.mxu0 0.0
  %7557 = vmatpush1.msra.mxu0 0.0
  %7558 = vmatprep.subr.mxu0 0.0
  %7559 = vmatpush1.msra.mxu0 0.0
  %7560 = vmatprep.subr.mxu0 0.0
  %7561 = vmatpush1.msra.mxu0 0.0
  %7562 = vmatprep.subr.mxu0 0.0
  %7563 = vmatpush1.msra.mxu0 0.0
  %7564 = vmatprep.subr.mxu0 0.0
  %7565 = vmatpush1.msra.mxu0 0.0
  %7566 = vmatprep.subr.mxu0 0.0
  %7567 = vmatpush1.msra.mxu0 0.0
  %7568 = vmatprep.subr.mxu0 0.0
  %7569 = vmatpush1.msra.mxu0 0.0
  %7570 = vmatprep.subr.mxu0 0.0
  %7571 = vmatpush1.msra.mxu0 0.0
  %7572 = vmatprep.subr.mxu0 0.0
  %7573 = vmatpush1.msra.mxu0 0.0
  %7574 = vmatprep.subr.mxu0 0.0
  %7575 = vmatpush1.msra.mxu0 0.0
  %7576 = vmatprep.subr.mxu0 0.0
  %7577 = vmatpush1.msra.mxu0 0.0
  %7578 = vmatprep.subr.mxu0 0.0
  %7579 = vmatpush1.msra.mxu0 0.0
  %7580 = vmatprep.subr.mxu0 0.0
  %7581 = vmatpush1.msra.mxu0 0.0
  %7582 = vmatprep.subr.mxu0 0.0
  %7583 = vmatpush1.msra.mxu0 0.0
  %7584 = vmatprep.subr.mxu0 0.0
  %7585 = vmatpush1.msra.mxu0 0.0
  %7586 = vmatprep.subr.mxu0 0.0
  %7587 = vmatpush1.msra.mxu0 0.0
  %7588 = vmatprep.subr.mxu0 0.0
  %7589 = vmatpush1.msra.mxu0 0.0
  %7590 = vmatprep.subr.mxu0 0.0
  %7591 = vmatpush1.msra.mxu0 0.0
  %7592 = vmatprep.subr.mxu0 0.0
  %7593 = vmatpush1.msra.mxu0 0.0
  %7594 = vmatprep.subr.mxu0 0.0
  %7595 = vmatpush1.msra.mxu0 0.0
  %7596 = vmatprep.subr.mxu0 0.0
  %7597 = vmatpush1.msra.mxu0 0.0
  %7598 = vmatprep.subr.mxu0 0.0
  %7599 = vmatpush1.msra.mxu0 0.0
  %7600 = vmatprep.subr.mxu0 0.0
  %7601 = vmatpush1.msra.mxu0 0.0
  %7602 = vmatprep.mubr.f32.mxu0 0.0
  %7603 = vmatmul.mubr.f32.gmra.mrb[0].mxu0 %v3419
  %v7604 = vpop.f32.mrb[0].mxu0
  %v7605 = vadd.f32 0.0, %v7604
  %v7606 = vpop.f32.mrb[0].mxu0
  %v7607 = vadd.f32 0.0, %v7606
  %7608 = vdwg.mxu0
  %7609 = vmatprep.subr.mxu0 %v7533
  %7610 = vmatpush1.msra.mxu0 %v7532
  %7611 = vmatprep.subr.mxu0 0.0
  %7612 = vmatpush1.msra.mxu0 0.0
  %7613 = vmatprep.subr.mxu0 0.0
  %7614 = vmatpush1.msra.mxu0 0.0
  %7615 = vmatprep.subr.mxu0 0.0
  %7616 = vmatpush1.msra.mxu0 0.0
  %7617 = vmatprep.subr.mxu0 0.0
  %7618 = vmatpush1.msra.mxu0 0.0
  %7619 = vmatprep.subr.mxu0 0.0
  %7620 = vmatpush1.msra.mxu0 0.0
  %7621 = vmatprep.subr.mxu0 0.0
  %7622 = vmatpush1.msra.mxu0 0.0
  %7623 = vmatprep.subr.mxu0 0.0
  %7624 = vmatpush1.msra.mxu0 0.0
  %7625 = vmatprep.subr.mxu0 0.0
  %7626 = vmatpush1.msra.mxu0 0.0
  %7627 = vmatprep.subr.mxu0 0.0
  %7628 = vmatpush1.msra.mxu0 0.0
  %7629 = vmatprep.subr.mxu0 0.0
  %7630 = vmatpush1.msra.mxu0 0.0
  %7631 = vmatprep.subr.mxu0 0.0
  %7632 = vmatpush1.msra.mxu0 0.0
  %7633 = vmatprep.subr.mxu0 0.0
  %7634 = vmatpush1.msra.mxu0 0.0
  %7635 = vmatprep.subr.mxu0 0.0
  %7636 = vmatpush1.msra.mxu0 0.0
  %7637 = vmatprep.subr.mxu0 0.0
  %7638 = vmatpush1.msra.mxu0 0.0
  %7639 = vmatprep.subr.mxu0 0.0
  %7640 = vmatpush1.msra.mxu0 0.0
  %7641 = vmatprep.subr.mxu0 0.0
  %7642 = vmatpush1.msra.mxu0 0.0
  %7643 = vmatprep.subr.mxu0 0.0
  %7644 = vmatpush1.msra.mxu0 0.0
  %7645 = vmatprep.subr.mxu0 0.0
  %7646 = vmatpush1.msra.mxu0 0.0
  %7647 = vmatprep.subr.mxu0 0.0
  %7648 = vmatpush1.msra.mxu0 0.0
  %7649 = vmatprep.subr.mxu0 0.0
  %7650 = vmatpush1.msra.mxu0 0.0
  %7651 = vmatprep.subr.mxu0 0.0
  %7652 = vmatpush1.msra.mxu0 0.0
  %7653 = vmatprep.subr.mxu0 0.0
  %7654 = vmatpush1.msra.mxu0 0.0
  %7655 = vmatprep.subr.mxu0 0.0
  %7656 = vmatpush1.msra.mxu0 0.0
  %7657 = vmatprep.subr.mxu0 0.0
  %7658 = vmatpush1.msra.mxu0 0.0
  %7659 = vmatprep.subr.mxu0 0.0
  %7660 = vmatpush1.msra.mxu0 0.0
  %7661 = vmatprep.subr.mxu0 0.0
  %7662 = vmatpush1.msra.mxu0 0.0
  %7663 = vmatprep.subr.mxu0 0.0
  %7664 = vmatpush1.msra.mxu0 0.0
  %7665 = vmatprep.subr.mxu0 0.0
  %7666 = vmatpush1.msra.mxu0 0.0
  %7667 = vmatprep.subr.mxu0 0.0
  %7668 = vmatpush1.msra.mxu0 0.0
  %7669 = vmatprep.subr.mxu0 0.0
  %7670 = vmatpush1.msra.mxu0 0.0
  %7671 = vmatprep.subr.mxu0 0.0
  %7672 = vmatpush1.msra.mxu0 0.0
  %7673 = vmatprep.mubr.f32.mxu0 0.0
  %7674 = vmatmul.mubr.f32.gmra.mrb[0].mxu0 %v3419
  %v7675 = vpop.f32.mrb[0].mxu0
  %v7676 = vadd.f32 0.0, %v7675
  %v7677 = vpop.f32.mrb[0].mxu0
  %v7678 = vadd.f32 0.0, %v7677
  %7679 = vdwg.mxu0
  %v7680 = vadd.f32 %v7516, %v7605
  %v7681 = vadd.f32 %v7517, %v7607
  %v7682 = vadd.f32 %v7518, %v7676
  %v7683 = vadd.f32 %v7519, %v7678
  %7684 = vrot.lane.b32.xlu0 %v4257, 63
  %v7685 = vpop.permute.xlu0 %7684
  %7686 = vrot.lane.b32.xlu0 %v4258, 63
  %v7687 = vpop.permute.xlu0 %7686
  %7688 = vrot.lane.b32.xlu0 %v4259, 63
  %v7689 = vpop.permute.xlu0 %7688
  %7690 = vrot.lane.b32.xlu0 %v4260, 63
  %v7691 = vpop.permute.xlu0 %7690
  %7692 = vrot.lane.b32.xlu0 0.0, 63
  %v7693 = vpop.permute.xlu0 %7692
  %v7694 = vsel %vm3579, %v7685, %v7687
  %v7695 = vsel %vm3579, %v7687, %v7689
  %v7696 = vsel %vm3579, %v7689, %v7691
  %v7697 = vsel %vm3579, %v7691, %v7693
  %7702 = vmatprep.subr.mxu0 %v7695
  %7703 = vmatpush1.msra.mxu0 %v7694
  %7704 = vmatprep.subr.mxu0 0.0
  %7705 = vmatpush1.msra.mxu0 0.0
  %7706 = vmatprep.subr.mxu0 0.0
  %7707 = vmatpush1.msra.mxu0 0.0
  %7708 = vmatprep.subr.mxu0 0.0
  %7709 = vmatpush1.msra.mxu0 0.0
  %7710 = vmatprep.subr.mxu0 0.0
  %7711 = vmatpush1.msra.mxu0 0.0
  %7712 = vmatprep.subr.mxu0 0.0
  %7713 = vmatpush1.msra.mxu0 0.0
  %7714 = vmatprep.subr.mxu0 0.0
  %7715 = vmatpush1.msra.mxu0 0.0
  %7716 = vmatprep.subr.mxu0 0.0
  %7717 = vmatpush1.msra.mxu0 0.0
  %7718 = vmatprep.subr.mxu0 0.0
  %7719 = vmatpush1.msra.mxu0 0.0
  %7720 = vmatprep.subr.mxu0 0.0
  %7721 = vmatpush1.msra.mxu0 0.0
  %7722 = vmatprep.subr.mxu0 0.0
  %7723 = vmatpush1.msra.mxu0 0.0
  %7724 = vmatprep.subr.mxu0 0.0
  %7725 = vmatpush1.msra.mxu0 0.0
  %7726 = vmatprep.subr.mxu0 0.0
  %7727 = vmatpush1.msra.mxu0 0.0
  %7728 = vmatprep.subr.mxu0 0.0
  %7729 = vmatpush1.msra.mxu0 0.0
  %7730 = vmatprep.subr.mxu0 0.0
  %7731 = vmatpush1.msra.mxu0 0.0
  %7732 = vmatprep.subr.mxu0 0.0
  %7733 = vmatpush1.msra.mxu0 0.0
  %7734 = vmatprep.subr.mxu0 0.0
  %7735 = vmatpush1.msra.mxu0 0.0
  %7736 = vmatprep.subr.mxu0 0.0
  %7737 = vmatpush1.msra.mxu0 0.0
  %7738 = vmatprep.subr.mxu0 0.0
  %7739 = vmatpush1.msra.mxu0 0.0
  %7740 = vmatprep.subr.mxu0 0.0
  %7741 = vmatpush1.msra.mxu0 0.0
  %7742 = vmatprep.subr.mxu0 0.0
  %7743 = vmatpush1.msra.mxu0 0.0
  %7744 = vmatprep.subr.mxu0 0.0
  %7745 = vmatpush1.msra.mxu0 0.0
  %7746 = vmatprep.subr.mxu0 0.0
  %7747 = vmatpush1.msra.mxu0 0.0
  %7748 = vmatprep.subr.mxu0 0.0
  %7749 = vmatpush1.msra.mxu0 0.0
  %7750 = vmatprep.subr.mxu0 0.0
  %7751 = vmatpush1.msra.mxu0 0.0
  %7752 = vmatprep.subr.mxu0 0.0
  %7753 = vmatpush1.msra.mxu0 0.0
  %7754 = vmatprep.subr.mxu0 0.0
  %7755 = vmatpush1.msra.mxu0 0.0
  %7756 = vmatprep.subr.mxu0 0.0
  %7757 = vmatpush1.msra.mxu0 0.0
  %7758 = vmatprep.subr.mxu0 0.0
  %7759 = vmatpush1.msra.mxu0 0.0
  %7760 = vmatprep.subr.mxu0 0.0
  %7761 = vmatpush1.msra.mxu0 0.0
  %7762 = vmatprep.subr.mxu0 0.0
  %7763 = vmatpush1.msra.mxu0 0.0
  %7764 = vmatprep.subr.mxu0 0.0
  %7765 = vmatpush1.msra.mxu0 0.0
  %7766 = vmatprep.mubr.f32.mxu0 0.0
  %7767 = vmatmul.mubr.f32.gmra.mrb[0].mxu0 %v3589
  %v7768 = vpop.f32.mrb[0].mxu0
  %v7769 = vadd.f32 0.0, %v7768
  %v7770 = vpop.f32.mrb[0].mxu0
  %v7771 = vadd.f32 0.0, %v7770
  %7772 = vdwg.mxu0
  %7773 = vmatprep.subr.mxu0 %v7697
  %7774 = vmatpush1.msra.mxu0 %v7696
  %7775 = vmatprep.subr.mxu0 0.0
  %7776 = vmatpush1.msra.mxu0 0.0
  %7777 = vmatprep.subr.mxu0 0.0
  %7778 = vmatpush1.msra.mxu0 0.0
  %7779 = vmatprep.subr.mxu0 0.0
  %7780 = vmatpush1.msra.mxu0 0.0
  %7781 = vmatprep.subr.mxu0 0.0
  %7782 = vmatpush1.msra.mxu0 0.0
  %7783 = vmatprep.subr.mxu0 0.0
  %7784 = vmatpush1.msra.mxu0 0.0
  %7785 = vmatprep.subr.mxu0 0.0
  %7786 = vmatpush1.msra.mxu0 0.0
  %7787 = vmatprep.subr.mxu0 0.0
  %7788 = vmatpush1.msra.mxu0 0.0
  %7789 = vmatprep.subr.mxu0 0.0
  %7790 = vmatpush1.msra.mxu0 0.0
  %7791 = vmatprep.subr.mxu0 0.0
  %7792 = vmatpush1.msra.mxu0 0.0
  %7793 = vmatprep.subr.mxu0 0.0
  %7794 = vmatpush1.msra.mxu0 0.0
  %7795 = vmatprep.subr.mxu0 0.0
  %7796 = vmatpush1.msra.mxu0 0.0
  %7797 = vmatprep.subr.mxu0 0.0
  %7798 = vmatpush1.msra.mxu0 0.0
  %7799 = vmatprep.subr.mxu0 0.0
  %7800 = vmatpush1.msra.mxu0 0.0
  %7801 = vmatprep.subr.mxu0 0.0
  %7802 = vmatpush1.msra.mxu0 0.0
  %7803 = vmatprep.subr.mxu0 0.0
  %7804 = vmatpush1.msra.mxu0 0.0
  %7805 = vmatprep.subr.mxu0 0.0
  %7806 = vmatpush1.msra.mxu0 0.0
  %7807 = vmatprep.subr.mxu0 0.0
  %7808 = vmatpush1.msra.mxu0 0.0
  %7809 = vmatprep.subr.mxu0 0.0
  %7810 = vmatpush1.msra.mxu0 0.0
  %7811 = vmatprep.subr.mxu0 0.0
  %7812 = vmatpush1.msra.mxu0 0.0
  %7813 = vmatprep.subr.mxu0 0.0
  %7814 = vmatpush1.msra.mxu0 0.0
  %7815 = vmatprep.subr.mxu0 0.0
  %7816 = vmatpush1.msra.mxu0 0.0
  %7817 = vmatprep.subr.mxu0 0.0
  %7818 = vmatpush1.msra.mxu0 0.0
  %7819 = vmatprep.subr.mxu0 0.0
  %7820 = vmatpush1.msra.mxu0 0.0
  %7821 = vmatprep.subr.mxu0 0.0
  %7822 = vmatpush1.msra.mxu0 0.0
  %7823 = vmatprep.subr.mxu0 0.0
  %7824 = vmatpush1.msra.mxu0 0.0
  %7825 = vmatprep.subr.mxu0 0.0
  %7826 = vmatpush1.msra.mxu0 0.0
  %7827 = vmatprep.subr.mxu0 0.0
  %7828 = vmatpush1.msra.mxu0 0.0
  %7829 = vmatprep.subr.mxu0 0.0
  %7830 = vmatpush1.msra.mxu0 0.0
  %7831 = vmatprep.subr.mxu0 0.0
  %7832 = vmatpush1.msra.mxu0 0.0
  %7833 = vmatprep.subr.mxu0 0.0
  %7834 = vmatpush1.msra.mxu0 0.0
  %7835 = vmatprep.subr.mxu0 0.0
  %7836 = vmatpush1.msra.mxu0 0.0
  %7837 = vmatprep.mubr.f32.mxu0 0.0
  %7838 = vmatmul.mubr.f32.gmra.mrb[0].mxu0 %v3589
  %v7839 = vpop.f32.mrb[0].mxu0
  %v7840 = vadd.f32 0.0, %v7839
  %v7841 = vpop.f32.mrb[0].mxu0
  %v7842 = vadd.f32 0.0, %v7841
  %7843 = vdwg.mxu0
  %v7844 = vadd.f32 %v7680, %v7769
  %v7845 = vadd.f32 %v7681, %v7771
  %v7846 = vadd.f32 %v7682, %v7840
  %v7847 = vadd.f32 %v7683, %v7842
  %7848 = vrot.lane.b32.xlu0 %v4257, 62
  %v7849 = vpop.permute.xlu0 %7848
  %7850 = vrot.lane.b32.xlu0 %v4258, 62
  %v7851 = vpop.permute.xlu0 %7850
  %7852 = vrot.lane.b32.xlu0 %v4259, 62
  %v7853 = vpop.permute.xlu0 %7852
  %7854 = vrot.lane.b32.xlu0 %v4260, 62
  %v7855 = vpop.permute.xlu0 %7854
  %7856 = vrot.lane.b32.xlu0 0.0, 62
  %v7857 = vpop.permute.xlu0 %7856
  %v7858 = vsel %vm3749, %v7849, %v7851
  %v7859 = vsel %vm3749, %v7851, %v7853
  %v7860 = vsel %vm3749, %v7853, %v7855
  %v7861 = vsel %vm3749, %v7855, %v7857
  %7866 = vmatprep.subr.mxu0 %v7859
  %7867 = vmatpush1.msra.mxu0 %v7858
  %7868 = vmatprep.subr.mxu0 0.0
  %7869 = vmatpush1.msra.mxu0 0.0
  %7870 = vmatprep.subr.mxu0 0.0
  %7871 = vmatpush1.msra.mxu0 0.0
  %7872 = vmatprep.subr.mxu0 0.0
  %7873 = vmatpush1.msra.mxu0 0.0
  %7874 = vmatprep.subr.mxu0 0.0
  %7875 = vmatpush1.msra.mxu0 0.0
  %7876 = vmatprep.subr.mxu0 0.0
  %7877 = vmatpush1.msra.mxu0 0.0
  %7878 = vmatprep.subr.mxu0 0.0
  %7879 = vmatpush1.msra.mxu0 0.0
  %7880 = vmatprep.subr.mxu0 0.0
  %7881 = vmatpush1.msra.mxu0 0.0
  %7882 = vmatprep.subr.mxu0 0.0
  %7883 = vmatpush1.msra.mxu0 0.0
  %7884 = vmatprep.subr.mxu0 0.0
  %7885 = vmatpush1.msra.mxu0 0.0
  %7886 = vmatprep.subr.mxu0 0.0
  %7887 = vmatpush1.msra.mxu0 0.0
  %7888 = vmatprep.subr.mxu0 0.0
  %7889 = vmatpush1.msra.mxu0 0.0
  %7890 = vmatprep.subr.mxu0 0.0
  %7891 = vmatpush1.msra.mxu0 0.0
  %7892 = vmatprep.subr.mxu0 0.0
  %7893 = vmatpush1.msra.mxu0 0.0
  %7894 = vmatprep.subr.mxu0 0.0
  %7895 = vmatpush1.msra.mxu0 0.0
  %7896 = vmatprep.subr.mxu0 0.0
  %7897 = vmatpush1.msra.mxu0 0.0
  %7898 = vmatprep.subr.mxu0 0.0
  %7899 = vmatpush1.msra.mxu0 0.0
  %7900 = vmatprep.subr.mxu0 0.0
  %7901 = vmatpush1.msra.mxu0 0.0
  %7902 = vmatprep.subr.mxu0 0.0
  %7903 = vmatpush1.msra.mxu0 0.0
  %7904 = vmatprep.subr.mxu0 0.0
  %7905 = vmatpush1.msra.mxu0 0.0
  %7906 = vmatprep.subr.mxu0 0.0
  %7907 = vmatpush1.msra.mxu0 0.0
  %7908 = vmatprep.subr.mxu0 0.0
  %7909 = vmatpush1.msra.mxu0 0.0
  %7910 = vmatprep.subr.mxu0 0.0
  %7911 = vmatpush1.msra.mxu0 0.0
  %7912 = vmatprep.subr.mxu0 0.0
  %7913 = vmatpush1.msra.mxu0 0.0
  %7914 = vmatprep.subr.mxu0 0.0
  %7915 = vmatpush1.msra.mxu0 0.0
  %7916 = vmatprep.subr.mxu0 0.0
  %7917 = vmatpush1.msra.mxu0 0.0
  %7918 = vmatprep.subr.mxu0 0.0
  %7919 = vmatpush1.msra.mxu0 0.0
  %7920 = vmatprep.subr.mxu0 0.0
  %7921 = vmatpush1.msra.mxu0 0.0
  %7922 = vmatprep.subr.mxu0 0.0
  %7923 = vmatpush1.msra.mxu0 0.0
  %7924 = vmatprep.subr.mxu0 0.0
  %7925 = vmatpush1.msra.mxu0 0.0
  %7926 = vmatprep.subr.mxu0 0.0
  %7927 = vmatpush1.msra.mxu0 0.0
  %7928 = vmatprep.subr.mxu0 0.0
  %7929 = vmatpush1.msra.mxu0 0.0
  %7930 = vmatprep.mubr.f32.mxu0 0.0
  %7931 = vmatmul.mubr.f32.gmra.mrb[0].mxu0 %v3759
  %v7932 = vpop.f32.mrb[0].mxu0
  %v7933 = vadd.f32 0.0, %v7932
  %v7934 = vpop.f32.mrb[0].mxu0
  %v7935 = vadd.f32 0.0, %v7934
  %7936 = vdwg.mxu0
  %7937 = vmatprep.subr.mxu0 %v7861
  %7938 = vmatpush1.msra.mxu0 %v7860
  %7939 = vmatprep.subr.mxu0 0.0
  %7940 = vmatpush1.msra.mxu0 0.0
  %7941 = vmatprep.subr.mxu0 0.0
  %7942 = vmatpush1.msra.mxu0 0.0
  %7943 = vmatprep.subr.mxu0 0.0
  %7944 = vmatpush1.msra.mxu0 0.0
  %7945 = vmatprep.subr.mxu0 0.0
  %7946 = vmatpush1.msra.mxu0 0.0
  %7947 = vmatprep.subr.mxu0 0.0
  %7948 = vmatpush1.msra.mxu0 0.0
  %7949 = vmatprep.subr.mxu0 0.0
  %7950 = vmatpush1.msra.mxu0 0.0
  %7951 = vmatprep.subr.mxu0 0.0
  %7952 = vmatpush1.msra.mxu0 0.0
  %7953 = vmatprep.subr.mxu0 0.0
  %7954 = vmatpush1.msra.mxu0 0.0
  %7955 = vmatprep.subr.mxu0 0.0
  %7956 = vmatpush1.msra.mxu0 0.0
  %7957 = vmatprep.subr.mxu0 0.0
  %7958 = vmatpush1.msra.mxu0 0.0
  %7959 = vmatprep.subr.mxu0 0.0
  %7960 = vmatpush1.msra.mxu0 0.0
  %7961 = vmatprep.subr.mxu0 0.0
  %7962 = vmatpush1.msra.mxu0 0.0
  %7963 = vmatprep.subr.mxu0 0.0
  %7964 = vmatpush1.msra.mxu0 0.0
  %7965 = vmatprep.subr.mxu0 0.0
  %7966 = vmatpush1.msra.mxu0 0.0
  %7967 = vmatprep.subr.mxu0 0.0
  %7968 = vmatpush1.msra.mxu0 0.0
  %7969 = vmatprep.subr.mxu0 0.0
  %7970 = vmatpush1.msra.mxu0 0.0
  %7971 = vmatprep.subr.mxu0 0.0
  %7972 = vmatpush1.msra.mxu0 0.0
  %7973 = vmatprep.subr.mxu0 0.0
  %7974 = vmatpush1.msra.mxu0 0.0
  %7975 = vmatprep.subr.mxu0 0.0
  %7976 = vmatpush1.msra.mxu0 0.0
  %7977 = vmatprep.subr.mxu0 0.0
  %7978 = vmatpush1.msra.mxu0 0.0
  %7979 = vmatprep.subr.mxu0 0.0
  %7980 = vmatpush1.msra.mxu0 0.0
  %7981 = vmatprep.subr.mxu0 0.0
  %7982 = vmatpush1.msra.mxu0 0.0
  %7983 = vmatprep.subr.mxu0 0.0
  %7984 = vmatpush1.msra.mxu0 0.0
  %7985 = vmatprep.subr.mxu0 0.0
  %7986 = vmatpush1.msra.mxu0 0.0
  %7987 = vmatprep.subr.mxu0 0.0
  %7988 = vmatpush1.msra.mxu0 0.0
  %7989 = vmatprep.subr.mxu0 0.0
  %7990 = vmatpush1.msra.mxu0 0.0
  %7991 = vmatprep.subr.mxu0 0.0
  %7992 = vmatpush1.msra.mxu0 0.0
  %7993 = vmatprep.subr.mxu0 0.0
  %7994 = vmatpush1.msra.mxu0 0.0
  %7995 = vmatprep.subr.mxu0 0.0
  %7996 = vmatpush1.msra.mxu0 0.0
  %7997 = vmatprep.subr.mxu0 0.0
  %7998 = vmatpush1.msra.mxu0 0.0
  %7999 = vmatprep.subr.mxu0 0.0
  %8000 = vmatpush1.msra.mxu0 0.0
  %8001 = vmatprep.mubr.f32.mxu0 0.0
  %8002 = vmatmul.mubr.f32.gmra.mrb[0].mxu0 %v3759
  %v8003 = vpop.f32.mrb[0].mxu0
  %v8004 = vadd.f32 0.0, %v8003
  %v8005 = vpop.f32.mrb[0].mxu0
  %v8006 = vadd.f32 0.0, %v8005
  %8007 = vdwg.mxu0
  %v8008 = vadd.f32 %v7844, %v7933
  %v8009 = vadd.f32 %v7845, %v7935
  %v8010 = vadd.f32 %v7846, %v8004
  %v8011 = vadd.f32 %v7847, %v8006
  %8012 = vrot.lane.b32.xlu0 %v4257, 61
  %v8013 = vpop.permute.xlu0 %8012
  %8014 = vrot.lane.b32.xlu0 %v4258, 61
  %v8015 = vpop.permute.xlu0 %8014
  %8016 = vrot.lane.b32.xlu0 %v4259, 61
  %v8017 = vpop.permute.xlu0 %8016
  %8018 = vrot.lane.b32.xlu0 %v4260, 61
  %v8019 = vpop.permute.xlu0 %8018
  %8020 = vrot.lane.b32.xlu0 0.0, 61
  %v8021 = vpop.permute.xlu0 %8020
  %v8022 = vsel %vm3919, %v8013, %v8015
  %v8023 = vsel %vm3919, %v8015, %v8017
  %v8024 = vsel %vm3919, %v8017, %v8019
  %v8025 = vsel %vm3919, %v8019, %v8021
  %8030 = vmatprep.subr.mxu0 %v8023
  %8031 = vmatpush1.msra.mxu0 %v8022
  %8032 = vmatprep.subr.mxu0 0.0
  %8033 = vmatpush1.msra.mxu0 0.0
  %8034 = vmatprep.subr.mxu0 0.0
  %8035 = vmatpush1.msra.mxu0 0.0
  %8036 = vmatprep.subr.mxu0 0.0
  %8037 = vmatpush1.msra.mxu0 0.0
  %8038 = vmatprep.subr.mxu0 0.0
  %8039 = vmatpush1.msra.mxu0 0.0
  %8040 = vmatprep.subr.mxu0 0.0
  %8041 = vmatpush1.msra.mxu0 0.0
  %8042 = vmatprep.subr.mxu0 0.0
  %8043 = vmatpush1.msra.mxu0 0.0
  %8044 = vmatprep.subr.mxu0 0.0
  %8045 = vmatpush1.msra.mxu0 0.0
  %8046 = vmatprep.subr.mxu0 0.0
  %8047 = vmatpush1.msra.mxu0 0.0
  %8048 = vmatprep.subr.mxu0 0.0
  %8049 = vmatpush1.msra.mxu0 0.0
  %8050 = vmatprep.subr.mxu0 0.0
  %8051 = vmatpush1.msra.mxu0 0.0
  %8052 = vmatprep.subr.mxu0 0.0
  %8053 = vmatpush1.msra.mxu0 0.0
  %8054 = vmatprep.subr.mxu0 0.0
  %8055 = vmatpush1.msra.mxu0 0.0
  %8056 = vmatprep.subr.mxu0 0.0
  %8057 = vmatpush1.msra.mxu0 0.0
  %8058 = vmatprep.subr.mxu0 0.0
  %8059 = vmatpush1.msra.mxu0 0.0
  %8060 = vmatprep.subr.mxu0 0.0
  %8061 = vmatpush1.msra.mxu0 0.0
  %8062 = vmatprep.subr.mxu0 0.0
  %8063 = vmatpush1.msra.mxu0 0.0
  %8064 = vmatprep.subr.mxu0 0.0
  %8065 = vmatpush1.msra.mxu0 0.0
  %8066 = vmatprep.subr.mxu0 0.0
  %8067 = vmatpush1.msra.mxu0 0.0
  %8068 = vmatprep.subr.mxu0 0.0
  %8069 = vmatpush1.msra.mxu0 0.0
  %8070 = vmatprep.subr.mxu0 0.0
  %8071 = vmatpush1.msra.mxu0 0.0
  %8072 = vmatprep.subr.mxu0 0.0
  %8073 = vmatpush1.msra.mxu0 0.0
  %8074 = vmatprep.subr.mxu0 0.0
  %8075 = vmatpush1.msra.mxu0 0.0
  %8076 = vmatprep.subr.mxu0 0.0
  %8077 = vmatpush1.msra.mxu0 0.0
  %8078 = vmatprep.subr.mxu0 0.0
  %8079 = vmatpush1.msra.mxu0 0.0
  %8080 = vmatprep.subr.mxu0 0.0
  %8081 = vmatpush1.msra.mxu0 0.0
  %8082 = vmatprep.subr.mxu0 0.0
  %8083 = vmatpush1.msra.mxu0 0.0
  %8084 = vmatprep.subr.mxu0 0.0
  %8085 = vmatpush1.msra.mxu0 0.0
  %8086 = vmatprep.subr.mxu0 0.0
  %8087 = vmatpush1.msra.mxu0 0.0
  %8088 = vmatprep.subr.mxu0 0.0
  %8089 = vmatpush1.msra.mxu0 0.0
  %8090 = vmatprep.subr.mxu0 0.0
  %8091 = vmatpush1.msra.mxu0 0.0
  %8092 = vmatprep.subr.mxu0 0.0
  %8093 = vmatpush1.msra.mxu0 0.0
  %8094 = vmatprep.mubr.f32.mxu0 0.0
  %8095 = vmatmul.mubr.f32.gmra.mrb[0].mxu0 %v3929
  %v8096 = vpop.f32.mrb[0].mxu0
  %v8097 = vadd.f32 0.0, %v8096
  %v8098 = vpop.f32.mrb[0].mxu0
  %v8099 = vadd.f32 0.0, %v8098
  %8100 = vdwg.mxu0
  %8101 = vmatprep.subr.mxu0 %v8025
  %8102 = vmatpush1.msra.mxu0 %v8024
  %8103 = vmatprep.subr.mxu0 0.0
  %8104 = vmatpush1.msra.mxu0 0.0
  %8105 = vmatprep.subr.mxu0 0.0
  %8106 = vmatpush1.msra.mxu0 0.0
  %8107 = vmatprep.subr.mxu0 0.0
  %8108 = vmatpush1.msra.mxu0 0.0
  %8109 = vmatprep.subr.mxu0 0.0
  %8110 = vmatpush1.msra.mxu0 0.0
  %8111 = vmatprep.subr.mxu0 0.0
  %8112 = vmatpush1.msra.mxu0 0.0
  %8113 = vmatprep.subr.mxu0 0.0
  %8114 = vmatpush1.msra.mxu0 0.0
  %8115 = vmatprep.subr.mxu0 0.0
  %8116 = vmatpush1.msra.mxu0 0.0
  %8117 = vmatprep.subr.mxu0 0.0
  %8118 = vmatpush1.msra.mxu0 0.0
  %8119 = vmatprep.subr.mxu0 0.0
  %8120 = vmatpush1.msra.mxu0 0.0
  %8121 = vmatprep.subr.mxu0 0.0
  %8122 = vmatpush1.msra.mxu0 0.0
  %8123 = vmatprep.subr.mxu0 0.0
  %8124 = vmatpush1.msra.mxu0 0.0
  %8125 = vmatprep.subr.mxu0 0.0
  %8126 = vmatpush1.msra.mxu0 0.0
  %8127 = vmatprep.subr.mxu0 0.0
  %8128 = vmatpush1.msra.mxu0 0.0
  %8129 = vmatprep.subr.mxu0 0.0
  %8130 = vmatpush1.msra.mxu0 0.0
  %8131 = vmatprep.subr.mxu0 0.0
  %8132 = vmatpush1.msra.mxu0 0.0
  %8133 = vmatprep.subr.mxu0 0.0
  %8134 = vmatpush1.msra.mxu0 0.0
  %8135 = vmatprep.subr.mxu0 0.0
  %8136 = vmatpush1.msra.mxu0 0.0
  %8137 = vmatprep.subr.mxu0 0.0
  %8138 = vmatpush1.msra.mxu0 0.0
  %8139 = vmatprep.subr.mxu0 0.0
  %8140 = vmatpush1.msra.mxu0 0.0
  %8141 = vmatprep.subr.mxu0 0.0
  %8142 = vmatpush1.msra.mxu0 0.0
  %8143 = vmatprep.subr.mxu0 0.0
  %8144 = vmatpush1.msra.mxu0 0.0
  %8145 = vmatprep.subr.mxu0 0.0
  %8146 = vmatpush1.msra.mxu0 0.0
  %8147 = vmatprep.subr.mxu0 0.0
  %8148 = vmatpush1.msra.mxu0 0.0
  %8149 = vmatprep.subr.mxu0 0.0
  %8150 = vmatpush1.msra.mxu0 0.0
  %8151 = vmatprep.subr.mxu0 0.0
  %8152 = vmatpush1.msra.mxu0 0.0
  %8153 = vmatprep.subr.mxu0 0.0
  %8154 = vmatpush1.msra.mxu0 0.0
  %8155 = vmatprep.subr.mxu0 0.0
  %8156 = vmatpush1.msra.mxu0 0.0
  %8157 = vmatprep.subr.mxu0 0.0
  %8158 = vmatpush1.msra.mxu0 0.0
  %8159 = vmatprep.subr.mxu0 0.0
  %8160 = vmatpush1.msra.mxu0 0.0
  %8161 = vmatprep.subr.mxu0 0.0
  %8162 = vmatpush1.msra.mxu0 0.0
  %8163 = vmatprep.subr.mxu0 0.0
  %8164 = vmatpush1.msra.mxu0 0.0
  %8165 = vmatprep.mubr.f32.mxu0 0.0
  %8166 = vmatmul.mubr.f32.gmra.mrb[0].mxu0 %v3929
  %v8167 = vpop.f32.mrb[0].mxu0
  %v8168 = vadd.f32 0.0, %v8167
  %v8169 = vpop.f32.mrb[0].mxu0
  %v8170 = vadd.f32 0.0, %v8169
  %8171 = vdwg.mxu0
  %v8172 = vadd.f32 %v8008, %v8097
  %v8173 = vadd.f32 %v8009, %v8099
  %v8174 = vadd.f32 %v8010, %v8168
  %v8175 = vadd.f32 %v8011, %v8170
  %8176 = vrot.lane.b32.xlu0 %v4257, 60
  %v8177 = vpop.permute.xlu0 %8176
  %8178 = vrot.lane.b32.xlu0 %v4258, 60
  %v8179 = vpop.permute.xlu0 %8178
  %8180 = vrot.lane.b32.xlu0 %v4259, 60
  %v8181 = vpop.permute.xlu0 %8180
  %8182 = vrot.lane.b32.xlu0 %v4260, 60
  %v8183 = vpop.permute.xlu0 %8182
  %8184 = vrot.lane.b32.xlu0 0.0, 60
  %v8185 = vpop.permute.xlu0 %8184
  %v8186 = vsel %vm4089, %v8177, %v8179
  %v8187 = vsel %vm4089, %v8179, %v8181
  %v8188 = vsel %vm4089, %v8181, %v8183
  %v8189 = vsel %vm4089, %v8183, %v8185
  %8194 = vmatprep.subr.mxu0 %v8187
  %8195 = vmatpush1.msra.mxu0 %v8186
  %8196 = vmatprep.subr.mxu0 0.0
  %8197 = vmatpush1.msra.mxu0 0.0
  %8198 = vmatprep.subr.mxu0 0.0
  %8199 = vmatpush1.msra.mxu0 0.0
  %8200 = vmatprep.subr.mxu0 0.0
  %8201 = vmatpush1.msra.mxu0 0.0
  %8202 = vmatprep.subr.mxu0 0.0
  %8203 = vmatpush1.msra.mxu0 0.0
  %8204 = vmatprep.subr.mxu0 0.0
  %8205 = vmatpush1.msra.mxu0 0.0
  %8206 = vmatprep.subr.mxu0 0.0
  %8207 = vmatpush1.msra.mxu0 0.0
  %8208 = vmatprep.subr.mxu0 0.0
  %8209 = vmatpush1.msra.mxu0 0.0
  %8210 = vmatprep.subr.mxu0 0.0
  %8211 = vmatpush1.msra.mxu0 0.0
  %8212 = vmatprep.subr.mxu0 0.0
  %8213 = vmatpush1.msra.mxu0 0.0
  %8214 = vmatprep.subr.mxu0 0.0
  %8215 = vmatpush1.msra.mxu0 0.0
  %8216 = vmatprep.subr.mxu0 0.0
  %8217 = vmatpush1.msra.mxu0 0.0
  %8218 = vmatprep.subr.mxu0 0.0
  %8219 = vmatpush1.msra.mxu0 0.0
  %8220 = vmatprep.subr.mxu0 0.0
  %8221 = vmatpush1.msra.mxu0 0.0
  %8222 = vmatprep.subr.mxu0 0.0
  %8223 = vmatpush1.msra.mxu0 0.0
  %8224 = vmatprep.subr.mxu0 0.0
  %8225 = vmatpush1.msra.mxu0 0.0
  %8226 = vmatprep.subr.mxu0 0.0
  %8227 = vmatpush1.msra.mxu0 0.0
  %8228 = vmatprep.subr.mxu0 0.0
  %8229 = vmatpush1.msra.mxu0 0.0
  %8230 = vmatprep.subr.mxu0 0.0
  %8231 = vmatpush1.msra.mxu0 0.0
  %8232 = vmatprep.subr.mxu0 0.0
  %8233 = vmatpush1.msra.mxu0 0.0
  %8234 = vmatprep.subr.mxu0 0.0
  %8235 = vmatpush1.msra.mxu0 0.0
  %8236 = vmatprep.subr.mxu0 0.0
  %8237 = vmatpush1.msra.mxu0 0.0
  %8238 = vmatprep.subr.mxu0 0.0
  %8239 = vmatpush1.msra.mxu0 0.0
  %8240 = vmatprep.subr.mxu0 0.0
  %8241 = vmatpush1.msra.mxu0 0.0
  %8242 = vmatprep.subr.mxu0 0.0
  %8243 = vmatpush1.msra.mxu0 0.0
  %8244 = vmatprep.subr.mxu0 0.0
  %8245 = vmatpush1.msra.mxu0 0.0
  %8246 = vmatprep.subr.mxu0 0.0
  %8247 = vmatpush1.msra.mxu0 0.0
  %8248 = vmatprep.subr.mxu0 0.0
  %8249 = vmatpush1.msra.mxu0 0.0
  %8250 = vmatprep.subr.mxu0 0.0
  %8251 = vmatpush1.msra.mxu0 0.0
  %8252 = vmatprep.subr.mxu0 0.0
  %8253 = vmatpush1.msra.mxu0 0.0
  %8254 = vmatprep.subr.mxu0 0.0
  %8255 = vmatpush1.msra.mxu0 0.0
  %8256 = vmatprep.subr.mxu0 0.0
  %8257 = vmatpush1.msra.mxu0 0.0
  %8258 = vmatprep.mubr.f32.mxu0 0.0
  %8259 = vmatmul.mubr.f32.gmra.mrb[0].mxu0 %v4099
  %v8260 = vpop.f32.mrb[0].mxu0
  %v8261 = vadd.f32 0.0, %v8260
  %v8262 = vpop.f32.mrb[0].mxu0
  %v8263 = vadd.f32 0.0, %v8262
  %8264 = vdwg.mxu0
  %8265 = vmatprep.subr.mxu0 %v8189
  %8266 = vmatpush1.msra.mxu0 %v8188
  %8267 = vmatprep.subr.mxu0 0.0
  %8268 = vmatpush1.msra.mxu0 0.0
  %8269 = vmatprep.subr.mxu0 0.0
  %8270 = vmatpush1.msra.mxu0 0.0
  %8271 = vmatprep.subr.mxu0 0.0
  %8272 = vmatpush1.msra.mxu0 0.0
  %8273 = vmatprep.subr.mxu0 0.0
  %8274 = vmatpush1.msra.mxu0 0.0
  %8275 = vmatprep.subr.mxu0 0.0
  %8276 = vmatpush1.msra.mxu0 0.0
  %8277 = vmatprep.subr.mxu0 0.0
  %8278 = vmatpush1.msra.mxu0 0.0
  %8279 = vmatprep.subr.mxu0 0.0
  %8280 = vmatpush1.msra.mxu0 0.0
  %8281 = vmatprep.subr.mxu0 0.0
  %8282 = vmatpush1.msra.mxu0 0.0
  %8283 = vmatprep.subr.mxu0 0.0
  %8284 = vmatpush1.msra.mxu0 0.0
  %8285 = vmatprep.subr.mxu0 0.0
  %8286 = vmatpush1.msra.mxu0 0.0
  %8287 = vmatprep.subr.mxu0 0.0
  %8288 = vmatpush1.msra.mxu0 0.0
  %8289 = vmatprep.subr.mxu0 0.0
  %8290 = vmatpush1.msra.mxu0 0.0
  %8291 = vmatprep.subr.mxu0 0.0
  %8292 = vmatpush1.msra.mxu0 0.0
  %8293 = vmatprep.subr.mxu0 0.0
  %8294 = vmatpush1.msra.mxu0 0.0
  %8295 = vmatprep.subr.mxu0 0.0
  %8296 = vmatpush1.msra.mxu0 0.0
  %8297 = vmatprep.subr.mxu0 0.0
  %8298 = vmatpush1.msra.mxu0 0.0
  %8299 = vmatprep.subr.mxu0 0.0
  %8300 = vmatpush1.msra.mxu0 0.0
  %8301 = vmatprep.subr.mxu0 0.0
  %8302 = vmatpush1.msra.mxu0 0.0
  %8303 = vmatprep.subr.mxu0 0.0
  %8304 = vmatpush1.msra.mxu0 0.0
  %8305 = vmatprep.subr.mxu0 0.0
  %8306 = vmatpush1.msra.mxu0 0.0
  %8307 = vmatprep.subr.mxu0 0.0
  %8308 = vmatpush1.msra.mxu0 0.0
  %8309 = vmatprep.subr.mxu0 0.0
  %8310 = vmatpush1.msra.mxu0 0.0
  %8311 = vmatprep.subr.mxu0 0.0
  %8312 = vmatpush1.msra.mxu0 0.0
  %8313 = vmatprep.subr.mxu0 0.0
  %8314 = vmatpush1.msra.mxu0 0.0
  %8315 = vmatprep.subr.mxu0 0.0
  %8316 = vmatpush1.msra.mxu0 0.0
  %8317 = vmatprep.subr.mxu0 0.0
  %8318 = vmatpush1.msra.mxu0 0.0
  %8319 = vmatprep.subr.mxu0 0.0
  %8320 = vmatpush1.msra.mxu0 0.0
  %8321 = vmatprep.subr.mxu0 0.0
  %8322 = vmatpush1.msra.mxu0 0.0
  %8323 = vmatprep.subr.mxu0 0.0
  %8324 = vmatpush1.msra.mxu0 0.0
  %8325 = vmatprep.subr.mxu0 0.0
  %8326 = vmatpush1.msra.mxu0 0.0
  %8327 = vmatprep.subr.mxu0 0.0
  %8328 = vmatpush1.msra.mxu0 0.0
  %8329 = vmatprep.mubr.f32.mxu0 0.0
  %8330 = vmatmul.mubr.f32.gmra.mrb[0].mxu0 %v4099
  %v8331 = vpop.f32.mrb[0].mxu0
  %v8332 = vadd.f32 0.0, %v8331
  %v8333 = vpop.f32.mrb[0].mxu0
  %v8334 = vadd.f32 0.0, %v8333
  %8335 = vdwg.mxu0
  %v8336 = vadd.f32 %v8172, %v8261
  %v8337 = vadd.f32 %v8173, %v8263
  %v8338 = vadd.f32 %v8174, %v8332
  %v8339 = vadd.f32 %v8175, %v8334
  %s8340 = scalar_lea.vmem %s2, 8
  %v8341 = vld [vmem:[%s8340] sm:$0xff]
  %8343 = vset.pattern.permute.xlu0 0
  %8344 = vperm.xlu0 %8343, %v8341
  %v8345 = vpop.permute.xlu0 %8344
  %v8347 = vadd.f32 %v8336, %v8345
  %v8348 = vadd.f32 %v8337, %v8345
  %v8349 = vadd.f32 %v8338, %v8345
  %v8350 = vadd.f32 %v8339, %v8345
  %v8351 = vmax.f32 %v8347, 0.0
  %v8352 = vmax.f32 %v8348, 0.0
  %v8353 = vmax.f32 %v8349, 0.0
  %v8354 = vmax.f32 %v8350, 0.0
  %8359 = vrot.lane.b32.xlu0 %v8351, 127
  %v8360 = vpop.permute.xlu0 %8359
  %8361 = vrot.lane.b32.xlu0 %v8352, 127
  %v8362 = vpop.permute.xlu0 %8361
  %8363 = vrot.lane.b32.xlu0 %v8353, 127
  %v8364 = vpop.permute.xlu0 %8363
  %8365 = vrot.lane.b32.xlu0 %v8354, 127
  %v8366 = vpop.permute.xlu0 %8365
  %v8367 = vsel %vm37, %v8360, %v8362
  %v8368 = vsel %vm37, %v8362, %v8364
  %v8369 = vsel %vm37, %v8364, %v8366
  %v8370 = vsel %vm37, %v8366, %v4275
  %8375 = vmatprep.subr.mxu0 %v8368
  %8376 = vmatpush1.msra.mxu0 %v8367
  %8377 = vmatprep.subr.mxu0 0.0
  %8378 = vmatpush1.msra.mxu0 0.0
  %8379 = vmatprep.subr.mxu0 0.0
  %8380 = vmatpush1.msra.mxu0 0.0
  %8381 = vmatprep.subr.mxu0 0.0
  %8382 = vmatpush1.msra.mxu0 0.0
  %8383 = vmatprep.subr.mxu0 0.0
  %8384 = vmatpush1.msra.mxu0 0.0
  %8385 = vmatprep.subr.mxu0 0.0
  %8386 = vmatpush1.msra.mxu0 0.0
  %8387 = vmatprep.subr.mxu0 0.0
  %8388 = vmatpush1.msra.mxu0 0.0
  %8389 = vmatprep.subr.mxu0 0.0
  %8390 = vmatpush1.msra.mxu0 0.0
  %8391 = vmatprep.subr.mxu0 0.0
  %8392 = vmatpush1.msra.mxu0 0.0
  %8393 = vmatprep.subr.mxu0 0.0
  %8394 = vmatpush1.msra.mxu0 0.0
  %8395 = vmatprep.subr.mxu0 0.0
  %8396 = vmatpush1.msra.mxu0 0.0
  %8397 = vmatprep.subr.mxu0 0.0
  %8398 = vmatpush1.msra.mxu0 0.0
  %8399 = vmatprep.subr.mxu0 0.0
  %8400 = vmatpush1.msra.mxu0 0.0
  %8401 = vmatprep.subr.mxu0 0.0
  %8402 = vmatpush1.msra.mxu0 0.0
  %8403 = vmatprep.subr.mxu0 0.0
  %8404 = vmatpush1.msra.mxu0 0.0
  %8405 = vmatprep.subr.mxu0 0.0
  %8406 = vmatpush1.msra.mxu0 0.0
  %8407 = vmatprep.subr.mxu0 0.0
  %8408 = vmatpush1.msra.mxu0 0.0
  %8409 = vmatprep.subr.mxu0 0.0
  %8410 = vmatpush1.msra.mxu0 0.0
  %8411 = vmatprep.subr.mxu0 0.0
  %8412 = vmatpush1.msra.mxu0 0.0
  %8413 = vmatprep.subr.mxu0 0.0
  %8414 = vmatpush1.msra.mxu0 0.0
  %8415 = vmatprep.subr.mxu0 0.0
  %8416 = vmatpush1.msra.mxu0 0.0
  %8417 = vmatprep.subr.mxu0 0.0
  %8418 = vmatpush1.msra.mxu0 0.0
  %8419 = vmatprep.subr.mxu0 0.0
  %8420 = vmatpush1.msra.mxu0 0.0
  %8421 = vmatprep.subr.mxu0 0.0
  %8422 = vmatpush1.msra.mxu0 0.0
  %8423 = vmatprep.subr.mxu0 0.0
  %8424 = vmatpush1.msra.mxu0 0.0
  %8425 = vmatprep.subr.mxu0 0.0
  %8426 = vmatpush1.msra.mxu0 0.0
  %8427 = vmatprep.subr.mxu0 0.0
  %8428 = vmatpush1.msra.mxu0 0.0
  %8429 = vmatprep.subr.mxu0 0.0
  %8430 = vmatpush1.msra.mxu0 0.0
  %8431 = vmatprep.subr.mxu0 0.0
  %8432 = vmatpush1.msra.mxu0 0.0
  %8433 = vmatprep.subr.mxu0 0.0
  %8434 = vmatpush1.msra.mxu0 0.0
  %8435 = vmatprep.subr.mxu0 0.0
  %8436 = vmatpush1.msra.mxu0 0.0
  %8437 = vmatprep.subr.mxu0 0.0
  %8438 = vmatpush1.msra.mxu0 0.0
  %8439 = vmatprep.mubr.f32.mxu0 0.0
  %8440 = vmatmul.mubr.f32.gmra.mrb[0].mxu0 %v48
  %v8441 = vpop.f32.mrb[0].mxu0
  %v8442 = vadd.f32 0.0, %v8441
  %v8443 = vpop.f32.mrb[0].mxu0
  %v8444 = vadd.f32 0.0, %v8443
  %8445 = vdwg.mxu0
  %8446 = vmatprep.subr.mxu0 %v8370
  %8447 = vmatpush1.msra.mxu0 %v8369
  %8448 = vmatprep.subr.mxu0 0.0
  %8449 = vmatpush1.msra.mxu0 0.0
  %8450 = vmatprep.subr.mxu0 0.0
  %8451 = vmatpush1.msra.mxu0 0.0
  %8452 = vmatprep.subr.mxu0 0.0
  %8453 = vmatpush1.msra.mxu0 0.0
  %8454 = vmatprep.subr.mxu0 0.0
  %8455 = vmatpush1.msra.mxu0 0.0
  %8456 = vmatprep.subr.mxu0 0.0
  %8457 = vmatpush1.msra.mxu0 0.0
  %8458 = vmatprep.subr.mxu0 0.0
  %8459 = vmatpush1.msra.mxu0 0.0
  %8460 = vmatprep.subr.mxu0 0.0
  %8461 = vmatpush1.msra.mxu0 0.0
  %8462 = vmatprep.subr.mxu0 0.0
  %8463 = vmatpush1.msra.mxu0 0.0
  %8464 = vmatprep.subr.mxu0 0.0
  %8465 = vmatpush1.msra.mxu0 0.0
  %8466 = vmatprep.subr.mxu0 0.0
  %8467 = vmatpush1.msra.mxu0 0.0
  %8468 = vmatprep.subr.mxu0 0.0
  %8469 = vmatpush1.msra.mxu0 0.0
  %8470 = vmatprep.subr.mxu0 0.0
  %8471 = vmatpush1.msra.mxu0 0.0
  %8472 = vmatprep.subr.mxu0 0.0
  %8473 = vmatpush1.msra.mxu0 0.0
  %8474 = vmatprep.subr.mxu0 0.0
  %8475 = vmatpush1.msra.mxu0 0.0
  %8476 = vmatprep.subr.mxu0 0.0
  %8477 = vmatpush1.msra.mxu0 0.0
  %8478 = vmatprep.subr.mxu0 0.0
  %8479 = vmatpush1.msra.mxu0 0.0
  %8480 = vmatprep.subr.mxu0 0.0
  %8481 = vmatpush1.msra.mxu0 0.0
  %8482 = vmatprep.subr.mxu0 0.0
  %8483 = vmatpush1.msra.mxu0 0.0
  %8484 = vmatprep.subr.mxu0 0.0
  %8485 = vmatpush1.msra.mxu0 0.0
  %8486 = vmatprep.subr.mxu0 0.0
  %8487 = vmatpush1.msra.mxu0 0.0
  %8488 = vmatprep.subr.mxu0 0.0
  %8489 = vmatpush1.msra.mxu0 0.0
  %8490 = vmatprep.subr.mxu0 0.0
  %8491 = vmatpush1.msra.mxu0 0.0
  %8492 = vmatprep.subr.mxu0 0.0
  %8493 = vmatpush1.msra.mxu0 0.0
  %8494 = vmatprep.subr.mxu0 0.0
  %8495 = vmatpush1.msra.mxu0 0.0
  %8496 = vmatprep.subr.mxu0 0.0
  %8497 = vmatpush1.msra.mxu0 0.0
  %8498 = vmatprep.subr.mxu0 0.0
  %8499 = vmatpush1.msra.mxu0 0.0
  %8500 = vmatprep.subr.mxu0 0.0
  %8501 = vmatpush1.msra.mxu0 0.0
  %8502 = vmatprep.subr.mxu0 0.0
  %8503 = vmatpush1.msra.mxu0 0.0
  %8504 = vmatprep.subr.mxu0 0.0
  %8505 = vmatpush1.msra.mxu0 0.0
  %8506 = vmatprep.subr.mxu0 0.0
  %8507 = vmatpush1.msra.mxu0 0.0
  %8508 = vmatprep.subr.mxu0 0.0
  %8509 = vmatpush1.msra.mxu0 0.0
  %8510 = vmatprep.mubr.f32.mxu0 0.0
  %8511 = vmatmul.mubr.f32.gmra.mrb[0].mxu0 %v48
  %v8512 = vpop.f32.mrb[0].mxu0
  %v8513 = vadd.f32 0.0, %v8512
  %v8514 = vpop.f32.mrb[0].mxu0
  %v8515 = vadd.f32 0.0, %v8514
  %8516 = vdwg.mxu0
  %8517 = vmatprep.subr.mxu0 %v8352
  %8518 = vmatpush1.msra.mxu0 %v8351
  %8519 = vmatprep.subr.mxu0 0.0
  %8520 = vmatpush1.msra.mxu0 0.0
  %8521 = vmatprep.subr.mxu0 0.0
  %8522 = vmatpush1.msra.mxu0 0.0
  %8523 = vmatprep.subr.mxu0 0.0
  %8524 = vmatpush1.msra.mxu0 0.0
  %8525 = vmatprep.subr.mxu0 0.0
  %8526 = vmatpush1.msra.mxu0 0.0
  %8527 = vmatprep.subr.mxu0 0.0
  %8528 = vmatpush1.msra.mxu0 0.0
  %8529 = vmatprep.subr.mxu0 0.0
  %8530 = vmatpush1.msra.mxu0 0.0
  %8531 = vmatprep.subr.mxu0 0.0
  %8532 = vmatpush1.msra.mxu0 0.0
  %8533 = vmatprep.subr.mxu0 0.0
  %8534 = vmatpush1.msra.mxu0 0.0
  %8535 = vmatprep.subr.mxu0 0.0
  %8536 = vmatpush1.msra.mxu0 0.0
  %8537 = vmatprep.subr.mxu0 0.0
  %8538 = vmatpush1.msra.mxu0 0.0
  %8539 = vmatprep.subr.mxu0 0.0
  %8540 = vmatpush1.msra.mxu0 0.0
  %8541 = vmatprep.subr.mxu0 0.0
  %8542 = vmatpush1.msra.mxu0 0.0
  %8543 = vmatprep.subr.mxu0 0.0
  %8544 = vmatpush1.msra.mxu0 0.0
  %8545 = vmatprep.subr.mxu0 0.0
  %8546 = vmatpush1.msra.mxu0 0.0
  %8547 = vmatprep.subr.mxu0 0.0
  %8548 = vmatpush1.msra.mxu0 0.0
  %8549 = vmatprep.subr.mxu0 0.0
  %8550 = vmatpush1.msra.mxu0 0.0
  %8551 = vmatprep.subr.mxu0 0.0
  %8552 = vmatpush1.msra.mxu0 0.0
  %8553 = vmatprep.subr.mxu0 0.0
  %8554 = vmatpush1.msra.mxu0 0.0
  %8555 = vmatprep.subr.mxu0 0.0
  %8556 = vmatpush1.msra.mxu0 0.0
  %8557 = vmatprep.subr.mxu0 0.0
  %8558 = vmatpush1.msra.mxu0 0.0
  %8559 = vmatprep.subr.mxu0 0.0
  %8560 = vmatpush1.msra.mxu0 0.0
  %8561 = vmatprep.subr.mxu0 0.0
  %8562 = vmatpush1.msra.mxu0 0.0
  %8563 = vmatprep.subr.mxu0 0.0
  %8564 = vmatpush1.msra.mxu0 0.0
  %8565 = vmatprep.subr.mxu0 0.0
  %8566 = vmatpush1.msra.mxu0 0.0
  %8567 = vmatprep.subr.mxu0 0.0
  %8568 = vmatpush1.msra.mxu0 0.0
  %8569 = vmatprep.subr.mxu0 0.0
  %8570 = vmatpush1.msra.mxu0 0.0
  %8571 = vmatprep.subr.mxu0 0.0
  %8572 = vmatpush1.msra.mxu0 0.0
  %8573 = vmatprep.subr.mxu0 0.0
  %8574 = vmatpush1.msra.mxu0 0.0
  %8575 = vmatprep.subr.mxu0 0.0
  %8576 = vmatpush1.msra.mxu0 0.0
  %8577 = vmatprep.subr.mxu0 0.0
  %8578 = vmatpush1.msra.mxu0 0.0
  %8579 = vmatprep.subr.mxu0 0.0
  %8580 = vmatpush1.msra.mxu0 0.0
  %8581 = vmatprep.mubr.f32.mxu0 0.0
  %8582 = vmatmul.mubr.f32.gmra.mrb[0].mxu0 %v193
  %v8583 = vpop.f32.mrb[0].mxu0
  %v8584 = vadd.f32 %v8442, %v8583
  %v8585 = vpop.f32.mrb[0].mxu0
  %v8586 = vadd.f32 %v8444, %v8585
  %8587 = vdwg.mxu0
  %8588 = vmatprep.subr.mxu0 %v8354
  %8589 = vmatpush1.msra.mxu0 %v8353
  %8590 = vmatprep.subr.mxu0 0.0
  %8591 = vmatpush1.msra.mxu0 0.0
  %8592 = vmatprep.subr.mxu0 0.0
  %8593 = vmatpush1.msra.mxu0 0.0
  %8594 = vmatprep.subr.mxu0 0.0
  %8595 = vmatpush1.msra.mxu0 0.0
  %8596 = vmatprep.subr.mxu0 0.0
  %8597 = vmatpush1.msra.mxu0 0.0
  %8598 = vmatprep.subr.mxu0 0.0
  %8599 = vmatpush1.msra.mxu0 0.0
  %8600 = vmatprep.subr.mxu0 0.0
  %8601 = vmatpush1.msra.mxu0 0.0
  %8602 = vmatprep.subr.mxu0 0.0
  %8603 = vmatpush1.msra.mxu0 0.0
  %8604 = vmatprep.subr.mxu0 0.0
  %8605 = vmatpush1.msra.mxu0 0.0
  %8606 = vmatprep.subr.mxu0 0.0
  %8607 = vmatpush1.msra.mxu0 0.0
  %8608 = vmatprep.subr.mxu0 0.0
  %8609 = vmatpush1.msra.mxu0 0.0
  %8610 = vmatprep.subr.mxu0 0.0
  %8611 = vmatpush1.msra.mxu0 0.0
  %8612 = vmatprep.subr.mxu0 0.0
  %8613 = vmatpush1.msra.mxu0 0.0
  %8614 = vmatprep.subr.mxu0 0.0
  %8615 = vmatpush1.msra.mxu0 0.0
  %8616 = vmatprep.subr.mxu0 0.0
  %8617 = vmatpush1.msra.mxu0 0.0
  %8618 = vmatprep.subr.mxu0 0.0
  %8619 = vmatpush1.msra.mxu0 0.0
  %8620 = vmatprep.subr.mxu0 0.0
  %8621 = vmatpush1.msra.mxu0 0.0
  %8622 = vmatprep.subr.mxu0 0.0
  %8623 = vmatpush1.msra.mxu0 0.0
  %8624 = vmatprep.subr.mxu0 0.0
  %8625 = vmatpush1.msra.mxu0 0.0
  %8626 = vmatprep.subr.mxu0 0.0
  %8627 = vmatpush1.msra.mxu0 0.0
  %8628 = vmatprep.subr.mxu0 0.0
  %8629 = vmatpush1.msra.mxu0 0.0
  %8630 = vmatprep.subr.mxu0 0.0
  %8631 = vmatpush1.msra.mxu0 0.0
  %8632 = vmatprep.subr.mxu0 0.0
  %8633 = vmatpush1.msra.mxu0 0.0
  %8634 = vmatprep.subr.mxu0 0.0
  %8635 = vmatpush1.msra.mxu0 0.0
  %8636 = vmatprep.subr.mxu0 0.0
  %8637 = vmatpush1.msra.mxu0 0.0
  %8638 = vmatprep.subr.mxu0 0.0
  %8639 = vmatpush1.msra.mxu0 0.0
  %8640 = vmatprep.subr.mxu0 0.0
  %8641 = vmatpush1.msra.mxu0 0.0
  %8642 = vmatprep.subr.mxu0 0.0
  %8643 = vmatpush1.msra.mxu0 0.0
  %8644 = vmatprep.subr.mxu0 0.0
  %8645 = vmatpush1.msra.mxu0 0.0
  %8646 = vmatprep.subr.mxu0 0.0
  %8647 = vmatpush1.msra.mxu0 0.0
  %8648 = vmatprep.subr.mxu0 0.0
  %8649 = vmatpush1.msra.mxu0 0.0
  %8650 = vmatprep.subr.mxu0 0.0
  %8651 = vmatpush1.msra.mxu0 0.0
  %8652 = vmatprep.mubr.f32.mxu0 0.0
  %8653 = vmatmul.mubr.f32.gmra.mrb[0].mxu0 %v193
  %v8654 = vpop.f32.mrb[0].mxu0
  %v8655 = vadd.f32 %v8513, %v8654
  %v8656 = vpop.f32.mrb[0].mxu0
  %v8657 = vadd.f32 %v8515, %v8656
  %8658 = vdwg.mxu0
  %8659 = vrot.lane.b32.xlu0 %v8351, 126
  %v8660 = vpop.permute.xlu0 %8659
  %8661 = vrot.lane.b32.xlu0 %v8352, 126
  %v8662 = vpop.permute.xlu0 %8661
  %8663 = vrot.lane.b32.xlu0 %v8353, 126
  %v8664 = vpop.permute.xlu0 %8663
  %8665 = vrot.lane.b32.xlu0 %v8354, 126
  %v8666 = vpop.permute.xlu0 %8665
  %v8667 = vsel %vm349, %v8660, %v8662
  %v8668 = vsel %vm349, %v8662, %v8664
  %v8669 = vsel %vm349, %v8664, %v8666
  %v8670 = vsel %vm349, %v8666, %v4577
  %8675 = vmatprep.subr.mxu0 %v8668
  %8676 = vmatpush1.msra.mxu0 %v8667
  %8677 = vmatprep.subr.mxu0 0.0
  %8678 = vmatpush1.msra.mxu0 0.0
  %8679 = vmatprep.subr.mxu0 0.0
  %8680 = vmatpush1.msra.mxu0 0.0
  %8681 = vmatprep.subr.mxu0 0.0
  %8682 = vmatpush1.msra.mxu0 0.0
  %8683 = vmatprep.subr.mxu0 0.0
  %8684 = vmatpush1.msra.mxu0 0.0
  %8685 = vmatprep.subr.mxu0 0.0
  %8686 = vmatpush1.msra.mxu0 0.0
  %8687 = vmatprep.subr.mxu0 0.0
  %8688 = vmatpush1.msra.mxu0 0.0
  %8689 = vmatprep.subr.mxu0 0.0
  %8690 = vmatpush1.msra.mxu0 0.0
  %8691 = vmatprep.subr.mxu0 0.0
  %8692 = vmatpush1.msra.mxu0 0.0
  %8693 = vmatprep.subr.mxu0 0.0
  %8694 = vmatpush1.msra.mxu0 0.0
  %8695 = vmatprep.subr.mxu0 0.0
  %8696 = vmatpush1.msra.mxu0 0.0
  %8697 = vmatprep.subr.mxu0 0.0
  %8698 = vmatpush1.msra.mxu0 0.0
  %8699 = vmatprep.subr.mxu0 0.0
  %8700 = vmatpush1.msra.mxu0 0.0
  %8701 = vmatprep.subr.mxu0 0.0
  %8702 = vmatpush1.msra.mxu0 0.0
  %8703 = vmatprep.subr.mxu0 0.0
  %8704 = vmatpush1.msra.mxu0 0.0
  %8705 = vmatprep.subr.mxu0 0.0
  %8706 = vmatpush1.msra.mxu0 0.0
  %8707 = vmatprep.subr.mxu0 0.0
  %8708 = vmatpush1.msra.mxu0 0.0
  %8709 = vmatprep.subr.mxu0 0.0
  %8710 = vmatpush1.msra.mxu0 0.0
  %8711 = vmatprep.subr.mxu0 0.0
  %8712 = vmatpush1.msra.mxu0 0.0
  %8713 = vmatprep.subr.mxu0 0.0
  %8714 = vmatpush1.msra.mxu0 0.0
  %8715 = vmatprep.subr.mxu0 0.0
  %8716 = vmatpush1.msra.mxu0 0.0
  %8717 = vmatprep.subr.mxu0 0.0
  %8718 = vmatpush1.msra.mxu0 0.0
  %8719 = vmatprep.subr.mxu0 0.0
  %8720 = vmatpush1.msra.mxu0 0.0
  %8721 = vmatprep.subr.mxu0 0.0
  %8722 = vmatpush1.msra.mxu0 0.0
  %8723 = vmatprep.subr.mxu0 0.0
  %8724 = vmatpush1.msra.mxu0 0.0
  %8725 = vmatprep.subr.mxu0 0.0
  %8726 = vmatpush1.msra.mxu0 0.0
  %8727 = vmatprep.subr.mxu0 0.0
  %8728 = vmatpush1.msra.mxu0 0.0
  %8729 = vmatprep.subr.mxu0 0.0
  %8730 = vmatpush1.msra.mxu0 0.0
  %8731 = vmatprep.subr.mxu0 0.0
  %8732 = vmatpush1.msra.mxu0 0.0
  %8733 = vmatprep.subr.mxu0 0.0
  %8734 = vmatpush1.msra.mxu0 0.0
  %8735 = vmatprep.subr.mxu0 0.0
  %8736 = vmatpush1.msra.mxu0 0.0
  %8737 = vmatprep.subr.mxu0 0.0
  %8738 = vmatpush1.msra.mxu0 0.0
  %8739 = vmatprep.mubr.f32.mxu0 0.0
  %8740 = vmatmul.mubr.f32.gmra.mrb[0].mxu0 %v359
  %v8741 = vpop.f32.mrb[0].mxu0
  %v8742 = vadd.f32 0.0, %v8741
  %v8743 = vpop.f32.mrb[0].mxu0
  %v8744 = vadd.f32 0.0, %v8743
  %8745 = vdwg.mxu0
  %8746 = vmatprep.subr.mxu0 %v8670
  %8747 = vmatpush1.msra.mxu0 %v8669
  %8748 = vmatprep.subr.mxu0 0.0
  %8749 = vmatpush1.msra.mxu0 0.0
  %8750 = vmatprep.subr.mxu0 0.0
  %8751 = vmatpush1.msra.mxu0 0.0
  %8752 = vmatprep.subr.mxu0 0.0
  %8753 = vmatpush1.msra.mxu0 0.0
  %8754 = vmatprep.subr.mxu0 0.0
  %8755 = vmatpush1.msra.mxu0 0.0
  %8756 = vmatprep.subr.mxu0 0.0
  %8757 = vmatpush1.msra.mxu0 0.0
  %8758 = vmatprep.subr.mxu0 0.0
  %8759 = vmatpush1.msra.mxu0 0.0
  %8760 = vmatprep.subr.mxu0 0.0
  %8761 = vmatpush1.msra.mxu0 0.0
  %8762 = vmatprep.subr.mxu0 0.0
  %8763 = vmatpush1.msra.mxu0 0.0
  %8764 = vmatprep.subr.mxu0 0.0
  %8765 = vmatpush1.msra.mxu0 0.0
  %8766 = vmatprep.subr.mxu0 0.0
  %8767 = vmatpush1.msra.mxu0 0.0
  %8768 = vmatprep.subr.mxu0 0.0
  %8769 = vmatpush1.msra.mxu0 0.0
  %8770 = vmatprep.subr.mxu0 0.0
  %8771 = vmatpush1.msra.mxu0 0.0
  %8772 = vmatprep.subr.mxu0 0.0
  %8773 = vmatpush1.msra.mxu0 0.0
  %8774 = vmatprep.subr.mxu0 0.0
  %8775 = vmatpush1.msra.mxu0 0.0
  %8776 = vmatprep.subr.mxu0 0.0
  %8777 = vmatpush1.msra.mxu0 0.0
  %8778 = vmatprep.subr.mxu0 0.0
  %8779 = vmatpush1.msra.mxu0 0.0
  %8780 = vmatprep.subr.mxu0 0.0
  %8781 = vmatpush1.msra.mxu0 0.0
  %8782 = vmatprep.subr.mxu0 0.0
  %8783 = vmatpush1.msra.mxu0 0.0
  %8784 = vmatprep.subr.mxu0 0.0
  %8785 = vmatpush1.msra.mxu0 0.0
  %8786 = vmatprep.subr.mxu0 0.0
  %8787 = vmatpush1.msra.mxu0 0.0
  %8788 = vmatprep.subr.mxu0 0.0
  %8789 = vmatpush1.msra.mxu0 0.0
  %8790 = vmatprep.subr.mxu0 0.0
  %8791 = vmatpush1.msra.mxu0 0.0
  %8792 = vmatprep.subr.mxu0 0.0
  %8793 = vmatpush1.msra.mxu0 0.0
  %8794 = vmatprep.subr.mxu0 0.0
  %8795 = vmatpush1.msra.mxu0 0.0
  %8796 = vmatprep.subr.mxu0 0.0
  %8797 = vmatpush1.msra.mxu0 0.0
  %8798 = vmatprep.subr.mxu0 0.0
  %8799 = vmatpush1.msra.mxu0 0.0
  %8800 = vmatprep.subr.mxu0 0.0
  %8801 = vmatpush1.msra.mxu0 0.0
  %8802 = vmatprep.subr.mxu0 0.0
  %8803 = vmatpush1.msra.mxu0 0.0
  %8804 = vmatprep.subr.mxu0 0.0
  %8805 = vmatpush1.msra.mxu0 0.0
  %8806 = vmatprep.subr.mxu0 0.0
  %8807 = vmatpush1.msra.mxu0 0.0
  %8808 = vmatprep.subr.mxu0 0.0
  %8809 = vmatpush1.msra.mxu0 0.0
  %8810 = vmatprep.mubr.f32.mxu0 0.0
  %8811 = vmatmul.mubr.f32.gmra.mrb[0].mxu0 %v359
  %v8812 = vpop.f32.mrb[0].mxu0
  %v8813 = vadd.f32 0.0, %v8812
  %v8814 = vpop.f32.mrb[0].mxu0
  %v8815 = vadd.f32 0.0, %v8814
  %8816 = vdwg.mxu0
  %v8817 = vadd.f32 %v8584, %v8742
  %v8818 = vadd.f32 %v8586, %v8744
  %v8819 = vadd.f32 %v8655, %v8813
  %v8820 = vadd.f32 %v8657, %v8815
  %8821 = vrot.lane.b32.xlu0 %v8351, 125
  %v8822 = vpop.permute.xlu0 %8821
  %8823 = vrot.lane.b32.xlu0 %v8352, 125
  %v8824 = vpop.permute.xlu0 %8823
  %8825 = vrot.lane.b32.xlu0 %v8353, 125
  %v8826 = vpop.permute.xlu0 %8825
  %8827 = vrot.lane.b32.xlu0 %v8354, 125
  %v8828 = vpop.permute.xlu0 %8827
  %v8829 = vsel %vm519, %v8822, %v8824
  %v8830 = vsel %vm519, %v8824, %v8826
  %v8831 = vsel %vm519, %v8826, %v8828
  %v8832 = vsel %vm519, %v8828, %v4741
  %8837 = vmatprep.subr.mxu0 %v8830
  %8838 = vmatpush1.msra.mxu0 %v8829
  %8839 = vmatprep.subr.mxu0 0.0
  %8840 = vmatpush1.msra.mxu0 0.0
  %8841 = vmatprep.subr.mxu0 0.0
  %8842 = vmatpush1.msra.mxu0 0.0
  %8843 = vmatprep.subr.mxu0 0.0
  %8844 = vmatpush1.msra.mxu0 0.0
  %8845 = vmatprep.subr.mxu0 0.0
  %8846 = vmatpush1.msra.mxu0 0.0
  %8847 = vmatprep.subr.mxu0 0.0
  %8848 = vmatpush1.msra.mxu0 0.0
  %8849 = vmatprep.subr.mxu0 0.0
  %8850 = vmatpush1.msra.mxu0 0.0
  %8851 = vmatprep.subr.mxu0 0.0
  %8852 = vmatpush1.msra.mxu0 0.0
  %8853 = vmatprep.subr.mxu0 0.0
  %8854 = vmatpush1.msra.mxu0 0.0
  %8855 = vmatprep.subr.mxu0 0.0
  %8856 = vmatpush1.msra.mxu0 0.0
  %8857 = vmatprep.subr.mxu0 0.0
  %8858 = vmatpush1.msra.mxu0 0.0
  %8859 = vmatprep.subr.mxu0 0.0
  %8860 = vmatpush1.msra.mxu0 0.0
  %8861 = vmatprep.subr.mxu0 0.0
  %8862 = vmatpush1.msra.mxu0 0.0
  %8863 = vmatprep.subr.mxu0 0.0
  %8864 = vmatpush1.msra.mxu0 0.0
  %8865 = vmatprep.subr.mxu0 0.0
  %8866 = vmatpush1.msra.mxu0 0.0
  %8867 = vmatprep.subr.mxu0 0.0
  %8868 = vmatpush1.msra.mxu0 0.0
  %8869 = vmatprep.subr.mxu0 0.0
  %8870 = vmatpush1.msra.mxu0 0.0
  %8871 = vmatprep.subr.mxu0 0.0
  %8872 = vmatpush1.msra.mxu0 0.0
  %8873 = vmatprep.subr.mxu0 0.0
  %8874 = vmatpush1.msra.mxu0 0.0
  %8875 = vmatprep.subr.mxu0 0.0
  %8876 = vmatpush1.msra.mxu0 0.0
  %8877 = vmatprep.subr.mxu0 0.0
  %8878 = vmatpush1.msra.mxu0 0.0
  %8879 = vmatprep.subr.mxu0 0.0
  %8880 = vmatpush1.msra.mxu0 0.0
  %8881 = vmatprep.subr.mxu0 0.0
  %8882 = vmatpush1.msra.mxu0 0.0
  %8883 = vmatprep.subr.mxu0 0.0
  %8884 = vmatpush1.msra.mxu0 0.0
  %8885 = vmatprep.subr.mxu0 0.0
  %8886 = vmatpush1.msra.mxu0 0.0
  %8887 = vmatprep.subr.mxu0 0.0
  %8888 = vmatpush1.msra.mxu0 0.0
  %8889 = vmatprep.subr.mxu0 0.0
  %8890 = vmatpush1.msra.mxu0 0.0
  %8891 = vmatprep.subr.mxu0 0.0
  %8892 = vmatpush1.msra.mxu0 0.0
  %8893 = vmatprep.subr.mxu0 0.0
  %8894 = vmatpush1.msra.mxu0 0.0
  %8895 = vmatprep.subr.mxu0 0.0
  %8896 = vmatpush1.msra.mxu0 0.0
  %8897 = vmatprep.subr.mxu0 0.0
  %8898 = vmatpush1.msra.mxu0 0.0
  %8899 = vmatprep.subr.mxu0 0.0
  %8900 = vmatpush1.msra.mxu0 0.0
  %8901 = vmatprep.mubr.f32.mxu0 0.0
  %8902 = vmatmul.mubr.f32.gmra.mrb[0].mxu0 %v529
  %v8903 = vpop.f32.mrb[0].mxu0
  %v8904 = vadd.f32 0.0, %v8903
  %v8905 = vpop.f32.mrb[0].mxu0
  %v8906 = vadd.f32 0.0, %v8905
  %8907 = vdwg.mxu0
  %8908 = vmatprep.subr.mxu0 %v8832
  %8909 = vmatpush1.msra.mxu0 %v8831
  %8910 = vmatprep.subr.mxu0 0.0
  %8911 = vmatpush1.msra.mxu0 0.0
  %8912 = vmatprep.subr.mxu0 0.0
  %8913 = vmatpush1.msra.mxu0 0.0
  %8914 = vmatprep.subr.mxu0 0.0
  %8915 = vmatpush1.msra.mxu0 0.0
  %8916 = vmatprep.subr.mxu0 0.0
  %8917 = vmatpush1.msra.mxu0 0.0
  %8918 = vmatprep.subr.mxu0 0.0
  %8919 = vmatpush1.msra.mxu0 0.0
  %8920 = vmatprep.subr.mxu0 0.0
  %8921 = vmatpush1.msra.mxu0 0.0
  %8922 = vmatprep.subr.mxu0 0.0
  %8923 = vmatpush1.msra.mxu0 0.0
  %8924 = vmatprep.subr.mxu0 0.0
  %8925 = vmatpush1.msra.mxu0 0.0
  %8926 = vmatprep.subr.mxu0 0.0
  %8927 = vmatpush1.msra.mxu0 0.0
  %8928 = vmatprep.subr.mxu0 0.0
  %8929 = vmatpush1.msra.mxu0 0.0
  %8930 = vmatprep.subr.mxu0 0.0
  %8931 = vmatpush1.msra.mxu0 0.0
  %8932 = vmatprep.subr.mxu0 0.0
  %8933 = vmatpush1.msra.mxu0 0.0
  %8934 = vmatprep.subr.mxu0 0.0
  %8935 = vmatpush1.msra.mxu0 0.0
  %8936 = vmatprep.subr.mxu0 0.0
  %8937 = vmatpush1.msra.mxu0 0.0
  %8938 = vmatprep.subr.mxu0 0.0
  %8939 = vmatpush1.msra.mxu0 0.0
  %8940 = vmatprep.subr.mxu0 0.0
  %8941 = vmatpush1.msra.mxu0 0.0
  %8942 = vmatprep.subr.mxu0 0.0
  %8943 = vmatpush1.msra.mxu0 0.0
  %8944 = vmatprep.subr.mxu0 0.0
  %8945 = vmatpush1.msra.mxu0 0.0
  %8946 = vmatprep.subr.mxu0 0.0
  %8947 = vmatpush1.msra.mxu0 0.0
  %8948 = vmatprep.subr.mxu0 0.0
  %8949 = vmatpush1.msra.mxu0 0.0
  %8950 = vmatprep.subr.mxu0 0.0
  %8951 = vmatpush1.msra.mxu0 0.0
  %8952 = vmatprep.subr.mxu0 0.0
  %8953 = vmatpush1.msra.mxu0 0.0
  %8954 = vmatprep.subr.mxu0 0.0
  %8955 = vmatpush1.msra.mxu0 0.0
  %8956 = vmatprep.subr.mxu0 0.0
  %8957 = vmatpush1.msra.mxu0 0.0
  %8958 = vmatprep.subr.mxu0 0.0
  %8959 = vmatpush1.msra.mxu0 0.0
  %8960 = vmatprep.subr.mxu0 0.0
  %8961 = vmatpush1.msra.mxu0 0.0
  %8962 = vmatprep.subr.mxu0 0.0
  %8963 = vmatpush1.msra.mxu0 0.0
  %8964 = vmatprep.subr.mxu0 0.0
  %8965 = vmatpush1.msra.mxu0 0.0
  %8966 = vmatprep.subr.mxu0 0.0
  %8967 = vmatpush1.msra.mxu0 0.0
  %8968 = vmatprep.subr.mxu0 0.0
  %8969 = vmatpush1.msra.mxu0 0.0
  %8970 = vmatprep.subr.mxu0 0.0
  %8971 = vmatpush1.msra.mxu0 0.0
  %8972 = vmatprep.mubr.f32.mxu0 0.0
  %8973 = vmatmul.mubr.f32.gmra.mrb[0].mxu0 %v529
  %v8974 = vpop.f32.mrb[0].mxu0
  %v8975 = vadd.f32 0.0, %v8974
  %v8976 = vpop.f32.mrb[0].mxu0
  %v8977 = vadd.f32 0.0, %v8976
  %8978 = vdwg.mxu0
  %v8979 = vadd.f32 %v8817, %v8904
  %v8980 = vadd.f32 %v8818, %v8906
  %v8981 = vadd.f32 %v8819, %v8975
  %v8982 = vadd.f32 %v8820, %v8977
  %8983 = vrot.lane.b32.xlu0 %v8351, 124
  %v8984 = vpop.permute.xlu0 %8983
  %8985 = vrot.lane.b32.xlu0 %v8352, 124
  %v8986 = vpop.permute.xlu0 %8985
  %8987 = vrot.lane.b32.xlu0 %v8353, 124
  %v8988 = vpop.permute.xlu0 %8987
  %8989 = vrot.lane.b32.xlu0 %v8354, 124
  %v8990 = vpop.permute.xlu0 %8989
  %v8991 = vsel %vm689, %v8984, %v8986
  %v8992 = vsel %vm689, %v8986, %v8988
  %v8993 = vsel %vm689, %v8988, %v8990
  %v8994 = vsel %vm689, %v8990, %v4905
  %8999 = vmatprep.subr.mxu0 %v8992
  %9000 = vmatpush1.msra.mxu0 %v8991
  %9001 = vmatprep.subr.mxu0 0.0
  %9002 = vmatpush1.msra.mxu0 0.0
  %9003 = vmatprep.subr.mxu0 0.0
  %9004 = vmatpush1.msra.mxu0 0.0
  %9005 = vmatprep.subr.mxu0 0.0
  %9006 = vmatpush1.msra.mxu0 0.0
  %9007 = vmatprep.subr.mxu0 0.0
  %9008 = vmatpush1.msra.mxu0 0.0
  %9009 = vmatprep.subr.mxu0 0.0
  %9010 = vmatpush1.msra.mxu0 0.0
  %9011 = vmatprep.subr.mxu0 0.0
  %9012 = vmatpush1.msra.mxu0 0.0
  %9013 = vmatprep.subr.mxu0 0.0
  %9014 = vmatpush1.msra.mxu0 0.0
  %9015 = vmatprep.subr.mxu0 0.0
  %9016 = vmatpush1.msra.mxu0 0.0
  %9017 = vmatprep.subr.mxu0 0.0
  %9018 = vmatpush1.msra.mxu0 0.0
  %9019 = vmatprep.subr.mxu0 0.0
  %9020 = vmatpush1.msra.mxu0 0.0
  %9021 = vmatprep.subr.mxu0 0.0
  %9022 = vmatpush1.msra.mxu0 0.0
  %9023 = vmatprep.subr.mxu0 0.0
  %9024 = vmatpush1.msra.mxu0 0.0
  %9025 = vmatprep.subr.mxu0 0.0
  %9026 = vmatpush1.msra.mxu0 0.0
  %9027 = vmatprep.subr.mxu0 0.0
  %9028 = vmatpush1.msra.mxu0 0.0
  %9029 = vmatprep.subr.mxu0 0.0
  %9030 = vmatpush1.msra.mxu0 0.0
  %9031 = vmatprep.subr.mxu0 0.0
  %9032 = vmatpush1.msra.mxu0 0.0
  %9033 = vmatprep.subr.mxu0 0.0
  %9034 = vmatpush1.msra.mxu0 0.0
  %9035 = vmatprep.subr.mxu0 0.0
  %9036 = vmatpush1.msra.mxu0 0.0
  %9037 = vmatprep.subr.mxu0 0.0
  %9038 = vmatpush1.msra.mxu0 0.0
  %9039 = vmatprep.subr.mxu0 0.0
  %9040 = vmatpush1.msra.mxu0 0.0
  %9041 = vmatprep.subr.mxu0 0.0
  %9042 = vmatpush1.msra.mxu0 0.0
  %9043 = vmatprep.subr.mxu0 0.0
  %9044 = vmatpush1.msra.mxu0 0.0
  %9045 = vmatprep.subr.mxu0 0.0
  %9046 = vmatpush1.msra.mxu0 0.0
  %9047 = vmatprep.subr.mxu0 0.0
  %9048 = vmatpush1.msra.mxu0 0.0
  %9049 = vmatprep.subr.mxu0 0.0
  %9050 = vmatpush1.msra.mxu0 0.0
  %9051 = vmatprep.subr.mxu0 0.0
  %9052 = vmatpush1.msra.mxu0 0.0
  %9053 = vmatprep.subr.mxu0 0.0
  %9054 = vmatpush1.msra.mxu0 0.0
  %9055 = vmatprep.subr.mxu0 0.0
  %9056 = vmatpush1.msra.mxu0 0.0
  %9057 = vmatprep.subr.mxu0 0.0
  %9058 = vmatpush1.msra.mxu0 0.0
  %9059 = vmatprep.subr.mxu0 0.0
  %9060 = vmatpush1.msra.mxu0 0.0
  %9061 = vmatprep.subr.mxu0 0.0
  %9062 = vmatpush1.msra.mxu0 0.0
  %9063 = vmatprep.mubr.f32.mxu0 0.0
  %9064 = vmatmul.mubr.f32.gmra.mrb[0].mxu0 %v699
  %v9065 = vpop.f32.mrb[0].mxu0
  %v9066 = vadd.f32 0.0, %v9065
  %v9067 = vpop.f32.mrb[0].mxu0
  %v9068 = vadd.f32 0.0, %v9067
  %9069 = vdwg.mxu0
  %9070 = vmatprep.subr.mxu0 %v8994
  %9071 = vmatpush1.msra.mxu0 %v8993
  %9072 = vmatprep.subr.mxu0 0.0
  %9073 = vmatpush1.msra.mxu0 0.0
  %9074 = vmatprep.subr.mxu0 0.0
  %9075 = vmatpush1.msra.mxu0 0.0
  %9076 = vmatprep.subr.mxu0 0.0
  %9077 = vmatpush1.msra.mxu0 0.0
  %9078 = vmatprep.subr.mxu0 0.0
  %9079 = vmatpush1.msra.mxu0 0.0
  %9080 = vmatprep.subr.mxu0 0.0
  %9081 = vmatpush1.msra.mxu0 0.0
  %9082 = vmatprep.subr.mxu0 0.0
  %9083 = vmatpush1.msra.mxu0 0.0
  %9084 = vmatprep.subr.mxu0 0.0
  %9085 = vmatpush1.msra.mxu0 0.0
  %9086 = vmatprep.subr.mxu0 0.0
  %9087 = vmatpush1.msra.mxu0 0.0
  %9088 = vmatprep.subr.mxu0 0.0
  %9089 = vmatpush1.msra.mxu0 0.0
  %9090 = vmatprep.subr.mxu0 0.0
  %9091 = vmatpush1.msra.mxu0 0.0
  %9092 = vmatprep.subr.mxu0 0.0
  %9093 = vmatpush1.msra.mxu0 0.0
  %9094 = vmatprep.subr.mxu0 0.0
  %9095 = vmatpush1.msra.mxu0 0.0
  %9096 = vmatprep.subr.mxu0 0.0
  %9097 = vmatpush1.msra.mxu0 0.0
  %9098 = vmatprep.subr.mxu0 0.0
  %9099 = vmatpush1.msra.mxu0 0.0
  %9100 = vmatprep.subr.mxu0 0.0
  %9101 = vmatpush1.msra.mxu0 0.0
  %9102 = vmatprep.subr.mxu0 0.0
  %9103 = vmatpush1.msra.mxu0 0.0
  %9104 = vmatprep.subr.mxu0 0.0
  %9105 = vmatpush1.msra.mxu0 0.0
  %9106 = vmatprep.subr.mxu0 0.0
  %9107 = vmatpush1.msra.mxu0 0.0
  %9108 = vmatprep.subr.mxu0 0.0
  %9109 = vmatpush1.msra.mxu0 0.0
  %9110 = vmatprep.subr.mxu0 0.0
  %9111 = vmatpush1.msra.mxu0 0.0
  %9112 = vmatprep.subr.mxu0 0.0
  %9113 = vmatpush1.msra.mxu0 0.0
  %9114 = vmatprep.subr.mxu0 0.0
  %9115 = vmatpush1.msra.mxu0 0.0
  %9116 = vmatprep.subr.mxu0 0.0
  %9117 = vmatpush1.msra.mxu0 0.0
  %9118 = vmatprep.subr.mxu0 0.0
  %9119 = vmatpush1.msra.mxu0 0.0
  %9120 = vmatprep.subr.mxu0 0.0
  %9121 = vmatpush1.msra.mxu0 0.0
  %9122 = vmatprep.subr.mxu0 0.0
  %9123 = vmatpush1.msra.mxu0 0.0
  %9124 = vmatprep.subr.mxu0 0.0
  %9125 = vmatpush1.msra.mxu0 0.0
  %9126 = vmatprep.subr.mxu0 0.0
  %9127 = vmatpush1.msra.mxu0 0.0
  %9128 = vmatprep.subr.mxu0 0.0
  %9129 = vmatpush1.msra.mxu0 0.0
  %9130 = vmatprep.subr.mxu0 0.0
  %9131 = vmatpush1.msra.mxu0 0.0
  %9132 = vmatprep.subr.mxu0 0.0
  %9133 = vmatpush1.msra.mxu0 0.0
  %9134 = vmatprep.mubr.f32.mxu0 0.0
  %9135 = vmatmul.mubr.f32.gmra.mrb[0].mxu0 %v699
  %v9136 = vpop.f32.mrb[0].mxu0
  %v9137 = vadd.f32 0.0, %v9136
  %v9138 = vpop.f32.mrb[0].mxu0
  %v9139 = vadd.f32 0.0, %v9138
  %9140 = vdwg.mxu0
  %v9141 = vadd.f32 %v8979, %v9066
  %v9142 = vadd.f32 %v8980, %v9068
  %v9143 = vadd.f32 %v8981, %v9137
  %v9144 = vadd.f32 %v8982, %v9139
  %9145 = vrot.lane.b32.xlu0 %v8351, 112
  %v9146 = vpop.permute.xlu0 %9145
  %9147 = vrot.lane.b32.xlu0 %v8352, 112
  %v9148 = vpop.permute.xlu0 %9147
  %9149 = vrot.lane.b32.xlu0 %v8353, 112
  %v9150 = vpop.permute.xlu0 %9149
  %9151 = vrot.lane.b32.xlu0 %v8354, 112
  %v9152 = vpop.permute.xlu0 %9151
  %v9153 = vsel %vm859, %v9146, %v9148
  %v9154 = vsel %vm859, %v9148, %v9150
  %v9155 = vsel %vm859, %v9150, %v9152
  %v9156 = vsel %vm859, %v9152, %v5069
  %9161 = vmatprep.subr.mxu0 %v9154
  %9162 = vmatpush1.msra.mxu0 %v9153
  %9163 = vmatprep.subr.mxu0 0.0
  %9164 = vmatpush1.msra.mxu0 0.0
  %9165 = vmatprep.subr.mxu0 0.0
  %9166 = vmatpush1.msra.mxu0 0.0
  %9167 = vmatprep.subr.mxu0 0.0
  %9168 = vmatpush1.msra.mxu0 0.0
  %9169 = vmatprep.subr.mxu0 0.0
  %9170 = vmatpush1.msra.mxu0 0.0
  %9171 = vmatprep.subr.mxu0 0.0
  %9172 = vmatpush1.msra.mxu0 0.0
  %9173 = vmatprep.subr.mxu0 0.0
  %9174 = vmatpush1.msra.mxu0 0.0
  %9175 = vmatprep.subr.mxu0 0.0
  %9176 = vmatpush1.msra.mxu0 0.0
  %9177 = vmatprep.subr.mxu0 0.0
  %9178 = vmatpush1.msra.mxu0 0.0
  %9179 = vmatprep.subr.mxu0 0.0
  %9180 = vmatpush1.msra.mxu0 0.0
  %9181 = vmatprep.subr.mxu0 0.0
  %9182 = vmatpush1.msra.mxu0 0.0
  %9183 = vmatprep.subr.mxu0 0.0
  %9184 = vmatpush1.msra.mxu0 0.0
  %9185 = vmatprep.subr.mxu0 0.0
  %9186 = vmatpush1.msra.mxu0 0.0
  %9187 = vmatprep.subr.mxu0 0.0
  %9188 = vmatpush1.msra.mxu0 0.0
  %9189 = vmatprep.subr.mxu0 0.0
  %9190 = vmatpush1.msra.mxu0 0.0
  %9191 = vmatprep.subr.mxu0 0.0
  %9192 = vmatpush1.msra.mxu0 0.0
  %9193 = vmatprep.subr.mxu0 0.0
  %9194 = vmatpush1.msra.mxu0 0.0
  %9195 = vmatprep.subr.mxu0 0.0
  %9196 = vmatpush1.msra.mxu0 0.0
  %9197 = vmatprep.subr.mxu0 0.0
  %9198 = vmatpush1.msra.mxu0 0.0
  %9199 = vmatprep.subr.mxu0 0.0
  %9200 = vmatpush1.msra.mxu0 0.0
  %9201 = vmatprep.subr.mxu0 0.0
  %9202 = vmatpush1.msra.mxu0 0.0
  %9203 = vmatprep.subr.mxu0 0.0
  %9204 = vmatpush1.msra.mxu0 0.0
  %9205 = vmatprep.subr.mxu0 0.0
  %9206 = vmatpush1.msra.mxu0 0.0
  %9207 = vmatprep.subr.mxu0 0.0
  %9208 = vmatpush1.msra.mxu0 0.0
  %9209 = vmatprep.subr.mxu0 0.0
  %9210 = vmatpush1.msra.mxu0 0.0
  %9211 = vmatprep.subr.mxu0 0.0
  %9212 = vmatpush1.msra.mxu0 0.0
  %9213 = vmatprep.subr.mxu0 0.0
  %9214 = vmatpush1.msra.mxu0 0.0
  %9215 = vmatprep.subr.mxu0 0.0
  %9216 = vmatpush1.msra.mxu0 0.0
  %9217 = vmatprep.subr.mxu0 0.0
  %9218 = vmatpush1.msra.mxu0 0.0
  %9219 = vmatprep.subr.mxu0 0.0
  %9220 = vmatpush1.msra.mxu0 0.0
  %9221 = vmatprep.subr.mxu0 0.0
  %9222 = vmatpush1.msra.mxu0 0.0
  %9223 = vmatprep.subr.mxu0 0.0
  %9224 = vmatpush1.msra.mxu0 0.0
  %9225 = vmatprep.mubr.f32.mxu0 0.0
  %9226 = vmatmul.mubr.f32.gmra.mrb[0].mxu0 %v869
  %v9227 = vpop.f32.mrb[0].mxu0
  %v9228 = vadd.f32 0.0, %v9227
  %v9229 = vpop.f32.mrb[0].mxu0
  %v9230 = vadd.f32 0.0, %v9229
  %9231 = vdwg.mxu0
  %9232 = vmatprep.subr.mxu0 %v9156
  %9233 = vmatpush1.msra.mxu0 %v9155
  %9234 = vmatprep.subr.mxu0 0.0
  %9235 = vmatpush1.msra.mxu0 0.0
  %9236 = vmatprep.subr.mxu0 0.0
  %9237 = vmatpush1.msra.mxu0 0.0
  %9238 = vmatprep.subr.mxu0 0.0
  %9239 = vmatpush1.msra.mxu0 0.0
  %9240 = vmatprep.subr.mxu0 0.0
  %9241 = vmatpush1.msra.mxu0 0.0
  %9242 = vmatprep.subr.mxu0 0.0
  %9243 = vmatpush1.msra.mxu0 0.0
  %9244 = vmatprep.subr.mxu0 0.0
  %9245 = vmatpush1.msra.mxu0 0.0
  %9246 = vmatprep.subr.mxu0 0.0
  %9247 = vmatpush1.msra.mxu0 0.0
  %9248 = vmatprep.subr.mxu0 0.0
  %9249 = vmatpush1.msra.mxu0 0.0
  %9250 = vmatprep.subr.mxu0 0.0
  %9251 = vmatpush1.msra.mxu0 0.0
  %9252 = vmatprep.subr.mxu0 0.0
  %9253 = vmatpush1.msra.mxu0 0.0
  %9254 = vmatprep.subr.mxu0 0.0
  %9255 = vmatpush1.msra.mxu0 0.0
  %9256 = vmatprep.subr.mxu0 0.0
  %9257 = vmatpush1.msra.mxu0 0.0
  %9258 = vmatprep.subr.mxu0 0.0
  %9259 = vmatpush1.msra.mxu0 0.0
  %9260 = vmatprep.subr.mxu0 0.0
  %9261 = vmatpush1.msra.mxu0 0.0
  %9262 = vmatprep.subr.mxu0 0.0
  %9263 = vmatpush1.msra.mxu0 0.0
  %9264 = vmatprep.subr.mxu0 0.0
  %9265 = vmatpush1.msra.mxu0 0.0
  %9266 = vmatprep.subr.mxu0 0.0
  %9267 = vmatpush1.msra.mxu0 0.0
  %9268 = vmatprep.subr.mxu0 0.0
  %9269 = vmatpush1.msra.mxu0 0.0
  %9270 = vmatprep.subr.mxu0 0.0
  %9271 = vmatpush1.msra.mxu0 0.0
  %9272 = vmatprep.subr.mxu0 0.0
  %9273 = vmatpush1.msra.mxu0 0.0
  %9274 = vmatprep.subr.mxu0 0.0
  %9275 = vmatpush1.msra.mxu0 0.0
  %9276 = vmatprep.subr.mxu0 0.0
  %9277 = vmatpush1.msra.mxu0 0.0
  %9278 = vmatprep.subr.mxu0 0.0
  %9279 = vmatpush1.msra.mxu0 0.0
  %9280 = vmatprep.subr.mxu0 0.0
  %9281 = vmatpush1.msra.mxu0 0.0
  %9282 = vmatprep.subr.mxu0 0.0
  %9283 = vmatpush1.msra.mxu0 0.0
  %9284 = vmatprep.subr.mxu0 0.0
  %9285 = vmatpush1.msra.mxu0 0.0
  %9286 = vmatprep.subr.mxu0 0.0
  %9287 = vmatpush1.msra.mxu0 0.0
  %9288 = vmatprep.subr.mxu0 0.0
  %9289 = vmatpush1.msra.mxu0 0.0
  %9290 = vmatprep.subr.mxu0 0.0
  %9291 = vmatpush1.msra.mxu0 0.0
  %9292 = vmatprep.subr.mxu0 0.0
  %9293 = vmatpush1.msra.mxu0 0.0
  %9294 = vmatprep.subr.mxu0 0.0
  %9295 = vmatpush1.msra.mxu0 0.0
  %9296 = vmatprep.mubr.f32.mxu0 0.0
  %9297 = vmatmul.mubr.f32.gmra.mrb[0].mxu0 %v869
  %v9298 = vpop.f32.mrb[0].mxu0
  %v9299 = vadd.f32 0.0, %v9298
  %v9300 = vpop.f32.mrb[0].mxu0
  %v9301 = vadd.f32 0.0, %v9300
  %9302 = vdwg.mxu0
  %v9303 = vadd.f32 %v9141, %v9228
  %v9304 = vadd.f32 %v9142, %v9230
  %v9305 = vadd.f32 %v9143, %v9299
  %v9306 = vadd.f32 %v9144, %v9301
  %9307 = vrot.lane.b32.xlu0 %v8351, 111
  %v9308 = vpop.permute.xlu0 %9307
  %9309 = vrot.lane.b32.xlu0 %v8352, 111
  %v9310 = vpop.permute.xlu0 %9309
  %9311 = vrot.lane.b32.xlu0 %v8353, 111
  %v9312 = vpop.permute.xlu0 %9311
  %9313 = vrot.lane.b32.xlu0 %v8354, 111
  %v9314 = vpop.permute.xlu0 %9313
  %v9315 = vsel %vm1029, %v9308, %v9310
  %v9316 = vsel %vm1029, %v9310, %v9312
  %v9317 = vsel %vm1029, %v9312, %v9314
  %v9318 = vsel %vm1029, %v9314, %v5233
  %9323 = vmatprep.subr.mxu0 %v9316
  %9324 = vmatpush1.msra.mxu0 %v9315
  %9325 = vmatprep.subr.mxu0 0.0
  %9326 = vmatpush1.msra.mxu0 0.0
  %9327 = vmatprep.subr.mxu0 0.0
  %9328 = vmatpush1.msra.mxu0 0.0
  %9329 = vmatprep.subr.mxu0 0.0
  %9330 = vmatpush1.msra.mxu0 0.0
  %9331 = vmatprep.subr.mxu0 0.0
  %9332 = vmatpush1.msra.mxu0 0.0
  %9333 = vmatprep.subr.mxu0 0.0
  %9334 = vmatpush1.msra.mxu0 0.0
  %9335 = vmatprep.subr.mxu0 0.0
  %9336 = vmatpush1.msra.mxu0 0.0
  %9337 = vmatprep.subr.mxu0 0.0
  %9338 = vmatpush1.msra.mxu0 0.0
  %9339 = vmatprep.subr.mxu0 0.0
  %9340 = vmatpush1.msra.mxu0 0.0
  %9341 = vmatprep.subr.mxu0 0.0
  %9342 = vmatpush1.msra.mxu0 0.0
  %9343 = vmatprep.subr.mxu0 0.0
  %9344 = vmatpush1.msra.mxu0 0.0
  %9345 = vmatprep.subr.mxu0 0.0
  %9346 = vmatpush1.msra.mxu0 0.0
  %9347 = vmatprep.subr.mxu0 0.0
  %9348 = vmatpush1.msra.mxu0 0.0
  %9349 = vmatprep.subr.mxu0 0.0
  %9350 = vmatpush1.msra.mxu0 0.0
  %9351 = vmatprep.subr.mxu0 0.0
  %9352 = vmatpush1.msra.mxu0 0.0
  %9353 = vmatprep.subr.mxu0 0.0
  %9354 = vmatpush1.msra.mxu0 0.0
  %9355 = vmatprep.subr.mxu0 0.0
  %9356 = vmatpush1.msra.mxu0 0.0
  %9357 = vmatprep.subr.mxu0 0.0
  %9358 = vmatpush1.msra.mxu0 0.0
  %9359 = vmatprep.subr.mxu0 0.0
  %9360 = vmatpush1.msra.mxu0 0.0
  %9361 = vmatprep.subr.mxu0 0.0
  %9362 = vmatpush1.msra.mxu0 0.0
  %9363 = vmatprep.subr.mxu0 0.0
  %9364 = vmatpush1.msra.mxu0 0.0
  %9365 = vmatprep.subr.mxu0 0.0
  %9366 = vmatpush1.msra.mxu0 0.0
  %9367 = vmatprep.subr.mxu0 0.0
  %9368 = vmatpush1.msra.mxu0 0.0
  %9369 = vmatprep.subr.mxu0 0.0
  %9370 = vmatpush1.msra.mxu0 0.0
  %9371 = vmatprep.subr.mxu0 0.0
  %9372 = vmatpush1.msra.mxu0 0.0
  %9373 = vmatprep.subr.mxu0 0.0
  %9374 = vmatpush1.msra.mxu0 0.0
  %9375 = vmatprep.subr.mxu0 0.0
  %9376 = vmatpush1.msra.mxu0 0.0
  %9377 = vmatprep.subr.mxu0 0.0
  %9378 = vmatpush1.msra.mxu0 0.0
  %9379 = vmatprep.subr.mxu0 0.0
  %9380 = vmatpush1.msra.mxu0 0.0
  %9381 = vmatprep.subr.mxu0 0.0
  %9382 = vmatpush1.msra.mxu0 0.0
  %9383 = vmatprep.subr.mxu0 0.0
  %9384 = vmatpush1.msra.mxu0 0.0
  %9385 = vmatprep.subr.mxu0 0.0
  %9386 = vmatpush1.msra.mxu0 0.0
  %9387 = vmatprep.mubr.f32.mxu0 0.0
  %9388 = vmatmul.mubr.f32.gmra.mrb[0].mxu0 %v1039
  %v9389 = vpop.f32.mrb[0].mxu0
  %v9390 = vadd.f32 0.0, %v9389
  %v9391 = vpop.f32.mrb[0].mxu0
  %v9392 = vadd.f32 0.0, %v9391
  %9393 = vdwg.mxu0
  %9394 = vmatprep.subr.mxu0 %v9318
  %9395 = vmatpush1.msra.mxu0 %v9317
  %9396 = vmatprep.subr.mxu0 0.0
  %9397 = vmatpush1.msra.mxu0 0.0
  %9398 = vmatprep.subr.mxu0 0.0
  %9399 = vmatpush1.msra.mxu0 0.0
  %9400 = vmatprep.subr.mxu0 0.0
  %9401 = vmatpush1.msra.mxu0 0.0
  %9402 = vmatprep.subr.mxu0 0.0
  %9403 = vmatpush1.msra.mxu0 0.0
  %9404 = vmatprep.subr.mxu0 0.0
  %9405 = vmatpush1.msra.mxu0 0.0
  %9406 = vmatprep.subr.mxu0 0.0
  %9407 = vmatpush1.msra.mxu0 0.0
  %9408 = vmatprep.subr.mxu0 0.0
  %9409 = vmatpush1.msra.mxu0 0.0
  %9410 = vmatprep.subr.mxu0 0.0
  %9411 = vmatpush1.msra.mxu0 0.0
  %9412 = vmatprep.subr.mxu0 0.0
  %9413 = vmatpush1.msra.mxu0 0.0
  %9414 = vmatprep.subr.mxu0 0.0
  %9415 = vmatpush1.msra.mxu0 0.0
  %9416 = vmatprep.subr.mxu0 0.0
  %9417 = vmatpush1.msra.mxu0 0.0
  %9418 = vmatprep.subr.mxu0 0.0
  %9419 = vmatpush1.msra.mxu0 0.0
  %9420 = vmatprep.subr.mxu0 0.0
  %9421 = vmatpush1.msra.mxu0 0.0
  %9422 = vmatprep.subr.mxu0 0.0
  %9423 = vmatpush1.msra.mxu0 0.0
  %9424 = vmatprep.subr.mxu0 0.0
  %9425 = vmatpush1.msra.mxu0 0.0
  %9426 = vmatprep.subr.mxu0 0.0
  %9427 = vmatpush1.msra.mxu0 0.0
  %9428 = vmatprep.subr.mxu0 0.0
  %9429 = vmatpush1.msra.mxu0 0.0
  %9430 = vmatprep.subr.mxu0 0.0
  %9431 = vmatpush1.msra.mxu0 0.0
  %9432 = vmatprep.subr.mxu0 0.0
  %9433 = vmatpush1.msra.mxu0 0.0
  %9434 = vmatprep.subr.mxu0 0.0
  %9435 = vmatpush1.msra.mxu0 0.0
  %9436 = vmatprep.subr.mxu0 0.0
  %9437 = vmatpush1.msra.mxu0 0.0
  %9438 = vmatprep.subr.mxu0 0.0
  %9439 = vmatpush1.msra.mxu0 0.0
  %9440 = vmatprep.subr.mxu0 0.0
  %9441 = vmatpush1.msra.mxu0 0.0
  %9442 = vmatprep.subr.mxu0 0.0
  %9443 = vmatpush1.msra.mxu0 0.0
  %9444 = vmatprep.subr.mxu0 0.0
  %9445 = vmatpush1.msra.mxu0 0.0
  %9446 = vmatprep.subr.mxu0 0.0
  %9447 = vmatpush1.msra.mxu0 0.0
  %9448 = vmatprep.subr.mxu0 0.0
  %9449 = vmatpush1.msra.mxu0 0.0
  %9450 = vmatprep.subr.mxu0 0.0
  %9451 = vmatpush1.msra.mxu0 0.0
  %9452 = vmatprep.subr.mxu0 0.0
  %9453 = vmatpush1.msra.mxu0 0.0
  %9454 = vmatprep.subr.mxu0 0.0
  %9455 = vmatpush1.msra.mxu0 0.0
  %9456 = vmatprep.subr.mxu0 0.0
  %9457 = vmatpush1.msra.mxu0 0.0
  %9458 = vmatprep.mubr.f32.mxu0 0.0
  %9459 = vmatmul.mubr.f32.gmra.mrb[0].mxu0 %v1039
  %v9460 = vpop.f32.mrb[0].mxu0
  %v9461 = vadd.f32 0.0, %v9460
  %v9462 = vpop.f32.mrb[0].mxu0
  %v9463 = vadd.f32 0.0, %v9462
  %9464 = vdwg.mxu0
  %v9465 = vadd.f32 %v9303, %v9390
  %v9466 = vadd.f32 %v9304, %v9392
  %v9467 = vadd.f32 %v9305, %v9461
  %v9468 = vadd.f32 %v9306, %v9463
  %9469 = vrot.lane.b32.xlu0 %v8351, 110
  %v9470 = vpop.permute.xlu0 %9469
  %9471 = vrot.lane.b32.xlu0 %v8352, 110
  %v9472 = vpop.permute.xlu0 %9471
  %9473 = vrot.lane.b32.xlu0 %v8353, 110
  %v9474 = vpop.permute.xlu0 %9473
  %9475 = vrot.lane.b32.xlu0 %v8354, 110
  %v9476 = vpop.permute.xlu0 %9475
  %v9477 = vsel %vm1199, %v9470, %v9472
  %v9478 = vsel %vm1199, %v9472, %v9474
  %v9479 = vsel %vm1199, %v9474, %v9476
  %v9480 = vsel %vm1199, %v9476, %v5397
  %9485 = vmatprep.subr.mxu0 %v9478
  %9486 = vmatpush1.msra.mxu0 %v9477
  %9487 = vmatprep.subr.mxu0 0.0
  %9488 = vmatpush1.msra.mxu0 0.0
  %9489 = vmatprep.subr.mxu0 0.0
  %9490 = vmatpush1.msra.mxu0 0.0
  %9491 = vmatprep.subr.mxu0 0.0
  %9492 = vmatpush1.msra.mxu0 0.0
  %9493 = vmatprep.subr.mxu0 0.0
  %9494 = vmatpush1.msra.mxu0 0.0
  %9495 = vmatprep.subr.mxu0 0.0
  %9496 = vmatpush1.msra.mxu0 0.0
  %9497 = vmatprep.subr.mxu0 0.0
  %9498 = vmatpush1.msra.mxu0 0.0
  %9499 = vmatprep.subr.mxu0 0.0
  %9500 = vmatpush1.msra.mxu0 0.0
  %9501 = vmatprep.subr.mxu0 0.0
  %9502 = vmatpush1.msra.mxu0 0.0
  %9503 = vmatprep.subr.mxu0 0.0
  %9504 = vmatpush1.msra.mxu0 0.0
  %9505 = vmatprep.subr.mxu0 0.0
  %9506 = vmatpush1.msra.mxu0 0.0
  %9507 = vmatprep.subr.mxu0 0.0
  %9508 = vmatpush1.msra.mxu0 0.0
  %9509 = vmatprep.subr.mxu0 0.0
  %9510 = vmatpush1.msra.mxu0 0.0
  %9511 = vmatprep.subr.mxu0 0.0
  %9512 = vmatpush1.msra.mxu0 0.0
  %9513 = vmatprep.subr.mxu0 0.0
  %9514 = vmatpush1.msra.mxu0 0.0
  %9515 = vmatprep.subr.mxu0 0.0
  %9516 = vmatpush1.msra.mxu0 0.0
  %9517 = vmatprep.subr.mxu0 0.0
  %9518 = vmatpush1.msra.mxu0 0.0
  %9519 = vmatprep.subr.mxu0 0.0
  %9520 = vmatpush1.msra.mxu0 0.0
  %9521 = vmatprep.subr.mxu0 0.0
  %9522 = vmatpush1.msra.mxu0 0.0
  %9523 = vmatprep.subr.mxu0 0.0
  %9524 = vmatpush1.msra.mxu0 0.0
  %9525 = vmatprep.subr.mxu0 0.0
  %9526 = vmatpush1.msra.mxu0 0.0
  %9527 = vmatprep.subr.mxu0 0.0
  %9528 = vmatpush1.msra.mxu0 0.0
  %9529 = vmatprep.subr.mxu0 0.0
  %9530 = vmatpush1.msra.mxu0 0.0
  %9531 = vmatprep.subr.mxu0 0.0
  %9532 = vmatpush1.msra.mxu0 0.0
  %9533 = vmatprep.subr.mxu0 0.0
  %9534 = vmatpush1.msra.mxu0 0.0
  %9535 = vmatprep.subr.mxu0 0.0
  %9536 = vmatpush1.msra.mxu0 0.0
  %9537 = vmatprep.subr.mxu0 0.0
  %9538 = vmatpush1.msra.mxu0 0.0
  %9539 = vmatprep.subr.mxu0 0.0
  %9540 = vmatpush1.msra.mxu0 0.0
  %9541 = vmatprep.subr.mxu0 0.0
  %9542 = vmatpush1.msra.mxu0 0.0
  %9543 = vmatprep.subr.mxu0 0.0
  %9544 = vmatpush1.msra.mxu0 0.0
  %9545 = vmatprep.subr.mxu0 0.0
  %9546 = vmatpush1.msra.mxu0 0.0
  %9547 = vmatprep.subr.mxu0 0.0
  %9548 = vmatpush1.msra.mxu0 0.0
  %9549 = vmatprep.mubr.f32.mxu0 0.0
  %9550 = vmatmul.mubr.f32.gmra.mrb[0].mxu0 %v1209
  %v9551 = vpop.f32.mrb[0].mxu0
  %v9552 = vadd.f32 0.0, %v9551
  %v9553 = vpop.f32.mrb[0].mxu0
  %v9554 = vadd.f32 0.0, %v9553
  %9555 = vdwg.mxu0
  %9556 = vmatprep.subr.mxu0 %v9480
  %9557 = vmatpush1.msra.mxu0 %v9479
  %9558 = vmatprep.subr.mxu0 0.0
  %9559 = vmatpush1.msra.mxu0 0.0
  %9560 = vmatprep.subr.mxu0 0.0
  %9561 = vmatpush1.msra.mxu0 0.0
  %9562 = vmatprep.subr.mxu0 0.0
  %9563 = vmatpush1.msra.mxu0 0.0
  %9564 = vmatprep.subr.mxu0 0.0
  %9565 = vmatpush1.msra.mxu0 0.0
  %9566 = vmatprep.subr.mxu0 0.0
  %9567 = vmatpush1.msra.mxu0 0.0
  %9568 = vmatprep.subr.mxu0 0.0
  %9569 = vmatpush1.msra.mxu0 0.0
  %9570 = vmatprep.subr.mxu0 0.0
  %9571 = vmatpush1.msra.mxu0 0.0
  %9572 = vmatprep.subr.mxu0 0.0
  %9573 = vmatpush1.msra.mxu0 0.0
  %9574 = vmatprep.subr.mxu0 0.0
  %9575 = vmatpush1.msra.mxu0 0.0
  %9576 = vmatprep.subr.mxu0 0.0
  %9577 = vmatpush1.msra.mxu0 0.0
  %9578 = vmatprep.subr.mxu0 0.0
  %9579 = vmatpush1.msra.mxu0 0.0
  %9580 = vmatprep.subr.mxu0 0.0
  %9581 = vmatpush1.msra.mxu0 0.0
  %9582 = vmatprep.subr.mxu0 0.0
  %9583 = vmatpush1.msra.mxu0 0.0
  %9584 = vmatprep.subr.mxu0 0.0
  %9585 = vmatpush1.msra.mxu0 0.0
  %9586 = vmatprep.subr.mxu0 0.0
  %9587 = vmatpush1.msra.mxu0 0.0
  %9588 = vmatprep.subr.mxu0 0.0
  %9589 = vmatpush1.msra.mxu0 0.0
  %9590 = vmatprep.subr.mxu0 0.0
  %9591 = vmatpush1.msra.mxu0 0.0
  %9592 = vmatprep.subr.mxu0 0.0
  %9593 = vmatpush1.msra.mxu0 0.0
  %9594 = vmatprep.subr.mxu0 0.0
  %9595 = vmatpush1.msra.mxu0 0.0
  %9596 = vmatprep.subr.mxu0 0.0
  %9597 = vmatpush1.msra.mxu0 0.0
  %9598 = vmatprep.subr.mxu0 0.0
  %9599 = vmatpush1.msra.mxu0 0.0
  %9600 = vmatprep.subr.mxu0 0.0
  %9601 = vmatpush1.msra.mxu0 0.0
  %9602 = vmatprep.subr.mxu0 0.0
  %9603 = vmatpush1.msra.mxu0 0.0
  %9604 = vmatprep.subr.mxu0 0.0
  %9605 = vmatpush1.msra.mxu0 0.0
  %9606 = vmatprep.subr.mxu0 0.0
  %9607 = vmatpush1.msra.mxu0 0.0
  %9608 = vmatprep.subr.mxu0 0.0
  %9609 = vmatpush1.msra.mxu0 0.0
  %9610 = vmatprep.subr.mxu0 0.0
  %9611 = vmatpush1.msra.mxu0 0.0
  %9612 = vmatprep.subr.mxu0 0.0
  %9613 = vmatpush1.msra.mxu0 0.0
  %9614 = vmatprep.subr.mxu0 0.0
  %9615 = vmatpush1.msra.mxu0 0.0
  %9616 = vmatprep.subr.mxu0 0.0
  %9617 = vmatpush1.msra.mxu0 0.0
  %9618 = vmatprep.subr.mxu0 0.0
  %9619 = vmatpush1.msra.mxu0 0.0
  %9620 = vmatprep.mubr.f32.mxu0 0.0
  %9621 = vmatmul.mubr.f32.gmra.mrb[0].mxu0 %v1209
  %v9622 = vpop.f32.mrb[0].mxu0
  %v9623 = vadd.f32 0.0, %v9622
  %v9624 = vpop.f32.mrb[0].mxu0
  %v9625 = vadd.f32 0.0, %v9624
  %9626 = vdwg.mxu0
  %v9627 = vadd.f32 %v9465, %v9552
  %v9628 = vadd.f32 %v9466, %v9554
  %v9629 = vadd.f32 %v9467, %v9623
  %v9630 = vadd.f32 %v9468, %v9625
  %9631 = vrot.lane.b32.xlu0 %v8351, 109
  %v9632 = vpop.permute.xlu0 %9631
  %9633 = vrot.lane.b32.xlu0 %v8352, 109
  %v9634 = vpop.permute.xlu0 %9633
  %9635 = vrot.lane.b32.xlu0 %v8353, 109
  %v9636 = vpop.permute.xlu0 %9635
  %9637 = vrot.lane.b32.xlu0 %v8354, 109
  %v9638 = vpop.permute.xlu0 %9637
  %v9639 = vsel %vm1369, %v9632, %v9634
  %v9640 = vsel %vm1369, %v9634, %v9636
  %v9641 = vsel %vm1369, %v9636, %v9638
  %v9642 = vsel %vm1369, %v9638, %v5561
  %9647 = vmatprep.subr.mxu0 %v9640
  %9648 = vmatpush1.msra.mxu0 %v9639
  %9649 = vmatprep.subr.mxu0 0.0
  %9650 = vmatpush1.msra.mxu0 0.0
  %9651 = vmatprep.subr.mxu0 0.0
  %9652 = vmatpush1.msra.mxu0 0.0
  %9653 = vmatprep.subr.mxu0 0.0
  %9654 = vmatpush1.msra.mxu0 0.0
  %9655 = vmatprep.subr.mxu0 0.0
  %9656 = vmatpush1.msra.mxu0 0.0
  %9657 = vmatprep.subr.mxu0 0.0
  %9658 = vmatpush1.msra.mxu0 0.0
  %9659 = vmatprep.subr.mxu0 0.0
  %9660 = vmatpush1.msra.mxu0 0.0
  %9661 = vmatprep.subr.mxu0 0.0
  %9662 = vmatpush1.msra.mxu0 0.0
  %9663 = vmatprep.subr.mxu0 0.0
  %9664 = vmatpush1.msra.mxu0 0.0
  %9665 = vmatprep.subr.mxu0 0.0
  %9666 = vmatpush1.msra.mxu0 0.0
  %9667 = vmatprep.subr.mxu0 0.0
  %9668 = vmatpush1.msra.mxu0 0.0
  %9669 = vmatprep.subr.mxu0 0.0
  %9670 = vmatpush1.msra.mxu0 0.0
  %9671 = vmatprep.subr.mxu0 0.0
  %9672 = vmatpush1.msra.mxu0 0.0
  %9673 = vmatprep.subr.mxu0 0.0
  %9674 = vmatpush1.msra.mxu0 0.0
  %9675 = vmatprep.subr.mxu0 0.0
  %9676 = vmatpush1.msra.mxu0 0.0
  %9677 = vmatprep.subr.mxu0 0.0
  %9678 = vmatpush1.msra.mxu0 0.0
  %9679 = vmatprep.subr.mxu0 0.0
  %9680 = vmatpush1.msra.mxu0 0.0
  %9681 = vmatprep.subr.mxu0 0.0
  %9682 = vmatpush1.msra.mxu0 0.0
  %9683 = vmatprep.subr.mxu0 0.0
  %9684 = vmatpush1.msra.mxu0 0.0
  %9685 = vmatprep.subr.mxu0 0.0
  %9686 = vmatpush1.msra.mxu0 0.0
  %9687 = vmatprep.subr.mxu0 0.0
  %9688 = vmatpush1.msra.mxu0 0.0
  %9689 = vmatprep.subr.mxu0 0.0
  %9690 = vmatpush1.msra.mxu0 0.0
  %9691 = vmatprep.subr.mxu0 0.0
  %9692 = vmatpush1.msra.mxu0 0.0
  %9693 = vmatprep.subr.mxu0 0.0
  %9694 = vmatpush1.msra.mxu0 0.0
  %9695 = vmatprep.subr.mxu0 0.0
  %9696 = vmatpush1.msra.mxu0 0.0
  %9697 = vmatprep.subr.mxu0 0.0
  %9698 = vmatpush1.msra.mxu0 0.0
  %9699 = vmatprep.subr.mxu0 0.0
  %9700 = vmatpush1.msra.mxu0 0.0
  %9701 = vmatprep.subr.mxu0 0.0
  %9702 = vmatpush1.msra.mxu0 0.0
  %9703 = vmatprep.subr.mxu0 0.0
  %9704 = vmatpush1.msra.mxu0 0.0
  %9705 = vmatprep.subr.mxu0 0.0
  %9706 = vmatpush1.msra.mxu0 0.0
  %9707 = vmatprep.subr.mxu0 0.0
  %9708 = vmatpush1.msra.mxu0 0.0
  %9709 = vmatprep.subr.mxu0 0.0
  %9710 = vmatpush1.msra.mxu0 0.0
  %9711 = vmatprep.mubr.f32.mxu0 0.0
  %9712 = vmatmul.mubr.f32.gmra.mrb[0].mxu0 %v1379
  %v9713 = vpop.f32.mrb[0].mxu0
  %v9714 = vadd.f32 0.0, %v9713
  %v9715 = vpop.f32.mrb[0].mxu0
  %v9716 = vadd.f32 0.0, %v9715
  %9717 = vdwg.mxu0
  %9718 = vmatprep.subr.mxu0 %v9642
  %9719 = vmatpush1.msra.mxu0 %v9641
  %9720 = vmatprep.subr.mxu0 0.0
  %9721 = vmatpush1.msra.mxu0 0.0
  %9722 = vmatprep.subr.mxu0 0.0
  %9723 = vmatpush1.msra.mxu0 0.0
  %9724 = vmatprep.subr.mxu0 0.0
  %9725 = vmatpush1.msra.mxu0 0.0
  %9726 = vmatprep.subr.mxu0 0.0
  %9727 = vmatpush1.msra.mxu0 0.0
  %9728 = vmatprep.subr.mxu0 0.0
  %9729 = vmatpush1.msra.mxu0 0.0
  %9730 = vmatprep.subr.mxu0 0.0
  %9731 = vmatpush1.msra.mxu0 0.0
  %9732 = vmatprep.subr.mxu0 0.0
  %9733 = vmatpush1.msra.mxu0 0.0
  %9734 = vmatprep.subr.mxu0 0.0
  %9735 = vmatpush1.msra.mxu0 0.0
  %9736 = vmatprep.subr.mxu0 0.0
  %9737 = vmatpush1.msra.mxu0 0.0
  %9738 = vmatprep.subr.mxu0 0.0
  %9739 = vmatpush1.msra.mxu0 0.0
  %9740 = vmatprep.subr.mxu0 0.0
  %9741 = vmatpush1.msra.mxu0 0.0
  %9742 = vmatprep.subr.mxu0 0.0
  %9743 = vmatpush1.msra.mxu0 0.0
  %9744 = vmatprep.subr.mxu0 0.0
  %9745 = vmatpush1.msra.mxu0 0.0
  %9746 = vmatprep.subr.mxu0 0.0
  %9747 = vmatpush1.msra.mxu0 0.0
  %9748 = vmatprep.subr.mxu0 0.0
  %9749 = vmatpush1.msra.mxu0 0.0
  %9750 = vmatprep.subr.mxu0 0.0
  %9751 = vmatpush1.msra.mxu0 0.0
  %9752 = vmatprep.subr.mxu0 0.0
  %9753 = vmatpush1.msra.mxu0 0.0
  %9754 = vmatprep.subr.mxu0 0.0
  %9755 = vmatpush1.msra.mxu0 0.0
  %9756 = vmatprep.subr.mxu0 0.0
  %9757 = vmatpush1.msra.mxu0 0.0
  %9758 = vmatprep.subr.mxu0 0.0
  %9759 = vmatpush1.msra.mxu0 0.0
  %9760 = vmatprep.subr.mxu0 0.0
  %9761 = vmatpush1.msra.mxu0 0.0
  %9762 = vmatprep.subr.mxu0 0.0
  %9763 = vmatpush1.msra.mxu0 0.0
  %9764 = vmatprep.subr.mxu0 0.0
  %9765 = vmatpush1.msra.mxu0 0.0
  %9766 = vmatprep.subr.mxu0 0.0
  %9767 = vmatpush1.msra.mxu0 0.0
  %9768 = vmatprep.subr.mxu0 0.0
  %9769 = vmatpush1.msra.mxu0 0.0
  %9770 = vmatprep.subr.mxu0 0.0
  %9771 = vmatpush1.msra.mxu0 0.0
  %9772 = vmatprep.subr.mxu0 0.0
  %9773 = vmatpush1.msra.mxu0 0.0
  %9774 = vmatprep.subr.mxu0 0.0
  %9775 = vmatpush1.msra.mxu0 0.0
  %9776 = vmatprep.subr.mxu0 0.0
  %9777 = vmatpush1.msra.mxu0 0.0
  %9778 = vmatprep.subr.mxu0 0.0
  %9779 = vmatpush1.msra.mxu0 0.0
  %9780 = vmatprep.subr.mxu0 0.0
  %9781 = vmatpush1.msra.mxu0 0.0
  %9782 = vmatprep.mubr.f32.mxu0 0.0
  %9783 = vmatmul.mubr.f32.gmra.mrb[0].mxu0 %v1379
  %v9784 = vpop.f32.mrb[0].mxu0
  %v9785 = vadd.f32 0.0, %v9784
  %v9786 = vpop.f32.mrb[0].mxu0
  %v9787 = vadd.f32 0.0, %v9786
  %9788 = vdwg.mxu0
  %v9789 = vadd.f32 %v9627, %v9714
  %v9790 = vadd.f32 %v9628, %v9716
  %v9791 = vadd.f32 %v9629, %v9785
  %v9792 = vadd.f32 %v9630, %v9787
  %9793 = vrot.lane.b32.xlu0 %v8351, 108
  %v9794 = vpop.permute.xlu0 %9793
  %9795 = vrot.lane.b32.xlu0 %v8352, 108
  %v9796 = vpop.permute.xlu0 %9795
  %9797 = vrot.lane.b32.xlu0 %v8353, 108
  %v9798 = vpop.permute.xlu0 %9797
  %9799 = vrot.lane.b32.xlu0 %v8354, 108
  %v9800 = vpop.permute.xlu0 %9799
  %v9801 = vsel %vm1539, %v9794, %v9796
  %v9802 = vsel %vm1539, %v9796, %v9798
  %v9803 = vsel %vm1539, %v9798, %v9800
  %v9804 = vsel %vm1539, %v9800, %v5725
  %9809 = vmatprep.subr.mxu0 %v9802
  %9810 = vmatpush1.msra.mxu0 %v9801
  %9811 = vmatprep.subr.mxu0 0.0
  %9812 = vmatpush1.msra.mxu0 0.0
  %9813 = vmatprep.subr.mxu0 0.0
  %9814 = vmatpush1.msra.mxu0 0.0
  %9815 = vmatprep.subr.mxu0 0.0
  %9816 = vmatpush1.msra.mxu0 0.0
  %9817 = vmatprep.subr.mxu0 0.0
  %9818 = vmatpush1.msra.mxu0 0.0
  %9819 = vmatprep.subr.mxu0 0.0
  %9820 = vmatpush1.msra.mxu0 0.0
  %9821 = vmatprep.subr.mxu0 0.0
  %9822 = vmatpush1.msra.mxu0 0.0
  %9823 = vmatprep.subr.mxu0 0.0
  %9824 = vmatpush1.msra.mxu0 0.0
  %9825 = vmatprep.subr.mxu0 0.0
  %9826 = vmatpush1.msra.mxu0 0.0
  %9827 = vmatprep.subr.mxu0 0.0
  %9828 = vmatpush1.msra.mxu0 0.0
  %9829 = vmatprep.subr.mxu0 0.0
  %9830 = vmatpush1.msra.mxu0 0.0
  %9831 = vmatprep.subr.mxu0 0.0
  %9832 = vmatpush1.msra.mxu0 0.0
  %9833 = vmatprep.subr.mxu0 0.0
  %9834 = vmatpush1.msra.mxu0 0.0
  %9835 = vmatprep.subr.mxu0 0.0
  %9836 = vmatpush1.msra.mxu0 0.0
  %9837 = vmatprep.subr.mxu0 0.0
  %9838 = vmatpush1.msra.mxu0 0.0
  %9839 = vmatprep.subr.mxu0 0.0
  %9840 = vmatpush1.msra.mxu0 0.0
  %9841 = vmatprep.subr.mxu0 0.0
  %9842 = vmatpush1.msra.mxu0 0.0
  %9843 = vmatprep.subr.mxu0 0.0
  %9844 = vmatpush1.msra.mxu0 0.0
  %9845 = vmatprep.subr.mxu0 0.0
  %9846 = vmatpush1.msra.mxu0 0.0
  %9847 = vmatprep.subr.mxu0 0.0
  %9848 = vmatpush1.msra.mxu0 0.0
  %9849 = vmatprep.subr.mxu0 0.0
  %9850 = vmatpush1.msra.mxu0 0.0
  %9851 = vmatprep.subr.mxu0 0.0
  %9852 = vmatpush1.msra.mxu0 0.0
  %9853 = vmatprep.subr.mxu0 0.0
  %9854 = vmatpush1.msra.mxu0 0.0
  %9855 = vmatprep.subr.mxu0 0.0
  %9856 = vmatpush1.msra.mxu0 0.0
  %9857 = vmatprep.subr.mxu0 0.0
  %9858 = vmatpush1.msra.mxu0 0.0
  %9859 = vmatprep.subr.mxu0 0.0
  %9860 = vmatpush1.msra.mxu0 0.0
  %9861 = vmatprep.subr.mxu0 0.0
  %9862 = vmatpush1.msra.mxu0 0.0
  %9863 = vmatprep.subr.mxu0 0.0
  %9864 = vmatpush1.msra.mxu0 0.0
  %9865 = vmatprep.subr.mxu0 0.0
  %9866 = vmatpush1.msra.mxu0 0.0
  %9867 = vmatprep.subr.mxu0 0.0
  %9868 = vmatpush1.msra.mxu0 0.0
  %9869 = vmatprep.subr.mxu0 0.0
  %9870 = vmatpush1.msra.mxu0 0.0
  %9871 = vmatprep.subr.mxu0 0.0
  %9872 = vmatpush1.msra.mxu0 0.0
  %9873 = vmatprep.mubr.f32.mxu0 0.0
  %9874 = vmatmul.mubr.f32.gmra.mrb[0].mxu0 %v1549
  %v9875 = vpop.f32.mrb[0].mxu0
  %v9876 = vadd.f32 0.0, %v9875
  %v9877 = vpop.f32.mrb[0].mxu0
  %v9878 = vadd.f32 0.0, %v9877
  %9879 = vdwg.mxu0
  %9880 = vmatprep.subr.mxu0 %v9804
  %9881 = vmatpush1.msra.mxu0 %v9803
  %9882 = vmatprep.subr.mxu0 0.0
  %9883 = vmatpush1.msra.mxu0 0.0
  %9884 = vmatprep.subr.mxu0 0.0
  %9885 = vmatpush1.msra.mxu0 0.0
  %9886 = vmatprep.subr.mxu0 0.0
  %9887 = vmatpush1.msra.mxu0 0.0
  %9888 = vmatprep.subr.mxu0 0.0
  %9889 = vmatpush1.msra.mxu0 0.0
  %9890 = vmatprep.subr.mxu0 0.0
  %9891 = vmatpush1.msra.mxu0 0.0
  %9892 = vmatprep.subr.mxu0 0.0
  %9893 = vmatpush1.msra.mxu0 0.0
  %9894 = vmatprep.subr.mxu0 0.0
  %9895 = vmatpush1.msra.mxu0 0.0
  %9896 = vmatprep.subr.mxu0 0.0
  %9897 = vmatpush1.msra.mxu0 0.0
  %9898 = vmatprep.subr.mxu0 0.0
  %9899 = vmatpush1.msra.mxu0 0.0
  %9900 = vmatprep.subr.mxu0 0.0
  %9901 = vmatpush1.msra.mxu0 0.0
  %9902 = vmatprep.subr.mxu0 0.0
  %9903 = vmatpush1.msra.mxu0 0.0
  %9904 = vmatprep.subr.mxu0 0.0
  %9905 = vmatpush1.msra.mxu0 0.0
  %9906 = vmatprep.subr.mxu0 0.0
  %9907 = vmatpush1.msra.mxu0 0.0
  %9908 = vmatprep.subr.mxu0 0.0
  %9909 = vmatpush1.msra.mxu0 0.0
  %9910 = vmatprep.subr.mxu0 0.0
  %9911 = vmatpush1.msra.mxu0 0.0
  %9912 = vmatprep.subr.mxu0 0.0
  %9913 = vmatpush1.msra.mxu0 0.0
  %9914 = vmatprep.subr.mxu0 0.0
  %9915 = vmatpush1.msra.mxu0 0.0
  %9916 = vmatprep.subr.mxu0 0.0
  %9917 = vmatpush1.msra.mxu0 0.0
  %9918 = vmatprep.subr.mxu0 0.0
  %9919 = vmatpush1.msra.mxu0 0.0
  %9920 = vmatprep.subr.mxu0 0.0
  %9921 = vmatpush1.msra.mxu0 0.0
  %9922 = vmatprep.subr.mxu0 0.0
  %9923 = vmatpush1.msra.mxu0 0.0
  %9924 = vmatprep.subr.mxu0 0.0
  %9925 = vmatpush1.msra.mxu0 0.0
  %9926 = vmatprep.subr.mxu0 0.0
  %9927 = vmatpush1.msra.mxu0 0.0
  %9928 = vmatprep.subr.mxu0 0.0
  %9929 = vmatpush1.msra.mxu0 0.0
  %9930 = vmatprep.subr.mxu0 0.0
  %9931 = vmatpush1.msra.mxu0 0.0
  %9932 = vmatprep.subr.mxu0 0.0
  %9933 = vmatpush1.msra.mxu0 0.0
  %9934 = vmatprep.subr.mxu0 0.0
  %9935 = vmatpush1.msra.mxu0 0.0
  %9936 = vmatprep.subr.mxu0 0.0
  %9937 = vmatpush1.msra.mxu0 0.0
  %9938 = vmatprep.subr.mxu0 0.0
  %9939 = vmatpush1.msra.mxu0 0.0
  %9940 = vmatprep.subr.mxu0 0.0
  %9941 = vmatpush1.msra.mxu0 0.0
  %9942 = vmatprep.subr.mxu0 0.0
  %9943 = vmatpush1.msra.mxu0 0.0
  %9944 = vmatprep.mubr.f32.mxu0 0.0
  %9945 = vmatmul.mubr.f32.gmra.mrb[0].mxu0 %v1549
  %v9946 = vpop.f32.mrb[0].mxu0
  %v9947 = vadd.f32 0.0, %v9946
  %v9948 = vpop.f32.mrb[0].mxu0
  %v9949 = vadd.f32 0.0, %v9948
  %9950 = vdwg.mxu0
  %v9951 = vadd.f32 %v9789, %v9876
  %v9952 = vadd.f32 %v9790, %v9878
  %v9953 = vadd.f32 %v9791, %v9947
  %v9954 = vadd.f32 %v9792, %v9949
  %9955 = vrot.lane.b32.xlu0 %v8351, 96
  %v9956 = vpop.permute.xlu0 %9955
  %9957 = vrot.lane.b32.xlu0 %v8352, 96
  %v9958 = vpop.permute.xlu0 %9957
  %9959 = vrot.lane.b32.xlu0 %v8353, 96
  %v9960 = vpop.permute.xlu0 %9959
  %9961 = vrot.lane.b32.xlu0 %v8354, 96
  %v9962 = vpop.permute.xlu0 %9961
  %v9963 = vsel %vm1709, %v9956, %v9958
  %v9964 = vsel %vm1709, %v9958, %v9960
  %v9965 = vsel %vm1709, %v9960, %v9962
  %v9966 = vsel %vm1709, %v9962, %v5889
  %9971 = vmatprep.subr.mxu0 %v9964
  %9972 = vmatpush1.msra.mxu0 %v9963
  %9973 = vmatprep.subr.mxu0 0.0
  %9974 = vmatpush1.msra.mxu0 0.0
  %9975 = vmatprep.subr.mxu0 0.0
  %9976 = vmatpush1.msra.mxu0 0.0
  %9977 = vmatprep.subr.mxu0 0.0
  %9978 = vmatpush1.msra.mxu0 0.0
  %9979 = vmatprep.subr.mxu0 0.0
  %9980 = vmatpush1.msra.mxu0 0.0
  %9981 = vmatprep.subr.mxu0 0.0
  %9982 = vmatpush1.msra.mxu0 0.0
  %9983 = vmatprep.subr.mxu0 0.0
  %9984 = vmatpush1.msra.mxu0 0.0
  %9985 = vmatprep.subr.mxu0 0.0
  %9986 = vmatpush1.msra.mxu0 0.0
  %9987 = vmatprep.subr.mxu0 0.0
  %9988 = vmatpush1.msra.mxu0 0.0
  %9989 = vmatprep.subr.mxu0 0.0
  %9990 = vmatpush1.msra.mxu0 0.0
  %9991 = vmatprep.subr.mxu0 0.0
  %9992 = vmatpush1.msra.mxu0 0.0
  %9993 = vmatprep.subr.mxu0 0.0
  %9994 = vmatpush1.msra.mxu0 0.0
  %9995 = vmatprep.subr.mxu0 0.0
  %9996 = vmatpush1.msra.mxu0 0.0
  %9997 = vmatprep.subr.mxu0 0.0
  %9998 = vmatpush1.msra.mxu0 0.0
  %9999 = vmatprep.subr.mxu0 0.0
  %10000 = vmatpush1.msra.mxu0 0.0
  %10001 = vmatprep.subr.mxu0 0.0
  %10002 = vmatpush1.msra.mxu0 0.0
  %10003 = vmatprep.subr.mxu0 0.0
  %10004 = vmatpush1.msra.mxu0 0.0
  %10005 = vmatprep.subr.mxu0 0.0
  %10006 = vmatpush1.msra.mxu0 0.0
  %10007 = vmatprep.subr.mxu0 0.0
  %10008 = vmatpush1.msra.mxu0 0.0
  %10009 = vmatprep.subr.mxu0 0.0
  %10010 = vmatpush1.msra.mxu0 0.0
  %10011 = vmatprep.subr.mxu0 0.0
  %10012 = vmatpush1.msra.mxu0 0.0
  %10013 = vmatprep.subr.mxu0 0.0
  %10014 = vmatpush1.msra.mxu0 0.0
  %10015 = vmatprep.subr.mxu0 0.0
  %10016 = vmatpush1.msra.mxu0 0.0
  %10017 = vmatprep.subr.mxu0 0.0
  %10018 = vmatpush1.msra.mxu0 0.0
  %10019 = vmatprep.subr.mxu0 0.0
  %10020 = vmatpush1.msra.mxu0 0.0
  %10021 = vmatprep.subr.mxu0 0.0
  %10022 = vmatpush1.msra.mxu0 0.0
  %10023 = vmatprep.subr.mxu0 0.0
  %10024 = vmatpush1.msra.mxu0 0.0
  %10025 = vmatprep.subr.mxu0 0.0
  %10026 = vmatpush1.msra.mxu0 0.0
  %10027 = vmatprep.subr.mxu0 0.0
  %10028 = vmatpush1.msra.mxu0 0.0
  %10029 = vmatprep.subr.mxu0 0.0
  %10030 = vmatpush1.msra.mxu0 0.0
  %10031 = vmatprep.subr.mxu0 0.0
  %10032 = vmatpush1.msra.mxu0 0.0
  %10033 = vmatprep.subr.mxu0 0.0
  %10034 = vmatpush1.msra.mxu0 0.0
  %10035 = vmatprep.mubr.f32.mxu0 0.0
  %10036 = vmatmul.mubr.f32.gmra.mrb[0].mxu0 %v1719
  %v10037 = vpop.f32.mrb[0].mxu0
  %v10038 = vadd.f32 0.0, %v10037
  %v10039 = vpop.f32.mrb[0].mxu0
  %v10040 = vadd.f32 0.0, %v10039
  %10041 = vdwg.mxu0
  %10042 = vmatprep.subr.mxu0 %v9966
  %10043 = vmatpush1.msra.mxu0 %v9965
  %10044 = vmatprep.subr.mxu0 0.0
  %10045 = vmatpush1.msra.mxu0 0.0
  %10046 = vmatprep.subr.mxu0 0.0
  %10047 = vmatpush1.msra.mxu0 0.0
  %10048 = vmatprep.subr.mxu0 0.0
  %10049 = vmatpush1.msra.mxu0 0.0
  %10050 = vmatprep.subr.mxu0 0.0
  %10051 = vmatpush1.msra.mxu0 0.0
  %10052 = vmatprep.subr.mxu0 0.0
  %10053 = vmatpush1.msra.mxu0 0.0
  %10054 = vmatprep.subr.mxu0 0.0
  %10055 = vmatpush1.msra.mxu0 0.0
  %10056 = vmatprep.subr.mxu0 0.0
  %10057 = vmatpush1.msra.mxu0 0.0
  %10058 = vmatprep.subr.mxu0 0.0
  %10059 = vmatpush1.msra.mxu0 0.0
  %10060 = vmatprep.subr.mxu0 0.0
  %10061 = vmatpush1.msra.mxu0 0.0
  %10062 = vmatprep.subr.mxu0 0.0
  %10063 = vmatpush1.msra.mxu0 0.0
  %10064 = vmatprep.subr.mxu0 0.0
  %10065 = vmatpush1.msra.mxu0 0.0
  %10066 = vmatprep.subr.mxu0 0.0
  %10067 = vmatpush1.msra.mxu0 0.0
  %10068 = vmatprep.subr.mxu0 0.0
  %10069 = vmatpush1.msra.mxu0 0.0
  %10070 = vmatprep.subr.mxu0 0.0
  %10071 = vmatpush1.msra.mxu0 0.0
  %10072 = vmatprep.subr.mxu0 0.0
  %10073 = vmatpush1.msra.mxu0 0.0
  %10074 = vmatprep.subr.mxu0 0.0
  %10075 = vmatpush1.msra.mxu0 0.0
  %10076 = vmatprep.subr.mxu0 0.0
  %10077 = vmatpush1.msra.mxu0 0.0
  %10078 = vmatprep.subr.mxu0 0.0
  %10079 = vmatpush1.msra.mxu0 0.0
  %10080 = vmatprep.subr.mxu0 0.0
  %10081 = vmatpush1.msra.mxu0 0.0
  %10082 = vmatprep.subr.mxu0 0.0
  %10083 = vmatpush1.msra.mxu0 0.0
  %10084 = vmatprep.subr.mxu0 0.0
  %10085 = vmatpush1.msra.mxu0 0.0
  %10086 = vmatprep.subr.mxu0 0.0
  %10087 = vmatpush1.msra.mxu0 0.0
  %10088 = vmatprep.subr.mxu0 0.0
  %10089 = vmatpush1.msra.mxu0 0.0
  %10090 = vmatprep.subr.mxu0 0.0
  %10091 = vmatpush1.msra.mxu0 0.0
  %10092 = vmatprep.subr.mxu0 0.0
  %10093 = vmatpush1.msra.mxu0 0.0
  %10094 = vmatprep.subr.mxu0 0.0
  %10095 = vmatpush1.msra.mxu0 0.0
  %10096 = vmatprep.subr.mxu0 0.0
  %10097 = vmatpush1.msra.mxu0 0.0
  %10098 = vmatprep.subr.mxu0 0.0
  %10099 = vmatpush1.msra.mxu0 0.0
  %10100 = vmatprep.subr.mxu0 0.0
  %10101 = vmatpush1.msra.mxu0 0.0
  %10102 = vmatprep.subr.mxu0 0.0
  %10103 = vmatpush1.msra.mxu0 0.0
  %10104 = vmatprep.subr.mxu0 0.0
  %10105 = vmatpush1.msra.mxu0 0.0
  %10106 = vmatprep.mubr.f32.mxu0 0.0
  %10107 = vmatmul.mubr.f32.gmra.mrb[0].mxu0 %v1719
  %v10108 = vpop.f32.mrb[0].mxu0
  %v10109 = vadd.f32 0.0, %v10108
  %v10110 = vpop.f32.mrb[0].mxu0
  %v10111 = vadd.f32 0.0, %v10110
  %10112 = vdwg.mxu0
  %v10113 = vadd.f32 %v9951, %v10038
  %v10114 = vadd.f32 %v9952, %v10040
  %v10115 = vadd.f32 %v9953, %v10109
  %v10116 = vadd.f32 %v9954, %v10111
  %10117 = vrot.lane.b32.xlu0 %v8351, 95
  %v10118 = vpop.permute.xlu0 %10117
  %10119 = vrot.lane.b32.xlu0 %v8352, 95
  %v10120 = vpop.permute.xlu0 %10119
  %10121 = vrot.lane.b32.xlu0 %v8353, 95
  %v10122 = vpop.permute.xlu0 %10121
  %10123 = vrot.lane.b32.xlu0 %v8354, 95
  %v10124 = vpop.permute.xlu0 %10123
  %v10125 = vsel %vm1879, %v10118, %v10120
  %v10126 = vsel %vm1879, %v10120, %v10122
  %v10127 = vsel %vm1879, %v10122, %v10124
  %v10128 = vsel %vm1879, %v10124, %v6053
  %10133 = vmatprep.subr.mxu0 %v10126
  %10134 = vmatpush1.msra.mxu0 %v10125
  %10135 = vmatprep.subr.mxu0 0.0
  %10136 = vmatpush1.msra.mxu0 0.0
  %10137 = vmatprep.subr.mxu0 0.0
  %10138 = vmatpush1.msra.mxu0 0.0
  %10139 = vmatprep.subr.mxu0 0.0
  %10140 = vmatpush1.msra.mxu0 0.0
  %10141 = vmatprep.subr.mxu0 0.0
  %10142 = vmatpush1.msra.mxu0 0.0
  %10143 = vmatprep.subr.mxu0 0.0
  %10144 = vmatpush1.msra.mxu0 0.0
  %10145 = vmatprep.subr.mxu0 0.0
  %10146 = vmatpush1.msra.mxu0 0.0
  %10147 = vmatprep.subr.mxu0 0.0
  %10148 = vmatpush1.msra.mxu0 0.0
  %10149 = vmatprep.subr.mxu0 0.0
  %10150 = vmatpush1.msra.mxu0 0.0
  %10151 = vmatprep.subr.mxu0 0.0
  %10152 = vmatpush1.msra.mxu0 0.0
  %10153 = vmatprep.subr.mxu0 0.0
  %10154 = vmatpush1.msra.mxu0 0.0
  %10155 = vmatprep.subr.mxu0 0.0
  %10156 = vmatpush1.msra.mxu0 0.0
  %10157 = vmatprep.subr.mxu0 0.0
  %10158 = vmatpush1.msra.mxu0 0.0
  %10159 = vmatprep.subr.mxu0 0.0
  %10160 = vmatpush1.msra.mxu0 0.0
  %10161 = vmatprep.subr.mxu0 0.0
  %10162 = vmatpush1.msra.mxu0 0.0
  %10163 = vmatprep.subr.mxu0 0.0
  %10164 = vmatpush1.msra.mxu0 0.0
  %10165 = vmatprep.subr.mxu0 0.0
  %10166 = vmatpush1.msra.mxu0 0.0
  %10167 = vmatprep.subr.mxu0 0.0
  %10168 = vmatpush1.msra.mxu0 0.0
  %10169 = vmatprep.subr.mxu0 0.0
  %10170 = vmatpush1.msra.mxu0 0.0
  %10171 = vmatprep.subr.mxu0 0.0
  %10172 = vmatpush1.msra.mxu0 0.0
  %10173 = vmatprep.subr.mxu0 0.0
  %10174 = vmatpush1.msra.mxu0 0.0
  %10175 = vmatprep.subr.mxu0 0.0
  %10176 = vmatpush1.msra.mxu0 0.0
  %10177 = vmatprep.subr.mxu0 0.0
  %10178 = vmatpush1.msra.mxu0 0.0
  %10179 = vmatprep.subr.mxu0 0.0
  %10180 = vmatpush1.msra.mxu0 0.0
  %10181 = vmatprep.subr.mxu0 0.0
  %10182 = vmatpush1.msra.mxu0 0.0
  %10183 = vmatprep.subr.mxu0 0.0
  %10184 = vmatpush1.msra.mxu0 0.0
  %10185 = vmatprep.subr.mxu0 0.0
  %10186 = vmatpush1.msra.mxu0 0.0
  %10187 = vmatprep.subr.mxu0 0.0
  %10188 = vmatpush1.msra.mxu0 0.0
  %10189 = vmatprep.subr.mxu0 0.0
  %10190 = vmatpush1.msra.mxu0 0.0
  %10191 = vmatprep.subr.mxu0 0.0
  %10192 = vmatpush1.msra.mxu0 0.0
  %10193 = vmatprep.subr.mxu0 0.0
  %10194 = vmatpush1.msra.mxu0 0.0
  %10195 = vmatprep.subr.mxu0 0.0
  %10196 = vmatpush1.msra.mxu0 0.0
  %10197 = vmatprep.mubr.f32.mxu0 0.0
  %10198 = vmatmul.mubr.f32.gmra.mrb[0].mxu0 %v1889
  %v10199 = vpop.f32.mrb[0].mxu0
  %v10200 = vadd.f32 0.0, %v10199
  %v10201 = vpop.f32.mrb[0].mxu0
  %v10202 = vadd.f32 0.0, %v10201
  %10203 = vdwg.mxu0
  %10204 = vmatprep.subr.mxu0 %v10128
  %10205 = vmatpush1.msra.mxu0 %v10127
  %10206 = vmatprep.subr.mxu0 0.0
  %10207 = vmatpush1.msra.mxu0 0.0
  %10208 = vmatprep.subr.mxu0 0.0
  %10209 = vmatpush1.msra.mxu0 0.0
  %10210 = vmatprep.subr.mxu0 0.0
  %10211 = vmatpush1.msra.mxu0 0.0
  %10212 = vmatprep.subr.mxu0 0.0
  %10213 = vmatpush1.msra.mxu0 0.0
  %10214 = vmatprep.subr.mxu0 0.0
  %10215 = vmatpush1.msra.mxu0 0.0
  %10216 = vmatprep.subr.mxu0 0.0
  %10217 = vmatpush1.msra.mxu0 0.0
  %10218 = vmatprep.subr.mxu0 0.0
  %10219 = vmatpush1.msra.mxu0 0.0
  %10220 = vmatprep.subr.mxu0 0.0
  %10221 = vmatpush1.msra.mxu0 0.0
  %10222 = vmatprep.subr.mxu0 0.0
  %10223 = vmatpush1.msra.mxu0 0.0
  %10224 = vmatprep.subr.mxu0 0.0
  %10225 = vmatpush1.msra.mxu0 0.0
  %10226 = vmatprep.subr.mxu0 0.0
  %10227 = vmatpush1.msra.mxu0 0.0
  %10228 = vmatprep.subr.mxu0 0.0
  %10229 = vmatpush1.msra.mxu0 0.0
  %10230 = vmatprep.subr.mxu0 0.0
  %10231 = vmatpush1.msra.mxu0 0.0
  %10232 = vmatprep.subr.mxu0 0.0
  %10233 = vmatpush1.msra.mxu0 0.0
  %10234 = vmatprep.subr.mxu0 0.0
  %10235 = vmatpush1.msra.mxu0 0.0
  %10236 = vmatprep.subr.mxu0 0.0
  %10237 = vmatpush1.msra.mxu0 0.0
  %10238 = vmatprep.subr.mxu0 0.0
  %10239 = vmatpush1.msra.mxu0 0.0
  %10240 = vmatprep.subr.mxu0 0.0
  %10241 = vmatpush1.msra.mxu0 0.0
  %10242 = vmatprep.subr.mxu0 0.0
  %10243 = vmatpush1.msra.mxu0 0.0
  %10244 = vmatprep.subr.mxu0 0.0
  %10245 = vmatpush1.msra.mxu0 0.0
  %10246 = vmatprep.subr.mxu0 0.0
  %10247 = vmatpush1.msra.mxu0 0.0
  %10248 = vmatprep.subr.mxu0 0.0
  %10249 = vmatpush1.msra.mxu0 0.0
  %10250 = vmatprep.subr.mxu0 0.0
  %10251 = vmatpush1.msra.mxu0 0.0
  %10252 = vmatprep.subr.mxu0 0.0
  %10253 = vmatpush1.msra.mxu0 0.0
  %10254 = vmatprep.subr.mxu0 0.0
  %10255 = vmatpush1.msra.mxu0 0.0
  %10256 = vmatprep.subr.mxu0 0.0
  %10257 = vmatpush1.msra.mxu0 0.0
  %10258 = vmatprep.subr.mxu0 0.0
  %10259 = vmatpush1.msra.mxu0 0.0
  %10260 = vmatprep.subr.mxu0 0.0
  %10261 = vmatpush1.msra.mxu0 0.0
  %10262 = vmatprep.subr.mxu0 0.0
  %10263 = vmatpush1.msra.mxu0 0.0
  %10264 = vmatprep.subr.mxu0 0.0
  %10265 = vmatpush1.msra.mxu0 0.0
  %10266 = vmatprep.subr.mxu0 0.0
  %10267 = vmatpush1.msra.mxu0 0.0
  %10268 = vmatprep.mubr.f32.mxu0 0.0
  %10269 = vmatmul.mubr.f32.gmra.mrb[0].mxu0 %v1889
  %v10270 = vpop.f32.mrb[0].mxu0
  %v10271 = vadd.f32 0.0, %v10270
  %v10272 = vpop.f32.mrb[0].mxu0
  %v10273 = vadd.f32 0.0, %v10272
  %10274 = vdwg.mxu0
  %v10275 = vadd.f32 %v10113, %v10200
  %v10276 = vadd.f32 %v10114, %v10202
  %v10277 = vadd.f32 %v10115, %v10271
  %v10278 = vadd.f32 %v10116, %v10273
  %10279 = vrot.lane.b32.xlu0 %v8351, 94
  %v10280 = vpop.permute.xlu0 %10279
  %10281 = vrot.lane.b32.xlu0 %v8352, 94
  %v10282 = vpop.permute.xlu0 %10281
  %10283 = vrot.lane.b32.xlu0 %v8353, 94
  %v10284 = vpop.permute.xlu0 %10283
  %10285 = vrot.lane.b32.xlu0 %v8354, 94
  %v10286 = vpop.permute.xlu0 %10285
  %v10287 = vsel %vm2049, %v10280, %v10282
  %v10288 = vsel %vm2049, %v10282, %v10284
  %v10289 = vsel %vm2049, %v10284, %v10286
  %v10290 = vsel %vm2049, %v10286, %v6217
  %10295 = vmatprep.subr.mxu0 %v10288
  %10296 = vmatpush1.msra.mxu0 %v10287
  %10297 = vmatprep.subr.mxu0 0.0
  %10298 = vmatpush1.msra.mxu0 0.0
  %10299 = vmatprep.subr.mxu0 0.0
  %10300 = vmatpush1.msra.mxu0 0.0
  %10301 = vmatprep.subr.mxu0 0.0
  %10302 = vmatpush1.msra.mxu0 0.0
  %10303 = vmatprep.subr.mxu0 0.0
  %10304 = vmatpush1.msra.mxu0 0.0
  %10305 = vmatprep.subr.mxu0 0.0
  %10306 = vmatpush1.msra.mxu0 0.0
  %10307 = vmatprep.subr.mxu0 0.0
  %10308 = vmatpush1.msra.mxu0 0.0
  %10309 = vmatprep.subr.mxu0 0.0
  %10310 = vmatpush1.msra.mxu0 0.0
  %10311 = vmatprep.subr.mxu0 0.0
  %10312 = vmatpush1.msra.mxu0 0.0
  %10313 = vmatprep.subr.mxu0 0.0
  %10314 = vmatpush1.msra.mxu0 0.0
  %10315 = vmatprep.subr.mxu0 0.0
  %10316 = vmatpush1.msra.mxu0 0.0
  %10317 = vmatprep.subr.mxu0 0.0
  %10318 = vmatpush1.msra.mxu0 0.0
  %10319 = vmatprep.subr.mxu0 0.0
  %10320 = vmatpush1.msra.mxu0 0.0
  %10321 = vmatprep.subr.mxu0 0.0
  %10322 = vmatpush1.msra.mxu0 0.0
  %10323 = vmatprep.subr.mxu0 0.0
  %10324 = vmatpush1.msra.mxu0 0.0
  %10325 = vmatprep.subr.mxu0 0.0
  %10326 = vmatpush1.msra.mxu0 0.0
  %10327 = vmatprep.subr.mxu0 0.0
  %10328 = vmatpush1.msra.mxu0 0.0
  %10329 = vmatprep.subr.mxu0 0.0
  %10330 = vmatpush1.msra.mxu0 0.0
  %10331 = vmatprep.subr.mxu0 0.0
  %10332 = vmatpush1.msra.mxu0 0.0
  %10333 = vmatprep.subr.mxu0 0.0
  %10334 = vmatpush1.msra.mxu0 0.0
  %10335 = vmatprep.subr.mxu0 0.0
  %10336 = vmatpush1.msra.mxu0 0.0
  %10337 = vmatprep.subr.mxu0 0.0
  %10338 = vmatpush1.msra.mxu0 0.0
  %10339 = vmatprep.subr.mxu0 0.0
  %10340 = vmatpush1.msra.mxu0 0.0
  %10341 = vmatprep.subr.mxu0 0.0
  %10342 = vmatpush1.msra.mxu0 0.0
  %10343 = vmatprep.subr.mxu0 0.0
  %10344 = vmatpush1.msra.mxu0 0.0
  %10345 = vmatprep.subr.mxu0 0.0
  %10346 = vmatpush1.msra.mxu0 0.0
  %10347 = vmatprep.subr.mxu0 0.0
  %10348 = vmatpush1.msra.mxu0 0.0
  %10349 = vmatprep.subr.mxu0 0.0
  %10350 = vmatpush1.msra.mxu0 0.0
  %10351 = vmatprep.subr.mxu0 0.0
  %10352 = vmatpush1.msra.mxu0 0.0
  %10353 = vmatprep.subr.mxu0 0.0
  %10354 = vmatpush1.msra.mxu0 0.0
  %10355 = vmatprep.subr.mxu0 0.0
  %10356 = vmatpush1.msra.mxu0 0.0
  %10357 = vmatprep.subr.mxu0 0.0
  %10358 = vmatpush1.msra.mxu0 0.0
  %10359 = vmatprep.mubr.f32.mxu0 0.0
  %10360 = vmatmul.mubr.f32.gmra.mrb[0].mxu0 %v2059
  %v10361 = vpop.f32.mrb[0].mxu0
  %v10362 = vadd.f32 0.0, %v10361
  %v10363 = vpop.f32.mrb[0].mxu0
  %v10364 = vadd.f32 0.0, %v10363
  %10365 = vdwg.mxu0
  %10366 = vmatprep.subr.mxu0 %v10290
  %10367 = vmatpush1.msra.mxu0 %v10289
  %10368 = vmatprep.subr.mxu0 0.0
  %10369 = vmatpush1.msra.mxu0 0.0
  %10370 = vmatprep.subr.mxu0 0.0
  %10371 = vmatpush1.msra.mxu0 0.0
  %10372 = vmatprep.subr.mxu0 0.0
  %10373 = vmatpush1.msra.mxu0 0.0
  %10374 = vmatprep.subr.mxu0 0.0
  %10375 = vmatpush1.msra.mxu0 0.0
  %10376 = vmatprep.subr.mxu0 0.0
  %10377 = vmatpush1.msra.mxu0 0.0
  %10378 = vmatprep.subr.mxu0 0.0
  %10379 = vmatpush1.msra.mxu0 0.0
  %10380 = vmatprep.subr.mxu0 0.0
  %10381 = vmatpush1.msra.mxu0 0.0
  %10382 = vmatprep.subr.mxu0 0.0
  %10383 = vmatpush1.msra.mxu0 0.0
  %10384 = vmatprep.subr.mxu0 0.0
  %10385 = vmatpush1.msra.mxu0 0.0
  %10386 = vmatprep.subr.mxu0 0.0
  %10387 = vmatpush1.msra.mxu0 0.0
  %10388 = vmatprep.subr.mxu0 0.0
  %10389 = vmatpush1.msra.mxu0 0.0
  %10390 = vmatprep.subr.mxu0 0.0
  %10391 = vmatpush1.msra.mxu0 0.0
  %10392 = vmatprep.subr.mxu0 0.0
  %10393 = vmatpush1.msra.mxu0 0.0
  %10394 = vmatprep.subr.mxu0 0.0
  %10395 = vmatpush1.msra.mxu0 0.0
  %10396 = vmatprep.subr.mxu0 0.0
  %10397 = vmatpush1.msra.mxu0 0.0
  %10398 = vmatprep.subr.mxu0 0.0
  %10399 = vmatpush1.msra.mxu0 0.0
  %10400 = vmatprep.subr.mxu0 0.0
  %10401 = vmatpush1.msra.mxu0 0.0
  %10402 = vmatprep.subr.mxu0 0.0
  %10403 = vmatpush1.msra.mxu0 0.0
  %10404 = vmatprep.subr.mxu0 0.0
  %10405 = vmatpush1.msra.mxu0 0.0
  %10406 = vmatprep.subr.mxu0 0.0
  %10407 = vmatpush1.msra.mxu0 0.0
  %10408 = vmatprep.subr.mxu0 0.0
  %10409 = vmatpush1.msra.mxu0 0.0
  %10410 = vmatprep.subr.mxu0 0.0
  %10411 = vmatpush1.msra.mxu0 0.0
  %10412 = vmatprep.subr.mxu0 0.0
  %10413 = vmatpush1.msra.mxu0 0.0
  %10414 = vmatprep.subr.mxu0 0.0
  %10415 = vmatpush1.msra.mxu0 0.0
  %10416 = vmatprep.subr.mxu0 0.0
  %10417 = vmatpush1.msra.mxu0 0.0
  %10418 = vmatprep.subr.mxu0 0.0
  %10419 = vmatpush1.msra.mxu0 0.0
  %10420 = vmatprep.subr.mxu0 0.0
  %10421 = vmatpush1.msra.mxu0 0.0
  %10422 = vmatprep.subr.mxu0 0.0
  %10423 = vmatpush1.msra.mxu0 0.0
  %10424 = vmatprep.subr.mxu0 0.0
  %10425 = vmatpush1.msra.mxu0 0.0
  %10426 = vmatprep.subr.mxu0 0.0
  %10427 = vmatpush1.msra.mxu0 0.0
  %10428 = vmatprep.subr.mxu0 0.0
  %10429 = vmatpush1.msra.mxu0 0.0
  %10430 = vmatprep.mubr.f32.mxu0 0.0
  %10431 = vmatmul.mubr.f32.gmra.mrb[0].mxu0 %v2059
  %v10432 = vpop.f32.mrb[0].mxu0
  %v10433 = vadd.f32 0.0, %v10432
  %v10434 = vpop.f32.mrb[0].mxu0
  %v10435 = vadd.f32 0.0, %v10434
  %10436 = vdwg.mxu0
  %v10437 = vadd.f32 %v10275, %v10362
  %v10438 = vadd.f32 %v10276, %v10364
  %v10439 = vadd.f32 %v10277, %v10433
  %v10440 = vadd.f32 %v10278, %v10435
  %10441 = vrot.lane.b32.xlu0 %v8351, 93
  %v10442 = vpop.permute.xlu0 %10441
  %10443 = vrot.lane.b32.xlu0 %v8352, 93
  %v10444 = vpop.permute.xlu0 %10443
  %10445 = vrot.lane.b32.xlu0 %v8353, 93
  %v10446 = vpop.permute.xlu0 %10445
  %10447 = vrot.lane.b32.xlu0 %v8354, 93
  %v10448 = vpop.permute.xlu0 %10447
  %v10449 = vsel %vm2219, %v10442, %v10444
  %v10450 = vsel %vm2219, %v10444, %v10446
  %v10451 = vsel %vm2219, %v10446, %v10448
  %v10452 = vsel %vm2219, %v10448, %v6381
  %10457 = vmatprep.subr.mxu0 %v10450
  %10458 = vmatpush1.msra.mxu0 %v10449
  %10459 = vmatprep.subr.mxu0 0.0
  %10460 = vmatpush1.msra.mxu0 0.0
  %10461 = vmatprep.subr.mxu0 0.0
  %10462 = vmatpush1.msra.mxu0 0.0
  %10463 = vmatprep.subr.mxu0 0.0
  %10464 = vmatpush1.msra.mxu0 0.0
  %10465 = vmatprep.subr.mxu0 0.0
  %10466 = vmatpush1.msra.mxu0 0.0
  %10467 = vmatprep.subr.mxu0 0.0
  %10468 = vmatpush1.msra.mxu0 0.0
  %10469 = vmatprep.subr.mxu0 0.0
  %10470 = vmatpush1.msra.mxu0 0.0
  %10471 = vmatprep.subr.mxu0 0.0
  %10472 = vmatpush1.msra.mxu0 0.0
  %10473 = vmatprep.subr.mxu0 0.0
  %10474 = vmatpush1.msra.mxu0 0.0
  %10475 = vmatprep.subr.mxu0 0.0
  %10476 = vmatpush1.msra.mxu0 0.0
  %10477 = vmatprep.subr.mxu0 0.0
  %10478 = vmatpush1.msra.mxu0 0.0
  %10479 = vmatprep.subr.mxu0 0.0
  %10480 = vmatpush1.msra.mxu0 0.0
  %10481 = vmatprep.subr.mxu0 0.0
  %10482 = vmatpush1.msra.mxu0 0.0
  %10483 = vmatprep.subr.mxu0 0.0
  %10484 = vmatpush1.msra.mxu0 0.0
  %10485 = vmatprep.subr.mxu0 0.0
  %10486 = vmatpush1.msra.mxu0 0.0
  %10487 = vmatprep.subr.mxu0 0.0
  %10488 = vmatpush1.msra.mxu0 0.0
  %10489 = vmatprep.subr.mxu0 0.0
  %10490 = vmatpush1.msra.mxu0 0.0
  %10491 = vmatprep.subr.mxu0 0.0
  %10492 = vmatpush1.msra.mxu0 0.0
  %10493 = vmatprep.subr.mxu0 0.0
  %10494 = vmatpush1.msra.mxu0 0.0
  %10495 = vmatprep.subr.mxu0 0.0
  %10496 = vmatpush1.msra.mxu0 0.0
  %10497 = vmatprep.subr.mxu0 0.0
  %10498 = vmatpush1.msra.mxu0 0.0
  %10499 = vmatprep.subr.mxu0 0.0
  %10500 = vmatpush1.msra.mxu0 0.0
  %10501 = vmatprep.subr.mxu0 0.0
  %10502 = vmatpush1.msra.mxu0 0.0
  %10503 = vmatprep.subr.mxu0 0.0
  %10504 = vmatpush1.msra.mxu0 0.0
  %10505 = vmatprep.subr.mxu0 0.0
  %10506 = vmatpush1.msra.mxu0 0.0
  %10507 = vmatprep.subr.mxu0 0.0
  %10508 = vmatpush1.msra.mxu0 0.0
  %10509 = vmatprep.subr.mxu0 0.0
  %10510 = vmatpush1.msra.mxu0 0.0
  %10511 = vmatprep.subr.mxu0 0.0
  %10512 = vmatpush1.msra.mxu0 0.0
  %10513 = vmatprep.subr.mxu0 0.0
  %10514 = vmatpush1.msra.mxu0 0.0
  %10515 = vmatprep.subr.mxu0 0.0
  %10516 = vmatpush1.msra.mxu0 0.0
  %10517 = vmatprep.subr.mxu0 0.0
  %10518 = vmatpush1.msra.mxu0 0.0
  %10519 = vmatprep.subr.mxu0 0.0
  %10520 = vmatpush1.msra.mxu0 0.0
  %10521 = vmatprep.mubr.f32.mxu0 0.0
  %10522 = vmatmul.mubr.f32.gmra.mrb[0].mxu0 %v2229
  %v10523 = vpop.f32.mrb[0].mxu0
  %v10524 = vadd.f32 0.0, %v10523
  %v10525 = vpop.f32.mrb[0].mxu0
  %v10526 = vadd.f32 0.0, %v10525
  %10527 = vdwg.mxu0
  %10528 = vmatprep.subr.mxu0 %v10452
  %10529 = vmatpush1.msra.mxu0 %v10451
  %10530 = vmatprep.subr.mxu0 0.0
  %10531 = vmatpush1.msra.mxu0 0.0
  %10532 = vmatprep.subr.mxu0 0.0
  %10533 = vmatpush1.msra.mxu0 0.0
  %10534 = vmatprep.subr.mxu0 0.0
  %10535 = vmatpush1.msra.mxu0 0.0
  %10536 = vmatprep.subr.mxu0 0.0
  %10537 = vmatpush1.msra.mxu0 0.0
  %10538 = vmatprep.subr.mxu0 0.0
  %10539 = vmatpush1.msra.mxu0 0.0
  %10540 = vmatprep.subr.mxu0 0.0
  %10541 = vmatpush1.msra.mxu0 0.0
  %10542 = vmatprep.subr.mxu0 0.0
  %10543 = vmatpush1.msra.mxu0 0.0
  %10544 = vmatprep.subr.mxu0 0.0
  %10545 = vmatpush1.msra.mxu0 0.0
  %10546 = vmatprep.subr.mxu0 0.0
  %10547 = vmatpush1.msra.mxu0 0.0
  %10548 = vmatprep.subr.mxu0 0.0
  %10549 = vmatpush1.msra.mxu0 0.0
  %10550 = vmatprep.subr.mxu0 0.0
  %10551 = vmatpush1.msra.mxu0 0.0
  %10552 = vmatprep.subr.mxu0 0.0
  %10553 = vmatpush1.msra.mxu0 0.0
  %10554 = vmatprep.subr.mxu0 0.0
  %10555 = vmatpush1.msra.mxu0 0.0
  %10556 = vmatprep.subr.mxu0 0.0
  %10557 = vmatpush1.msra.mxu0 0.0
  %10558 = vmatprep.subr.mxu0 0.0
  %10559 = vmatpush1.msra.mxu0 0.0
  %10560 = vmatprep.subr.mxu0 0.0
  %10561 = vmatpush1.msra.mxu0 0.0
  %10562 = vmatprep.subr.mxu0 0.0
  %10563 = vmatpush1.msra.mxu0 0.0
  %10564 = vmatprep.subr.mxu0 0.0
  %10565 = vmatpush1.msra.mxu0 0.0
  %10566 = vmatprep.subr.mxu0 0.0
  %10567 = vmatpush1.msra.mxu0 0.0
  %10568 = vmatprep.subr.mxu0 0.0
  %10569 = vmatpush1.msra.mxu0 0.0
  %10570 = vmatprep.subr.mxu0 0.0
  %10571 = vmatpush1.msra.mxu0 0.0
  %10572 = vmatprep.subr.mxu0 0.0
  %10573 = vmatpush1.msra.mxu0 0.0
  %10574 = vmatprep.subr.mxu0 0.0
  %10575 = vmatpush1.msra.mxu0 0.0
  %10576 = vmatprep.subr.mxu0 0.0
  %10577 = vmatpush1.msra.mxu0 0.0
  %10578 = vmatprep.subr.mxu0 0.0
  %10579 = vmatpush1.msra.mxu0 0.0
  %10580 = vmatprep.subr.mxu0 0.0
  %10581 = vmatpush1.msra.mxu0 0.0
  %10582 = vmatprep.subr.mxu0 0.0
  %10583 = vmatpush1.msra.mxu0 0.0
  %10584 = vmatprep.subr.mxu0 0.0
  %10585 = vmatpush1.msra.mxu0 0.0
  %10586 = vmatprep.subr.mxu0 0.0
  %10587 = vmatpush1.msra.mxu0 0.0
  %10588 = vmatprep.subr.mxu0 0.0
  %10589 = vmatpush1.msra.mxu0 0.0
  %10590 = vmatprep.subr.mxu0 0.0
  %10591 = vmatpush1.msra.mxu0 0.0
  %10592 = vmatprep.mubr.f32.mxu0 0.0
  %10593 = vmatmul.mubr.f32.gmra.mrb[0].mxu0 %v2229
  %v10594 = vpop.f32.mrb[0].mxu0
  %v10595 = vadd.f32 0.0, %v10594
  %v10596 = vpop.f32.mrb[0].mxu0
  %v10597 = vadd.f32 0.0, %v10596
  %10598 = vdwg.mxu0
  %v10599 = vadd.f32 %v10437, %v10524
  %v10600 = vadd.f32 %v10438, %v10526
  %v10601 = vadd.f32 %v10439, %v10595
  %v10602 = vadd.f32 %v10440, %v10597
  %10603 = vrot.lane.b32.xlu0 %v8351, 92
  %v10604 = vpop.permute.xlu0 %10603
  %10605 = vrot.lane.b32.xlu0 %v8352, 92
  %v10606 = vpop.permute.xlu0 %10605
  %10607 = vrot.lane.b32.xlu0 %v8353, 92
  %v10608 = vpop.permute.xlu0 %10607
  %10609 = vrot.lane.b32.xlu0 %v8354, 92
  %v10610 = vpop.permute.xlu0 %10609
  %v10611 = vsel %vm2389, %v10604, %v10606
  %v10612 = vsel %vm2389, %v10606, %v10608
  %v10613 = vsel %vm2389, %v10608, %v10610
  %v10614 = vsel %vm2389, %v10610, %v6545
  %10619 = vmatprep.subr.mxu0 %v10612
  %10620 = vmatpush1.msra.mxu0 %v10611
  %10621 = vmatprep.subr.mxu0 0.0
  %10622 = vmatpush1.msra.mxu0 0.0
  %10623 = vmatprep.subr.mxu0 0.0
  %10624 = vmatpush1.msra.mxu0 0.0
  %10625 = vmatprep.subr.mxu0 0.0
  %10626 = vmatpush1.msra.mxu0 0.0
  %10627 = vmatprep.subr.mxu0 0.0
  %10628 = vmatpush1.msra.mxu0 0.0
  %10629 = vmatprep.subr.mxu0 0.0
  %10630 = vmatpush1.msra.mxu0 0.0
  %10631 = vmatprep.subr.mxu0 0.0
  %10632 = vmatpush1.msra.mxu0 0.0
  %10633 = vmatprep.subr.mxu0 0.0
  %10634 = vmatpush1.msra.mxu0 0.0
  %10635 = vmatprep.subr.mxu0 0.0
  %10636 = vmatpush1.msra.mxu0 0.0
  %10637 = vmatprep.subr.mxu0 0.0
  %10638 = vmatpush1.msra.mxu0 0.0
  %10639 = vmatprep.subr.mxu0 0.0
  %10640 = vmatpush1.msra.mxu0 0.0
  %10641 = vmatprep.subr.mxu0 0.0
  %10642 = vmatpush1.msra.mxu0 0.0
  %10643 = vmatprep.subr.mxu0 0.0
  %10644 = vmatpush1.msra.mxu0 0.0
  %10645 = vmatprep.subr.mxu0 0.0
  %10646 = vmatpush1.msra.mxu0 0.0
  %10647 = vmatprep.subr.mxu0 0.0
  %10648 = vmatpush1.msra.mxu0 0.0
  %10649 = vmatprep.subr.mxu0 0.0
  %10650 = vmatpush1.msra.mxu0 0.0
  %10651 = vmatprep.subr.mxu0 0.0
  %10652 = vmatpush1.msra.mxu0 0.0
  %10653 = vmatprep.subr.mxu0 0.0
  %10654 = vmatpush1.msra.mxu0 0.0
  %10655 = vmatprep.subr.mxu0 0.0
  %10656 = vmatpush1.msra.mxu0 0.0
  %10657 = vmatprep.subr.mxu0 0.0
  %10658 = vmatpush1.msra.mxu0 0.0
  %10659 = vmatprep.subr.mxu0 0.0
  %10660 = vmatpush1.msra.mxu0 0.0
  %10661 = vmatprep.subr.mxu0 0.0
  %10662 = vmatpush1.msra.mxu0 0.0
  %10663 = vmatprep.subr.mxu0 0.0
  %10664 = vmatpush1.msra.mxu0 0.0
  %10665 = vmatprep.subr.mxu0 0.0
  %10666 = vmatpush1.msra.mxu0 0.0
  %10667 = vmatprep.subr.mxu0 0.0
  %10668 = vmatpush1.msra.mxu0 0.0
  %10669 = vmatprep.subr.mxu0 0.0
  %10670 = vmatpush1.msra.mxu0 0.0
  %10671 = vmatprep.subr.mxu0 0.0
  %10672 = vmatpush1.msra.mxu0 0.0
  %10673 = vmatprep.subr.mxu0 0.0
  %10674 = vmatpush1.msra.mxu0 0.0
  %10675 = vmatprep.subr.mxu0 0.0
  %10676 = vmatpush1.msra.mxu0 0.0
  %10677 = vmatprep.subr.mxu0 0.0
  %10678 = vmatpush1.msra.mxu0 0.0
  %10679 = vmatprep.subr.mxu0 0.0
  %10680 = vmatpush1.msra.mxu0 0.0
  %10681 = vmatprep.subr.mxu0 0.0
  %10682 = vmatpush1.msra.mxu0 0.0
  %10683 = vmatprep.mubr.f32.mxu0 0.0
  %10684 = vmatmul.mubr.f32.gmra.mrb[0].mxu0 %v2399
  %v10685 = vpop.f32.mrb[0].mxu0
  %v10686 = vadd.f32 0.0, %v10685
  %v10687 = vpop.f32.mrb[0].mxu0
  %v10688 = vadd.f32 0.0, %v10687
  %10689 = vdwg.mxu0
  %10690 = vmatprep.subr.mxu0 %v10614
  %10691 = vmatpush1.msra.mxu0 %v10613
  %10692 = vmatprep.subr.mxu0 0.0
  %10693 = vmatpush1.msra.mxu0 0.0
  %10694 = vmatprep.subr.mxu0 0.0
  %10695 = vmatpush1.msra.mxu0 0.0
  %10696 = vmatprep.subr.mxu0 0.0
  %10697 = vmatpush1.msra.mxu0 0.0
  %10698 = vmatprep.subr.mxu0 0.0
  %10699 = vmatpush1.msra.mxu0 0.0
  %10700 = vmatprep.subr.mxu0 0.0
  %10701 = vmatpush1.msra.mxu0 0.0
  %10702 = vmatprep.subr.mxu0 0.0
  %10703 = vmatpush1.msra.mxu0 0.0
  %10704 = vmatprep.subr.mxu0 0.0
  %10705 = vmatpush1.msra.mxu0 0.0
  %10706 = vmatprep.subr.mxu0 0.0
  %10707 = vmatpush1.msra.mxu0 0.0
  %10708 = vmatprep.subr.mxu0 0.0
  %10709 = vmatpush1.msra.mxu0 0.0
  %10710 = vmatprep.subr.mxu0 0.0
  %10711 = vmatpush1.msra.mxu0 0.0
  %10712 = vmatprep.subr.mxu0 0.0
  %10713 = vmatpush1.msra.mxu0 0.0
  %10714 = vmatprep.subr.mxu0 0.0
  %10715 = vmatpush1.msra.mxu0 0.0
  %10716 = vmatprep.subr.mxu0 0.0
  %10717 = vmatpush1.msra.mxu0 0.0
  %10718 = vmatprep.subr.mxu0 0.0
  %10719 = vmatpush1.msra.mxu0 0.0
  %10720 = vmatprep.subr.mxu0 0.0
  %10721 = vmatpush1.msra.mxu0 0.0
  %10722 = vmatprep.subr.mxu0 0.0
  %10723 = vmatpush1.msra.mxu0 0.0
  %10724 = vmatprep.subr.mxu0 0.0
  %10725 = vmatpush1.msra.mxu0 0.0
  %10726 = vmatprep.subr.mxu0 0.0
  %10727 = vmatpush1.msra.mxu0 0.0
  %10728 = vmatprep.subr.mxu0 0.0
  %10729 = vmatpush1.msra.mxu0 0.0
  %10730 = vmatprep.subr.mxu0 0.0
  %10731 = vmatpush1.msra.mxu0 0.0
  %10732 = vmatprep.subr.mxu0 0.0
  %10733 = vmatpush1.msra.mxu0 0.0
  %10734 = vmatprep.subr.mxu0 0.0
  %10735 = vmatpush1.msra.mxu0 0.0
  %10736 = vmatprep.subr.mxu0 0.0
  %10737 = vmatpush1.msra.mxu0 0.0
  %10738 = vmatprep.subr.mxu0 0.0
  %10739 = vmatpush1.msra.mxu0 0.0
  %10740 = vmatprep.subr.mxu0 0.0
  %10741 = vmatpush1.msra.mxu0 0.0
  %10742 = vmatprep.subr.mxu0 0.0
  %10743 = vmatpush1.msra.mxu0 0.0
  %10744 = vmatprep.subr.mxu0 0.0
  %10745 = vmatpush1.msra.mxu0 0.0
  %10746 = vmatprep.subr.mxu0 0.0
  %10747 = vmatpush1.msra.mxu0 0.0
  %10748 = vmatprep.subr.mxu0 0.0
  %10749 = vmatpush1.msra.mxu0 0.0
  %10750 = vmatprep.subr.mxu0 0.0
  %10751 = vmatpush1.msra.mxu0 0.0
  %10752 = vmatprep.subr.mxu0 0.0
  %10753 = vmatpush1.msra.mxu0 0.0
  %10754 = vmatprep.mubr.f32.mxu0 0.0
  %10755 = vmatmul.mubr.f32.gmra.mrb[0].mxu0 %v2399
  %v10756 = vpop.f32.mrb[0].mxu0
  %v10757 = vadd.f32 0.0, %v10756
  %v10758 = vpop.f32.mrb[0].mxu0
  %v10759 = vadd.f32 0.0, %v10758
  %10760 = vdwg.mxu0
  %v10761 = vadd.f32 %v10599, %v10686
  %v10762 = vadd.f32 %v10600, %v10688
  %v10763 = vadd.f32 %v10601, %v10757
  %v10764 = vadd.f32 %v10602, %v10759
  %10765 = vrot.lane.b32.xlu0 %v8351, 80
  %v10766 = vpop.permute.xlu0 %10765
  %10767 = vrot.lane.b32.xlu0 %v8352, 80
  %v10768 = vpop.permute.xlu0 %10767
  %10769 = vrot.lane.b32.xlu0 %v8353, 80
  %v10770 = vpop.permute.xlu0 %10769
  %10771 = vrot.lane.b32.xlu0 %v8354, 80
  %v10772 = vpop.permute.xlu0 %10771
  %v10773 = vsel %vm2559, %v10766, %v10768
  %v10774 = vsel %vm2559, %v10768, %v10770
  %v10775 = vsel %vm2559, %v10770, %v10772
  %v10776 = vsel %vm2559, %v10772, %v6709
  %10781 = vmatprep.subr.mxu0 %v10774
  %10782 = vmatpush1.msra.mxu0 %v10773
  %10783 = vmatprep.subr.mxu0 0.0
  %10784 = vmatpush1.msra.mxu0 0.0
  %10785 = vmatprep.subr.mxu0 0.0
  %10786 = vmatpush1.msra.mxu0 0.0
  %10787 = vmatprep.subr.mxu0 0.0
  %10788 = vmatpush1.msra.mxu0 0.0
  %10789 = vmatprep.subr.mxu0 0.0
  %10790 = vmatpush1.msra.mxu0 0.0
  %10791 = vmatprep.subr.mxu0 0.0
  %10792 = vmatpush1.msra.mxu0 0.0
  %10793 = vmatprep.subr.mxu0 0.0
  %10794 = vmatpush1.msra.mxu0 0.0
  %10795 = vmatprep.subr.mxu0 0.0
  %10796 = vmatpush1.msra.mxu0 0.0
  %10797 = vmatprep.subr.mxu0 0.0
  %10798 = vmatpush1.msra.mxu0 0.0
  %10799 = vmatprep.subr.mxu0 0.0
  %10800 = vmatpush1.msra.mxu0 0.0
  %10801 = vmatprep.subr.mxu0 0.0
  %10802 = vmatpush1.msra.mxu0 0.0
  %10803 = vmatprep.subr.mxu0 0.0
  %10804 = vmatpush1.msra.mxu0 0.0
  %10805 = vmatprep.subr.mxu0 0.0
  %10806 = vmatpush1.msra.mxu0 0.0
  %10807 = vmatprep.subr.mxu0 0.0
  %10808 = vmatpush1.msra.mxu0 0.0
  %10809 = vmatprep.subr.mxu0 0.0
  %10810 = vmatpush1.msra.mxu0 0.0
  %10811 = vmatprep.subr.mxu0 0.0
  %10812 = vmatpush1.msra.mxu0 0.0
  %10813 = vmatprep.subr.mxu0 0.0
  %10814 = vmatpush1.msra.mxu0 0.0
  %10815 = vmatprep.subr.mxu0 0.0
  %10816 = vmatpush1.msra.mxu0 0.0
  %10817 = vmatprep.subr.mxu0 0.0
  %10818 = vmatpush1.msra.mxu0 0.0
  %10819 = vmatprep.subr.mxu0 0.0
  %10820 = vmatpush1.msra.mxu0 0.0
  %10821 = vmatprep.subr.mxu0 0.0
  %10822 = vmatpush1.msra.mxu0 0.0
  %10823 = vmatprep.subr.mxu0 0.0
  %10824 = vmatpush1.msra.mxu0 0.0
  %10825 = vmatprep.subr.mxu0 0.0
  %10826 = vmatpush1.msra.mxu0 0.0
  %10827 = vmatprep.subr.mxu0 0.0
  %10828 = vmatpush1.msra.mxu0 0.0
  %10829 = vmatprep.subr.mxu0 0.0
  %10830 = vmatpush1.msra.mxu0 0.0
  %10831 = vmatprep.subr.mxu0 0.0
  %10832 = vmatpush1.msra.mxu0 0.0
  %10833 = vmatprep.subr.mxu0 0.0
  %10834 = vmatpush1.msra.mxu0 0.0
  %10835 = vmatprep.subr.mxu0 0.0
  %10836 = vmatpush1.msra.mxu0 0.0
  %10837 = vmatprep.subr.mxu0 0.0
  %10838 = vmatpush1.msra.mxu0 0.0
  %10839 = vmatprep.subr.mxu0 0.0
  %10840 = vmatpush1.msra.mxu0 0.0
  %10841 = vmatprep.subr.mxu0 0.0
  %10842 = vmatpush1.msra.mxu0 0.0
  %10843 = vmatprep.subr.mxu0 0.0
  %10844 = vmatpush1.msra.mxu0 0.0
  %10845 = vmatprep.mubr.f32.mxu0 0.0
  %10846 = vmatmul.mubr.f32.gmra.mrb[0].mxu0 %v2569
  %v10847 = vpop.f32.mrb[0].mxu0
  %v10848 = vadd.f32 0.0, %v10847
  %v10849 = vpop.f32.mrb[0].mxu0
  %v10850 = vadd.f32 0.0, %v10849
  %10851 = vdwg.mxu0
  %10852 = vmatprep.subr.mxu0 %v10776
  %10853 = vmatpush1.msra.mxu0 %v10775
  %10854 = vmatprep.subr.mxu0 0.0
  %10855 = vmatpush1.msra.mxu0 0.0
  %10856 = vmatprep.subr.mxu0 0.0
  %10857 = vmatpush1.msra.mxu0 0.0
  %10858 = vmatprep.subr.mxu0 0.0
  %10859 = vmatpush1.msra.mxu0 0.0
  %10860 = vmatprep.subr.mxu0 0.0
  %10861 = vmatpush1.msra.mxu0 0.0
  %10862 = vmatprep.subr.mxu0 0.0
  %10863 = vmatpush1.msra.mxu0 0.0
  %10864 = vmatprep.subr.mxu0 0.0
  %10865 = vmatpush1.msra.mxu0 0.0
  %10866 = vmatprep.subr.mxu0 0.0
  %10867 = vmatpush1.msra.mxu0 0.0
  %10868 = vmatprep.subr.mxu0 0.0
  %10869 = vmatpush1.msra.mxu0 0.0
  %10870 = vmatprep.subr.mxu0 0.0
  %10871 = vmatpush1.msra.mxu0 0.0
  %10872 = vmatprep.subr.mxu0 0.0
  %10873 = vmatpush1.msra.mxu0 0.0
  %10874 = vmatprep.subr.mxu0 0.0
  %10875 = vmatpush1.msra.mxu0 0.0
  %10876 = vmatprep.subr.mxu0 0.0
  %10877 = vmatpush1.msra.mxu0 0.0
  %10878 = vmatprep.subr.mxu0 0.0
  %10879 = vmatpush1.msra.mxu0 0.0
  %10880 = vmatprep.subr.mxu0 0.0
  %10881 = vmatpush1.msra.mxu0 0.0
  %10882 = vmatprep.subr.mxu0 0.0
  %10883 = vmatpush1.msra.mxu0 0.0
  %10884 = vmatprep.subr.mxu0 0.0
  %10885 = vmatpush1.msra.mxu0 0.0
  %10886 = vmatprep.subr.mxu0 0.0
  %10887 = vmatpush1.msra.mxu0 0.0
  %10888 = vmatprep.subr.mxu0 0.0
  %10889 = vmatpush1.msra.mxu0 0.0
  %10890 = vmatprep.subr.mxu0 0.0
  %10891 = vmatpush1.msra.mxu0 0.0
  %10892 = vmatprep.subr.mxu0 0.0
  %10893 = vmatpush1.msra.mxu0 0.0
  %10894 = vmatprep.subr.mxu0 0.0
  %10895 = vmatpush1.msra.mxu0 0.0
  %10896 = vmatprep.subr.mxu0 0.0
  %10897 = vmatpush1.msra.mxu0 0.0
  %10898 = vmatprep.subr.mxu0 0.0
  %10899 = vmatpush1.msra.mxu0 0.0
  %10900 = vmatprep.subr.mxu0 0.0
  %10901 = vmatpush1.msra.mxu0 0.0
  %10902 = vmatprep.subr.mxu0 0.0
  %10903 = vmatpush1.msra.mxu0 0.0
  %10904 = vmatprep.subr.mxu0 0.0
  %10905 = vmatpush1.msra.mxu0 0.0
  %10906 = vmatprep.subr.mxu0 0.0
  %10907 = vmatpush1.msra.mxu0 0.0
  %10908 = vmatprep.subr.mxu0 0.0
  %10909 = vmatpush1.msra.mxu0 0.0
  %10910 = vmatprep.subr.mxu0 0.0
  %10911 = vmatpush1.msra.mxu0 0.0
  %10912 = vmatprep.subr.mxu0 0.0
  %10913 = vmatpush1.msra.mxu0 0.0
  %10914 = vmatprep.subr.mxu0 0.0
  %10915 = vmatpush1.msra.mxu0 0.0
  %10916 = vmatprep.mubr.f32.mxu0 0.0
  %10917 = vmatmul.mubr.f32.gmra.mrb[0].mxu0 %v2569
  %v10918 = vpop.f32.mrb[0].mxu0
  %v10919 = vadd.f32 0.0, %v10918
  %v10920 = vpop.f32.mrb[0].mxu0
  %v10921 = vadd.f32 0.0, %v10920
  %10922 = vdwg.mxu0
  %v10923 = vadd.f32 %v10761, %v10848
  %v10924 = vadd.f32 %v10762, %v10850
  %v10925 = vadd.f32 %v10763, %v10919
  %v10926 = vadd.f32 %v10764, %v10921
  %10927 = vrot.lane.b32.xlu0 %v8351, 79
  %v10928 = vpop.permute.xlu0 %10927
  %10929 = vrot.lane.b32.xlu0 %v8352, 79
  %v10930 = vpop.permute.xlu0 %10929
  %10931 = vrot.lane.b32.xlu0 %v8353, 79
  %v10932 = vpop.permute.xlu0 %10931
  %10933 = vrot.lane.b32.xlu0 %v8354, 79
  %v10934 = vpop.permute.xlu0 %10933
  %v10935 = vsel %vm2729, %v10928, %v10930
  %v10936 = vsel %vm2729, %v10930, %v10932
  %v10937 = vsel %vm2729, %v10932, %v10934
  %v10938 = vsel %vm2729, %v10934, %v6873
  %10943 = vmatprep.subr.mxu0 %v10936
  %10944 = vmatpush1.msra.mxu0 %v10935
  %10945 = vmatprep.subr.mxu0 0.0
  %10946 = vmatpush1.msra.mxu0 0.0
  %10947 = vmatprep.subr.mxu0 0.0
  %10948 = vmatpush1.msra.mxu0 0.0
  %10949 = vmatprep.subr.mxu0 0.0
  %10950 = vmatpush1.msra.mxu0 0.0
  %10951 = vmatprep.subr.mxu0 0.0
  %10952 = vmatpush1.msra.mxu0 0.0
  %10953 = vmatprep.subr.mxu0 0.0
  %10954 = vmatpush1.msra.mxu0 0.0
  %10955 = vmatprep.subr.mxu0 0.0
  %10956 = vmatpush1.msra.mxu0 0.0
  %10957 = vmatprep.subr.mxu0 0.0
  %10958 = vmatpush1.msra.mxu0 0.0
  %10959 = vmatprep.subr.mxu0 0.0
  %10960 = vmatpush1.msra.mxu0 0.0
  %10961 = vmatprep.subr.mxu0 0.0
  %10962 = vmatpush1.msra.mxu0 0.0
  %10963 = vmatprep.subr.mxu0 0.0
  %10964 = vmatpush1.msra.mxu0 0.0
  %10965 = vmatprep.subr.mxu0 0.0
  %10966 = vmatpush1.msra.mxu0 0.0
  %10967 = vmatprep.subr.mxu0 0.0
  %10968 = vmatpush1.msra.mxu0 0.0
  %10969 = vmatprep.subr.mxu0 0.0
  %10970 = vmatpush1.msra.mxu0 0.0
  %10971 = vmatprep.subr.mxu0 0.0
  %10972 = vmatpush1.msra.mxu0 0.0
  %10973 = vmatprep.subr.mxu0 0.0
  %10974 = vmatpush1.msra.mxu0 0.0
  %10975 = vmatprep.subr.mxu0 0.0
  %10976 = vmatpush1.msra.mxu0 0.0
  %10977 = vmatprep.subr.mxu0 0.0
  %10978 = vmatpush1.msra.mxu0 0.0
  %10979 = vmatprep.subr.mxu0 0.0
  %10980 = vmatpush1.msra.mxu0 0.0
  %10981 = vmatprep.subr.mxu0 0.0
  %10982 = vmatpush1.msra.mxu0 0.0
  %10983 = vmatprep.subr.mxu0 0.0
  %10984 = vmatpush1.msra.mxu0 0.0
  %10985 = vmatprep.subr.mxu0 0.0
  %10986 = vmatpush1.msra.mxu0 0.0
  %10987 = vmatprep.subr.mxu0 0.0
  %10988 = vmatpush1.msra.mxu0 0.0
  %10989 = vmatprep.subr.mxu0 0.0
  %10990 = vmatpush1.msra.mxu0 0.0
  %10991 = vmatprep.subr.mxu0 0.0
  %10992 = vmatpush1.msra.mxu0 0.0
  %10993 = vmatprep.subr.mxu0 0.0
  %10994 = vmatpush1.msra.mxu0 0.0
  %10995 = vmatprep.subr.mxu0 0.0
  %10996 = vmatpush1.msra.mxu0 0.0
  %10997 = vmatprep.subr.mxu0 0.0
  %10998 = vmatpush1.msra.mxu0 0.0
  %10999 = vmatprep.subr.mxu0 0.0
  %11000 = vmatpush1.msra.mxu0 0.0
  %11001 = vmatprep.subr.mxu0 0.0
  %11002 = vmatpush1.msra.mxu0 0.0
  %11003 = vmatprep.subr.mxu0 0.0
  %11004 = vmatpush1.msra.mxu0 0.0
  %11005 = vmatprep.subr.mxu0 0.0
  %11006 = vmatpush1.msra.mxu0 0.0
  %11007 = vmatprep.mubr.f32.mxu0 0.0
  %11008 = vmatmul.mubr.f32.gmra.mrb[0].mxu0 %v2739
  %v11009 = vpop.f32.mrb[0].mxu0
  %v11010 = vadd.f32 0.0, %v11009
  %v11011 = vpop.f32.mrb[0].mxu0
  %v11012 = vadd.f32 0.0, %v11011
  %11013 = vdwg.mxu0
  %11014 = vmatprep.subr.mxu0 %v10938
  %11015 = vmatpush1.msra.mxu0 %v10937
  %11016 = vmatprep.subr.mxu0 0.0
  %11017 = vmatpush1.msra.mxu0 0.0
  %11018 = vmatprep.subr.mxu0 0.0
  %11019 = vmatpush1.msra.mxu0 0.0
  %11020 = vmatprep.subr.mxu0 0.0
  %11021 = vmatpush1.msra.mxu0 0.0
  %11022 = vmatprep.subr.mxu0 0.0
  %11023 = vmatpush1.msra.mxu0 0.0
  %11024 = vmatprep.subr.mxu0 0.0
  %11025 = vmatpush1.msra.mxu0 0.0
  %11026 = vmatprep.subr.mxu0 0.0
  %11027 = vmatpush1.msra.mxu0 0.0
  %11028 = vmatprep.subr.mxu0 0.0
  %11029 = vmatpush1.msra.mxu0 0.0
  %11030 = vmatprep.subr.mxu0 0.0
  %11031 = vmatpush1.msra.mxu0 0.0
  %11032 = vmatprep.subr.mxu0 0.0
  %11033 = vmatpush1.msra.mxu0 0.0
  %11034 = vmatprep.subr.mxu0 0.0
  %11035 = vmatpush1.msra.mxu0 0.0
  %11036 = vmatprep.subr.mxu0 0.0
  %11037 = vmatpush1.msra.mxu0 0.0
  %11038 = vmatprep.subr.mxu0 0.0
  %11039 = vmatpush1.msra.mxu0 0.0
  %11040 = vmatprep.subr.mxu0 0.0
  %11041 = vmatpush1.msra.mxu0 0.0
  %11042 = vmatprep.subr.mxu0 0.0
  %11043 = vmatpush1.msra.mxu0 0.0
  %11044 = vmatprep.subr.mxu0 0.0
  %11045 = vmatpush1.msra.mxu0 0.0
  %11046 = vmatprep.subr.mxu0 0.0
  %11047 = vmatpush1.msra.mxu0 0.0
  %11048 = vmatprep.subr.mxu0 0.0
  %11049 = vmatpush1.msra.mxu0 0.0
  %11050 = vmatprep.subr.mxu0 0.0
  %11051 = vmatpush1.msra.mxu0 0.0
  %11052 = vmatprep.subr.mxu0 0.0
  %11053 = vmatpush1.msra.mxu0 0.0
  %11054 = vmatprep.subr.mxu0 0.0
  %11055 = vmatpush1.msra.mxu0 0.0
  %11056 = vmatprep.subr.mxu0 0.0
  %11057 = vmatpush1.msra.mxu0 0.0
  %11058 = vmatprep.subr.mxu0 0.0
  %11059 = vmatpush1.msra.mxu0 0.0
  %11060 = vmatprep.subr.mxu0 0.0
  %11061 = vmatpush1.msra.mxu0 0.0
  %11062 = vmatprep.subr.mxu0 0.0
  %11063 = vmatpush1.msra.mxu0 0.0
  %11064 = vmatprep.subr.mxu0 0.0
  %11065 = vmatpush1.msra.mxu0 0.0
  %11066 = vmatprep.subr.mxu0 0.0
  %11067 = vmatpush1.msra.mxu0 0.0
  %11068 = vmatprep.subr.mxu0 0.0
  %11069 = vmatpush1.msra.mxu0 0.0
  %11070 = vmatprep.subr.mxu0 0.0
  %11071 = vmatpush1.msra.mxu0 0.0
  %11072 = vmatprep.subr.mxu0 0.0
  %11073 = vmatpush1.msra.mxu0 0.0
  %11074 = vmatprep.subr.mxu0 0.0
  %11075 = vmatpush1.msra.mxu0 0.0
  %11076 = vmatprep.subr.mxu0 0.0
  %11077 = vmatpush1.msra.mxu0 0.0
  %11078 = vmatprep.mubr.f32.mxu0 0.0
  %11079 = vmatmul.mubr.f32.gmra.mrb[0].mxu0 %v2739
  %v11080 = vpop.f32.mrb[0].mxu0
  %v11081 = vadd.f32 0.0, %v11080
  %v11082 = vpop.f32.mrb[0].mxu0
  %v11083 = vadd.f32 0.0, %v11082
  %11084 = vdwg.mxu0
  %v11085 = vadd.f32 %v10923, %v11010
  %v11086 = vadd.f32 %v10924, %v11012
  %v11087 = vadd.f32 %v10925, %v11081
  %v11088 = vadd.f32 %v10926, %v11083
  %11089 = vrot.lane.b32.xlu0 %v8351, 78
  %v11090 = vpop.permute.xlu0 %11089
  %11091 = vrot.lane.b32.xlu0 %v8352, 78
  %v11092 = vpop.permute.xlu0 %11091
  %11093 = vrot.lane.b32.xlu0 %v8353, 78
  %v11094 = vpop.permute.xlu0 %11093
  %11095 = vrot.lane.b32.xlu0 %v8354, 78
  %v11096 = vpop.permute.xlu0 %11095
  %v11097 = vsel %vm2899, %v11090, %v11092
  %v11098 = vsel %vm2899, %v11092, %v11094
  %v11099 = vsel %vm2899, %v11094, %v11096
  %v11100 = vsel %vm2899, %v11096, %v7037
  %11105 = vmatprep.subr.mxu0 %v11098
  %11106 = vmatpush1.msra.mxu0 %v11097
  %11107 = vmatprep.subr.mxu0 0.0
  %11108 = vmatpush1.msra.mxu0 0.0
  %11109 = vmatprep.subr.mxu0 0.0
  %11110 = vmatpush1.msra.mxu0 0.0
  %11111 = vmatprep.subr.mxu0 0.0
  %11112 = vmatpush1.msra.mxu0 0.0
  %11113 = vmatprep.subr.mxu0 0.0
  %11114 = vmatpush1.msra.mxu0 0.0
  %11115 = vmatprep.subr.mxu0 0.0
  %11116 = vmatpush1.msra.mxu0 0.0
  %11117 = vmatprep.subr.mxu0 0.0
  %11118 = vmatpush1.msra.mxu0 0.0
  %11119 = vmatprep.subr.mxu0 0.0
  %11120 = vmatpush1.msra.mxu0 0.0
  %11121 = vmatprep.subr.mxu0 0.0
  %11122 = vmatpush1.msra.mxu0 0.0
  %11123 = vmatprep.subr.mxu0 0.0
  %11124 = vmatpush1.msra.mxu0 0.0
  %11125 = vmatprep.subr.mxu0 0.0
  %11126 = vmatpush1.msra.mxu0 0.0
  %11127 = vmatprep.subr.mxu0 0.0
  %11128 = vmatpush1.msra.mxu0 0.0
  %11129 = vmatprep.subr.mxu0 0.0
  %11130 = vmatpush1.msra.mxu0 0.0
  %11131 = vmatprep.subr.mxu0 0.0
  %11132 = vmatpush1.msra.mxu0 0.0
  %11133 = vmatprep.subr.mxu0 0.0
  %11134 = vmatpush1.msra.mxu0 0.0
  %11135 = vmatprep.subr.mxu0 0.0
  %11136 = vmatpush1.msra.mxu0 0.0
  %11137 = vmatprep.subr.mxu0 0.0
  %11138 = vmatpush1.msra.mxu0 0.0
  %11139 = vmatprep.subr.mxu0 0.0
  %11140 = vmatpush1.msra.mxu0 0.0
  %11141 = vmatprep.subr.mxu0 0.0
  %11142 = vmatpush1.msra.mxu0 0.0
  %11143 = vmatprep.subr.mxu0 0.0
  %11144 = vmatpush1.msra.mxu0 0.0
  %11145 = vmatprep.subr.mxu0 0.0
  %11146 = vmatpush1.msra.mxu0 0.0
  %11147 = vmatprep.subr.mxu0 0.0
  %11148 = vmatpush1.msra.mxu0 0.0
  %11149 = vmatprep.subr.mxu0 0.0
  %11150 = vmatpush1.msra.mxu0 0.0
  %11151 = vmatprep.subr.mxu0 0.0
  %11152 = vmatpush1.msra.mxu0 0.0
  %11153 = vmatprep.subr.mxu0 0.0
  %11154 = vmatpush1.msra.mxu0 0.0
  %11155 = vmatprep.subr.mxu0 0.0
  %11156 = vmatpush1.msra.mxu0 0.0
  %11157 = vmatprep.subr.mxu0 0.0
  %11158 = vmatpush1.msra.mxu0 0.0
  %11159 = vmatprep.subr.mxu0 0.0
  %11160 = vmatpush1.msra.mxu0 0.0
  %11161 = vmatprep.subr.mxu0 0.0
  %11162 = vmatpush1.msra.mxu0 0.0
  %11163 = vmatprep.subr.mxu0 0.0
  %11164 = vmatpush1.msra.mxu0 0.0
  %11165 = vmatprep.subr.mxu0 0.0
  %11166 = vmatpush1.msra.mxu0 0.0
  %11167 = vmatprep.subr.mxu0 0.0
  %11168 = vmatpush1.msra.mxu0 0.0
  %11169 = vmatprep.mubr.f32.mxu0 0.0
  %11170 = vmatmul.mubr.f32.gmra.mrb[0].mxu0 %v2909
  %v11171 = vpop.f32.mrb[0].mxu0
  %v11172 = vadd.f32 0.0, %v11171
  %v11173 = vpop.f32.mrb[0].mxu0
  %v11174 = vadd.f32 0.0, %v11173
  %11175 = vdwg.mxu0
  %11176 = vmatprep.subr.mxu0 %v11100
  %11177 = vmatpush1.msra.mxu0 %v11099
  %11178 = vmatprep.subr.mxu0 0.0
  %11179 = vmatpush1.msra.mxu0 0.0
  %11180 = vmatprep.subr.mxu0 0.0
  %11181 = vmatpush1.msra.mxu0 0.0
  %11182 = vmatprep.subr.mxu0 0.0
  %11183 = vmatpush1.msra.mxu0 0.0
  %11184 = vmatprep.subr.mxu0 0.0
  %11185 = vmatpush1.msra.mxu0 0.0
  %11186 = vmatprep.subr.mxu0 0.0
  %11187 = vmatpush1.msra.mxu0 0.0
  %11188 = vmatprep.subr.mxu0 0.0
  %11189 = vmatpush1.msra.mxu0 0.0
  %11190 = vmatprep.subr.mxu0 0.0
  %11191 = vmatpush1.msra.mxu0 0.0
  %11192 = vmatprep.subr.mxu0 0.0
  %11193 = vmatpush1.msra.mxu0 0.0
  %11194 = vmatprep.subr.mxu0 0.0
  %11195 = vmatpush1.msra.mxu0 0.0
  %11196 = vmatprep.subr.mxu0 0.0
  %11197 = vmatpush1.msra.mxu0 0.0
  %11198 = vmatprep.subr.mxu0 0.0
  %11199 = vmatpush1.msra.mxu0 0.0
  %11200 = vmatprep.subr.mxu0 0.0
  %11201 = vmatpush1.msra.mxu0 0.0
  %11202 = vmatprep.subr.mxu0 0.0
  %11203 = vmatpush1.msra.mxu0 0.0
  %11204 = vmatprep.subr.mxu0 0.0
  %11205 = vmatpush1.msra.mxu0 0.0
  %11206 = vmatprep.subr.mxu0 0.0
  %11207 = vmatpush1.msra.mxu0 0.0
  %11208 = vmatprep.subr.mxu0 0.0
  %11209 = vmatpush1.msra.mxu0 0.0
  %11210 = vmatprep.subr.mxu0 0.0
  %11211 = vmatpush1.msra.mxu0 0.0
  %11212 = vmatprep.subr.mxu0 0.0
  %11213 = vmatpush1.msra.mxu0 0.0
  %11214 = vmatprep.subr.mxu0 0.0
  %11215 = vmatpush1.msra.mxu0 0.0
  %11216 = vmatprep.subr.mxu0 0.0
  %11217 = vmatpush1.msra.mxu0 0.0
  %11218 = vmatprep.subr.mxu0 0.0
  %11219 = vmatpush1.msra.mxu0 0.0
  %11220 = vmatprep.subr.mxu0 0.0
  %11221 = vmatpush1.msra.mxu0 0.0
  %11222 = vmatprep.subr.mxu0 0.0
  %11223 = vmatpush1.msra.mxu0 0.0
  %11224 = vmatprep.subr.mxu0 0.0
  %11225 = vmatpush1.msra.mxu0 0.0
  %11226 = vmatprep.subr.mxu0 0.0
  %11227 = vmatpush1.msra.mxu0 0.0
  %11228 = vmatprep.subr.mxu0 0.0
  %11229 = vmatpush1.msra.mxu0 0.0
  %11230 = vmatprep.subr.mxu0 0.0
  %11231 = vmatpush1.msra.mxu0 0.0
  %11232 = vmatprep.subr.mxu0 0.0
  %11233 = vmatpush1.msra.mxu0 0.0
  %11234 = vmatprep.subr.mxu0 0.0
  %11235 = vmatpush1.msra.mxu0 0.0
  %11236 = vmatprep.subr.mxu0 0.0
  %11237 = vmatpush1.msra.mxu0 0.0
  %11238 = vmatprep.subr.mxu0 0.0
  %11239 = vmatpush1.msra.mxu0 0.0
  %11240 = vmatprep.mubr.f32.mxu0 0.0
  %11241 = vmatmul.mubr.f32.gmra.mrb[0].mxu0 %v2909
  %v11242 = vpop.f32.mrb[0].mxu0
  %v11243 = vadd.f32 0.0, %v11242
  %v11244 = vpop.f32.mrb[0].mxu0
  %v11245 = vadd.f32 0.0, %v11244
  %11246 = vdwg.mxu0
  %v11247 = vadd.f32 %v11085, %v11172
  %v11248 = vadd.f32 %v11086, %v11174
  %v11249 = vadd.f32 %v11087, %v11243
  %v11250 = vadd.f32 %v11088, %v11245
  %11251 = vrot.lane.b32.xlu0 %v8351, 77
  %v11252 = vpop.permute.xlu0 %11251
  %11253 = vrot.lane.b32.xlu0 %v8352, 77
  %v11254 = vpop.permute.xlu0 %11253
  %11255 = vrot.lane.b32.xlu0 %v8353, 77
  %v11256 = vpop.permute.xlu0 %11255
  %11257 = vrot.lane.b32.xlu0 %v8354, 77
  %v11258 = vpop.permute.xlu0 %11257
  %v11259 = vsel %vm3069, %v11252, %v11254
  %v11260 = vsel %vm3069, %v11254, %v11256
  %v11261 = vsel %vm3069, %v11256, %v11258
  %v11262 = vsel %vm3069, %v11258, %v7201
  %11267 = vmatprep.subr.mxu0 %v11260
  %11268 = vmatpush1.msra.mxu0 %v11259
  %11269 = vmatprep.subr.mxu0 0.0
  %11270 = vmatpush1.msra.mxu0 0.0
  %11271 = vmatprep.subr.mxu0 0.0
  %11272 = vmatpush1.msra.mxu0 0.0
  %11273 = vmatprep.subr.mxu0 0.0
  %11274 = vmatpush1.msra.mxu0 0.0
  %11275 = vmatprep.subr.mxu0 0.0
  %11276 = vmatpush1.msra.mxu0 0.0
  %11277 = vmatprep.subr.mxu0 0.0
  %11278 = vmatpush1.msra.mxu0 0.0
  %11279 = vmatprep.subr.mxu0 0.0
  %11280 = vmatpush1.msra.mxu0 0.0
  %11281 = vmatprep.subr.mxu0 0.0
  %11282 = vmatpush1.msra.mxu0 0.0
  %11283 = vmatprep.subr.mxu0 0.0
  %11284 = vmatpush1.msra.mxu0 0.0
  %11285 = vmatprep.subr.mxu0 0.0
  %11286 = vmatpush1.msra.mxu0 0.0
  %11287 = vmatprep.subr.mxu0 0.0
  %11288 = vmatpush1.msra.mxu0 0.0
  %11289 = vmatprep.subr.mxu0 0.0
  %11290 = vmatpush1.msra.mxu0 0.0
  %11291 = vmatprep.subr.mxu0 0.0
  %11292 = vmatpush1.msra.mxu0 0.0
  %11293 = vmatprep.subr.mxu0 0.0
  %11294 = vmatpush1.msra.mxu0 0.0
  %11295 = vmatprep.subr.mxu0 0.0
  %11296 = vmatpush1.msra.mxu0 0.0
  %11297 = vmatprep.subr.mxu0 0.0
  %11298 = vmatpush1.msra.mxu0 0.0
  %11299 = vmatprep.subr.mxu0 0.0
  %11300 = vmatpush1.msra.mxu0 0.0
  %11301 = vmatprep.subr.mxu0 0.0
  %11302 = vmatpush1.msra.mxu0 0.0
  %11303 = vmatprep.subr.mxu0 0.0
  %11304 = vmatpush1.msra.mxu0 0.0
  %11305 = vmatprep.subr.mxu0 0.0
  %11306 = vmatpush1.msra.mxu0 0.0
  %11307 = vmatprep.subr.mxu0 0.0
  %11308 = vmatpush1.msra.mxu0 0.0
  %11309 = vmatprep.subr.mxu0 0.0
  %11310 = vmatpush1.msra.mxu0 0.0
  %11311 = vmatprep.subr.mxu0 0.0
  %11312 = vmatpush1.msra.mxu0 0.0
  %11313 = vmatprep.subr.mxu0 0.0
  %11314 = vmatpush1.msra.mxu0 0.0
  %11315 = vmatprep.subr.mxu0 0.0
  %11316 = vmatpush1.msra.mxu0 0.0
  %11317 = vmatprep.subr.mxu0 0.0
  %11318 = vmatpush1.msra.mxu0 0.0
  %11319 = vmatprep.subr.mxu0 0.0
  %11320 = vmatpush1.msra.mxu0 0.0
  %11321 = vmatprep.subr.mxu0 0.0
  %11322 = vmatpush1.msra.mxu0 0.0
  %11323 = vmatprep.subr.mxu0 0.0
  %11324 = vmatpush1.msra.mxu0 0.0
  %11325 = vmatprep.subr.mxu0 0.0
  %11326 = vmatpush1.msra.mxu0 0.0
  %11327 = vmatprep.subr.mxu0 0.0
  %11328 = vmatpush1.msra.mxu0 0.0
  %11329 = vmatprep.subr.mxu0 0.0
  %11330 = vmatpush1.msra.mxu0 0.0
  %11331 = vmatprep.mubr.f32.mxu0 0.0
  %11332 = vmatmul.mubr.f32.gmra.mrb[0].mxu0 %v3079
  %v11333 = vpop.f32.mrb[0].mxu0
  %v11334 = vadd.f32 0.0, %v11333
  %v11335 = vpop.f32.mrb[0].mxu0
  %v11336 = vadd.f32 0.0, %v11335
  %11337 = vdwg.mxu0
  %11338 = vmatprep.subr.mxu0 %v11262
  %11339 = vmatpush1.msra.mxu0 %v11261
  %11340 = vmatprep.subr.mxu0 0.0
  %11341 = vmatpush1.msra.mxu0 0.0
  %11342 = vmatprep.subr.mxu0 0.0
  %11343 = vmatpush1.msra.mxu0 0.0
  %11344 = vmatprep.subr.mxu0 0.0
  %11345 = vmatpush1.msra.mxu0 0.0
  %11346 = vmatprep.subr.mxu0 0.0
  %11347 = vmatpush1.msra.mxu0 0.0
  %11348 = vmatprep.subr.mxu0 0.0
  %11349 = vmatpush1.msra.mxu0 0.0
  %11350 = vmatprep.subr.mxu0 0.0
  %11351 = vmatpush1.msra.mxu0 0.0
  %11352 = vmatprep.subr.mxu0 0.0
  %11353 = vmatpush1.msra.mxu0 0.0
  %11354 = vmatprep.subr.mxu0 0.0
  %11355 = vmatpush1.msra.mxu0 0.0
  %11356 = vmatprep.subr.mxu0 0.0
  %11357 = vmatpush1.msra.mxu0 0.0
  %11358 = vmatprep.subr.mxu0 0.0
  %11359 = vmatpush1.msra.mxu0 0.0
  %11360 = vmatprep.subr.mxu0 0.0
  %11361 = vmatpush1.msra.mxu0 0.0
  %11362 = vmatprep.subr.mxu0 0.0
  %11363 = vmatpush1.msra.mxu0 0.0
  %11364 = vmatprep.subr.mxu0 0.0
  %11365 = vmatpush1.msra.mxu0 0.0
  %11366 = vmatprep.subr.mxu0 0.0
  %11367 = vmatpush1.msra.mxu0 0.0
  %11368 = vmatprep.subr.mxu0 0.0
  %11369 = vmatpush1.msra.mxu0 0.0
  %11370 = vmatprep.subr.mxu0 0.0
  %11371 = vmatpush1.msra.mxu0 0.0
  %11372 = vmatprep.subr.mxu0 0.0
  %11373 = vmatpush1.msra.mxu0 0.0
  %11374 = vmatprep.subr.mxu0 0.0
  %11375 = vmatpush1.msra.mxu0 0.0
  %11376 = vmatprep.subr.mxu0 0.0
  %11377 = vmatpush1.msra.mxu0 0.0
  %11378 = vmatprep.subr.mxu0 0.0
  %11379 = vmatpush1.msra.mxu0 0.0
  %11380 = vmatprep.subr.mxu0 0.0
  %11381 = vmatpush1.msra.mxu0 0.0
  %11382 = vmatprep.subr.mxu0 0.0
  %11383 = vmatpush1.msra.mxu0 0.0
  %11384 = vmatprep.subr.mxu0 0.0
  %11385 = vmatpush1.msra.mxu0 0.0
  %11386 = vmatprep.subr.mxu0 0.0
  %11387 = vmatpush1.msra.mxu0 0.0
  %11388 = vmatprep.subr.mxu0 0.0
  %11389 = vmatpush1.msra.mxu0 0.0
  %11390 = vmatprep.subr.mxu0 0.0
  %11391 = vmatpush1.msra.mxu0 0.0
  %11392 = vmatprep.subr.mxu0 0.0
  %11393 = vmatpush1.msra.mxu0 0.0
  %11394 = vmatprep.subr.mxu0 0.0
  %11395 = vmatpush1.msra.mxu0 0.0
  %11396 = vmatprep.subr.mxu0 0.0
  %11397 = vmatpush1.msra.mxu0 0.0
  %11398 = vmatprep.subr.mxu0 0.0
  %11399 = vmatpush1.msra.mxu0 0.0
  %11400 = vmatprep.subr.mxu0 0.0
  %11401 = vmatpush1.msra.mxu0 0.0
  %11402 = vmatprep.mubr.f32.mxu0 0.0
  %11403 = vmatmul.mubr.f32.gmra.mrb[0].mxu0 %v3079
  %v11404 = vpop.f32.mrb[0].mxu0
  %v11405 = vadd.f32 0.0, %v11404
  %v11406 = vpop.f32.mrb[0].mxu0
  %v11407 = vadd.f32 0.0, %v11406
  %11408 = vdwg.mxu0
  %v11409 = vadd.f32 %v11247, %v11334
  %v11410 = vadd.f32 %v11248, %v11336
  %v11411 = vadd.f32 %v11249, %v11405
  %v11412 = vadd.f32 %v11250, %v11407
  %11413 = vrot.lane.b32.xlu0 %v8351, 76
  %v11414 = vpop.permute.xlu0 %11413
  %11415 = vrot.lane.b32.xlu0 %v8352, 76
  %v11416 = vpop.permute.xlu0 %11415
  %11417 = vrot.lane.b32.xlu0 %v8353, 76
  %v11418 = vpop.permute.xlu0 %11417
  %11419 = vrot.lane.b32.xlu0 %v8354, 76
  %v11420 = vpop.permute.xlu0 %11419
  %v11421 = vsel %vm3239, %v11414, %v11416
  %v11422 = vsel %vm3239, %v11416, %v11418
  %v11423 = vsel %vm3239, %v11418, %v11420
  %v11424 = vsel %vm3239, %v11420, %v7365
  %11429 = vmatprep.subr.mxu0 %v11422
  %11430 = vmatpush1.msra.mxu0 %v11421
  %11431 = vmatprep.subr.mxu0 0.0
  %11432 = vmatpush1.msra.mxu0 0.0
  %11433 = vmatprep.subr.mxu0 0.0
  %11434 = vmatpush1.msra.mxu0 0.0
  %11435 = vmatprep.subr.mxu0 0.0
  %11436 = vmatpush1.msra.mxu0 0.0
  %11437 = vmatprep.subr.mxu0 0.0
  %11438 = vmatpush1.msra.mxu0 0.0
  %11439 = vmatprep.subr.mxu0 0.0
  %11440 = vmatpush1.msra.mxu0 0.0
  %11441 = vmatprep.subr.mxu0 0.0
  %11442 = vmatpush1.msra.mxu0 0.0
  %11443 = vmatprep.subr.mxu0 0.0
  %11444 = vmatpush1.msra.mxu0 0.0
  %11445 = vmatprep.subr.mxu0 0.0
  %11446 = vmatpush1.msra.mxu0 0.0
  %11447 = vmatprep.subr.mxu0 0.0
  %11448 = vmatpush1.msra.mxu0 0.0
  %11449 = vmatprep.subr.mxu0 0.0
  %11450 = vmatpush1.msra.mxu0 0.0
  %11451 = vmatprep.subr.mxu0 0.0
  %11452 = vmatpush1.msra.mxu0 0.0
  %11453 = vmatprep.subr.mxu0 0.0
  %11454 = vmatpush1.msra.mxu0 0.0
  %11455 = vmatprep.subr.mxu0 0.0
  %11456 = vmatpush1.msra.mxu0 0.0
  %11457 = vmatprep.subr.mxu0 0.0
  %11458 = vmatpush1.msra.mxu0 0.0
  %11459 = vmatprep.subr.mxu0 0.0
  %11460 = vmatpush1.msra.mxu0 0.0
  %11461 = vmatprep.subr.mxu0 0.0
  %11462 = vmatpush1.msra.mxu0 0.0
  %11463 = vmatprep.subr.mxu0 0.0
  %11464 = vmatpush1.msra.mxu0 0.0
  %11465 = vmatprep.subr.mxu0 0.0
  %11466 = vmatpush1.msra.mxu0 0.0
  %11467 = vmatprep.subr.mxu0 0.0
  %11468 = vmatpush1.msra.mxu0 0.0
  %11469 = vmatprep.subr.mxu0 0.0
  %11470 = vmatpush1.msra.mxu0 0.0
  %11471 = vmatprep.subr.mxu0 0.0
  %11472 = vmatpush1.msra.mxu0 0.0
  %11473 = vmatprep.subr.mxu0 0.0
  %11474 = vmatpush1.msra.mxu0 0.0
  %11475 = vmatprep.subr.mxu0 0.0
  %11476 = vmatpush1.msra.mxu0 0.0
  %11477 = vmatprep.subr.mxu0 0.0
  %11478 = vmatpush1.msra.mxu0 0.0
  %11479 = vmatprep.subr.mxu0 0.0
  %11480 = vmatpush1.msra.mxu0 0.0
  %11481 = vmatprep.subr.mxu0 0.0
  %11482 = vmatpush1.msra.mxu0 0.0
  %11483 = vmatprep.subr.mxu0 0.0
  %11484 = vmatpush1.msra.mxu0 0.0
  %11485 = vmatprep.subr.mxu0 0.0
  %11486 = vmatpush1.msra.mxu0 0.0
  %11487 = vmatprep.subr.mxu0 0.0
  %11488 = vmatpush1.msra.mxu0 0.0
  %11489 = vmatprep.subr.mxu0 0.0
  %11490 = vmatpush1.msra.mxu0 0.0
  %11491 = vmatprep.subr.mxu0 0.0
  %11492 = vmatpush1.msra.mxu0 0.0
  %11493 = vmatprep.mubr.f32.mxu0 0.0
  %11494 = vmatmul.mubr.f32.gmra.mrb[0].mxu0 %v3249
  %v11495 = vpop.f32.mrb[0].mxu0
  %v11496 = vadd.f32 0.0, %v11495
  %v11497 = vpop.f32.mrb[0].mxu0
  %v11498 = vadd.f32 0.0, %v11497
  %11499 = vdwg.mxu0
  %11500 = vmatprep.subr.mxu0 %v11424
  %11501 = vmatpush1.msra.mxu0 %v11423
  %11502 = vmatprep.subr.mxu0 0.0
  %11503 = vmatpush1.msra.mxu0 0.0
  %11504 = vmatprep.subr.mxu0 0.0
  %11505 = vmatpush1.msra.mxu0 0.0
  %11506 = vmatprep.subr.mxu0 0.0
  %11507 = vmatpush1.msra.mxu0 0.0
  %11508 = vmatprep.subr.mxu0 0.0
  %11509 = vmatpush1.msra.mxu0 0.0
  %11510 = vmatprep.subr.mxu0 0.0
  %11511 = vmatpush1.msra.mxu0 0.0
  %11512 = vmatprep.subr.mxu0 0.0
  %11513 = vmatpush1.msra.mxu0 0.0
  %11514 = vmatprep.subr.mxu0 0.0
  %11515 = vmatpush1.msra.mxu0 0.0
  %11516 = vmatprep.subr.mxu0 0.0
  %11517 = vmatpush1.msra.mxu0 0.0
  %11518 = vmatprep.subr.mxu0 0.0
  %11519 = vmatpush1.msra.mxu0 0.0
  %11520 = vmatprep.subr.mxu0 0.0
  %11521 = vmatpush1.msra.mxu0 0.0
  %11522 = vmatprep.subr.mxu0 0.0
  %11523 = vmatpush1.msra.mxu0 0.0
  %11524 = vmatprep.subr.mxu0 0.0
  %11525 = vmatpush1.msra.mxu0 0.0
  %11526 = vmatprep.subr.mxu0 0.0
  %11527 = vmatpush1.msra.mxu0 0.0
  %11528 = vmatprep.subr.mxu0 0.0
  %11529 = vmatpush1.msra.mxu0 0.0
  %11530 = vmatprep.subr.mxu0 0.0
  %11531 = vmatpush1.msra.mxu0 0.0
  %11532 = vmatprep.subr.mxu0 0.0
  %11533 = vmatpush1.msra.mxu0 0.0
  %11534 = vmatprep.subr.mxu0 0.0
  %11535 = vmatpush1.msra.mxu0 0.0
  %11536 = vmatprep.subr.mxu0 0.0
  %11537 = vmatpush1.msra.mxu0 0.0
  %11538 = vmatprep.subr.mxu0 0.0
  %11539 = vmatpush1.msra.mxu0 0.0
  %11540 = vmatprep.subr.mxu0 0.0
  %11541 = vmatpush1.msra.mxu0 0.0
  %11542 = vmatprep.subr.mxu0 0.0
  %11543 = vmatpush1.msra.mxu0 0.0
  %11544 = vmatprep.subr.mxu0 0.0
  %11545 = vmatpush1.msra.mxu0 0.0
  %11546 = vmatprep.subr.mxu0 0.0
  %11547 = vmatpush1.msra.mxu0 0.0
  %11548 = vmatprep.subr.mxu0 0.0
  %11549 = vmatpush1.msra.mxu0 0.0
  %11550 = vmatprep.subr.mxu0 0.0
  %11551 = vmatpush1.msra.mxu0 0.0
  %11552 = vmatprep.subr.mxu0 0.0
  %11553 = vmatpush1.msra.mxu0 0.0
  %11554 = vmatprep.subr.mxu0 0.0
  %11555 = vmatpush1.msra.mxu0 0.0
  %11556 = vmatprep.subr.mxu0 0.0
  %11557 = vmatpush1.msra.mxu0 0.0
  %11558 = vmatprep.subr.mxu0 0.0
  %11559 = vmatpush1.msra.mxu0 0.0
  %11560 = vmatprep.subr.mxu0 0.0
  %11561 = vmatpush1.msra.mxu0 0.0
  %11562 = vmatprep.subr.mxu0 0.0
  %11563 = vmatpush1.msra.mxu0 0.0
  %11564 = vmatprep.mubr.f32.mxu0 0.0
  %11565 = vmatmul.mubr.f32.gmra.mrb[0].mxu0 %v3249
  %v11566 = vpop.f32.mrb[0].mxu0
  %v11567 = vadd.f32 0.0, %v11566
  %v11568 = vpop.f32.mrb[0].mxu0
  %v11569 = vadd.f32 0.0, %v11568
  %11570 = vdwg.mxu0
  %v11571 = vadd.f32 %v11409, %v11496
  %v11572 = vadd.f32 %v11410, %v11498
  %v11573 = vadd.f32 %v11411, %v11567
  %v11574 = vadd.f32 %v11412, %v11569
  %11575 = vrot.lane.b32.xlu0 %v8351, 64
  %v11576 = vpop.permute.xlu0 %11575
  %11577 = vrot.lane.b32.xlu0 %v8352, 64
  %v11578 = vpop.permute.xlu0 %11577
  %11579 = vrot.lane.b32.xlu0 %v8353, 64
  %v11580 = vpop.permute.xlu0 %11579
  %11581 = vrot.lane.b32.xlu0 %v8354, 64
  %v11582 = vpop.permute.xlu0 %11581
  %v11583 = vsel %vm3409, %v11576, %v11578
  %v11584 = vsel %vm3409, %v11578, %v11580
  %v11585 = vsel %vm3409, %v11580, %v11582
  %v11586 = vsel %vm3409, %v11582, %v7529
  %11591 = vmatprep.subr.mxu0 %v11584
  %11592 = vmatpush1.msra.mxu0 %v11583
  %11593 = vmatprep.subr.mxu0 0.0
  %11594 = vmatpush1.msra.mxu0 0.0
  %11595 = vmatprep.subr.mxu0 0.0
  %11596 = vmatpush1.msra.mxu0 0.0
  %11597 = vmatprep.subr.mxu0 0.0
  %11598 = vmatpush1.msra.mxu0 0.0
  %11599 = vmatprep.subr.mxu0 0.0
  %11600 = vmatpush1.msra.mxu0 0.0
  %11601 = vmatprep.subr.mxu0 0.0
  %11602 = vmatpush1.msra.mxu0 0.0
  %11603 = vmatprep.subr.mxu0 0.0
  %11604 = vmatpush1.msra.mxu0 0.0
  %11605 = vmatprep.subr.mxu0 0.0
  %11606 = vmatpush1.msra.mxu0 0.0
  %11607 = vmatprep.subr.mxu0 0.0
  %11608 = vmatpush1.msra.mxu0 0.0
  %11609 = vmatprep.subr.mxu0 0.0
  %11610 = vmatpush1.msra.mxu0 0.0
  %11611 = vmatprep.subr.mxu0 0.0
  %11612 = vmatpush1.msra.mxu0 0.0
  %11613 = vmatprep.subr.mxu0 0.0
  %11614 = vmatpush1.msra.mxu0 0.0
  %11615 = vmatprep.subr.mxu0 0.0
  %11616 = vmatpush1.msra.mxu0 0.0
  %11617 = vmatprep.subr.mxu0 0.0
  %11618 = vmatpush1.msra.mxu0 0.0
  %11619 = vmatprep.subr.mxu0 0.0
  %11620 = vmatpush1.msra.mxu0 0.0
  %11621 = vmatprep.subr.mxu0 0.0
  %11622 = vmatpush1.msra.mxu0 0.0
  %11623 = vmatprep.subr.mxu0 0.0
  %11624 = vmatpush1.msra.mxu0 0.0
  %11625 = vmatprep.subr.mxu0 0.0
  %11626 = vmatpush1.msra.mxu0 0.0
  %11627 = vmatprep.subr.mxu0 0.0
  %11628 = vmatpush1.msra.mxu0 0.0
  %11629 = vmatprep.subr.mxu0 0.0
  %11630 = vmatpush1.msra.mxu0 0.0
  %11631 = vmatprep.subr.mxu0 0.0
  %11632 = vmatpush1.msra.mxu0 0.0
  %11633 = vmatprep.subr.mxu0 0.0
  %11634 = vmatpush1.msra.mxu0 0.0
  %11635 = vmatprep.subr.mxu0 0.0
  %11636 = vmatpush1.msra.mxu0 0.0
  %11637 = vmatprep.subr.mxu0 0.0
  %11638 = vmatpush1.msra.mxu0 0.0
  %11639 = vmatprep.subr.mxu0 0.0
  %11640 = vmatpush1.msra.mxu0 0.0
  %11641 = vmatprep.subr.mxu0 0.0
  %11642 = vmatpush1.msra.mxu0 0.0
  %11643 = vmatprep.subr.mxu0 0.0
  %11644 = vmatpush1.msra.mxu0 0.0
  %11645 = vmatprep.subr.mxu0 0.0
  %11646 = vmatpush1.msra.mxu0 0.0
  %11647 = vmatprep.subr.mxu0 0.0
  %11648 = vmatpush1.msra.mxu0 0.0
  %11649 = vmatprep.subr.mxu0 0.0
  %11650 = vmatpush1.msra.mxu0 0.0
  %11651 = vmatprep.subr.mxu0 0.0
  %11652 = vmatpush1.msra.mxu0 0.0
  %11653 = vmatprep.subr.mxu0 0.0
  %11654 = vmatpush1.msra.mxu0 0.0
  %11655 = vmatprep.mubr.f32.mxu0 0.0
  %11656 = vmatmul.mubr.f32.gmra.mrb[0].mxu0 %v3419
  %v11657 = vpop.f32.mrb[0].mxu0
  %v11658 = vadd.f32 0.0, %v11657
  %v11659 = vpop.f32.mrb[0].mxu0
  %v11660 = vadd.f32 0.0, %v11659
  %11661 = vdwg.mxu0
  %11662 = vmatprep.subr.mxu0 %v11586
  %11663 = vmatpush1.msra.mxu0 %v11585
  %11664 = vmatprep.subr.mxu0 0.0
  %11665 = vmatpush1.msra.mxu0 0.0
  %11666 = vmatprep.subr.mxu0 0.0
  %11667 = vmatpush1.msra.mxu0 0.0
  %11668 = vmatprep.subr.mxu0 0.0
  %11669 = vmatpush1.msra.mxu0 0.0
  %11670 = vmatprep.subr.mxu0 0.0
  %11671 = vmatpush1.msra.mxu0 0.0
  %11672 = vmatprep.subr.mxu0 0.0
  %11673 = vmatpush1.msra.mxu0 0.0
  %11674 = vmatprep.subr.mxu0 0.0
  %11675 = vmatpush1.msra.mxu0 0.0
  %11676 = vmatprep.subr.mxu0 0.0
  %11677 = vmatpush1.msra.mxu0 0.0
  %11678 = vmatprep.subr.mxu0 0.0
  %11679 = vmatpush1.msra.mxu0 0.0
  %11680 = vmatprep.subr.mxu0 0.0
  %11681 = vmatpush1.msra.mxu0 0.0
  %11682 = vmatprep.subr.mxu0 0.0
  %11683 = vmatpush1.msra.mxu0 0.0
  %11684 = vmatprep.subr.mxu0 0.0
  %11685 = vmatpush1.msra.mxu0 0.0
  %11686 = vmatprep.subr.mxu0 0.0
  %11687 = vmatpush1.msra.mxu0 0.0
  %11688 = vmatprep.subr.mxu0 0.0
  %11689 = vmatpush1.msra.mxu0 0.0
  %11690 = vmatprep.subr.mxu0 0.0
  %11691 = vmatpush1.msra.mxu0 0.0
  %11692 = vmatprep.subr.mxu0 0.0
  %11693 = vmatpush1.msra.mxu0 0.0
  %11694 = vmatprep.subr.mxu0 0.0
  %11695 = vmatpush1.msra.mxu0 0.0
  %11696 = vmatprep.subr.mxu0 0.0
  %11697 = vmatpush1.msra.mxu0 0.0
  %11698 = vmatprep.subr.mxu0 0.0
  %11699 = vmatpush1.msra.mxu0 0.0
  %11700 = vmatprep.subr.mxu0 0.0
  %11701 = vmatpush1.msra.mxu0 0.0
  %11702 = vmatprep.subr.mxu0 0.0
  %11703 = vmatpush1.msra.mxu0 0.0
  %11704 = vmatprep.subr.mxu0 0.0
  %11705 = vmatpush1.msra.mxu0 0.0
  %11706 = vmatprep.subr.mxu0 0.0
  %11707 = vmatpush1.msra.mxu0 0.0
  %11708 = vmatprep.subr.mxu0 0.0
  %11709 = vmatpush1.msra.mxu0 0.0
  %11710 = vmatprep.subr.mxu0 0.0
  %11711 = vmatpush1.msra.mxu0 0.0
  %11712 = vmatprep.subr.mxu0 0.0
  %11713 = vmatpush1.msra.mxu0 0.0
  %11714 = vmatprep.subr.mxu0 0.0
  %11715 = vmatpush1.msra.mxu0 0.0
  %11716 = vmatprep.subr.mxu0 0.0
  %11717 = vmatpush1.msra.mxu0 0.0
  %11718 = vmatprep.subr.mxu0 0.0
  %11719 = vmatpush1.msra.mxu0 0.0
  %11720 = vmatprep.subr.mxu0 0.0
  %11721 = vmatpush1.msra.mxu0 0.0
  %11722 = vmatprep.subr.mxu0 0.0
  %11723 = vmatpush1.msra.mxu0 0.0
  %11724 = vmatprep.subr.mxu0 0.0
  %11725 = vmatpush1.msra.mxu0 0.0
  %11726 = vmatprep.mubr.f32.mxu0 0.0
  %11727 = vmatmul.mubr.f32.gmra.mrb[0].mxu0 %v3419
  %v11728 = vpop.f32.mrb[0].mxu0
  %v11729 = vadd.f32 0.0, %v11728
  %v11730 = vpop.f32.mrb[0].mxu0
  %v11731 = vadd.f32 0.0, %v11730
  %11732 = vdwg.mxu0
  %v11733 = vadd.f32 %v11571, %v11658
  %v11734 = vadd.f32 %v11572, %v11660
  %v11735 = vadd.f32 %v11573, %v11729
  %v11736 = vadd.f32 %v11574, %v11731
  %11737 = vrot.lane.b32.xlu0 %v8351, 63
  %v11738 = vpop.permute.xlu0 %11737
  %11739 = vrot.lane.b32.xlu0 %v8352, 63
  %v11740 = vpop.permute.xlu0 %11739
  %11741 = vrot.lane.b32.xlu0 %v8353, 63
  %v11742 = vpop.permute.xlu0 %11741
  %11743 = vrot.lane.b32.xlu0 %v8354, 63
  %v11744 = vpop.permute.xlu0 %11743
  %v11745 = vsel %vm3579, %v11738, %v11740
  %v11746 = vsel %vm3579, %v11740, %v11742
  %v11747 = vsel %vm3579, %v11742, %v11744
  %v11748 = vsel %vm3579, %v11744, %v7693
  %11753 = vmatprep.subr.mxu0 %v11746
  %11754 = vmatpush1.msra.mxu0 %v11745
  %11755 = vmatprep.subr.mxu0 0.0
  %11756 = vmatpush1.msra.mxu0 0.0
  %11757 = vmatprep.subr.mxu0 0.0
  %11758 = vmatpush1.msra.mxu0 0.0
  %11759 = vmatprep.subr.mxu0 0.0
  %11760 = vmatpush1.msra.mxu0 0.0
  %11761 = vmatprep.subr.mxu0 0.0
  %11762 = vmatpush1.msra.mxu0 0.0
  %11763 = vmatprep.subr.mxu0 0.0
  %11764 = vmatpush1.msra.mxu0 0.0
  %11765 = vmatprep.subr.mxu0 0.0
  %11766 = vmatpush1.msra.mxu0 0.0
  %11767 = vmatprep.subr.mxu0 0.0
  %11768 = vmatpush1.msra.mxu0 0.0
  %11769 = vmatprep.subr.mxu0 0.0
  %11770 = vmatpush1.msra.mxu0 0.0
  %11771 = vmatprep.subr.mxu0 0.0
  %11772 = vmatpush1.msra.mxu0 0.0
  %11773 = vmatprep.subr.mxu0 0.0
  %11774 = vmatpush1.msra.mxu0 0.0
  %11775 = vmatprep.subr.mxu0 0.0
  %11776 = vmatpush1.msra.mxu0 0.0
  %11777 = vmatprep.subr.mxu0 0.0
  %11778 = vmatpush1.msra.mxu0 0.0
  %11779 = vmatprep.subr.mxu0 0.0
  %11780 = vmatpush1.msra.mxu0 0.0
  %11781 = vmatprep.subr.mxu0 0.0
  %11782 = vmatpush1.msra.mxu0 0.0
  %11783 = vmatprep.subr.mxu0 0.0
  %11784 = vmatpush1.msra.mxu0 0.0
  %11785 = vmatprep.subr.mxu0 0.0
  %11786 = vmatpush1.msra.mxu0 0.0
  %11787 = vmatprep.subr.mxu0 0.0
  %11788 = vmatpush1.msra.mxu0 0.0
  %11789 = vmatprep.subr.mxu0 0.0
  %11790 = vmatpush1.msra.mxu0 0.0
  %11791 = vmatprep.subr.mxu0 0.0
  %11792 = vmatpush1.msra.mxu0 0.0
  %11793 = vmatprep.subr.mxu0 0.0
  %11794 = vmatpush1.msra.mxu0 0.0
  %11795 = vmatprep.subr.mxu0 0.0
  %11796 = vmatpush1.msra.mxu0 0.0
  %11797 = vmatprep.subr.mxu0 0.0
  %11798 = vmatpush1.msra.mxu0 0.0
  %11799 = vmatprep.subr.mxu0 0.0
  %11800 = vmatpush1.msra.mxu0 0.0
  %11801 = vmatprep.subr.mxu0 0.0
  %11802 = vmatpush1.msra.mxu0 0.0
  %11803 = vmatprep.subr.mxu0 0.0
  %11804 = vmatpush1.msra.mxu0 0.0
  %11805 = vmatprep.subr.mxu0 0.0
  %11806 = vmatpush1.msra.mxu0 0.0
  %11807 = vmatprep.subr.mxu0 0.0
  %11808 = vmatpush1.msra.mxu0 0.0
  %11809 = vmatprep.subr.mxu0 0.0
  %11810 = vmatpush1.msra.mxu0 0.0
  %11811 = vmatprep.subr.mxu0 0.0
  %11812 = vmatpush1.msra.mxu0 0.0
  %11813 = vmatprep.subr.mxu0 0.0
  %11814 = vmatpush1.msra.mxu0 0.0
  %11815 = vmatprep.subr.mxu0 0.0
  %11816 = vmatpush1.msra.mxu0 0.0
  %11817 = vmatprep.mubr.f32.mxu0 0.0
  %11818 = vmatmul.mubr.f32.gmra.mrb[0].mxu0 %v3589
  %v11819 = vpop.f32.mrb[0].mxu0
  %v11820 = vadd.f32 0.0, %v11819
  %v11821 = vpop.f32.mrb[0].mxu0
  %v11822 = vadd.f32 0.0, %v11821
  %11823 = vdwg.mxu0
  %11824 = vmatprep.subr.mxu0 %v11748
  %11825 = vmatpush1.msra.mxu0 %v11747
  %11826 = vmatprep.subr.mxu0 0.0
  %11827 = vmatpush1.msra.mxu0 0.0
  %11828 = vmatprep.subr.mxu0 0.0
  %11829 = vmatpush1.msra.mxu0 0.0
  %11830 = vmatprep.subr.mxu0 0.0
  %11831 = vmatpush1.msra.mxu0 0.0
  %11832 = vmatprep.subr.mxu0 0.0
  %11833 = vmatpush1.msra.mxu0 0.0
  %11834 = vmatprep.subr.mxu0 0.0
  %11835 = vmatpush1.msra.mxu0 0.0
  %11836 = vmatprep.subr.mxu0 0.0
  %11837 = vmatpush1.msra.mxu0 0.0
  %11838 = vmatprep.subr.mxu0 0.0
  %11839 = vmatpush1.msra.mxu0 0.0
  %11840 = vmatprep.subr.mxu0 0.0
  %11841 = vmatpush1.msra.mxu0 0.0
  %11842 = vmatprep.subr.mxu0 0.0
  %11843 = vmatpush1.msra.mxu0 0.0
  %11844 = vmatprep.subr.mxu0 0.0
  %11845 = vmatpush1.msra.mxu0 0.0
  %11846 = vmatprep.subr.mxu0 0.0
  %11847 = vmatpush1.msra.mxu0 0.0
  %11848 = vmatprep.subr.mxu0 0.0
  %11849 = vmatpush1.msra.mxu0 0.0
  %11850 = vmatprep.subr.mxu0 0.0
  %11851 = vmatpush1.msra.mxu0 0.0
  %11852 = vmatprep.subr.mxu0 0.0
  %11853 = vmatpush1.msra.mxu0 0.0
  %11854 = vmatprep.subr.mxu0 0.0
  %11855 = vmatpush1.msra.mxu0 0.0
  %11856 = vmatprep.subr.mxu0 0.0
  %11857 = vmatpush1.msra.mxu0 0.0
  %11858 = vmatprep.subr.mxu0 0.0
  %11859 = vmatpush1.msra.mxu0 0.0
  %11860 = vmatprep.subr.mxu0 0.0
  %11861 = vmatpush1.msra.mxu0 0.0
  %11862 = vmatprep.subr.mxu0 0.0
  %11863 = vmatpush1.msra.mxu0 0.0
  %11864 = vmatprep.subr.mxu0 0.0
  %11865 = vmatpush1.msra.mxu0 0.0
  %11866 = vmatprep.subr.mxu0 0.0
  %11867 = vmatpush1.msra.mxu0 0.0
  %11868 = vmatprep.subr.mxu0 0.0
  %11869 = vmatpush1.msra.mxu0 0.0
  %11870 = vmatprep.subr.mxu0 0.0
  %11871 = vmatpush1.msra.mxu0 0.0
  %11872 = vmatprep.subr.mxu0 0.0
  %11873 = vmatpush1.msra.mxu0 0.0
  %11874 = vmatprep.subr.mxu0 0.0
  %11875 = vmatpush1.msra.mxu0 0.0
  %11876 = vmatprep.subr.mxu0 0.0
  %11877 = vmatpush1.msra.mxu0 0.0
  %11878 = vmatprep.subr.mxu0 0.0
  %11879 = vmatpush1.msra.mxu0 0.0
  %11880 = vmatprep.subr.mxu0 0.0
  %11881 = vmatpush1.msra.mxu0 0.0
  %11882 = vmatprep.subr.mxu0 0.0
  %11883 = vmatpush1.msra.mxu0 0.0
  %11884 = vmatprep.subr.mxu0 0.0
  %11885 = vmatpush1.msra.mxu0 0.0
  %11886 = vmatprep.subr.mxu0 0.0
  %11887 = vmatpush1.msra.mxu0 0.0
  %11888 = vmatprep.mubr.f32.mxu0 0.0
  %11889 = vmatmul.mubr.f32.gmra.mrb[0].mxu0 %v3589
  %v11890 = vpop.f32.mrb[0].mxu0
  %v11891 = vadd.f32 0.0, %v11890
  %v11892 = vpop.f32.mrb[0].mxu0
  %v11893 = vadd.f32 0.0, %v11892
  %11894 = vdwg.mxu0
  %v11895 = vadd.f32 %v11733, %v11820
  %v11896 = vadd.f32 %v11734, %v11822
  %v11897 = vadd.f32 %v11735, %v11891
  %v11898 = vadd.f32 %v11736, %v11893
  %11899 = vrot.lane.b32.xlu0 %v8351, 62
  %v11900 = vpop.permute.xlu0 %11899
  %11901 = vrot.lane.b32.xlu0 %v8352, 62
  %v11902 = vpop.permute.xlu0 %11901
  %11903 = vrot.lane.b32.xlu0 %v8353, 62
  %v11904 = vpop.permute.xlu0 %11903
  %11905 = vrot.lane.b32.xlu0 %v8354, 62
  %v11906 = vpop.permute.xlu0 %11905
  %v11907 = vsel %vm3749, %v11900, %v11902
  %v11908 = vsel %vm3749, %v11902, %v11904
  %v11909 = vsel %vm3749, %v11904, %v11906
  %v11910 = vsel %vm3749, %v11906, %v7857
  %11915 = vmatprep.subr.mxu0 %v11908
  %11916 = vmatpush1.msra.mxu0 %v11907
  %11917 = vmatprep.subr.mxu0 0.0
  %11918 = vmatpush1.msra.mxu0 0.0
  %11919 = vmatprep.subr.mxu0 0.0
  %11920 = vmatpush1.msra.mxu0 0.0
  %11921 = vmatprep.subr.mxu0 0.0
  %11922 = vmatpush1.msra.mxu0 0.0
  %11923 = vmatprep.subr.mxu0 0.0
  %11924 = vmatpush1.msra.mxu0 0.0
  %11925 = vmatprep.subr.mxu0 0.0
  %11926 = vmatpush1.msra.mxu0 0.0
  %11927 = vmatprep.subr.mxu0 0.0
  %11928 = vmatpush1.msra.mxu0 0.0
  %11929 = vmatprep.subr.mxu0 0.0
  %11930 = vmatpush1.msra.mxu0 0.0
  %11931 = vmatprep.subr.mxu0 0.0
  %11932 = vmatpush1.msra.mxu0 0.0
  %11933 = vmatprep.subr.mxu0 0.0
  %11934 = vmatpush1.msra.mxu0 0.0
  %11935 = vmatprep.subr.mxu0 0.0
  %11936 = vmatpush1.msra.mxu0 0.0
  %11937 = vmatprep.subr.mxu0 0.0
  %11938 = vmatpush1.msra.mxu0 0.0
  %11939 = vmatprep.subr.mxu0 0.0
  %11940 = vmatpush1.msra.mxu0 0.0
  %11941 = vmatprep.subr.mxu0 0.0
  %11942 = vmatpush1.msra.mxu0 0.0
  %11943 = vmatprep.subr.mxu0 0.0
  %11944 = vmatpush1.msra.mxu0 0.0
  %11945 = vmatprep.subr.mxu0 0.0
  %11946 = vmatpush1.msra.mxu0 0.0
  %11947 = vmatprep.subr.mxu0 0.0
  %11948 = vmatpush1.msra.mxu0 0.0
  %11949 = vmatprep.subr.mxu0 0.0
  %11950 = vmatpush1.msra.mxu0 0.0
  %11951 = vmatprep.subr.mxu0 0.0
  %11952 = vmatpush1.msra.mxu0 0.0
  %11953 = vmatprep.subr.mxu0 0.0
  %11954 = vmatpush1.msra.mxu0 0.0
  %11955 = vmatprep.subr.mxu0 0.0
  %11956 = vmatpush1.msra.mxu0 0.0
  %11957 = vmatprep.subr.mxu0 0.0
  %11958 = vmatpush1.msra.mxu0 0.0
  %11959 = vmatprep.subr.mxu0 0.0
  %11960 = vmatpush1.msra.mxu0 0.0
  %11961 = vmatprep.subr.mxu0 0.0
  %11962 = vmatpush1.msra.mxu0 0.0
  %11963 = vmatprep.subr.mxu0 0.0
  %11964 = vmatpush1.msra.mxu0 0.0
  %11965 = vmatprep.subr.mxu0 0.0
  %11966 = vmatpush1.msra.mxu0 0.0
  %11967 = vmatprep.subr.mxu0 0.0
  %11968 = vmatpush1.msra.mxu0 0.0
  %11969 = vmatprep.subr.mxu0 0.0
  %11970 = vmatpush1.msra.mxu0 0.0
  %11971 = vmatprep.subr.mxu0 0.0
  %11972 = vmatpush1.msra.mxu0 0.0
  %11973 = vmatprep.subr.mxu0 0.0
  %11974 = vmatpush1.msra.mxu0 0.0
  %11975 = vmatprep.subr.mxu0 0.0
  %11976 = vmatpush1.msra.mxu0 0.0
  %11977 = vmatprep.subr.mxu0 0.0
  %11978 = vmatpush1.msra.mxu0 0.0
  %11979 = vmatprep.mubr.f32.mxu0 0.0
  %11980 = vmatmul.mubr.f32.gmra.mrb[0].mxu0 %v3759
  %v11981 = vpop.f32.mrb[0].mxu0
  %v11982 = vadd.f32 0.0, %v11981
  %v11983 = vpop.f32.mrb[0].mxu0
  %v11984 = vadd.f32 0.0, %v11983
  %11985 = vdwg.mxu0
  %11986 = vmatprep.subr.mxu0 %v11910
  %11987 = vmatpush1.msra.mxu0 %v11909
  %11988 = vmatprep.subr.mxu0 0.0
  %11989 = vmatpush1.msra.mxu0 0.0
  %11990 = vmatprep.subr.mxu0 0.0
  %11991 = vmatpush1.msra.mxu0 0.0
  %11992 = vmatprep.subr.mxu0 0.0
  %11993 = vmatpush1.msra.mxu0 0.0
  %11994 = vmatprep.subr.mxu0 0.0
  %11995 = vmatpush1.msra.mxu0 0.0
  %11996 = vmatprep.subr.mxu0 0.0
  %11997 = vmatpush1.msra.mxu0 0.0
  %11998 = vmatprep.subr.mxu0 0.0
  %11999 = vmatpush1.msra.mxu0 0.0
  %12000 = vmatprep.subr.mxu0 0.0
  %12001 = vmatpush1.msra.mxu0 0.0
  %12002 = vmatprep.subr.mxu0 0.0
  %12003 = vmatpush1.msra.mxu0 0.0
  %12004 = vmatprep.subr.mxu0 0.0
  %12005 = vmatpush1.msra.mxu0 0.0
  %12006 = vmatprep.subr.mxu0 0.0
  %12007 = vmatpush1.msra.mxu0 0.0
  %12008 = vmatprep.subr.mxu0 0.0
  %12009 = vmatpush1.msra.mxu0 0.0
  %12010 = vmatprep.subr.mxu0 0.0
  %12011 = vmatpush1.msra.mxu0 0.0
  %12012 = vmatprep.subr.mxu0 0.0
  %12013 = vmatpush1.msra.mxu0 0.0
  %12014 = vmatprep.subr.mxu0 0.0
  %12015 = vmatpush1.msra.mxu0 0.0
  %12016 = vmatprep.subr.mxu0 0.0
  %12017 = vmatpush1.msra.mxu0 0.0
  %12018 = vmatprep.subr.mxu0 0.0
  %12019 = vmatpush1.msra.mxu0 0.0
  %12020 = vmatprep.subr.mxu0 0.0
  %12021 = vmatpush1.msra.mxu0 0.0
  %12022 = vmatprep.subr.mxu0 0.0
  %12023 = vmatpush1.msra.mxu0 0.0
  %12024 = vmatprep.subr.mxu0 0.0
  %12025 = vmatpush1.msra.mxu0 0.0
  %12026 = vmatprep.subr.mxu0 0.0
  %12027 = vmatpush1.msra.mxu0 0.0
  %12028 = vmatprep.subr.mxu0 0.0
  %12029 = vmatpush1.msra.mxu0 0.0
  %12030 = vmatprep.subr.mxu0 0.0
  %12031 = vmatpush1.msra.mxu0 0.0
  %12032 = vmatprep.subr.mxu0 0.0
  %12033 = vmatpush1.msra.mxu0 0.0
  %12034 = vmatprep.subr.mxu0 0.0
  %12035 = vmatpush1.msra.mxu0 0.0
  %12036 = vmatprep.subr.mxu0 0.0
  %12037 = vmatpush1.msra.mxu0 0.0
  %12038 = vmatprep.subr.mxu0 0.0
  %12039 = vmatpush1.msra.mxu0 0.0
  %12040 = vmatprep.subr.mxu0 0.0
  %12041 = vmatpush1.msra.mxu0 0.0
  %12042 = vmatprep.subr.mxu0 0.0
  %12043 = vmatpush1.msra.mxu0 0.0
  %12044 = vmatprep.subr.mxu0 0.0
  %12045 = vmatpush1.msra.mxu0 0.0
  %12046 = vmatprep.subr.mxu0 0.0
  %12047 = vmatpush1.msra.mxu0 0.0
  %12048 = vmatprep.subr.mxu0 0.0
  %12049 = vmatpush1.msra.mxu0 0.0
  %12050 = vmatprep.mubr.f32.mxu0 0.0
  %12051 = vmatmul.mubr.f32.gmra.mrb[0].mxu0 %v3759
  %v12052 = vpop.f32.mrb[0].mxu0
  %v12053 = vadd.f32 0.0, %v12052
  %v12054 = vpop.f32.mrb[0].mxu0
  %v12055 = vadd.f32 0.0, %v12054
  %12056 = vdwg.mxu0
  %v12057 = vadd.f32 %v11895, %v11982
  %v12058 = vadd.f32 %v11896, %v11984
  %v12059 = vadd.f32 %v11897, %v12053
  %v12060 = vadd.f32 %v11898, %v12055
  %12061 = vrot.lane.b32.xlu0 %v8351, 61
  %v12062 = vpop.permute.xlu0 %12061
  %12063 = vrot.lane.b32.xlu0 %v8352, 61
  %v12064 = vpop.permute.xlu0 %12063
  %12065 = vrot.lane.b32.xlu0 %v8353, 61
  %v12066 = vpop.permute.xlu0 %12065
  %12067 = vrot.lane.b32.xlu0 %v8354, 61
  %v12068 = vpop.permute.xlu0 %12067
  %v12069 = vsel %vm3919, %v12062, %v12064
  %v12070 = vsel %vm3919, %v12064, %v12066
  %v12071 = vsel %vm3919, %v12066, %v12068
  %v12072 = vsel %vm3919, %v12068, %v8021
  %12077 = vmatprep.subr.mxu0 %v12070
  %12078 = vmatpush1.msra.mxu0 %v12069
  %12079 = vmatprep.subr.mxu0 0.0
  %12080 = vmatpush1.msra.mxu0 0.0
  %12081 = vmatprep.subr.mxu0 0.0
  %12082 = vmatpush1.msra.mxu0 0.0
  %12083 = vmatprep.subr.mxu0 0.0
  %12084 = vmatpush1.msra.mxu0 0.0
  %12085 = vmatprep.subr.mxu0 0.0
  %12086 = vmatpush1.msra.mxu0 0.0
  %12087 = vmatprep.subr.mxu0 0.0
  %12088 = vmatpush1.msra.mxu0 0.0
  %12089 = vmatprep.subr.mxu0 0.0
  %12090 = vmatpush1.msra.mxu0 0.0
  %12091 = vmatprep.subr.mxu0 0.0
  %12092 = vmatpush1.msra.mxu0 0.0
  %12093 = vmatprep.subr.mxu0 0.0
  %12094 = vmatpush1.msra.mxu0 0.0
  %12095 = vmatprep.subr.mxu0 0.0
  %12096 = vmatpush1.msra.mxu0 0.0
  %12097 = vmatprep.subr.mxu0 0.0
  %12098 = vmatpush1.msra.mxu0 0.0
  %12099 = vmatprep.subr.mxu0 0.0
  %12100 = vmatpush1.msra.mxu0 0.0
  %12101 = vmatprep.subr.mxu0 0.0
  %12102 = vmatpush1.msra.mxu0 0.0
  %12103 = vmatprep.subr.mxu0 0.0
  %12104 = vmatpush1.msra.mxu0 0.0
  %12105 = vmatprep.subr.mxu0 0.0
  %12106 = vmatpush1.msra.mxu0 0.0
  %12107 = vmatprep.subr.mxu0 0.0
  %12108 = vmatpush1.msra.mxu0 0.0
  %12109 = vmatprep.subr.mxu0 0.0
  %12110 = vmatpush1.msra.mxu0 0.0
  %12111 = vmatprep.subr.mxu0 0.0
  %12112 = vmatpush1.msra.mxu0 0.0
  %12113 = vmatprep.subr.mxu0 0.0
  %12114 = vmatpush1.msra.mxu0 0.0
  %12115 = vmatprep.subr.mxu0 0.0
  %12116 = vmatpush1.msra.mxu0 0.0
  %12117 = vmatprep.subr.mxu0 0.0
  %12118 = vmatpush1.msra.mxu0 0.0
  %12119 = vmatprep.subr.mxu0 0.0
  %12120 = vmatpush1.msra.mxu0 0.0
  %12121 = vmatprep.subr.mxu0 0.0
  %12122 = vmatpush1.msra.mxu0 0.0
  %12123 = vmatprep.subr.mxu0 0.0
  %12124 = vmatpush1.msra.mxu0 0.0
  %12125 = vmatprep.subr.mxu0 0.0
  %12126 = vmatpush1.msra.mxu0 0.0
  %12127 = vmatprep.subr.mxu0 0.0
  %12128 = vmatpush1.msra.mxu0 0.0
  %12129 = vmatprep.subr.mxu0 0.0
  %12130 = vmatpush1.msra.mxu0 0.0
  %12131 = vmatprep.subr.mxu0 0.0
  %12132 = vmatpush1.msra.mxu0 0.0
  %12133 = vmatprep.subr.mxu0 0.0
  %12134 = vmatpush1.msra.mxu0 0.0
  %12135 = vmatprep.subr.mxu0 0.0
  %12136 = vmatpush1.msra.mxu0 0.0
  %12137 = vmatprep.subr.mxu0 0.0
  %12138 = vmatpush1.msra.mxu0 0.0
  %12139 = vmatprep.subr.mxu0 0.0
  %12140 = vmatpush1.msra.mxu0 0.0
  %12141 = vmatprep.mubr.f32.mxu0 0.0
  %12142 = vmatmul.mubr.f32.gmra.mrb[0].mxu0 %v3929
  %v12143 = vpop.f32.mrb[0].mxu0
  %v12144 = vadd.f32 0.0, %v12143
  %v12145 = vpop.f32.mrb[0].mxu0
  %v12146 = vadd.f32 0.0, %v12145
  %12147 = vdwg.mxu0
  %12148 = vmatprep.subr.mxu0 %v12072
  %12149 = vmatpush1.msra.mxu0 %v12071
  %12150 = vmatprep.subr.mxu0 0.0
  %12151 = vmatpush1.msra.mxu0 0.0
  %12152 = vmatprep.subr.mxu0 0.0
  %12153 = vmatpush1.msra.mxu0 0.0
  %12154 = vmatprep.subr.mxu0 0.0
  %12155 = vmatpush1.msra.mxu0 0.0
  %12156 = vmatprep.subr.mxu0 0.0
  %12157 = vmatpush1.msra.mxu0 0.0
  %12158 = vmatprep.subr.mxu0 0.0
  %12159 = vmatpush1.msra.mxu0 0.0
  %12160 = vmatprep.subr.mxu0 0.0
  %12161 = vmatpush1.msra.mxu0 0.0
  %12162 = vmatprep.subr.mxu0 0.0
  %12163 = vmatpush1.msra.mxu0 0.0
  %12164 = vmatprep.subr.mxu0 0.0
  %12165 = vmatpush1.msra.mxu0 0.0
  %12166 = vmatprep.subr.mxu0 0.0
  %12167 = vmatpush1.msra.mxu0 0.0
  %12168 = vmatprep.subr.mxu0 0.0
  %12169 = vmatpush1.msra.mxu0 0.0
  %12170 = vmatprep.subr.mxu0 0.0
  %12171 = vmatpush1.msra.mxu0 0.0
  %12172 = vmatprep.subr.mxu0 0.0
  %12173 = vmatpush1.msra.mxu0 0.0
  %12174 = vmatprep.subr.mxu0 0.0
  %12175 = vmatpush1.msra.mxu0 0.0
  %12176 = vmatprep.subr.mxu0 0.0
  %12177 = vmatpush1.msra.mxu0 0.0
  %12178 = vmatprep.subr.mxu0 0.0
  %12179 = vmatpush1.msra.mxu0 0.0
  %12180 = vmatprep.subr.mxu0 0.0
  %12181 = vmatpush1.msra.mxu0 0.0
  %12182 = vmatprep.subr.mxu0 0.0
  %12183 = vmatpush1.msra.mxu0 0.0
  %12184 = vmatprep.subr.mxu0 0.0
  %12185 = vmatpush1.msra.mxu0 0.0
  %12186 = vmatprep.subr.mxu0 0.0
  %12187 = vmatpush1.msra.mxu0 0.0
  %12188 = vmatprep.subr.mxu0 0.0
  %12189 = vmatpush1.msra.mxu0 0.0
  %12190 = vmatprep.subr.mxu0 0.0
  %12191 = vmatpush1.msra.mxu0 0.0
  %12192 = vmatprep.subr.mxu0 0.0
  %12193 = vmatpush1.msra.mxu0 0.0
  %12194 = vmatprep.subr.mxu0 0.0
  %12195 = vmatpush1.msra.mxu0 0.0
  %12196 = vmatprep.subr.mxu0 0.0
  %12197 = vmatpush1.msra.mxu0 0.0
  %12198 = vmatprep.subr.mxu0 0.0
  %12199 = vmatpush1.msra.mxu0 0.0
  %12200 = vmatprep.subr.mxu0 0.0
  %12201 = vmatpush1.msra.mxu0 0.0
  %12202 = vmatprep.subr.mxu0 0.0
  %12203 = vmatpush1.msra.mxu0 0.0
  %12204 = vmatprep.subr.mxu0 0.0
  %12205 = vmatpush1.msra.mxu0 0.0
  %12206 = vmatprep.subr.mxu0 0.0
  %12207 = vmatpush1.msra.mxu0 0.0
  %12208 = vmatprep.subr.mxu0 0.0
  %12209 = vmatpush1.msra.mxu0 0.0
  %12210 = vmatprep.subr.mxu0 0.0
  %12211 = vmatpush1.msra.mxu0 0.0
  %12212 = vmatprep.mubr.f32.mxu0 0.0
  %12213 = vmatmul.mubr.f32.gmra.mrb[0].mxu0 %v3929
  %v12214 = vpop.f32.mrb[0].mxu0
  %v12215 = vadd.f32 0.0, %v12214
  %v12216 = vpop.f32.mrb[0].mxu0
  %v12217 = vadd.f32 0.0, %v12216
  %12218 = vdwg.mxu0
  %v12219 = vadd.f32 %v12057, %v12144
  %v12220 = vadd.f32 %v12058, %v12146
  %v12221 = vadd.f32 %v12059, %v12215
  %v12222 = vadd.f32 %v12060, %v12217
  %12223 = vrot.lane.b32.xlu0 %v8351, 60
  %v12224 = vpop.permute.xlu0 %12223
  %12225 = vrot.lane.b32.xlu0 %v8352, 60
  %v12226 = vpop.permute.xlu0 %12225
  %12227 = vrot.lane.b32.xlu0 %v8353, 60
  %v12228 = vpop.permute.xlu0 %12227
  %12229 = vrot.lane.b32.xlu0 %v8354, 60
  %v12230 = vpop.permute.xlu0 %12229
  %v12231 = vsel %vm4089, %v12224, %v12226
  %v12232 = vsel %vm4089, %v12226, %v12228
  %v12233 = vsel %vm4089, %v12228, %v12230
  %v12234 = vsel %vm4089, %v12230, %v8185
  %12239 = vmatprep.subr.mxu0 %v12232
  %12240 = vmatpush1.msra.mxu0 %v12231
  %12241 = vmatprep.subr.mxu0 0.0
  %12242 = vmatpush1.msra.mxu0 0.0
  %12243 = vmatprep.subr.mxu0 0.0
  %12244 = vmatpush1.msra.mxu0 0.0
  %12245 = vmatprep.subr.mxu0 0.0
  %12246 = vmatpush1.msra.mxu0 0.0
  %12247 = vmatprep.subr.mxu0 0.0
  %12248 = vmatpush1.msra.mxu0 0.0
  %12249 = vmatprep.subr.mxu0 0.0
  %12250 = vmatpush1.msra.mxu0 0.0
  %12251 = vmatprep.subr.mxu0 0.0
  %12252 = vmatpush1.msra.mxu0 0.0
  %12253 = vmatprep.subr.mxu0 0.0
  %12254 = vmatpush1.msra.mxu0 0.0
  %12255 = vmatprep.subr.mxu0 0.0
  %12256 = vmatpush1.msra.mxu0 0.0
  %12257 = vmatprep.subr.mxu0 0.0
  %12258 = vmatpush1.msra.mxu0 0.0
  %12259 = vmatprep.subr.mxu0 0.0
  %12260 = vmatpush1.msra.mxu0 0.0
  %12261 = vmatprep.subr.mxu0 0.0
  %12262 = vmatpush1.msra.mxu0 0.0
  %12263 = vmatprep.subr.mxu0 0.0
  %12264 = vmatpush1.msra.mxu0 0.0
  %12265 = vmatprep.subr.mxu0 0.0
  %12266 = vmatpush1.msra.mxu0 0.0
  %12267 = vmatprep.subr.mxu0 0.0
  %12268 = vmatpush1.msra.mxu0 0.0
  %12269 = vmatprep.subr.mxu0 0.0
  %12270 = vmatpush1.msra.mxu0 0.0
  %12271 = vmatprep.subr.mxu0 0.0
  %12272 = vmatpush1.msra.mxu0 0.0
  %12273 = vmatprep.subr.mxu0 0.0
  %12274 = vmatpush1.msra.mxu0 0.0
  %12275 = vmatprep.subr.mxu0 0.0
  %12276 = vmatpush1.msra.mxu0 0.0
  %12277 = vmatprep.subr.mxu0 0.0
  %12278 = vmatpush1.msra.mxu0 0.0
  %12279 = vmatprep.subr.mxu0 0.0
  %12280 = vmatpush1.msra.mxu0 0.0
  %12281 = vmatprep.subr.mxu0 0.0
  %12282 = vmatpush1.msra.mxu0 0.0
  %12283 = vmatprep.subr.mxu0 0.0
  %12284 = vmatpush1.msra.mxu0 0.0
  %12285 = vmatprep.subr.mxu0 0.0
  %12286 = vmatpush1.msra.mxu0 0.0
  %12287 = vmatprep.subr.mxu0 0.0
  %12288 = vmatpush1.msra.mxu0 0.0
  %12289 = vmatprep.subr.mxu0 0.0
  %12290 = vmatpush1.msra.mxu0 0.0
  %12291 = vmatprep.subr.mxu0 0.0
  %12292 = vmatpush1.msra.mxu0 0.0
  %12293 = vmatprep.subr.mxu0 0.0
  %12294 = vmatpush1.msra.mxu0 0.0
  %12295 = vmatprep.subr.mxu0 0.0
  %12296 = vmatpush1.msra.mxu0 0.0
  %12297 = vmatprep.subr.mxu0 0.0
  %12298 = vmatpush1.msra.mxu0 0.0
  %12299 = vmatprep.subr.mxu0 0.0
  %12300 = vmatpush1.msra.mxu0 0.0
  %12301 = vmatprep.subr.mxu0 0.0
  %12302 = vmatpush1.msra.mxu0 0.0
  %12303 = vmatprep.mubr.f32.mxu0 0.0
  %12304 = vmatmul.mubr.f32.gmra.mrb[0].mxu0 %v4099
  %v12305 = vpop.f32.mrb[0].mxu0
  %v12306 = vadd.f32 0.0, %v12305
  %v12307 = vpop.f32.mrb[0].mxu0
  %v12308 = vadd.f32 0.0, %v12307
  %12309 = vdwg.mxu0
  %12310 = vmatprep.subr.mxu0 %v12234
  %12311 = vmatpush1.msra.mxu0 %v12233
  %12312 = vmatprep.subr.mxu0 0.0
  %12313 = vmatpush1.msra.mxu0 0.0
  %12314 = vmatprep.subr.mxu0 0.0
  %12315 = vmatpush1.msra.mxu0 0.0
  %12316 = vmatprep.subr.mxu0 0.0
  %12317 = vmatpush1.msra.mxu0 0.0
  %12318 = vmatprep.subr.mxu0 0.0
  %12319 = vmatpush1.msra.mxu0 0.0
  %12320 = vmatprep.subr.mxu0 0.0
  %12321 = vmatpush1.msra.mxu0 0.0
  %12322 = vmatprep.subr.mxu0 0.0
  %12323 = vmatpush1.msra.mxu0 0.0
  %12324 = vmatprep.subr.mxu0 0.0
  %12325 = vmatpush1.msra.mxu0 0.0
  %12326 = vmatprep.subr.mxu0 0.0
  %12327 = vmatpush1.msra.mxu0 0.0
  %12328 = vmatprep.subr.mxu0 0.0
  %12329 = vmatpush1.msra.mxu0 0.0
  %12330 = vmatprep.subr.mxu0 0.0
  %12331 = vmatpush1.msra.mxu0 0.0
  %12332 = vmatprep.subr.mxu0 0.0
  %12333 = vmatpush1.msra.mxu0 0.0
  %12334 = vmatprep.subr.mxu0 0.0
  %12335 = vmatpush1.msra.mxu0 0.0
  %12336 = vmatprep.subr.mxu0 0.0
  %12337 = vmatpush1.msra.mxu0 0.0
  %12338 = vmatprep.subr.mxu0 0.0
  %12339 = vmatpush1.msra.mxu0 0.0
  %12340 = vmatprep.subr.mxu0 0.0
  %12341 = vmatpush1.msra.mxu0 0.0
  %12342 = vmatprep.subr.mxu0 0.0
  %12343 = vmatpush1.msra.mxu0 0.0
  %12344 = vmatprep.subr.mxu0 0.0
  %12345 = vmatpush1.msra.mxu0 0.0
  %12346 = vmatprep.subr.mxu0 0.0
  %12347 = vmatpush1.msra.mxu0 0.0
  %12348 = vmatprep.subr.mxu0 0.0
  %12349 = vmatpush1.msra.mxu0 0.0
  %12350 = vmatprep.subr.mxu0 0.0
  %12351 = vmatpush1.msra.mxu0 0.0
  %12352 = vmatprep.subr.mxu0 0.0
  %12353 = vmatpush1.msra.mxu0 0.0
  %12354 = vmatprep.subr.mxu0 0.0
  %12355 = vmatpush1.msra.mxu0 0.0
  %12356 = vmatprep.subr.mxu0 0.0
  %12357 = vmatpush1.msra.mxu0 0.0
  %12358 = vmatprep.subr.mxu0 0.0
  %12359 = vmatpush1.msra.mxu0 0.0
  %12360 = vmatprep.subr.mxu0 0.0
  %12361 = vmatpush1.msra.mxu0 0.0
  %12362 = vmatprep.subr.mxu0 0.0
  %12363 = vmatpush1.msra.mxu0 0.0
  %12364 = vmatprep.subr.mxu0 0.0
  %12365 = vmatpush1.msra.mxu0 0.0
  %12366 = vmatprep.subr.mxu0 0.0
  %12367 = vmatpush1.msra.mxu0 0.0
  %12368 = vmatprep.subr.mxu0 0.0
  %12369 = vmatpush1.msra.mxu0 0.0
  %12370 = vmatprep.subr.mxu0 0.0
  %12371 = vmatpush1.msra.mxu0 0.0
  %12372 = vmatprep.subr.mxu0 0.0
  %12373 = vmatpush1.msra.mxu0 0.0
  %12374 = vmatprep.mubr.f32.mxu0 0.0
  %12375 = vmatmul.mubr.f32.gmra.mrb[0].mxu0 %v4099
  %v12376 = vpop.f32.mrb[0].mxu0
  %v12377 = vadd.f32 0.0, %v12376
  %v12378 = vpop.f32.mrb[0].mxu0
  %v12379 = vadd.f32 0.0, %v12378
  %12380 = vdwg.mxu0
  %v12381 = vadd.f32 %v12219, %v12306
  %v12382 = vadd.f32 %v12220, %v12308
  %v12383 = vadd.f32 %v12221, %v12377
  %v12384 = vadd.f32 %v12222, %v12379
  %s12385 = scalar_lea.vmem %s2, 16
  %v12386 = vld [vmem:[%s12385] sm:$0xff]
  %12388 = vset.pattern.permute.xlu0 0
  %12389 = vperm.xlu0 %12388, %v12386
  %v12390 = vpop.permute.xlu0 %12389
  %v12392 = vadd.f32 %v12381, %v12390
  %v12393 = vadd.f32 %v12382, %v12390
  %v12394 = vadd.f32 %v12383, %v12390
  %v12395 = vadd.f32 %v12384, %v12390
  %v12396 = vmax.f32 %v12392, 0.0
  %v12397 = vmax.f32 %v12393, 0.0
  %v12398 = vmax.f32 %v12394, 0.0
  %v12399 = vmax.f32 %v12395, 0.0
  %12400 = vst [vmem:[%s3] sm:$0xff] %v12396
  %12401 = vst [vmem:[%s3 + $0x8] sm:$0xff] %v12397
  %12402 = vst [vmem:[%s3 + $0x10] sm:$0xff] %v12398
  %12403 = vst [vmem:[%s3 + $0x18] sm:$0xff] %v12399
  // Predicated region
  $region14: #{model_forward.1} parent=0 // pred_check
    _
  $region15: #{model_forward.1} parent=0 // pred_check_branch
    %12405 = sbr.rel (0) target = $region17
  $region16: #{model_forward.1} parent=0 // pred_region
    _
  $region17: #{model_forward.1} parent=0 // pred_fallthru
    _
  // Predicated region
  $region18: #{model_forward.1} parent=0 // pred_check
    _
  $region19: #{model_forward.1} parent=0 // pred_check_branch
    %12407 = sbr.rel (0) target = $region21
  $region20: #{model_forward.1} parent=0 // pred_region
    _
  $region21: #{model_forward.1} parent=0 // pred_fallthru
    _

</llo_original>
